<compile_context>
chip_gen: v6e
topology: v6e:2x2x1
jax: 0.10.0
libtpu: 0.0.40
codegen_flags: <defaults>
</compile_context>

<pallas_src>
import jax
import jax.numpy as jnp
from jax import lax
from jax.experimental import pallas as pl
from jax.experimental.pallas import tpu as pltpu


# ----------------------------- model dimensions ----------------------------

IN_C = 4            # in_channelz
HID_C = 8
OUT_C = 16          # small synthetic stand-in for 512
H = W = 16          # input spatial size
HP, WP = H // 2, W // 2       # after pool1 : 8 x 8
HQ, WQ = HP // 2, WP // 2     # after pool2 : 4 x 4


# ----------------------------- in-kernel helpers ---------------------------

def _conv3x3_relu(xp_ref, w_ref, b_ref, h, w):
    """3x3 SAME conv + bias + ReLU from a spatially padded VMEM ref.

    xp_ref: (h+2, w+2, Cin) padded activations
    w_ref : (9, Cin, Cout)  taps flattened row-major (kh*3 + kw)
    b_ref : (1, Cout)
    returns (h*w, Cout) float32.
    """
    cout = w_ref.shape[-1]
    acc = jnp.zeros((h * w, cout), jnp.float32)
    # 9 whole-image matmuls, fully unrolled (static trip count, visible to the scheduler).
    for kh in range(3):
        for kw in range(3):
            patch = xp_ref[pl.ds(kh, h), pl.ds(kw, w), :]          # (h, w, Cin)
            acc = acc + jnp.dot(patch.reshape(h * w, patch.shape[-1]),
                                w_ref[3 * kh + kw],
                                preferred_element_type=jnp.float32)
    # bias broadcast + ReLU applied once (hoisted out of the tap loop)
    return jnp.maximum(acc + b_ref[...], 0.0)


def _maxpool2x2(src_ref, rowmax_ref):
    """2x2 / stride-2 max pool.  src_ref:(h,w,c) -> value (h/2, w/2, c)."""
    h, w, c = src_ref.shape
    ho, wo = h // 2, w // 2
    # rows: stride-2 along the leading dim; columns: stride-2 along the sublane dim
    rowmax_ref[...] = jnp.maximum(src_ref[pl.ds(0, ho, stride=2)],
                                  src_ref[pl.ds(1, ho, stride=2)])        # (ho, w, c)
    return jnp.maximum(rowmax_ref[:, pl.ds(0, wo, stride=2), :],
                       rowmax_ref[:, pl.ds(1, wo, stride=2), :])          # (ho, wo, c)


# ----------------------------- fused kernel --------------------------------

def _encoder_fused_kernel(xp_ref, w1_ref, b1_ref, w2_ref, b2_ref, w3_ref, b3_ref,
                          o_ref,
                          p1_ref, a2_ref, rm1_ref, p2_ref, a3_ref, rm2_ref):
    # conv1 : IN_C -> HID_C, SAME, ReLU ; write padded so conv2 can do shifted reads
    y1 = _conv3x3_relu(xp_ref, w1_ref, b1_ref, H, W)                      # (H*W, HID_C)
    p1_ref[...] = jnp.zeros_like(p1_ref)
    p1_ref[pl.ds(1, H), pl.ds(1, W), :] = y1.reshape(H, W, HID_C)

    # conv2 : HID_C -> HID_C, SAME, ReLU
    y2 = _conv3x3_relu(p1_ref, w2_ref, b2_ref, H, W)                      # (H*W, HID_C)
    a2_ref[...] = y2.reshape(H, W, HID_C)

    # pool1 : 2x2 / stride 2 (indices discarded) ; write padded for conv3
    pooled1 = _maxpool2x2(a2_ref, rm1_ref)                                # (HP, WP, HID_C)
    p2_ref[...] = jnp.zeros_like(p2_ref)
    p2_ref[pl.ds(1, HP), pl.ds(1, WP), :] = pooled1

    # conv3 : HID_C -> OUT_C, SAME, ReLU
    y3 = _conv3x3_relu(p2_ref, w3_ref, b3_ref, HP, WP)                    # (HP*WP, OUT_C)
    a3_ref[...] = y3.reshape(HP, WP, OUT_C)

    # pool2 : 2x2 / stride 2
    pooled2 = _maxpool2x2(a3_ref, rm2_ref)                                # (HQ, WQ, OUT_C)

    # spatial-mean "merger" over (-2, -1), fused into the same kernel
    s = jnp.sum(pooled2, axis=0)                                          # (WQ, OUT_C)
    s = jnp.sum(s, axis=0, keepdims=True)                                 # (1, OUT_C)
    o_ref[...] = s * (1.0 / (HQ * WQ))


# ----------------------------- pallas_call wrapper -------------------------

def encoder_fused(x_nhwc, params):
    """x_nhwc: (N, H, W, IN_C) f32 -> (N, OUT_C) fused encoder code."""
    (w1, b1), (w2, b2), (w3, b3) = params
    N = x_nhwc.shape[0]
    xp = jnp.pad(x_nhwc, ((0, 0), (1, 1), (1, 1), (0, 0)))      # SAME padding (glue)

    w1r = w1.reshape(9, IN_C, HID_C)
    w2r = w2.reshape(9, HID_C, HID_C)
    w3r = w3.reshape(9, HID_C, OUT_C)
    b1r = b1.reshape(1, HID_C)
    b2r = b2.reshape(1, HID_C)
    b3r = b3.reshape(1, OUT_C)

    out = pl.pallas_call(
        _encoder_fused_kernel,
        out_shape=jax.ShapeDtypeStruct((N, 1, OUT_C), jnp.float32),
        grid_spec=pltpu.PrefetchScalarGridSpec(
            num_scalar_prefetch=0,
            grid=(N,),
            in_specs=[
                pl.BlockSpec((None, H + 2, W + 2, IN_C), lambda n: (n, 0, 0, 0)),
                # weight/bias blocks use constant index maps -> fetched once, stay VMEM-resident
                pl.BlockSpec((9, IN_C, HID_C), lambda n: (0, 0, 0)),
                pl.BlockSpec((1, HID_C), lambda n: (0, 0)),
                pl.BlockSpec((9, HID_C, HID_C), lambda n: (0, 0, 0)),
                pl.BlockSpec((1, HID_C), lambda n: (0, 0)),
                pl.BlockSpec((9, HID_C, OUT_C), lambda n: (0, 0, 0)),
                pl.BlockSpec((1, OUT_C), lambda n: (0, 0)),
            ],
            out_specs=pl.BlockSpec((None, 1, OUT_C), lambda n: (n, 0, 0)),
            scratch_shapes=[
                pltpu.VMEM((H + 2, W + 2, HID_C), jnp.float32),    # p1 : padded conv1 out
                pltpu.VMEM((H, W, HID_C), jnp.float32),            # a2 : conv2 out
                pltpu.VMEM((HP, W, HID_C), jnp.float32),           # rm1: pool1 row-max
                pltpu.VMEM((HP + 2, WP + 2, HID_C), jnp.float32),  # p2 : padded pool1 out
                pltpu.VMEM((HP, WP, OUT_C), jnp.float32),          # a3 : conv3 out
                pltpu.VMEM((HQ, WP, OUT_C), jnp.float32),          # rm2: pool2 row-max
            ],
        ),
        # "parallel" batch axis: shards across the 2 TensorCores on v7x, serial elsewhere.
        compiler_params=pltpu.CompilerParams(dimension_semantics=("parallel",)),
    )(xp, w1r, b1r, w2r, b2r, w3r, b3r)
    return out[:, 0, :]


# ----------------------------- model setup / forward -----------------------

def init_params(key):
    """Deterministic synthetic VGG-like weights: conv(4->8), conv(8->8), conv(8->16)."""
    dims = [(IN_C, HID_C), (HID_C, HID_C), (HID_C, OUT_C)]
    params = []
    for i, (cin, cout) in enumerate(dims):
        kw, kb = jax.random.split(jax.random.fold_in(key, i))
        w = 0.1 * jax.random.normal(kw, (3, 3, cin, cout), jnp.float32)   # HWIO
        b = 0.1 * jax.random.normal(kb, (cout,), jnp.float32)
        params.append((w, b))
    return params


@jax.jit
def encoder_fused_forward(x_nchw, params):
    # layout: input arrives NCHW (PyTorch convention) -> transpose to NHWC for the kernel.
    x = jnp.transpose(x_nchw.astype(jnp.float32), (0, 2, 3, 1))
    return encoder_fused(x, params)                                       # (N, OUT_C)


def _reference_forward(x_nchw, params):
    """Pure-JAX reference for validation."""
    x = jnp.transpose(x_nchw.astype(jnp.float32), (0, 2, 3, 1))

    def conv(x, w, b):
        y = lax.conv_general_dilated(x, w, (1, 1), 'SAME',
                                     dimension_numbers=('NHWC', 'HWIO', 'NHWC'))
        return jax.nn.relu(y + b)

    def pool(x):
        return lax.reduce_window(x, -jnp.inf, lax.max, (1, 2, 2, 1), (1, 2, 2, 1), 'VALID')

    (w1, b1), (w2, b2), (w3, b3) = params
    x = conv(x, w1, b1)
    x = conv(x, w2, b2)
    x = pool(x)
    x = conv(x, w3, b3)
    x = pool(x)
    return jnp.mean(x, axis=(1, 2))


if __name__ == "__main__":
    key = jax.random.PRNGKey(0)
    params = init_params(jax.random.fold_in(key, 123))
    x = jax.random.normal(jax.random.fold_in(key, 7), (2, IN_C, H, W), jnp.float32)

    out = jax.block_until_ready(encoder_fused_forward(x, params))
    ref = jax.block_until_ready(_reference_forward(x, params))

    assert out.shape == (2, OUT_C), out.shape
    if not bool(jnp.allclose(out, ref, rtol=1e-2, atol=1e-2)):
        raise AssertionError(
            f"mismatch vs reference, max|diff|={float(jnp.max(jnp.abs(out - ref)))}")
    print("KERNEL_OK")
</pallas_src>

<mosaic_0001>
module attributes {stable_mosaic.version = 11 : i64} {
  func.func @_encoder_fused_kernel(%arg0: i32, %arg1: memref<1x18x18x4xf32, #tpu.memory_space<vmem>>, %arg2: memref<9x4x8xf32, #tpu.memory_space<vmem>>, %arg3: memref<1x8xf32, #tpu.memory_space<vmem>>, %arg4: memref<9x8x8xf32, #tpu.memory_space<vmem>>, %arg5: memref<1x8xf32, #tpu.memory_space<vmem>>, %arg6: memref<9x8x16xf32, #tpu.memory_space<vmem>>, %arg7: memref<1x16xf32, #tpu.memory_space<vmem>>, %arg8: memref<1x1x16xf32, #tpu.memory_space<vmem>>, %arg9: memref<18x18x8xf32, #tpu.memory_space<vmem>>, %arg10: memref<16x16x8xf32, #tpu.memory_space<vmem>>, %arg11: memref<8x16x8xf32, #tpu.memory_space<vmem>>, %arg12: memref<10x10x8xf32, #tpu.memory_space<vmem>>, %arg13: memref<8x8x16xf32, #tpu.memory_space<vmem>>, %arg14: memref<4x8x16xf32, #tpu.memory_space<vmem>>) attributes {dimension_semantics = [#tpu.dimension_semantics<parallel>], iteration_bounds = array<i64: 2>, scalar_prefetch = 0 : i64, scratch_operands = 6 : i64, tpu.core_type = #tpu.core_type<tc>, window_params = [{transform_indices = @transform_0, window_bounds = array<i64: 1, 18, 18, 4>}, {pipeline_mode = #tpu.pipeline_mode<synchronous>, transform_indices = @transform_1, window_bounds = array<i64: 9, 4, 8>}, {pipeline_mode = #tpu.pipeline_mode<synchronous>, transform_indices = @transform_2, window_bounds = array<i64: 1, 8>}, {pipeline_mode = #tpu.pipeline_mode<synchronous>, transform_indices = @transform_3, window_bounds = array<i64: 9, 8, 8>}, {pipeline_mode = #tpu.pipeline_mode<synchronous>, transform_indices = @transform_4, window_bounds = array<i64: 1, 8>}, {pipeline_mode = #tpu.pipeline_mode<synchronous>, transform_indices = @transform_5, window_bounds = array<i64: 9, 8, 16>}, {pipeline_mode = #tpu.pipeline_mode<synchronous>, transform_indices = @transform_6, window_bounds = array<i64: 1, 16>}, {transform_indices = @transform_7, window_bounds = array<i64: 1, 1, 16>}]} {
    %cst = arith.constant 0.000000e+00 : f32
    %0 = vector.broadcast %cst : f32 to vector<256x8xf32>
    %c0 = arith.constant 0 : index
    %c0_0 = arith.constant 0 : index
    %c0_1 = arith.constant 0 : index
    %c0_2 = arith.constant 0 : index
    %1 = vector.load %arg1[%c0, %c0_0, %c0_1, %c0_2] : memref<1x18x18x4xf32, #tpu.memory_space<vmem>>, vector<1x16x16x4xf32>
    %2 = vector.shape_cast %1 : vector<1x16x16x4xf32> to vector<16x16x4xf32>
    %3 = vector.shape_cast %2 : vector<16x16x4xf32> to vector<256x4xf32>
    %c0_3 = arith.constant 0 : index
    %c0_4 = arith.constant 0 : index
    %c0_5 = arith.constant 0 : index
    %4 = vector.load %arg2[%c0_3, %c0_4, %c0_5] : memref<9x4x8xf32, #tpu.memory_space<vmem>>, vector<1x4x8xf32>
    %5 = vector.shape_cast %4 : vector<1x4x8xf32> to vector<4x8xf32>
    %cst_6 = arith.constant dense<0.000000e+00> : vector<256x8xf32>
    %6 = tpu.matmul %3, %5, %cst_6 {dimension_numbers = #tpu.dot_dimension_numbers<[1], [0], [0], [1], [0, 0, 1, 1], [], []>} : vector<256x4xf32>, vector<4x8xf32>, vector<256x8xf32> -> vector<256x8xf32>
    %7 = arith.addf %0, %6 : vector<256x8xf32>
    %c0_7 = arith.constant 0 : index
    %c0_8 = arith.constant 0 : index
    %c1 = arith.constant 1 : index
    %c0_9 = arith.constant 0 : index
    %8 = vector.load %arg1[%c0_7, %c0_8, %c1, %c0_9] : memref<1x18x18x4xf32, #tpu.memory_space<vmem>>, vector<1x16x16x4xf32>
    %9 = vector.shape_cast %8 : vector<1x16x16x4xf32> to vector<16x16x4xf32>
    %10 = vector.shape_cast %9 : vector<16x16x4xf32> to vector<256x4xf32>
    %c1_10 = arith.constant 1 : index
    %c0_11 = arith.constant 0 : index
    %c0_12 = arith.constant 0 : index
    %11 = vector.load %arg2[%c1_10, %c0_11, %c0_12] : memref<9x4x8xf32, #tpu.memory_space<vmem>>, vector<1x4x8xf32>
    %12 = vector.shape_cast %11 : vector<1x4x8xf32> to vector<4x8xf32>
    %cst_13 = arith.constant dense<0.000000e+00> : vector<256x8xf32>
    %13 = tpu.matmul %10, %12, %cst_13 {dimension_numbers = #tpu.dot_dimension_numbers<[1], [0], [0], [1], [0, 0, 1, 1], [], []>} : vector<256x4xf32>, vector<4x8xf32>, vector<256x8xf32> -> vector<256x8xf32>
    %14 = arith.addf %7, %13 : vector<256x8xf32>
    %c0_14 = arith.constant 0 : index
    %c0_15 = arith.constant 0 : index
    %c2 = arith.constant 2 : index
    %c0_16 = arith.constant 0 : index
    %15 = vector.load %arg1[%c0_14, %c0_15, %c2, %c0_16] : memref<1x18x18x4xf32, #tpu.memory_space<vmem>>, vector<1x16x16x4xf32>
    %16 = vector.shape_cast %15 : vector<1x16x16x4xf32> to vector<16x16x4xf32>
    %17 = vector.shape_cast %16 : vector<16x16x4xf32> to vector<256x4xf32>
    %c2_17 = arith.constant 2 : index
    %c0_18 = arith.constant 0 : index
    %c0_19 = arith.constant 0 : index
    %18 = vector.load %arg2[%c2_17, %c0_18, %c0_19] : memref<9x4x8xf32, #tpu.memory_space<vmem>>, vector<1x4x8xf32>
    %19 = vector.shape_cast %18 : vector<1x4x8xf32> to vector<4x8xf32>
    %cst_20 = arith.constant dense<0.000000e+00> : vector<256x8xf32>
    %20 = tpu.matmul %17, %19, %cst_20 {dimension_numbers = #tpu.dot_dimension_numbers<[1], [0], [0], [1], [0, 0, 1, 1], [], []>} : vector<256x4xf32>, vector<4x8xf32>, vector<256x8xf32> -> vector<256x8xf32>
    %21 = arith.addf %14, %20 : vector<256x8xf32>
    %c0_21 = arith.constant 0 : index
    %c1_22 = arith.constant 1 : index
    %c0_23 = arith.constant 0 : index
    %c0_24 = arith.constant 0 : index
    %22 = vector.load %arg1[%c0_21, %c1_22, %c0_23, %c0_24] : memref<1x18x18x4xf32, #tpu.memory_space<vmem>>, vector<1x16x16x4xf32>
    %23 = vector.shape_cast %22 : vector<1x16x16x4xf32> to vector<16x16x4xf32>
    %24 = vector.shape_cast %23 : vector<16x16x4xf32> to vector<256x4xf32>
    %c3 = arith.constant 3 : index
    %c0_25 = arith.constant 0 : index
    %c0_26 = arith.constant 0 : index
    %25 = vector.load %arg2[%c3, %c0_25, %c0_26] : memref<9x4x8xf32, #tpu.memory_space<vmem>>, vector<1x4x8xf32>
    %26 = vector.shape_cast %25 : vector<1x4x8xf32> to vector<4x8xf32>
    %cst_27 = arith.constant dense<0.000000e+00> : vector<256x8xf32>
    %27 = tpu.matmul %24, %26, %cst_27 {dimension_numbers = #tpu.dot_dimension_numbers<[1], [0], [0], [1], [0, 0, 1, 1], [], []>} : vector<256x4xf32>, vector<4x8xf32>, vector<256x8xf32> -> vector<256x8xf32>
    %28 = arith.addf %21, %27 : vector<256x8xf32>
    %c0_28 = arith.constant 0 : index
    %c1_29 = arith.constant 1 : index
    %c1_30 = arith.constant 1 : index
    %c0_31 = arith.constant 0 : index
    %29 = vector.load %arg1[%c0_28, %c1_29, %c1_30, %c0_31] : memref<1x18x18x4xf32, #tpu.memory_space<vmem>>, vector<1x16x16x4xf32>
    %30 = vector.shape_cast %29 : vector<1x16x16x4xf32> to vector<16x16x4xf32>
    %31 = vector.shape_cast %30 : vector<16x16x4xf32> to vector<256x4xf32>
    %c4 = arith.constant 4 : index
    %c0_32 = arith.constant 0 : index
    %c0_33 = arith.constant 0 : index
    %32 = vector.load %arg2[%c4, %c0_32, %c0_33] : memref<9x4x8xf32, #tpu.memory_space<vmem>>, vector<1x4x8xf32>
    %33 = vector.shape_cast %32 : vector<1x4x8xf32> to vector<4x8xf32>
    %cst_34 = arith.constant dense<0.000000e+00> : vector<256x8xf32>
    %34 = tpu.matmul %31, %33, %cst_34 {dimension_numbers = #tpu.dot_dimension_numbers<[1], [0], [0], [1], [0, 0, 1, 1], [], []>} : vector<256x4xf32>, vector<4x8xf32>, vector<256x8xf32> -> vector<256x8xf32>
    %35 = arith.addf %28, %34 : vector<256x8xf32>
    %c0_35 = arith.constant 0 : index
    %c1_36 = arith.constant 1 : index
    %c2_37 = arith.constant 2 : index
    %c0_38 = arith.constant 0 : index
    %36 = vector.load %arg1[%c0_35, %c1_36, %c2_37, %c0_38] : memref<1x18x18x4xf32, #tpu.memory_space<vmem>>, vector<1x16x16x4xf32>
    %37 = vector.shape_cast %36 : vector<1x16x16x4xf32> to vector<16x16x4xf32>
    %38 = vector.shape_cast %37 : vector<16x16x4xf32> to vector<256x4xf32>
    %c5 = arith.constant 5 : index
    %c0_39 = arith.constant 0 : index
    %c0_40 = arith.constant 0 : index
    %39 = vector.load %arg2[%c5, %c0_39, %c0_40] : memref<9x4x8xf32, #tpu.memory_space<vmem>>, vector<1x4x8xf32>
    %40 = vector.shape_cast %39 : vector<1x4x8xf32> to vector<4x8xf32>
    %cst_41 = arith.constant dense<0.000000e+00> : vector<256x8xf32>
    %41 = tpu.matmul %38, %40, %cst_41 {dimension_numbers = #tpu.dot_dimension_numbers<[1], [0], [0], [1], [0, 0, 1, 1], [], []>} : vector<256x4xf32>, vector<4x8xf32>, vector<256x8xf32> -> vector<256x8xf32>
    %42 = arith.addf %35, %41 : vector<256x8xf32>
    %c0_42 = arith.constant 0 : index
    %c2_43 = arith.constant 2 : index
    %c0_44 = arith.constant 0 : index
    %c0_45 = arith.constant 0 : index
    %43 = vector.load %arg1[%c0_42, %c2_43, %c0_44, %c0_45] : memref<1x18x18x4xf32, #tpu.memory_space<vmem>>, vector<1x16x16x4xf32>
    %44 = vector.shape_cast %43 : vector<1x16x16x4xf32> to vector<16x16x4xf32>
    %45 = vector.shape_cast %44 : vector<16x16x4xf32> to vector<256x4xf32>
    %c6 = arith.constant 6 : index
    %c0_46 = arith.constant 0 : index
    %c0_47 = arith.constant 0 : index
    %46 = vector.load %arg2[%c6, %c0_46, %c0_47] : memref<9x4x8xf32, #tpu.memory_space<vmem>>, vector<1x4x8xf32>
    %47 = vector.shape_cast %46 : vector<1x4x8xf32> to vector<4x8xf32>
    %cst_48 = arith.constant dense<0.000000e+00> : vector<256x8xf32>
    %48 = tpu.matmul %45, %47, %cst_48 {dimension_numbers = #tpu.dot_dimension_numbers<[1], [0], [0], [1], [0, 0, 1, 1], [], []>} : vector<256x4xf32>, vector<4x8xf32>, vector<256x8xf32> -> vector<256x8xf32>
    %49 = arith.addf %42, %48 : vector<256x8xf32>
    %c0_49 = arith.constant 0 : index
    %c2_50 = arith.constant 2 : index
    %c1_51 = arith.constant 1 : index
    %c0_52 = arith.constant 0 : index
    %50 = vector.load %arg1[%c0_49, %c2_50, %c1_51, %c0_52] : memref<1x18x18x4xf32, #tpu.memory_space<vmem>>, vector<1x16x16x4xf32>
    %51 = vector.shape_cast %50 : vector<1x16x16x4xf32> to vector<16x16x4xf32>
    %52 = vector.shape_cast %51 : vector<16x16x4xf32> to vector<256x4xf32>
    %c7 = arith.constant 7 : index
    %c0_53 = arith.constant 0 : index
    %c0_54 = arith.constant 0 : index
    %53 = vector.load %arg2[%c7, %c0_53, %c0_54] : memref<9x4x8xf32, #tpu.memory_space<vmem>>, vector<1x4x8xf32>
    %54 = vector.shape_cast %53 : vector<1x4x8xf32> to vector<4x8xf32>
    %cst_55 = arith.constant dense<0.000000e+00> : vector<256x8xf32>
    %55 = tpu.matmul %52, %54, %cst_55 {dimension_numbers = #tpu.dot_dimension_numbers<[1], [0], [0], [1], [0, 0, 1, 1], [], []>} : vector<256x4xf32>, vector<4x8xf32>, vector<256x8xf32> -> vector<256x8xf32>
    %56 = arith.addf %49, %55 : vector<256x8xf32>
    %c0_56 = arith.constant 0 : index
    %c2_57 = arith.constant 2 : index
    %c2_58 = arith.constant 2 : index
    %c0_59 = arith.constant 0 : index
    %57 = vector.load %arg1[%c0_56, %c2_57, %c2_58, %c0_59] : memref<1x18x18x4xf32, #tpu.memory_space<vmem>>, vector<1x16x16x4xf32>
    %58 = vector.shape_cast %57 : vector<1x16x16x4xf32> to vector<16x16x4xf32>
    %59 = vector.shape_cast %58 : vector<16x16x4xf32> to vector<256x4xf32>
    %c8 = arith.constant 8 : index
    %c0_60 = arith.constant 0 : index
    %c0_61 = arith.constant 0 : index
    %60 = vector.load %arg2[%c8, %c0_60, %c0_61] : memref<9x4x8xf32, #tpu.memory_space<vmem>>, vector<1x4x8xf32>
    %61 = vector.shape_cast %60 : vector<1x4x8xf32> to vector<4x8xf32>
    %cst_62 = arith.constant dense<0.000000e+00> : vector<256x8xf32>
    %62 = tpu.matmul %59, %61, %cst_62 {dimension_numbers = #tpu.dot_dimension_numbers<[1], [0], [0], [1], [0, 0, 1, 1], [], []>} : vector<256x4xf32>, vector<4x8xf32>, vector<256x8xf32> -> vector<256x8xf32>
    %63 = arith.addf %56, %62 : vector<256x8xf32>
    %c0_63 = arith.constant 0 : index
    %c0_64 = arith.constant 0 : index
    %64 = vector.load %arg3[%c0_63, %c0_64] : memref<1x8xf32, #tpu.memory_space<vmem>>, vector<1x8xf32>
    %65 = vector.broadcast %64 : vector<1x8xf32> to vector<256x8xf32>
    %66 = arith.addf %63, %65 : vector<256x8xf32>
    %cst_65 = arith.constant 0.000000e+00 : f32
    %67 = vector.broadcast %cst_65 : f32 to vector<256x8xf32>
    %68 = arith.maximumf %66, %67 : vector<256x8xf32>
    %cst_66 = arith.constant 0.000000e+00 : f32
    %69 = vector.broadcast %cst_66 : f32 to vector<18x18x8xf32>
    %c0_67 = arith.constant 0 : index
    %c0_68 = arith.constant 0 : index
    %c0_69 = arith.constant 0 : index
    %70 = vector.load %arg9[%c0_67, %c0_68, %c0_69] : memref<18x18x8xf32, #tpu.memory_space<vmem>>, vector<18x18x8xf32>
    tpu.vector_store %arg9[%c0_67, %c0_68, %c0_69], %69 {strides = array<i32>} : memref<18x18x8xf32, #tpu.memory_space<vmem>>, vector<18x18x8xf32>,
    %71 = vector.shape_cast %68 : vector<256x8xf32> to vector<16x16x8xf32>
    %c1_70 = arith.constant 1 : index
    %c1_71 = arith.constant 1 : index
    %c0_72 = arith.constant 0 : index
    %72 = vector.load %arg9[%c1_70, %c1_71, %c0_72] : memref<18x18x8xf32, #tpu.memory_space<vmem>>, vector<16x16x8xf32>
    tpu.vector_store %arg9[%c1_70, %c1_71, %c0_72], %71 {strides = array<i32>} : memref<18x18x8xf32, #tpu.memory_space<vmem>>, vector<16x16x8xf32>,
    %cst_73 = arith.constant 0.000000e+00 : f32
    %73 = vector.broadcast %cst_73 : f32 to vector<256x8xf32>
    %c0_74 = arith.constant 0 : index
    %c0_75 = arith.constant 0 : index
    %c0_76 = arith.constant 0 : index
    %74 = vector.load %arg9[%c0_74, %c0_75, %c0_76] : memref<18x18x8xf32, #tpu.memory_space<vmem>>, vector<16x16x8xf32>
    %75 = vector.shape_cast %74 : vector<16x16x8xf32> to vector<256x8xf32>
    %c0_77 = arith.constant 0 : index
    %c0_78 = arith.constant 0 : index
    %c0_79 = arith.constant 0 : index
    %76 = vector.load %arg4[%c0_77, %c0_78, %c0_79] : memref<9x8x8xf32, #tpu.memory_space<vmem>>, vector<1x8x8xf32>
    %77 = vector.shape_cast %76 : vector<1x8x8xf32> to vector<8x8xf32>
    %cst_80 = arith.constant dense<0.000000e+00> : vector<256x8xf32>
    %78 = tpu.matmul %75, %77, %cst_80 {dimension_numbers = #tpu.dot_dimension_numbers<[1], [0], [0], [1], [0, 0, 1, 1], [], []>} : vector<256x8xf32>, vector<8x8xf32>, vector<256x8xf32> -> vector<256x8xf32>
    %79 = arith.addf %73, %78 : vector<256x8xf32>
    %c0_81 = arith.constant 0 : index
    %c1_82 = arith.constant 1 : index
    %c0_83 = arith.constant 0 : index
    %80 = vector.load %arg9[%c0_81, %c1_82, %c0_83] : memref<18x18x8xf32, #tpu.memory_space<vmem>>, vector<16x16x8xf32>
    %81 = vector.shape_cast %80 : vector<16x16x8xf32> to vector<256x8xf32>
    %c1_84 = arith.constant 1 : index
    %c0_85 = arith.constant 0 : index
    %c0_86 = arith.constant 0 : index
    %82 = vector.load %arg4[%c1_84, %c0_85, %c0_86] : memref<9x8x8xf32, #tpu.memory_space<vmem>>, vector<1x8x8xf32>
    %83 = vector.shape_cast %82 : vector<1x8x8xf32> to vector<8x8xf32>
    %cst_87 = arith.constant dense<0.000000e+00> : vector<256x8xf32>
    %84 = tpu.matmul %81, %83, %cst_87 {dimension_numbers = #tpu.dot_dimension_numbers<[1], [0], [0], [1], [0, 0, 1, 1], [], []>} : vector<256x8xf32>, vector<8x8xf32>, vector<256x8xf32> -> vector<256x8xf32>
    %85 = arith.addf %79, %84 : vector<256x8xf32>
    %c0_88 = arith.constant 0 : index
    %c2_89 = arith.constant 2 : index
    %c0_90 = arith.constant 0 : index
    %86 = vector.load %arg9[%c0_88, %c2_89, %c0_90] : memref<18x18x8xf32, #tpu.memory_space<vmem>>, vector<16x16x8xf32>
    %87 = vector.shape_cast %86 : vector<16x16x8xf32> to vector<256x8xf32>
    %c2_91 = arith.constant 2 : index
    %c0_92 = arith.constant 0 : index
    %c0_93 = arith.constant 0 : index
    %88 = vector.load %arg4[%c2_91, %c0_92, %c0_93] : memref<9x8x8xf32, #tpu.memory_space<vmem>>, vector<1x8x8xf32>
    %89 = vector.shape_cast %88 : vector<1x8x8xf32> to vector<8x8xf32>
    %cst_94 = arith.constant dense<0.000000e+00> : vector<256x8xf32>
    %90 = tpu.matmul %87, %89, %cst_94 {dimension_numbers = #tpu.dot_dimension_numbers<[1], [0], [0], [1], [0, 0, 1, 1], [], []>} : vector<256x8xf32>, vector<8x8xf32>, vector<256x8xf32> -> vector<256x8xf32>
    %91 = arith.addf %85, %90 : vector<256x8xf32>
    %c1_95 = arith.constant 1 : index
    %c0_96 = arith.constant 0 : index
    %c0_97 = arith.constant 0 : index
    %92 = vector.load %arg9[%c1_95, %c0_96, %c0_97] : memref<18x18x8xf32, #tpu.memory_space<vmem>>, vector<16x16x8xf32>
    %93 = vector.shape_cast %92 : vector<16x16x8xf32> to vector<256x8xf32>
    %c3_98 = arith.constant 3 : index
    %c0_99 = arith.constant 0 : index
    %c0_100 = arith.constant 0 : index
    %94 = vector.load %arg4[%c3_98, %c0_99, %c0_100] : memref<9x8x8xf32, #tpu.memory_space<vmem>>, vector<1x8x8xf32>
    %95 = vector.shape_cast %94 : vector<1x8x8xf32> to vector<8x8xf32>
    %cst_101 = arith.constant dense<0.000000e+00> : vector<256x8xf32>
    %96 = tpu.matmul %93, %95, %cst_101 {dimension_numbers = #tpu.dot_dimension_numbers<[1], [0], [0], [1], [0, 0, 1, 1], [], []>} : vector<256x8xf32>, vector<8x8xf32>, vector<256x8xf32> -> vector<256x8xf32>
    %97 = arith.addf %91, %96 : vector<256x8xf32>
    %c1_102 = arith.constant 1 : index
    %c1_103 = arith.constant 1 : index
    %c0_104 = arith.constant 0 : index
    %98 = vector.load %arg9[%c1_102, %c1_103, %c0_104] : memref<18x18x8xf32, #tpu.memory_space<vmem>>, vector<16x16x8xf32>
    %99 = vector.shape_cast %98 : vector<16x16x8xf32> to vector<256x8xf32>
    %c4_105 = arith.constant 4 : index
    %c0_106 = arith.constant 0 : index
    %c0_107 = arith.constant 0 : index
    %100 = vector.load %arg4[%c4_105, %c0_106, %c0_107] : memref<9x8x8xf32, #tpu.memory_space<vmem>>, vector<1x8x8xf32>
    %101 = vector.shape_cast %100 : vector<1x8x8xf32> to vector<8x8xf32>
    %cst_108 = arith.constant dense<0.000000e+00> : vector<256x8xf32>
    %102 = tpu.matmul %99, %101, %cst_108 {dimension_numbers = #tpu.dot_dimension_numbers<[1], [0], [0], [1], [0, 0, 1, 1], [], []>} : vector<256x8xf32>, vector<8x8xf32>, vector<256x8xf32> -> vector<256x8xf32>
    %103 = arith.addf %97, %102 : vector<256x8xf32>
    %c1_109 = arith.constant 1 : index
    %c2_110 = arith.constant 2 : index
    %c0_111 = arith.constant 0 : index
    %104 = vector.load %arg9[%c1_109, %c2_110, %c0_111] : memref<18x18x8xf32, #tpu.memory_space<vmem>>, vector<16x16x8xf32>
    %105 = vector.shape_cast %104 : vector<16x16x8xf32> to vector<256x8xf32>
    %c5_112 = arith.constant 5 : index
    %c0_113 = arith.constant 0 : index
    %c0_114 = arith.constant 0 : index
    %106 = vector.load %arg4[%c5_112, %c0_113, %c0_114] : memref<9x8x8xf32, #tpu.memory_space<vmem>>, vector<1x8x8xf32>
    %107 = vector.shape_cast %106 : vector<1x8x8xf32> to vector<8x8xf32>
    %cst_115 = arith.constant dense<0.000000e+00> : vector<256x8xf32>
    %108 = tpu.matmul %105, %107, %cst_115 {dimension_numbers = #tpu.dot_dimension_numbers<[1], [0], [0], [1], [0, 0, 1, 1], [], []>} : vector<256x8xf32>, vector<8x8xf32>, vector<256x8xf32> -> vector<256x8xf32>
    %109 = arith.addf %103, %108 : vector<256x8xf32>
    %c2_116 = arith.constant 2 : index
    %c0_117 = arith.constant 0 : index
    %c0_118 = arith.constant 0 : index
    %110 = vector.load %arg9[%c2_116, %c0_117, %c0_118] : memref<18x18x8xf32, #tpu.memory_space<vmem>>, vector<16x16x8xf32>
    %111 = vector.shape_cast %110 : vector<16x16x8xf32> to vector<256x8xf32>
    %c6_119 = arith.constant 6 : index
    %c0_120 = arith.constant 0 : index
    %c0_121 = arith.constant 0 : index
    %112 = vector.load %arg4[%c6_119, %c0_120, %c0_121] : memref<9x8x8xf32, #tpu.memory_space<vmem>>, vector<1x8x8xf32>
    %113 = vector.shape_cast %112 : vector<1x8x8xf32> to vector<8x8xf32>
    %cst_122 = arith.constant dense<0.000000e+00> : vector<256x8xf32>
    %114 = tpu.matmul %111, %113, %cst_122 {dimension_numbers = #tpu.dot_dimension_numbers<[1], [0], [0], [1], [0, 0, 1, 1], [], []>} : vector<256x8xf32>, vector<8x8xf32>, vector<256x8xf32> -> vector<256x8xf32>
    %115 = arith.addf %109, %114 : vector<256x8xf32>
    %c2_123 = arith.constant 2 : index
    %c1_124 = arith.constant 1 : index
    %c0_125 = arith.constant 0 : index
    %116 = vector.load %arg9[%c2_123, %c1_124, %c0_125] : memref<18x18x8xf32, #tpu.memory_space<vmem>>, vector<16x16x8xf32>
    %117 = vector.shape_cast %116 : vector<16x16x8xf32> to vector<256x8xf32>
    %c7_126 = arith.constant 7 : index
    %c0_127 = arith.constant 0 : index
    %c0_128 = arith.constant 0 : index
    %118 = vector.load %arg4[%c7_126, %c0_127, %c0_128] : memref<9x8x8xf32, #tpu.memory_space<vmem>>, vector<1x8x8xf32>
    %119 = vector.shape_cast %118 : vector<1x8x8xf32> to vector<8x8xf32>
    %cst_129 = arith.constant dense<0.000000e+00> : vector<256x8xf32>
    %120 = tpu.matmul %117, %119, %cst_129 {dimension_numbers = #tpu.dot_dimension_numbers<[1], [0], [0], [1], [0, 0, 1, 1], [], []>} : vector<256x8xf32>, vector<8x8xf32>, vector<256x8xf32> -> vector<256x8xf32>
    %121 = arith.addf %115, %120 : vector<256x8xf32>
    %c2_130 = arith.constant 2 : index
    %c2_131 = arith.constant 2 : index
    %c0_132 = arith.constant 0 : index
    %122 = vector.load %arg9[%c2_130, %c2_131, %c0_132] : memref<18x18x8xf32, #tpu.memory_space<vmem>>, vector<16x16x8xf32>
    %123 = vector.shape_cast %122 : vector<16x16x8xf32> to vector<256x8xf32>
    %c8_133 = arith.constant 8 : index
    %c0_134 = arith.constant 0 : index
    %c0_135 = arith.constant 0 : index
    %124 = vector.load %arg4[%c8_133, %c0_134, %c0_135] : memref<9x8x8xf32, #tpu.memory_space<vmem>>, vector<1x8x8xf32>
    %125 = vector.shape_cast %124 : vector<1x8x8xf32> to vector<8x8xf32>
    %cst_136 = arith.constant dense<0.000000e+00> : vector<256x8xf32>
    %126 = tpu.matmul %123, %125, %cst_136 {dimension_numbers = #tpu.dot_dimension_numbers<[1], [0], [0], [1], [0, 0, 1, 1], [], []>} : vector<256x8xf32>, vector<8x8xf32>, vector<256x8xf32> -> vector<256x8xf32>
    %127 = arith.addf %121, %126 : vector<256x8xf32>
    %c0_137 = arith.constant 0 : index
    %c0_138 = arith.constant 0 : index
    %128 = vector.load %arg5[%c0_137, %c0_138] : memref<1x8xf32, #tpu.memory_space<vmem>>, vector<1x8xf32>
    %129 = vector.broadcast %128 : vector<1x8xf32> to vector<256x8xf32>
    %130 = arith.addf %127, %129 : vector<256x8xf32>
    %cst_139 = arith.constant 0.000000e+00 : f32
    %131 = vector.broadcast %cst_139 : f32 to vector<256x8xf32>
    %132 = arith.maximumf %130, %131 : vector<256x8xf32>
    %133 = vector.shape_cast %132 : vector<256x8xf32> to vector<16x16x8xf32>
    %c0_140 = arith.constant 0 : index
    %c0_141 = arith.constant 0 : index
    %c0_142 = arith.constant 0 : index
    %134 = vector.load %arg10[%c0_140, %c0_141, %c0_142] : memref<16x16x8xf32, #tpu.memory_space<vmem>>, vector<16x16x8xf32>
    tpu.vector_store %arg10[%c0_140, %c0_141, %c0_142], %133 {strides = array<i32>} : memref<16x16x8xf32, #tpu.memory_space<vmem>>, vector<16x16x8xf32>,
    %c0_143 = arith.constant 0 : index
    %c0_144 = arith.constant 0 : index
    %c0_145 = arith.constant 0 : index
    %135 = tpu.strided_load %arg10[%c0_143, %c0_144, %c0_145] {strides = array<i32: 2, 1, 1>} : memref<16x16x8xf32, #tpu.memory_space<vmem>>, vector<8x16x8xf32>
    %c1_146 = arith.constant 1 : index
    %c0_147 = arith.constant 0 : index
    %c0_148 = arith.constant 0 : index
    %136 = tpu.strided_load %arg10[%c1_146, %c0_147, %c0_148] {strides = array<i32: 2, 1, 1>} : memref<16x16x8xf32, #tpu.memory_space<vmem>>, vector<8x16x8xf32>
    %137 = arith.maximumf %135, %136 : vector<8x16x8xf32>
    %c0_149 = arith.constant 0 : index
    %c0_150 = arith.constant 0 : index
    %c0_151 = arith.constant 0 : index
    %138 = vector.load %arg11[%c0_149, %c0_150, %c0_151] : memref<8x16x8xf32, #tpu.memory_space<vmem>>, vector<8x16x8xf32>
    tpu.vector_store %arg11[%c0_149, %c0_150, %c0_151], %137 {strides = array<i32>} : memref<8x16x8xf32, #tpu.memory_space<vmem>>, vector<8x16x8xf32>,
    %c0_152 = arith.constant 0 : index
    %c0_153 = arith.constant 0 : index
    %c0_154 = arith.constant 0 : index
    %139 = tpu.strided_load %arg11[%c0_152, %c0_153, %c0_154] {strides = array<i32: 1, 2, 1>} : memref<8x16x8xf32, #tpu.memory_space<vmem>>, vector<8x8x8xf32>
    %c0_155 = arith.constant 0 : index
    %c1_156 = arith.constant 1 : index
    %c0_157 = arith.constant 0 : index
    %140 = tpu.strided_load %arg11[%c0_155, %c1_156, %c0_157] {strides = array<i32: 1, 2, 1>} : memref<8x16x8xf32, #tpu.memory_space<vmem>>, vector<8x8x8xf32>
    %141 = arith.maximumf %139, %140 : vector<8x8x8xf32>
    %cst_158 = arith.constant 0.000000e+00 : f32
    %142 = vector.broadcast %cst_158 : f32 to vector<10x10x8xf32>
    %c0_159 = arith.constant 0 : index
    %c0_160 = arith.constant 0 : index
    %c0_161 = arith.constant 0 : index
    %143 = vector.load %arg12[%c0_159, %c0_160, %c0_161] : memref<10x10x8xf32, #tpu.memory_space<vmem>>, vector<10x10x8xf32>
    tpu.vector_store %arg12[%c0_159, %c0_160, %c0_161], %142 {strides = array<i32>} : memref<10x10x8xf32, #tpu.memory_space<vmem>>, vector<10x10x8xf32>,
    %c1_162 = arith.constant 1 : index
    %c1_163 = arith.constant 1 : index
    %c0_164 = arith.constant 0 : index
    %144 = vector.load %arg12[%c1_162, %c1_163, %c0_164] : memref<10x10x8xf32, #tpu.memory_space<vmem>>, vector<8x8x8xf32>
    tpu.vector_store %arg12[%c1_162, %c1_163, %c0_164], %141 {strides = array<i32>} : memref<10x10x8xf32, #tpu.memory_space<vmem>>, vector<8x8x8xf32>,
    %cst_165 = arith.constant 0.000000e+00 : f32
    %145 = vector.broadcast %cst_165 : f32 to vector<64x16xf32>
    %c0_166 = arith.constant 0 : index
    %c0_167 = arith.constant 0 : index
    %c0_168 = arith.constant 0 : index
    %146 = vector.load %arg12[%c0_166, %c0_167, %c0_168] : memref<10x10x8xf32, #tpu.memory_space<vmem>>, vector<8x8x8xf32>
    %147 = vector.shape_cast %146 : vector<8x8x8xf32> to vector<64x8xf32>
    %c0_169 = arith.constant 0 : index
    %c0_170 = arith.constant 0 : index
    %c0_171 = arith.constant 0 : index
    %148 = vector.load %arg6[%c0_169, %c0_170, %c0_171] : memref<9x8x16xf32, #tpu.memory_space<vmem>>, vector<1x8x16xf32>
    %149 = vector.shape_cast %148 : vector<1x8x16xf32> to vector<8x16xf32>
    %cst_172 = arith.constant dense<0.000000e+00> : vector<64x16xf32>
    %150 = tpu.matmul %147, %149, %cst_172 {dimension_numbers = #tpu.dot_dimension_numbers<[1], [0], [0], [1], [0, 0, 1, 1], [], []>} : vector<64x8xf32>, vector<8x16xf32>, vector<64x16xf32> -> vector<64x16xf32>
    %151 = arith.addf %145, %150 : vector<64x16xf32>
    %c0_173 = arith.constant 0 : index
    %c1_174 = arith.constant 1 : index
    %c0_175 = arith.constant 0 : index
    %152 = vector.load %arg12[%c0_173, %c1_174, %c0_175] : memref<10x10x8xf32, #tpu.memory_space<vmem>>, vector<8x8x8xf32>
    %153 = vector.shape_cast %152 : vector<8x8x8xf32> to vector<64x8xf32>
    %c1_176 = arith.constant 1 : index
    %c0_177 = arith.constant 0 : index
    %c0_178 = arith.constant 0 : index
    %154 = vector.load %arg6[%c1_176, %c0_177, %c0_178] : memref<9x8x16xf32, #tpu.memory_space<vmem>>, vector<1x8x16xf32>
    %155 = vector.shape_cast %154 : vector<1x8x16xf32> to vector<8x16xf32>
    %cst_179 = arith.constant dense<0.000000e+00> : vector<64x16xf32>
    %156 = tpu.matmul %153, %155, %cst_179 {dimension_numbers = #tpu.dot_dimension_numbers<[1], [0], [0], [1], [0, 0, 1, 1], [], []>} : vector<64x8xf32>, vector<8x16xf32>, vector<64x16xf32> -> vector<64x16xf32>
    %157 = arith.addf %151, %156 : vector<64x16xf32>
    %c0_180 = arith.constant 0 : index
    %c2_181 = arith.constant 2 : index
    %c0_182 = arith.constant 0 : index
    %158 = vector.load %arg12[%c0_180, %c2_181, %c0_182] : memref<10x10x8xf32, #tpu.memory_space<vmem>>, vector<8x8x8xf32>
    %159 = vector.shape_cast %158 : vector<8x8x8xf32> to vector<64x8xf32>
    %c2_183 = arith.constant 2 : index
    %c0_184 = arith.constant 0 : index
    %c0_185 = arith.constant 0 : index
    %160 = vector.load %arg6[%c2_183, %c0_184, %c0_185] : memref<9x8x16xf32, #tpu.memory_space<vmem>>, vector<1x8x16xf32>
    %161 = vector.shape_cast %160 : vector<1x8x16xf32> to vector<8x16xf32>
    %cst_186 = arith.constant dense<0.000000e+00> : vector<64x16xf32>
    %162 = tpu.matmul %159, %161, %cst_186 {dimension_numbers = #tpu.dot_dimension_numbers<[1], [0], [0], [1], [0, 0, 1, 1], [], []>} : vector<64x8xf32>, vector<8x16xf32>, vector<64x16xf32> -> vector<64x16xf32>
    %163 = arith.addf %157, %162 : vector<64x16xf32>
    %c1_187 = arith.constant 1 : index
    %c0_188 = arith.constant 0 : index
    %c0_189 = arith.constant 0 : index
    %164 = vector.load %arg12[%c1_187, %c0_188, %c0_189] : memref<10x10x8xf32, #tpu.memory_space<vmem>>, vector<8x8x8xf32>
    %165 = vector.shape_cast %164 : vector<8x8x8xf32> to vector<64x8xf32>
    %c3_190 = arith.constant 3 : index
    %c0_191 = arith.constant 0 : index
    %c0_192 = arith.constant 0 : index
    %166 = vector.load %arg6[%c3_190, %c0_191, %c0_192] : memref<9x8x16xf32, #tpu.memory_space<vmem>>, vector<1x8x16xf32>
    %167 = vector.shape_cast %166 : vector<1x8x16xf32> to vector<8x16xf32>
    %cst_193 = arith.constant dense<0.000000e+00> : vector<64x16xf32>
    %168 = tpu.matmul %165, %167, %cst_193 {dimension_numbers = #tpu.dot_dimension_numbers<[1], [0], [0], [1], [0, 0, 1, 1], [], []>} : vector<64x8xf32>, vector<8x16xf32>, vector<64x16xf32> -> vector<64x16xf32>
    %169 = arith.addf %163, %168 : vector<64x16xf32>
    %c1_194 = arith.constant 1 : index
    %c1_195 = arith.constant 1 : index
    %c0_196 = arith.constant 0 : index
    %170 = vector.load %arg12[%c1_194, %c1_195, %c0_196] : memref<10x10x8xf32, #tpu.memory_space<vmem>>, vector<8x8x8xf32>
    %171 = vector.shape_cast %170 : vector<8x8x8xf32> to vector<64x8xf32>
    %c4_197 = arith.constant 4 : index
    %c0_198 = arith.constant 0 : index
    %c0_199 = arith.constant 0 : index
    %172 = vector.load %arg6[%c4_197, %c0_198, %c0_199] : memref<9x8x16xf32, #tpu.memory_space<vmem>>, vector<1x8x16xf32>
    %173 = vector.shape_cast %172 : vector<1x8x16xf32> to vector<8x16xf32>
    %cst_200 = arith.constant dense<0.000000e+00> : vector<64x16xf32>
    %174 = tpu.matmul %171, %173, %cst_200 {dimension_numbers = #tpu.dot_dimension_numbers<[1], [0], [0], [1], [0, 0, 1, 1], [], []>} : vector<64x8xf32>, vector<8x16xf32>, vector<64x16xf32> -> vector<64x16xf32>
    %175 = arith.addf %169, %174 : vector<64x16xf32>
    %c1_201 = arith.constant 1 : index
    %c2_202 = arith.constant 2 : index
    %c0_203 = arith.constant 0 : index
    %176 = vector.load %arg12[%c1_201, %c2_202, %c0_203] : memref<10x10x8xf32, #tpu.memory_space<vmem>>, vector<8x8x8xf32>
    %177 = vector.shape_cast %176 : vector<8x8x8xf32> to vector<64x8xf32>
    %c5_204 = arith.constant 5 : index
    %c0_205 = arith.constant 0 : index
    %c0_206 = arith.constant 0 : index
    %178 = vector.load %arg6[%c5_204, %c0_205, %c0_206] : memref<9x8x16xf32, #tpu.memory_space<vmem>>, vector<1x8x16xf32>
    %179 = vector.shape_cast %178 : vector<1x8x16xf32> to vector<8x16xf32>
    %cst_207 = arith.constant dense<0.000000e+00> : vector<64x16xf32>
    %180 = tpu.matmul %177, %179, %cst_207 {dimension_numbers = #tpu.dot_dimension_numbers<[1], [0], [0], [1], [0, 0, 1, 1], [], []>} : vector<64x8xf32>, vector<8x16xf32>, vector<64x16xf32> -> vector<64x16xf32>
    %181 = arith.addf %175, %180 : vector<64x16xf32>
    %c2_208 = arith.constant 2 : index
    %c0_209 = arith.constant 0 : index
    %c0_210 = arith.constant 0 : index
    %182 = vector.load %arg12[%c2_208, %c0_209, %c0_210] : memref<10x10x8xf32, #tpu.memory_space<vmem>>, vector<8x8x8xf32>
    %183 = vector.shape_cast %182 : vector<8x8x8xf32> to vector<64x8xf32>
    %c6_211 = arith.constant 6 : index
    %c0_212 = arith.constant 0 : index
    %c0_213 = arith.constant 0 : index
    %184 = vector.load %arg6[%c6_211, %c0_212, %c0_213] : memref<9x8x16xf32, #tpu.memory_space<vmem>>, vector<1x8x16xf32>
    %185 = vector.shape_cast %184 : vector<1x8x16xf32> to vector<8x16xf32>
    %cst_214 = arith.constant dense<0.000000e+00> : vector<64x16xf32>
    %186 = tpu.matmul %183, %185, %cst_214 {dimension_numbers = #tpu.dot_dimension_numbers<[1], [0], [0], [1], [0, 0, 1, 1], [], []>} : vector<64x8xf32>, vector<8x16xf32>, vector<64x16xf32> -> vector<64x16xf32>
    %187 = arith.addf %181, %186 : vector<64x16xf32>
    %c2_215 = arith.constant 2 : index
    %c1_216 = arith.constant 1 : index
    %c0_217 = arith.constant 0 : index
    %188 = vector.load %arg12[%c2_215, %c1_216, %c0_217] : memref<10x10x8xf32, #tpu.memory_space<vmem>>, vector<8x8x8xf32>
    %189 = vector.shape_cast %188 : vector<8x8x8xf32> to vector<64x8xf32>
    %c7_218 = arith.constant 7 : index
    %c0_219 = arith.constant 0 : index
    %c0_220 = arith.constant 0 : index
    %190 = vector.load %arg6[%c7_218, %c0_219, %c0_220] : memref<9x8x16xf32, #tpu.memory_space<vmem>>, vector<1x8x16xf32>
    %191 = vector.shape_cast %190 : vector<1x8x16xf32> to vector<8x16xf32>
    %cst_221 = arith.constant dense<0.000000e+00> : vector<64x16xf32>
    %192 = tpu.matmul %189, %191, %cst_221 {dimension_numbers = #tpu.dot_dimension_numbers<[1], [0], [0], [1], [0, 0, 1, 1], [], []>} : vector<64x8xf32>, vector<8x16xf32>, vector<64x16xf32> -> vector<64x16xf32>
    %193 = arith.addf %187, %192 : vector<64x16xf32>
    %c2_222 = arith.constant 2 : index
    %c2_223 = arith.constant 2 : index
    %c0_224 = arith.constant 0 : index
    %194 = vector.load %arg12[%c2_222, %c2_223, %c0_224] : memref<10x10x8xf32, #tpu.memory_space<vmem>>, vector<8x8x8xf32>
    %195 = vector.shape_cast %194 : vector<8x8x8xf32> to vector<64x8xf32>
    %c8_225 = arith.constant 8 : index
    %c0_226 = arith.constant 0 : index
    %c0_227 = arith.constant 0 : index
    %196 = vector.load %arg6[%c8_225, %c0_226, %c0_227] : memref<9x8x16xf32, #tpu.memory_space<vmem>>, vector<1x8x16xf32>
    %197 = vector.shape_cast %196 : vector<1x8x16xf32> to vector<8x16xf32>
    %cst_228 = arith.constant dense<0.000000e+00> : vector<64x16xf32>
    %198 = tpu.matmul %195, %197, %cst_228 {dimension_numbers = #tpu.dot_dimension_numbers<[1], [0], [0], [1], [0, 0, 1, 1], [], []>} : vector<64x8xf32>, vector<8x16xf32>, vector<64x16xf32> -> vector<64x16xf32>
    %199 = arith.addf %193, %198 : vector<64x16xf32>
    %c0_229 = arith.constant 0 : index
    %c0_230 = arith.constant 0 : index
    %200 = vector.load %arg7[%c0_229, %c0_230] : memref<1x16xf32, #tpu.memory_space<vmem>>, vector<1x16xf32>
    %201 = vector.broadcast %200 : vector<1x16xf32> to vector<64x16xf32>
    %202 = arith.addf %199, %201 : vector<64x16xf32>
    %cst_231 = arith.constant 0.000000e+00 : f32
    %203 = vector.broadcast %cst_231 : f32 to vector<64x16xf32>
    %204 = arith.maximumf %202, %203 : vector<64x16xf32>
    %205 = vector.shape_cast %204 : vector<64x16xf32> to vector<8x8x16xf32>
    %c0_232 = arith.constant 0 : index
    %c0_233 = arith.constant 0 : index
    %c0_234 = arith.constant 0 : index
    %206 = vector.load %arg13[%c0_232, %c0_233, %c0_234] : memref<8x8x16xf32, #tpu.memory_space<vmem>>, vector<8x8x16xf32>
    tpu.vector_store %arg13[%c0_232, %c0_233, %c0_234], %205 {strides = array<i32>} : memref<8x8x16xf32, #tpu.memory_space<vmem>>, vector<8x8x16xf32>,
    %c0_235 = arith.constant 0 : index
    %c0_236 = arith.constant 0 : index
    %c0_237 = arith.constant 0 : index
    %207 = tpu.strided_load %arg13[%c0_235, %c0_236, %c0_237] {strides = array<i32: 2, 1, 1>} : memref<8x8x16xf32, #tpu.memory_space<vmem>>, vector<4x8x16xf32>
    %c1_238 = arith.constant 1 : index
    %c0_239 = arith.constant 0 : index
    %c0_240 = arith.constant 0 : index
    %208 = tpu.strided_load %arg13[%c1_238, %c0_239, %c0_240] {strides = array<i32: 2, 1, 1>} : memref<8x8x16xf32, #tpu.memory_space<vmem>>, vector<4x8x16xf32>
    %209 = arith.maximumf %207, %208 : vector<4x8x16xf32>
    %c0_241 = arith.constant 0 : index
    %c0_242 = arith.constant 0 : index
    %c0_243 = arith.constant 0 : index
    %210 = vector.load %arg14[%c0_241, %c0_242, %c0_243] : memref<4x8x16xf32, #tpu.memory_space<vmem>>, vector<4x8x16xf32>
    tpu.vector_store %arg14[%c0_241, %c0_242, %c0_243], %209 {strides = array<i32>} : memref<4x8x16xf32, #tpu.memory_space<vmem>>, vector<4x8x16xf32>,
    %c0_244 = arith.constant 0 : index
    %c0_245 = arith.constant 0 : index
    %c0_246 = arith.constant 0 : index
    %211 = tpu.strided_load %arg14[%c0_244, %c0_245, %c0_246] {strides = array<i32: 1, 2, 1>} : memref<4x8x16xf32, #tpu.memory_space<vmem>>, vector<4x4x16xf32>
    %c0_247 = arith.constant 0 : index
    %c1_248 = arith.constant 1 : index
    %c0_249 = arith.constant 0 : index
    %212 = tpu.strided_load %arg14[%c0_247, %c1_248, %c0_249] {strides = array<i32: 1, 2, 1>} : memref<4x8x16xf32, #tpu.memory_space<vmem>>, vector<4x4x16xf32>
    %213 = arith.maximumf %211, %212 : vector<4x4x16xf32>
    %cst_250 = arith.constant dense<0.000000e+00> : vector<4x16xf32>
    %214 = vector.multi_reduction <add>, %213, %cst_250 [0] : vector<4x4x16xf32> to vector<4x16xf32>
    %cst_251 = arith.constant dense<0.000000e+00> : vector<16xf32>
    %215 = vector.multi_reduction <add>, %214, %cst_251 [0] : vector<4x16xf32> to vector<16xf32>
    %216 = vector.shape_cast %215 : vector<16xf32> to vector<1x16xf32>
    %cst_252 = arith.constant 6.250000e-02 : f32
    %217 = vector.broadcast %cst_252 : f32 to vector<1x16xf32>
    %218 = arith.mulf %216, %217 : vector<1x16xf32>
    %c0_253 = arith.constant 0 : index
    %c0_254 = arith.constant 0 : index
    %c0_255 = arith.constant 0 : index
    %219 = vector.load %arg8[%c0_253, %c0_254, %c0_255] : memref<1x1x16xf32, #tpu.memory_space<vmem>>, vector<1x1x16xf32>
    %220 = vector.shape_cast %219 : vector<1x1x16xf32> to vector<1x16xf32>
    %221 = vector.shape_cast %218 : vector<1x16xf32> to vector<1x1x16xf32>
    tpu.vector_store %arg8[%c0_253, %c0_254, %c0_255], %221 {strides = array<i32>} : memref<1x1x16xf32, #tpu.memory_space<vmem>>, vector<1x1x16xf32>,
    return
  }
  func.func @transform_0(%arg0: i32) -> (i32, i32, i32, i32) {
    %c0_i32 = arith.constant 0 : i32
    %c0_i32_0 = arith.constant 0 : i32
    %c0_i32_1 = arith.constant 0 : i32
    %c0_i32_2 = arith.constant 0 : i32
    return %arg0, %c0_i32, %c0_i32_0, %c0_i32_1 : i32, i32, i32, i32
  }
  func.func @transform_1(%arg0: i32) -> (i32, i32, i32) {
    %c0_i32 = arith.constant 0 : i32
    %c0_i32_0 = arith.constant 0 : i32
    %c0_i32_1 = arith.constant 0 : i32
    %c0_i32_2 = arith.constant 0 : i32
    return %c0_i32, %c0_i32_0, %c0_i32_1 : i32, i32, i32
  }
  func.func @transform_2(%arg0: i32) -> (i32, i32) {
    %c0_i32 = arith.constant 0 : i32
    %c0_i32_0 = arith.constant 0 : i32
    %c0_i32_1 = arith.constant 0 : i32
    return %c0_i32, %c0_i32_0 : i32, i32
  }
  func.func @transform_3(%arg0: i32) -> (i32, i32, i32) {
    %c0_i32 = arith.constant 0 : i32
    %c0_i32_0 = arith.constant 0 : i32
    %c0_i32_1 = arith.constant 0 : i32
    %c0_i32_2 = arith.constant 0 : i32
    return %c0_i32, %c0_i32_0, %c0_i32_1 : i32, i32, i32
  }
  func.func @transform_4(%arg0: i32) -> (i32, i32) {
    %c0_i32 = arith.constant 0 : i32
    %c0_i32_0 = arith.constant 0 : i32
    %c0_i32_1 = arith.constant 0 : i32
    return %c0_i32, %c0_i32_0 : i32, i32
  }
  func.func @transform_5(%arg0: i32) -> (i32, i32, i32) {
    %c0_i32 = arith.constant 0 : i32
    %c0_i32_0 = arith.constant 0 : i32
    %c0_i32_1 = arith.constant 0 : i32
    %c0_i32_2 = arith.constant 0 : i32
    return %c0_i32, %c0_i32_0, %c0_i32_1 : i32, i32, i32
  }
  func.func @transform_6(%arg0: i32) -> (i32, i32) {
    %c0_i32 = arith.constant 0 : i32
    %c0_i32_0 = arith.constant 0 : i32
    %c0_i32_1 = arith.constant 0 : i32
    return %c0_i32, %c0_i32_0 : i32, i32
  }
  func.func @transform_7(%arg0: i32) -> (i32, i32, i32) {
    %c0_i32 = arith.constant 0 : i32
    %c0_i32_0 = arith.constant 0 : i32
    %c0_i32_1 = arith.constant 0 : i32
    return %arg0, %c0_i32, %c0_i32_0 : i32, i32, i32
  }
}

</mosaic_0001>

<llo_original>
// kernel: encoder_fused_forward.1
$region0: #{encoder_fused_forward.1}
  #allocation0 [shape = 'u32[]', space=smem, size = 0x4, offset = 0x4, fixed_abs, tag = 'smem constant byte address 0x4 - core index']
  #allocation1 [shape = 'u32[144,128]{1,0:T(1,128)}', space=vmem, size = 0x12000, scoped, tag = 'internal scratch']
  #allocation2 [shape = 'f32[18,18,8]{2,1,0:T(8,128)}', space=vmem, size = 0x36000, scoped, tag = 'scratch operand']
  #allocation3 [shape = 'f32[16,16,8]{2,1,0:T(8,128)}', space=vmem, size = 0x20000, scoped, tag = 'scratch operand']
  #allocation4 [shape = 'f32[8,16,8]{2,1,0:T(8,128)}', space=vmem, size = 0x10000, scoped, tag = 'scratch operand']
  #allocation5 [shape = 'f32[10,10,8]{2,1,0:T(8,128)}', space=vmem, size = 0x14000, scoped, tag = 'scratch operand']
  #allocation6 [shape = 'f32[8,8,16]{2,1,0:T(8,128)}', space=vmem, size = 0x8000, scoped, tag = 'scratch operand']
  #allocation7 [shape = 'f32[4,8,16]{2,1,0:T(8,128)}', space=vmem, size = 0x4000, scoped, tag = 'scratch operand']
  %s0 = inlined_call_operand.vmem [shape: f32[2,18,18,4], index: 0, kind: input, shape index: {}]
  %s1 = inlined_call_operand.vmem [shape: f32[9,4,8], index: 1, kind: input, shape index: {}]
  %s2 = inlined_call_operand.vmem [shape: f32[1,8], index: 2, kind: input, shape index: {}]
  %s3 = inlined_call_operand.vmem [shape: f32[9,8,8], index: 3, kind: input, shape index: {}]
  %s4 = inlined_call_operand.vmem [shape: f32[1,8], index: 4, kind: input, shape index: {}]
  %s5 = inlined_call_operand.vmem [shape: f32[9,8,16], index: 5, kind: input, shape index: {}]
  %s6 = inlined_call_operand.vmem [shape: f32[1,16], index: 6, kind: input, shape index: {}]
  %s7 = inlined_call_operand.hbm [shape: f32[2,1,16], index: 7, kind: output, shape index: {}]
  %s8 = sld [smem:[#allocation0]]
  $region61: #{encoder_fused_forward.1} parent=0
    _
  %s10 = ssub.s32 1, %s8
  %s11 = scalar_select 0, %s10, %s8
  $region1: #{encoder_fused_forward.1} parent=0
    #allocation8 [shape = 'u8[1024]{0}', space=vmem, size = 0x400, scoped, tag = 'output window, operand 0']
    #allocation9 [shape = 's32[2]{0}', space=sflag, size = 0x8, scoped, tag = 'scoped memory for encoder_fused_forward.1']
    %12 = vsyncpa [#allocation9], 0
    %s13 = scalar_lea.sflag [#allocation9], 1
    %14 = vsyncpa %s13, 0
    loop: start=0, step=1, limit=4
    $region2: #{encoder_fused_forward.1} parent=1 // loop_pre_header
      _
    $region3: #{encoder_fused_forward.1} parent=1 // loop_header
      %s16 = sphi 0, %s20
      %p17 = scmp.ge.s32.totalorder %s16, 4
      %s26 = sphi 0, %s28
      %s29 = sphi 0, %s26
      %s30 = sphi 0, %s29
      %s46 = sphi 0, %s30
      %s50 = sphi 0, %s50
      %s52 = sphi 0, %s50
      %s53 = sphi 0, %s52
      %s67 = sphi 0, %s53
      %s71 = sphi 0, %s71
      %s73 = sphi 0, %s71
      %s74 = sphi 0, %s73
      %s88 = sphi 0, %s74
      %s92 = sphi 0, %s92
      %s94 = sphi 0, %s92
      %s95 = sphi 0, %s94
      %s109 = sphi 0, %s95
      %s113 = sphi 0, %s113
      %s115 = sphi 0, %s113
      %s116 = sphi 0, %s115
      %s130 = sphi 0, %s116
      %s134 = sphi 0, %s134
      %s136 = sphi 0, %s134
      %s137 = sphi 0, %s136
      %s151 = sphi 0, %s137
      %s155 = sphi 0, %s155
      %s157 = sphi 0, %s155
      %s158 = sphi 0, %s157
      %s172 = sphi 0, %s158
      %s178 = sphi 0, %s180
      %s181 = sphi 0, %s178
      %s182 = sphi 0, %s181
      %s198 = sphi 0, %s182
    $region4: #{encoder_fused_forward.1} parent=1 // loop_header_branch
      %19 = sbr.rel (%p17) target = $region8
    $region5: #{encoder_fused_forward.1} parent=1 // loop_body
      %s21 = ssub.s32 %s16, 1
      %s22 = ssub.s32 %s16, 2
      %s23 = sadd.s32 %s16, 1
      %s24 = ssub.s32 %s16, %s23
      %p25 = scmp.eq.s32.totalorder %s24, 0
      %s27 = sadd.s32 %s26, 1
      %s28 = scalar_select %p25, %s26, %s27
      %p31 = pneg %p25
      %p32 = scmp.eq.s32.totalorder %s16, 1
      %p33 = por %p31, %p32
      %p34 = scmp.ne.s32.totalorder %s26, %s29
      %p35 = scmp.eq.s32.totalorder %s16, 0
      %p36 = por %p34, %p35
      %p37 = scmp.ne.s32.totalorder %s26, %s29
      %p38 = scmp.eq.s32.totalorder %s21, 1
      %p39 = por %p37, %p38
      %p40 = scmp.ne.s32.totalorder %s29, %s30
      %p41 = scmp.eq.s32.totalorder %s21, 0
      %p42 = por %p40, %p41
      %p43 = scmp.ne.s32.totalorder %s29, %s30
      %p44 = scmp.eq.s32.totalorder %s22, 1
      %p45 = por %p43, %p44
      %p47 = scmp.ne.s32.totalorder %s30, %s46
      %p48 = scmp.eq.s32.totalorder %s22, 0
      %p49 = por %p47, %p48
      %s51 = sadd.s32 %s50, 1
      %p54 = scmp.eq.s32.totalorder %s16, 1
      %p55 = scmp.ne.s32.totalorder %s50, %s52
      %p56 = scmp.eq.s32.totalorder %s16, 0
      %p57 = por %p55, %p56
      %p58 = scmp.ne.s32.totalorder %s50, %s52
      %p59 = scmp.eq.s32.totalorder %s21, 1
      %p60 = por %p58, %p59
      %p61 = scmp.ne.s32.totalorder %s52, %s53
      %p62 = scmp.eq.s32.totalorder %s21, 0
      %p63 = por %p61, %p62
      %p64 = scmp.ne.s32.totalorder %s52, %s53
      %p65 = scmp.eq.s32.totalorder %s22, 1
      %p66 = por %p64, %p65
      %p68 = scmp.ne.s32.totalorder %s53, %s67
      %p69 = scmp.eq.s32.totalorder %s22, 0
      %p70 = por %p68, %p69
      %s72 = sadd.s32 %s71, 1
      %p75 = scmp.eq.s32.totalorder %s16, 1
      %p76 = scmp.ne.s32.totalorder %s71, %s73
      %p77 = scmp.eq.s32.totalorder %s16, 0
      %p78 = por %p76, %p77
      %p79 = scmp.ne.s32.totalorder %s71, %s73
      %p80 = scmp.eq.s32.totalorder %s21, 1
      %p81 = por %p79, %p80
      %p82 = scmp.ne.s32.totalorder %s73, %s74
      %p83 = scmp.eq.s32.totalorder %s21, 0
      %p84 = por %p82, %p83
      %p85 = scmp.ne.s32.totalorder %s73, %s74
      %p86 = scmp.eq.s32.totalorder %s22, 1
      %p87 = por %p85, %p86
      %p89 = scmp.ne.s32.totalorder %s74, %s88
      %p90 = scmp.eq.s32.totalorder %s22, 0
      %p91 = por %p89, %p90
      %s93 = sadd.s32 %s92, 1
      %p96 = scmp.eq.s32.totalorder %s16, 1
      %p97 = scmp.ne.s32.totalorder %s92, %s94
      %p98 = scmp.eq.s32.totalorder %s16, 0
      %p99 = por %p97, %p98
      %p100 = scmp.ne.s32.totalorder %s92, %s94
      %p101 = scmp.eq.s32.totalorder %s21, 1
      %p102 = por %p100, %p101
      %p103 = scmp.ne.s32.totalorder %s94, %s95
      %p104 = scmp.eq.s32.totalorder %s21, 0
      %p105 = por %p103, %p104
      %p106 = scmp.ne.s32.totalorder %s94, %s95
      %p107 = scmp.eq.s32.totalorder %s22, 1
      %p108 = por %p106, %p107
      %p110 = scmp.ne.s32.totalorder %s95, %s109
      %p111 = scmp.eq.s32.totalorder %s22, 0
      %p112 = por %p110, %p111
      %s114 = sadd.s32 %s113, 1
      %p117 = scmp.eq.s32.totalorder %s16, 1
      %p118 = scmp.ne.s32.totalorder %s113, %s115
      %p119 = scmp.eq.s32.totalorder %s16, 0
      %p120 = por %p118, %p119
      %p121 = scmp.ne.s32.totalorder %s113, %s115
      %p122 = scmp.eq.s32.totalorder %s21, 1
      %p123 = por %p121, %p122
      %p124 = scmp.ne.s32.totalorder %s115, %s116
      %p125 = scmp.eq.s32.totalorder %s21, 0
      %p126 = por %p124, %p125
      %p127 = scmp.ne.s32.totalorder %s115, %s116
      %p128 = scmp.eq.s32.totalorder %s22, 1
      %p129 = por %p127, %p128
      %p131 = scmp.ne.s32.totalorder %s116, %s130
      %p132 = scmp.eq.s32.totalorder %s22, 0
      %p133 = por %p131, %p132
      %s135 = sadd.s32 %s134, 1
      %p138 = scmp.eq.s32.totalorder %s16, 1
      %p139 = scmp.ne.s32.totalorder %s134, %s136
      %p140 = scmp.eq.s32.totalorder %s16, 0
      %p141 = por %p139, %p140
      %p142 = scmp.ne.s32.totalorder %s134, %s136
      %p143 = scmp.eq.s32.totalorder %s21, 1
      %p144 = por %p142, %p143
      %p145 = scmp.ne.s32.totalorder %s136, %s137
      %p146 = scmp.eq.s32.totalorder %s21, 0
      %p147 = por %p145, %p146
      %p148 = scmp.ne.s32.totalorder %s136, %s137
      %p149 = scmp.eq.s32.totalorder %s22, 1
      %p150 = por %p148, %p149
      %p152 = scmp.ne.s32.totalorder %s137, %s151
      %p153 = scmp.eq.s32.totalorder %s22, 0
      %p154 = por %p152, %p153
      %s156 = sadd.s32 %s155, 1
      %p159 = scmp.eq.s32.totalorder %s16, 1
      %p160 = scmp.ne.s32.totalorder %s155, %s157
      %p161 = scmp.eq.s32.totalorder %s16, 0
      %p162 = por %p160, %p161
      %p163 = scmp.ne.s32.totalorder %s155, %s157
      %p164 = scmp.eq.s32.totalorder %s21, 1
      %p165 = por %p163, %p164
      %p166 = scmp.ne.s32.totalorder %s157, %s158
      %p167 = scmp.eq.s32.totalorder %s21, 0
      %p168 = por %p166, %p167
      %p169 = scmp.ne.s32.totalorder %s157, %s158
      %p170 = scmp.eq.s32.totalorder %s22, 1
      %p171 = por %p169, %p170
      %p173 = scmp.ne.s32.totalorder %s158, %s172
      %p174 = scmp.eq.s32.totalorder %s22, 0
      %p175 = por %p173, %p174
      %s176 = ssub.s32 %s16, %s23
      %p177 = scmp.eq.s32.totalorder %s176, 0
      %s179 = sadd.s32 %s178, 1
      %s180 = scalar_select %p177, %s178, %s179
      %p183 = pneg %p177
      %p184 = scmp.eq.s32.totalorder %s16, 1
      %p185 = por %p183, %p184
      %p186 = scmp.ne.s32.totalorder %s178, %s181
      %p187 = scmp.eq.s32.totalorder %s16, 0
      %p188 = por %p186, %p187
      %p189 = scmp.ne.s32.totalorder %s178, %s181
      %p190 = scmp.eq.s32.totalorder %s21, 1
      %p191 = por %p189, %p190
      %p192 = scmp.ne.s32.totalorder %s181, %s182
      %p193 = scmp.eq.s32.totalorder %s21, 0
      %p194 = por %p192, %p193
      %p195 = scmp.ne.s32.totalorder %s181, %s182
      %p196 = scmp.eq.s32.totalorder %s22, 1
      %p197 = por %p195, %p196
      %p199 = scmp.ne.s32.totalorder %s182, %s198
      %p200 = scmp.eq.s32.totalorder %s22, 0
      %p201 = por %p199, %p200
      %p202 = scmp.le.s32.totalorder 1, %s16
      %p203 = scmp.lt.s32.totalorder %s16, 3
      %p204 = pnand %p202, %p203
      %p205 = pneg %p204
      // Predicated region
      $region9: #{encoder_fused_forward.1} parent=5 // pred_check
        _
      $region10: #{encoder_fused_forward.1} parent=5 // pred_check_branch
        %207 = sbr.rel (%p204) target = $region12
      $region11: #{encoder_fused_forward.1} parent=5 // pred_region
        %s208 = ssub.s32 %s16, 1
        // Predicated region
        $region13: #{encoder_fused_forward.1} parent=11 // pred_check
          %p209 = pneg %p63
        $region14: #{encoder_fused_forward.1} parent=11 // pred_check_branch
          %211 = sbr.rel (%p209) target = $region16
        $region15: #{encoder_fused_forward.1} parent=11 // pred_region
          _
        $region16: #{encoder_fused_forward.1} parent=11 // pred_fallthru
          _
        // Predicated region
        $region17: #{encoder_fused_forward.1} parent=11 // pred_check
          %p212 = pneg %p84
        $region18: #{encoder_fused_forward.1} parent=11 // pred_check_branch
          %214 = sbr.rel (%p212) target = $region20
        $region19: #{encoder_fused_forward.1} parent=11 // pred_region
          _
        $region20: #{encoder_fused_forward.1} parent=11 // pred_fallthru
          _
        // Predicated region
        $region21: #{encoder_fused_forward.1} parent=11 // pred_check
          %p215 = pneg %p105
        $region22: #{encoder_fused_forward.1} parent=11 // pred_check_branch
          %217 = sbr.rel (%p215) target = $region24
        $region23: #{encoder_fused_forward.1} parent=11 // pred_region
          _
        $region24: #{encoder_fused_forward.1} parent=11 // pred_fallthru
          _
        // Predicated region
        $region25: #{encoder_fused_forward.1} parent=11 // pred_check
          %p218 = pneg %p126
        $region26: #{encoder_fused_forward.1} parent=11 // pred_check_branch
          %220 = sbr.rel (%p218) target = $region28
        $region27: #{encoder_fused_forward.1} parent=11 // pred_region
          _
        $region28: #{encoder_fused_forward.1} parent=11 // pred_fallthru
          _
        // Predicated region
        $region29: #{encoder_fused_forward.1} parent=11 // pred_check
          %p221 = pneg %p147
        $region30: #{encoder_fused_forward.1} parent=11 // pred_check_branch
          %223 = sbr.rel (%p221) target = $region32
        $region31: #{encoder_fused_forward.1} parent=11 // pred_region
          _
        $region32: #{encoder_fused_forward.1} parent=11 // pred_fallthru
          _
        // Predicated region
        $region33: #{encoder_fused_forward.1} parent=11 // pred_check
          %p224 = pneg %p168
        $region34: #{encoder_fused_forward.1} parent=11 // pred_check_branch
          %226 = sbr.rel (%p224) target = $region36
        $region35: #{encoder_fused_forward.1} parent=11 // pred_region
          _
        $region36: #{encoder_fused_forward.1} parent=11 // pred_fallthru
          _
      $region12: #{encoder_fused_forward.1} parent=5 // pred_fallthru
        _
      %p227 = scmp.lt.s32.totalorder %s16, 2
      // Predicated region
      $region37: #{encoder_fused_forward.1} parent=5 // pred_check
        %p228 = pneg %p227
      $region38: #{encoder_fused_forward.1} parent=5 // pred_check_branch
        %230 = sbr.rel (%p228) target = $region40
      $region39: #{encoder_fused_forward.1} parent=5 // pred_region
        // Predicated region
        $region41: #{encoder_fused_forward.1} parent=39 // pred_check
          %p231 = pneg %p36
        $region42: #{encoder_fused_forward.1} parent=39 // pred_check_branch
          %233 = sbr.rel (%p231) target = $region44
        $region43: #{encoder_fused_forward.1} parent=39 // pred_region
          %p234 = scmp.lt.s32.totalorder %s16, 1
          %s235 = scalar_select %p234, %s16, 1
          %s236 = smul.addr %s235, 54
          %s237 = smul.addr %s236, 8
          %s238 = scalar_lea.vmem %s0, %s237
        $region44: #{encoder_fused_forward.1} parent=39 // pred_fallthru
          _
      $region40: #{encoder_fused_forward.1} parent=5 // pred_fallthru
        _
      %p239 = scmp.le.s32.totalorder 1, %s16
      %p240 = scmp.lt.s32.totalorder %s16, 3
      %p241 = pnand %p239, %p240
      %p242 = pneg %p241
      // Predicated region
      $region45: #{encoder_fused_forward.1} parent=5 // pred_check
        _
      $region46: #{encoder_fused_forward.1} parent=5 // pred_check_branch
        %244 = sbr.rel (%p241) target = $region48
      $region47: #{encoder_fused_forward.1} parent=5 // pred_region
        %s245 = ssub.s32 %s16, 1
        %p246 = scmp.lt.s32.totalorder %s21, 1
        %s247 = scalar_select %p246, %s21, 1
        %s248 = smul.addr %s247, 54
        %s249 = smul.addr %s248, 8
        %s250 = scalar_lea.vmem %s0, %s249
        %p251 = pneg %p42
        %p252 = pneg %p39
        %p253 = pneg %p63
        %p254 = pneg %p60
        %p255 = pneg %p84
        %p256 = pneg %p81
        %p257 = pneg %p105
        %p258 = pneg %p102
        %p259 = pneg %p126
        %p260 = pneg %p123
        %p261 = pneg %p147
        %p262 = pneg %p144
        %p263 = pneg %p168
        %p264 = pneg %p165
        %p265 = pneg %p194
        %p266 = pneg %p191
        %s267 = sand.u32 %s181, 1
        %s268 = scalar_lea.sflag [#allocation9], %s267
        %s269 = sand.u32 %s181, 1
        %s270 = scalar_lea.vmem [#allocation8], %s269
        %p271 = scmp.lt.s32.totalorder %s21, 1
        %s272 = scalar_select %p271, %s21, 1
        %s273 = smul.addr %s272, 54
        %s274 = smul.addr %s273, 8
        %s275 = scalar_lea.vmem %s0, %s274
        %v276 = vld [vmem:[%s275] sm:$0xff]
        %v277 = vld [vmem:[%s275 + $0x8] sm:$0xff]
        %v278 = vld [vmem:[%s275 + $0x18] sm:$0xff]
        %v279 = vld [vmem:[%s275 + $0x20] sm:$0xff]
        %v280 = vld [vmem:[%s275 + $0x30] sm:$0xff]
        %v281 = vld [vmem:[%s275 + $0x38] sm:$0xff]
        %v282 = vld [vmem:[%s275 + $0x48] sm:$0xff]
        %v283 = vld [vmem:[%s275 + $0x50] sm:$0xff]
        %v284 = vld [vmem:[%s275 + $0x60] sm:$0xff]
        %v285 = vld [vmem:[%s275 + $0x68] sm:$0xff]
        %v286 = vld [vmem:[%s275 + $0x78] sm:$0xff]
        %v287 = vld [vmem:[%s275 + $0x80] sm:$0xff]
        %v288 = vld [vmem:[%s275 + $0x90] sm:$0xff]
        %v289 = vld [vmem:[%s275 + $0x98] sm:$0xff]
        %v290 = vld [vmem:[%s275 + $0xa8] sm:$0xff]
        %v291 = vld [vmem:[%s275 + $0xb0] sm:$0xff]
        %v292 = vld [vmem:[%s275 + $0xc0] sm:$0xff]
        %v293 = vld [vmem:[%s275 + $0xc8] sm:$0xff]
        %v294 = vld [vmem:[%s275 + $0xd8] sm:$0xff]
        %v295 = vld [vmem:[%s275 + $0xe0] sm:$0xff]
        %v296 = vld [vmem:[%s275 + $0xf0] sm:$0xff]
        %v297 = vld [vmem:[%s275 + $0xf8] sm:$0xff]
        %v298 = vld [vmem:[%s275 + $0x108] sm:$0xff]
        %v299 = vld [vmem:[%s275 + $0x110] sm:$0xff]
        %v300 = vld [vmem:[%s275 + $0x120] sm:$0xff]
        %v301 = vld [vmem:[%s275 + $0x128] sm:$0xff]
        %v302 = vld [vmem:[%s275 + $0x138] sm:$0xff]
        %v303 = vld [vmem:[%s275 + $0x140] sm:$0xff]
        %v304 = vld [vmem:[%s275 + $0x150] sm:$0xff]
        %v305 = vld [vmem:[%s275 + $0x158] sm:$0xff]
        %v306 = vld [vmem:[%s275 + $0x168] sm:$0xff]
        %v307 = vld [vmem:[%s275 + $0x170] sm:$0xff]
        %v308 = vld [vmem:[%s1] sm:$0xf]
        %v309 = vld [vmem:[%s275 + $0x1] sm:$0xff]
        %v310 = vld [vmem:[%s275 + $0x9] sm:$0xff]
        %v311 = vld [vmem:[%s275 + $0x19] sm:$0xff]
        %v312 = vld [vmem:[%s275 + $0x21] sm:$0xff]
        %v313 = vld [vmem:[%s275 + $0x31] sm:$0xff]
        %v314 = vld [vmem:[%s275 + $0x39] sm:$0xff]
        %v315 = vld [vmem:[%s275 + $0x49] sm:$0xff]
        %v316 = vld [vmem:[%s275 + $0x51] sm:$0xff]
        %v317 = vld [vmem:[%s275 + $0x61] sm:$0xff]
        %v318 = vld [vmem:[%s275 + $0x69] sm:$0xff]
        %v319 = vld [vmem:[%s275 + $0x79] sm:$0xff]
        %v320 = vld [vmem:[%s275 + $0x81] sm:$0xff]
        %v321 = vld [vmem:[%s275 + $0x91] sm:$0xff]
        %v322 = vld [vmem:[%s275 + $0x99] sm:$0xff]
        %v323 = vld [vmem:[%s275 + $0xa9] sm:$0xff]
        %v324 = vld [vmem:[%s275 + $0xb1] sm:$0xff]
        %v325 = vld [vmem:[%s275 + $0xc1] sm:$0xff]
        %v326 = vld [vmem:[%s275 + $0xc9] sm:$0xff]
        %v327 = vld [vmem:[%s275 + $0xd9] sm:$0xff]
        %v328 = vld [vmem:[%s275 + $0xe1] sm:$0xff]
        %v329 = vld [vmem:[%s275 + $0xf1] sm:$0xff]
        %v330 = vld [vmem:[%s275 + $0xf9] sm:$0xff]
        %v331 = vld [vmem:[%s275 + $0x109] sm:$0xff]
        %v332 = vld [vmem:[%s275 + $0x111] sm:$0xff]
        %v333 = vld [vmem:[%s275 + $0x121] sm:$0xff]
        %v334 = vld [vmem:[%s275 + $0x129] sm:$0xff]
        %v335 = vld [vmem:[%s275 + $0x139] sm:$0xff]
        %v336 = vld [vmem:[%s275 + $0x141] sm:$0xff]
        %v337 = vld [vmem:[%s275 + $0x151] sm:$0xff]
        %v338 = vld [vmem:[%s275 + $0x159] sm:$0xff]
        %v339 = vld [vmem:[%s275 + $0x169] sm:$0xff]
        %v340 = vld [vmem:[%s275 + $0x171] sm:$0xff]
        %s341 = scalar_lea.vmem %s1, 4
        %v342 = vld [vmem:[%s341] sm:$0xf]
        %vm343 = vcmask 31744
        %v345 = vsel %vm343, %v309, 0
        %v348 = vsel %vm343, %v310, 0
        %v351 = vsel %vm343, %v311, 0
        %v354 = vsel %vm343, %v312, 0
        %v357 = vsel %vm343, %v313, 0
        %v360 = vsel %vm343, %v314, 0
        %v363 = vsel %vm343, %v315, 0
        %v366 = vsel %vm343, %v316, 0
        %v369 = vsel %vm343, %v317, 0
        %v372 = vsel %vm343, %v318, 0
        %v375 = vsel %vm343, %v319, 0
        %v378 = vsel %vm343, %v320, 0
        %v381 = vsel %vm343, %v321, 0
        %v384 = vsel %vm343, %v322, 0
        %v387 = vsel %vm343, %v323, 0
        %v390 = vsel %vm343, %v324, 0
        %v393 = vsel %vm343, %v325, 0
        %v396 = vsel %vm343, %v326, 0
        %v399 = vsel %vm343, %v327, 0
        %v402 = vsel %vm343, %v328, 0
        %v405 = vsel %vm343, %v329, 0
        %v408 = vsel %vm343, %v330, 0
        %v411 = vsel %vm343, %v331, 0
        %v414 = vsel %vm343, %v332, 0
        %v417 = vsel %vm343, %v333, 0
        %v420 = vsel %vm343, %v334, 0
        %v423 = vsel %vm343, %v335, 0
        %v426 = vsel %vm343, %v336, 0
        %v429 = vsel %vm343, %v337, 0
        %v432 = vsel %vm343, %v338, 0
        %v435 = vsel %vm343, %v339, 0
        %v438 = vsel %vm343, %v340, 0
        %vm440 = vcmask 1043456
        %v442 = vsel %vm440, %v342, 0
        %444 = vmatprep.subr.mxu0 0.0
        %445 = vmatpush1.msra.mxu0 0.0
        %446 = vmatprep.subr.mxu0 0.0
        %447 = vmatpush1.msra.mxu0 0.0
        %448 = vmatprep.subr.mxu0 0.0
        %449 = vmatpush1.msra.mxu0 0.0
        %450 = vmatprep.subr.mxu0 0.0
        %451 = vmatpush1.msra.mxu0 0.0
        %452 = vmatprep.subr.mxu0 0.0
        %453 = vmatpush1.msra.mxu0 0.0
        %454 = vmatprep.subr.mxu0 0.0
        %455 = vmatpush1.msra.mxu0 0.0
        %456 = vmatprep.subr.mxu0 0.0
        %457 = vmatpush1.msra.mxu0 0.0
        %458 = vmatprep.subr.mxu0 0.0
        %459 = vmatpush1.msra.mxu0 0.0
        %460 = vmatprep.subr.mxu0 0.0
        %461 = vmatpush1.msra.mxu0 0.0
        %462 = vmatprep.subr.mxu0 0.0
        %463 = vmatpush1.msra.mxu0 0.0
        %464 = vmatprep.subr.mxu0 0.0
        %465 = vmatpush1.msra.mxu0 0.0
        %466 = vmatprep.subr.mxu0 0.0
        %467 = vmatpush1.msra.mxu0 0.0
        %468 = vmatprep.subr.mxu0 0.0
        %469 = vmatpush1.msra.mxu0 0.0
        %470 = vmatprep.subr.mxu0 0.0
        %471 = vmatpush1.msra.mxu0 0.0
        %472 = vmatprep.subr.mxu0 0.0
        %473 = vmatpush1.msra.mxu0 0.0
        %474 = vmatprep.subr.mxu0 0.0
        %475 = vmatpush1.msra.mxu0 %v442
        %476 = vmatprep.subr.mxu0 0.0
        %477 = vmatpush2.msra.mxu0 0.0
        %478 = vmatprep.subr.mxu0 0.0
        %479 = vmatpush2.msra.mxu0 0.0
        %480 = vmatprep.subr.mxu0 0.0
        %481 = vmatpush2.msra.mxu0 0.0
        %482 = vmatprep.subr.mxu0 0.0
        %483 = vmatpush2.msra.mxu0 0.0
        %484 = vmatprep.subr.mxu0 0.0
        %485 = vmatpush2.msra.mxu0 0.0
        %486 = vmatprep.subr.mxu0 0.0
        %487 = vmatpush2.msra.mxu0 0.0
        %488 = vmatprep.subr.mxu0 0.0
        %489 = vmatpush2.msra.mxu0 0.0
        %490 = vmatprep.subr.mxu0 0.0
        %491 = vmatpush2.msra.mxu0 0.0
        %492 = vmatprep.subr.mxu0 0.0
        %493 = vmatpush2.msra.mxu0 0.0
        %494 = vmatprep.subr.mxu0 0.0
        %495 = vmatpush2.msra.mxu0 0.0
        %496 = vmatprep.subr.mxu0 0.0
        %497 = vmatpush2.msra.mxu0 0.0
        %498 = vmatprep.subr.mxu0 0.0
        %499 = vmatpush2.msra.mxu0 0.0
        %500 = vmatprep.subr.mxu0 0.0
        %501 = vmatpush2.msra.mxu0 0.0
        %502 = vmatprep.subr.mxu0 0.0
        %503 = vmatpush2.msra.mxu0 0.0
        %504 = vmatprep.subr.mxu0 0.0
        %505 = vmatpush2.msra.mxu0 0.0
        %506 = vmatprep.subr.mxu0 0.0
        %507 = vmatpush2.msra.mxu0 0.0
        %508 = vmatprep.mubr.f32.mxu0 0.0
        %509 = vmatmul.mubr.f32.gmra.mxu0 %v345
        %v510 = vpop.f32.mrf.mxu0
        %v511 = vadd.f32 0.0, %v510
        %v512 = vpop.f32.mrf.mxu0
        %513 = vmatprep.mubr.f32.mxu0 0.0
        %514 = vmatmul.mubr.f32.gmra.mxu0 %v348
        %v515 = vpop.f32.mrf.mxu0
        %v516 = vadd.f32 0.0, %v515
        %v517 = vpop.f32.mrf.mxu0
        %518 = vmatprep.mubr.f32.mxu0 0.0
        %519 = vmatmul.mubr.f32.gmra.mxu0 %v351
        %v520 = vpop.f32.mrf.mxu0
        %v521 = vadd.f32 0.0, %v520
        %v522 = vpop.f32.mrf.mxu0
        %523 = vmatprep.mubr.f32.mxu0 0.0
        %524 = vmatmul.mubr.f32.gmra.mxu0 %v354
        %v525 = vpop.f32.mrf.mxu0
        %v526 = vadd.f32 0.0, %v525
        %v527 = vpop.f32.mrf.mxu0
        %528 = vmatprep.mubr.f32.mxu0 0.0
        %529 = vmatmul.mubr.f32.gmra.mxu0 %v357
        %v530 = vpop.f32.mrf.mxu0
        %v531 = vadd.f32 0.0, %v530
        %v532 = vpop.f32.mrf.mxu0
        %533 = vmatprep.mubr.f32.mxu0 0.0
        %534 = vmatmul.mubr.f32.gmra.mxu0 %v360
        %v535 = vpop.f32.mrf.mxu0
        %v536 = vadd.f32 0.0, %v535
        %v537 = vpop.f32.mrf.mxu0
        %538 = vmatprep.mubr.f32.mxu0 0.0
        %539 = vmatmul.mubr.f32.gmra.mxu0 %v363
        %v540 = vpop.f32.mrf.mxu0
        %v541 = vadd.f32 0.0, %v540
        %v542 = vpop.f32.mrf.mxu0
        %543 = vmatprep.mubr.f32.mxu0 0.0
        %544 = vmatmul.mubr.f32.gmra.mxu0 %v366
        %v545 = vpop.f32.mrf.mxu0
        %v546 = vadd.f32 0.0, %v545
        %v547 = vpop.f32.mrf.mxu0
        %548 = vmatprep.mubr.f32.mxu0 0.0
        %549 = vmatmul.mubr.f32.gmra.mxu0 %v369
        %v550 = vpop.f32.mrf.mxu0
        %v551 = vadd.f32 0.0, %v550
        %v552 = vpop.f32.mrf.mxu0
        %553 = vmatprep.mubr.f32.mxu0 0.0
        %554 = vmatmul.mubr.f32.gmra.mxu0 %v372
        %v555 = vpop.f32.mrf.mxu0
        %v556 = vadd.f32 0.0, %v555
        %v557 = vpop.f32.mrf.mxu0
        %558 = vmatprep.mubr.f32.mxu0 0.0
        %559 = vmatmul.mubr.f32.gmra.mxu0 %v375
        %v560 = vpop.f32.mrf.mxu0
        %v561 = vadd.f32 0.0, %v560
        %v562 = vpop.f32.mrf.mxu0
        %563 = vmatprep.mubr.f32.mxu0 0.0
        %564 = vmatmul.mubr.f32.gmra.mxu0 %v378
        %v565 = vpop.f32.mrf.mxu0
        %v566 = vadd.f32 0.0, %v565
        %v567 = vpop.f32.mrf.mxu0
        %568 = vmatprep.mubr.f32.mxu0 0.0
        %569 = vmatmul.mubr.f32.gmra.mxu0 %v381
        %v570 = vpop.f32.mrf.mxu0
        %v571 = vadd.f32 0.0, %v570
        %v572 = vpop.f32.mrf.mxu0
        %573 = vmatprep.mubr.f32.mxu0 0.0
        %574 = vmatmul.mubr.f32.gmra.mxu0 %v384
        %v575 = vpop.f32.mrf.mxu0
        %v576 = vadd.f32 0.0, %v575
        %v577 = vpop.f32.mrf.mxu0
        %578 = vmatprep.mubr.f32.mxu0 0.0
        %579 = vmatmul.mubr.f32.gmra.mxu0 %v387
        %v580 = vpop.f32.mrf.mxu0
        %v581 = vadd.f32 0.0, %v580
        %v582 = vpop.f32.mrf.mxu0
        %583 = vmatprep.mubr.f32.mxu0 0.0
        %584 = vmatmul.mubr.f32.gmra.mxu0 %v390
        %v585 = vpop.f32.mrf.mxu0
        %v586 = vadd.f32 0.0, %v585
        %v587 = vpop.f32.mrf.mxu0
        %588 = vmatprep.mubr.f32.mxu0 0.0
        %589 = vmatmul.mubr.f32.gmra.mxu0 %v393
        %v590 = vpop.f32.mrf.mxu0
        %v591 = vadd.f32 0.0, %v590
        %v592 = vpop.f32.mrf.mxu0
        %593 = vmatprep.mubr.f32.mxu0 0.0
        %594 = vmatmul.mubr.f32.gmra.mxu0 %v396
        %v595 = vpop.f32.mrf.mxu0
        %v596 = vadd.f32 0.0, %v595
        %v597 = vpop.f32.mrf.mxu0
        %598 = vmatprep.mubr.f32.mxu0 0.0
        %599 = vmatmul.mubr.f32.gmra.mxu0 %v399
        %v600 = vpop.f32.mrf.mxu0
        %v601 = vadd.f32 0.0, %v600
        %v602 = vpop.f32.mrf.mxu0
        %603 = vmatprep.mubr.f32.mxu0 0.0
        %604 = vmatmul.mubr.f32.gmra.mxu0 %v402
        %v605 = vpop.f32.mrf.mxu0
        %v606 = vadd.f32 0.0, %v605
        %v607 = vpop.f32.mrf.mxu0
        %608 = vmatprep.mubr.f32.mxu0 0.0
        %609 = vmatmul.mubr.f32.gmra.mxu0 %v405
        %v610 = vpop.f32.mrf.mxu0
        %v611 = vadd.f32 0.0, %v610
        %v612 = vpop.f32.mrf.mxu0
        %613 = vmatprep.mubr.f32.mxu0 0.0
        %614 = vmatmul.mubr.f32.gmra.mxu0 %v408
        %v615 = vpop.f32.mrf.mxu0
        %v616 = vadd.f32 0.0, %v615
        %v617 = vpop.f32.mrf.mxu0
        %618 = vmatprep.mubr.f32.mxu0 0.0
        %619 = vmatmul.mubr.f32.gmra.mxu0 %v411
        %v620 = vpop.f32.mrf.mxu0
        %v621 = vadd.f32 0.0, %v620
        %v622 = vpop.f32.mrf.mxu0
        %623 = vmatprep.mubr.f32.mxu0 0.0
        %624 = vmatmul.mubr.f32.gmra.mxu0 %v414
        %v625 = vpop.f32.mrf.mxu0
        %v626 = vadd.f32 0.0, %v625
        %v627 = vpop.f32.mrf.mxu0
        %628 = vmatprep.mubr.f32.mxu0 0.0
        %629 = vmatmul.mubr.f32.gmra.mxu0 %v417
        %v630 = vpop.f32.mrf.mxu0
        %v631 = vadd.f32 0.0, %v630
        %v632 = vpop.f32.mrf.mxu0
        %633 = vmatprep.mubr.f32.mxu0 0.0
        %634 = vmatmul.mubr.f32.gmra.mxu0 %v420
        %v635 = vpop.f32.mrf.mxu0
        %v636 = vadd.f32 0.0, %v635
        %v637 = vpop.f32.mrf.mxu0
        %638 = vmatprep.mubr.f32.mxu0 0.0
        %639 = vmatmul.mubr.f32.gmra.mxu0 %v423
        %v640 = vpop.f32.mrf.mxu0
        %v641 = vadd.f32 0.0, %v640
        %v642 = vpop.f32.mrf.mxu0
        %643 = vmatprep.mubr.f32.mxu0 0.0
        %644 = vmatmul.mubr.f32.gmra.mxu0 %v426
        %v645 = vpop.f32.mrf.mxu0
        %v646 = vadd.f32 0.0, %v645
        %v647 = vpop.f32.mrf.mxu0
        %648 = vmatprep.mubr.f32.mxu0 0.0
        %649 = vmatmul.mubr.f32.gmra.mxu0 %v429
        %v650 = vpop.f32.mrf.mxu0
        %v651 = vadd.f32 0.0, %v650
        %v652 = vpop.f32.mrf.mxu0
        %653 = vmatprep.mubr.f32.mxu0 0.0
        %654 = vmatmul.mubr.f32.gmra.mxu0 %v432
        %v655 = vpop.f32.mrf.mxu0
        %v656 = vadd.f32 0.0, %v655
        %v657 = vpop.f32.mrf.mxu0
        %658 = vmatprep.mubr.f32.mxu0 0.0
        %659 = vmatmul.mubr.f32.gmra.mxu0 %v435
        %v660 = vpop.f32.mrf.mxu0
        %v661 = vadd.f32 0.0, %v660
        %v662 = vpop.f32.mrf.mxu0
        %663 = vmatprep.mubr.f32.mxu0 0.0
        %664 = vmatmul.mubr.f32.gmra.mxu0 %v438
        %v665 = vpop.f32.mrf.mxu0
        %v666 = vadd.f32 0.0, %v665
        %v667 = vpop.f32.mrf.mxu0
        %668 = vdwg.mxu0
        %v670 = vsel %vm343, %v276, 0
        %v673 = vsel %vm343, %v277, 0
        %v676 = vsel %vm343, %v278, 0
        %v679 = vsel %vm343, %v279, 0
        %v682 = vsel %vm343, %v280, 0
        %v685 = vsel %vm343, %v281, 0
        %v688 = vsel %vm343, %v282, 0
        %v691 = vsel %vm343, %v283, 0
        %v694 = vsel %vm343, %v284, 0
        %v697 = vsel %vm343, %v285, 0
        %v700 = vsel %vm343, %v286, 0
        %v703 = vsel %vm343, %v287, 0
        %v706 = vsel %vm343, %v288, 0
        %v709 = vsel %vm343, %v289, 0
        %v712 = vsel %vm343, %v290, 0
        %v715 = vsel %vm343, %v291, 0
        %v718 = vsel %vm343, %v292, 0
        %v721 = vsel %vm343, %v293, 0
        %v724 = vsel %vm343, %v294, 0
        %v727 = vsel %vm343, %v295, 0
        %v730 = vsel %vm343, %v296, 0
        %v733 = vsel %vm343, %v297, 0
        %v736 = vsel %vm343, %v298, 0
        %v739 = vsel %vm343, %v299, 0
        %v742 = vsel %vm343, %v300, 0
        %v745 = vsel %vm343, %v301, 0
        %v748 = vsel %vm343, %v302, 0
        %v751 = vsel %vm343, %v303, 0
        %v754 = vsel %vm343, %v304, 0
        %v757 = vsel %vm343, %v305, 0
        %v760 = vsel %vm343, %v306, 0
        %v763 = vsel %vm343, %v307, 0
        %v766 = vsel %vm440, %v308, 0
        %768 = vmatprep.subr.mxu0 0.0
        %769 = vmatpush1.msra.mxu0 0.0
        %770 = vmatprep.subr.mxu0 0.0
        %771 = vmatpush1.msra.mxu0 0.0
        %772 = vmatprep.subr.mxu0 0.0
        %773 = vmatpush1.msra.mxu0 0.0
        %774 = vmatprep.subr.mxu0 0.0
        %775 = vmatpush1.msra.mxu0 0.0
        %776 = vmatprep.subr.mxu0 0.0
        %777 = vmatpush1.msra.mxu0 0.0
        %778 = vmatprep.subr.mxu0 0.0
        %779 = vmatpush1.msra.mxu0 0.0
        %780 = vmatprep.subr.mxu0 0.0
        %781 = vmatpush1.msra.mxu0 0.0
        %782 = vmatprep.subr.mxu0 0.0
        %783 = vmatpush1.msra.mxu0 0.0
        %784 = vmatprep.subr.mxu0 0.0
        %785 = vmatpush1.msra.mxu0 0.0
        %786 = vmatprep.subr.mxu0 0.0
        %787 = vmatpush1.msra.mxu0 0.0
        %788 = vmatprep.subr.mxu0 0.0
        %789 = vmatpush1.msra.mxu0 0.0
        %790 = vmatprep.subr.mxu0 0.0
        %791 = vmatpush1.msra.mxu0 0.0
        %792 = vmatprep.subr.mxu0 0.0
        %793 = vmatpush1.msra.mxu0 0.0
        %794 = vmatprep.subr.mxu0 0.0
        %795 = vmatpush1.msra.mxu0 0.0
        %796 = vmatprep.subr.mxu0 0.0
        %797 = vmatpush1.msra.mxu0 0.0
        %798 = vmatprep.subr.mxu0 0.0
        %799 = vmatpush1.msra.mxu0 %v766
        %800 = vmatprep.subr.mxu0 0.0
        %801 = vmatpush2.msra.mxu0 0.0
        %802 = vmatprep.subr.mxu0 0.0
        %803 = vmatpush2.msra.mxu0 0.0
        %804 = vmatprep.subr.mxu0 0.0
        %805 = vmatpush2.msra.mxu0 0.0
        %806 = vmatprep.subr.mxu0 0.0
        %807 = vmatpush2.msra.mxu0 0.0
        %808 = vmatprep.subr.mxu0 0.0
        %809 = vmatpush2.msra.mxu0 0.0
        %810 = vmatprep.subr.mxu0 0.0
        %811 = vmatpush2.msra.mxu0 0.0
        %812 = vmatprep.subr.mxu0 0.0
        %813 = vmatpush2.msra.mxu0 0.0
        %814 = vmatprep.subr.mxu0 0.0
        %815 = vmatpush2.msra.mxu0 0.0
        %816 = vmatprep.subr.mxu0 0.0
        %817 = vmatpush2.msra.mxu0 0.0
        %818 = vmatprep.subr.mxu0 0.0
        %819 = vmatpush2.msra.mxu0 0.0
        %820 = vmatprep.subr.mxu0 0.0
        %821 = vmatpush2.msra.mxu0 0.0
        %822 = vmatprep.subr.mxu0 0.0
        %823 = vmatpush2.msra.mxu0 0.0
        %824 = vmatprep.subr.mxu0 0.0
        %825 = vmatpush2.msra.mxu0 0.0
        %826 = vmatprep.subr.mxu0 0.0
        %827 = vmatpush2.msra.mxu0 0.0
        %828 = vmatprep.subr.mxu0 0.0
        %829 = vmatpush2.msra.mxu0 0.0
        %830 = vmatprep.subr.mxu0 0.0
        %831 = vmatpush2.msra.mxu0 0.0
        %832 = vmatprep.mubr.f32.mxu0 0.0
        %833 = vmatmul.mubr.f32.gmra.mxu0 %v670
        %v834 = vpop.f32.mrf.mxu0
        %v835 = vadd.f32 %v511, %v834
        %v836 = vpop.f32.mrf.mxu0
        %837 = vmatprep.mubr.f32.mxu0 0.0
        %838 = vmatmul.mubr.f32.gmra.mxu0 %v673
        %v839 = vpop.f32.mrf.mxu0
        %v840 = vadd.f32 %v516, %v839
        %v841 = vpop.f32.mrf.mxu0
        %842 = vmatprep.mubr.f32.mxu0 0.0
        %843 = vmatmul.mubr.f32.gmra.mxu0 %v676
        %v844 = vpop.f32.mrf.mxu0
        %v845 = vadd.f32 %v521, %v844
        %v846 = vpop.f32.mrf.mxu0
        %847 = vmatprep.mubr.f32.mxu0 0.0
        %848 = vmatmul.mubr.f32.gmra.mxu0 %v679
        %v849 = vpop.f32.mrf.mxu0
        %v850 = vadd.f32 %v526, %v849
        %v851 = vpop.f32.mrf.mxu0
        %852 = vmatprep.mubr.f32.mxu0 0.0
        %853 = vmatmul.mubr.f32.gmra.mxu0 %v682
        %v854 = vpop.f32.mrf.mxu0
        %v855 = vadd.f32 %v531, %v854
        %v856 = vpop.f32.mrf.mxu0
        %857 = vmatprep.mubr.f32.mxu0 0.0
        %858 = vmatmul.mubr.f32.gmra.mxu0 %v685
        %v859 = vpop.f32.mrf.mxu0
        %v860 = vadd.f32 %v536, %v859
        %v861 = vpop.f32.mrf.mxu0
        %862 = vmatprep.mubr.f32.mxu0 0.0
        %863 = vmatmul.mubr.f32.gmra.mxu0 %v688
        %v864 = vpop.f32.mrf.mxu0
        %v865 = vadd.f32 %v541, %v864
        %v866 = vpop.f32.mrf.mxu0
        %867 = vmatprep.mubr.f32.mxu0 0.0
        %868 = vmatmul.mubr.f32.gmra.mxu0 %v691
        %v869 = vpop.f32.mrf.mxu0
        %v870 = vadd.f32 %v546, %v869
        %v871 = vpop.f32.mrf.mxu0
        %872 = vmatprep.mubr.f32.mxu0 0.0
        %873 = vmatmul.mubr.f32.gmra.mxu0 %v694
        %v874 = vpop.f32.mrf.mxu0
        %v875 = vadd.f32 %v551, %v874
        %v876 = vpop.f32.mrf.mxu0
        %877 = vmatprep.mubr.f32.mxu0 0.0
        %878 = vmatmul.mubr.f32.gmra.mxu0 %v697
        %v879 = vpop.f32.mrf.mxu0
        %v880 = vadd.f32 %v556, %v879
        %v881 = vpop.f32.mrf.mxu0
        %882 = vmatprep.mubr.f32.mxu0 0.0
        %883 = vmatmul.mubr.f32.gmra.mxu0 %v700
        %v884 = vpop.f32.mrf.mxu0
        %v885 = vadd.f32 %v561, %v884
        %v886 = vpop.f32.mrf.mxu0
        %887 = vmatprep.mubr.f32.mxu0 0.0
        %888 = vmatmul.mubr.f32.gmra.mxu0 %v703
        %v889 = vpop.f32.mrf.mxu0
        %v890 = vadd.f32 %v566, %v889
        %v891 = vpop.f32.mrf.mxu0
        %892 = vmatprep.mubr.f32.mxu0 0.0
        %893 = vmatmul.mubr.f32.gmra.mxu0 %v706
        %v894 = vpop.f32.mrf.mxu0
        %v895 = vadd.f32 %v571, %v894
        %v896 = vpop.f32.mrf.mxu0
        %897 = vmatprep.mubr.f32.mxu0 0.0
        %898 = vmatmul.mubr.f32.gmra.mxu0 %v709
        %v899 = vpop.f32.mrf.mxu0
        %v900 = vadd.f32 %v576, %v899
        %v901 = vpop.f32.mrf.mxu0
        %902 = vmatprep.mubr.f32.mxu0 0.0
        %903 = vmatmul.mubr.f32.gmra.mxu0 %v712
        %v904 = vpop.f32.mrf.mxu0
        %v905 = vadd.f32 %v581, %v904
        %v906 = vpop.f32.mrf.mxu0
        %907 = vmatprep.mubr.f32.mxu0 0.0
        %908 = vmatmul.mubr.f32.gmra.mxu0 %v715
        %v909 = vpop.f32.mrf.mxu0
        %v910 = vadd.f32 %v586, %v909
        %v911 = vpop.f32.mrf.mxu0
        %912 = vmatprep.mubr.f32.mxu0 0.0
        %913 = vmatmul.mubr.f32.gmra.mxu0 %v718
        %v914 = vpop.f32.mrf.mxu0
        %v915 = vadd.f32 %v591, %v914
        %v916 = vpop.f32.mrf.mxu0
        %917 = vmatprep.mubr.f32.mxu0 0.0
        %918 = vmatmul.mubr.f32.gmra.mxu0 %v721
        %v919 = vpop.f32.mrf.mxu0
        %v920 = vadd.f32 %v596, %v919
        %v921 = vpop.f32.mrf.mxu0
        %922 = vmatprep.mubr.f32.mxu0 0.0
        %923 = vmatmul.mubr.f32.gmra.mxu0 %v724
        %v924 = vpop.f32.mrf.mxu0
        %v925 = vadd.f32 %v601, %v924
        %v926 = vpop.f32.mrf.mxu0
        %927 = vmatprep.mubr.f32.mxu0 0.0
        %928 = vmatmul.mubr.f32.gmra.mxu0 %v727
        %v929 = vpop.f32.mrf.mxu0
        %v930 = vadd.f32 %v606, %v929
        %v931 = vpop.f32.mrf.mxu0
        %932 = vmatprep.mubr.f32.mxu0 0.0
        %933 = vmatmul.mubr.f32.gmra.mxu0 %v730
        %v934 = vpop.f32.mrf.mxu0
        %v935 = vadd.f32 %v611, %v934
        %v936 = vpop.f32.mrf.mxu0
        %937 = vmatprep.mubr.f32.mxu0 0.0
        %938 = vmatmul.mubr.f32.gmra.mxu0 %v733
        %v939 = vpop.f32.mrf.mxu0
        %v940 = vadd.f32 %v616, %v939
        %v941 = vpop.f32.mrf.mxu0
        %942 = vmatprep.mubr.f32.mxu0 0.0
        %943 = vmatmul.mubr.f32.gmra.mxu0 %v736
        %v944 = vpop.f32.mrf.mxu0
        %v945 = vadd.f32 %v621, %v944
        %v946 = vpop.f32.mrf.mxu0
        %947 = vmatprep.mubr.f32.mxu0 0.0
        %948 = vmatmul.mubr.f32.gmra.mxu0 %v739
        %v949 = vpop.f32.mrf.mxu0
        %v950 = vadd.f32 %v626, %v949
        %v951 = vpop.f32.mrf.mxu0
        %952 = vmatprep.mubr.f32.mxu0 0.0
        %953 = vmatmul.mubr.f32.gmra.mxu0 %v742
        %v954 = vpop.f32.mrf.mxu0
        %v955 = vadd.f32 %v631, %v954
        %v956 = vpop.f32.mrf.mxu0
        %957 = vmatprep.mubr.f32.mxu0 0.0
        %958 = vmatmul.mubr.f32.gmra.mxu0 %v745
        %v959 = vpop.f32.mrf.mxu0
        %v960 = vadd.f32 %v636, %v959
        %v961 = vpop.f32.mrf.mxu0
        %962 = vmatprep.mubr.f32.mxu0 0.0
        %963 = vmatmul.mubr.f32.gmra.mxu0 %v748
        %v964 = vpop.f32.mrf.mxu0
        %v965 = vadd.f32 %v641, %v964
        %v966 = vpop.f32.mrf.mxu0
        %967 = vmatprep.mubr.f32.mxu0 0.0
        %968 = vmatmul.mubr.f32.gmra.mxu0 %v751
        %v969 = vpop.f32.mrf.mxu0
        %v970 = vadd.f32 %v646, %v969
        %v971 = vpop.f32.mrf.mxu0
        %972 = vmatprep.mubr.f32.mxu0 0.0
        %973 = vmatmul.mubr.f32.gmra.mxu0 %v754
        %v974 = vpop.f32.mrf.mxu0
        %v975 = vadd.f32 %v651, %v974
        %v976 = vpop.f32.mrf.mxu0
        %977 = vmatprep.mubr.f32.mxu0 0.0
        %978 = vmatmul.mubr.f32.gmra.mxu0 %v757
        %v979 = vpop.f32.mrf.mxu0
        %v980 = vadd.f32 %v656, %v979
        %v981 = vpop.f32.mrf.mxu0
        %982 = vmatprep.mubr.f32.mxu0 0.0
        %983 = vmatmul.mubr.f32.gmra.mxu0 %v760
        %v984 = vpop.f32.mrf.mxu0
        %v985 = vadd.f32 %v661, %v984
        %v986 = vpop.f32.mrf.mxu0
        %987 = vmatprep.mubr.f32.mxu0 0.0
        %988 = vmatmul.mubr.f32.gmra.mxu0 %v763
        %v989 = vpop.f32.mrf.mxu0
        %v990 = vadd.f32 %v666, %v989
        %v991 = vpop.f32.mrf.mxu0
        %992 = vdwg.mxu0
        %v993 = vld [vmem:[%s275 + $0x2] sm:$0xff]
        %v994 = vld [vmem:[%s275 + $0xa] sm:$0xff]
        %v995 = vld [vmem:[%s275 + $0x1a] sm:$0xff]
        %v996 = vld [vmem:[%s275 + $0x22] sm:$0xff]
        %v997 = vld [vmem:[%s275 + $0x32] sm:$0xff]
        %v998 = vld [vmem:[%s275 + $0x3a] sm:$0xff]
        %v999 = vld [vmem:[%s275 + $0x4a] sm:$0xff]
        %v1000 = vld [vmem:[%s275 + $0x52] sm:$0xff]
        %v1001 = vld [vmem:[%s275 + $0x62] sm:$0xff]
        %v1002 = vld [vmem:[%s275 + $0x6a] sm:$0xff]
        %v1003 = vld [vmem:[%s275 + $0x7a] sm:$0xff]
        %v1004 = vld [vmem:[%s275 + $0x82] sm:$0xff]
        %v1005 = vld [vmem:[%s275 + $0x92] sm:$0xff]
        %v1006 = vld [vmem:[%s275 + $0x9a] sm:$0xff]
        %v1007 = vld [vmem:[%s275 + $0xaa] sm:$0xff]
        %v1008 = vld [vmem:[%s275 + $0xb2] sm:$0xff]
        %v1009 = vld [vmem:[%s275 + $0xc2] sm:$0xff]
        %v1010 = vld [vmem:[%s275 + $0xca] sm:$0xff]
        %v1011 = vld [vmem:[%s275 + $0xda] sm:$0xff]
        %v1012 = vld [vmem:[%s275 + $0xe2] sm:$0xff]
        %v1013 = vld [vmem:[%s275 + $0xf2] sm:$0xff]
        %v1014 = vld [vmem:[%s275 + $0xfa] sm:$0xff]
        %v1015 = vld [vmem:[%s275 + $0x10a] sm:$0xff]
        %v1016 = vld [vmem:[%s275 + $0x112] sm:$0xff]
        %v1017 = vld [vmem:[%s275 + $0x122] sm:$0xff]
        %v1018 = vld [vmem:[%s275 + $0x12a] sm:$0xff]
        %v1019 = vld [vmem:[%s275 + $0x13a] sm:$0xff]
        %v1020 = vld [vmem:[%s275 + $0x142] sm:$0xff]
        %v1021 = vld [vmem:[%s275 + $0x152] sm:$0xff]
        %v1022 = vld [vmem:[%s275 + $0x15a] sm:$0xff]
        %v1023 = vld [vmem:[%s275 + $0x16a] sm:$0xff]
        %v1024 = vld [vmem:[%s275 + $0x172] sm:$0xff]
        %s1025 = scalar_lea.vmem %s1, 8
        %v1026 = vld [vmem:[%s1025] sm:$0xf]
        %v1028 = vsel %vm343, %v993, 0
        %v1031 = vsel %vm343, %v994, 0
        %v1034 = vsel %vm343, %v995, 0
        %v1037 = vsel %vm343, %v996, 0
        %v1040 = vsel %vm343, %v997, 0
        %v1043 = vsel %vm343, %v998, 0
        %v1046 = vsel %vm343, %v999, 0
        %v1049 = vsel %vm343, %v1000, 0
        %v1052 = vsel %vm343, %v1001, 0
        %v1055 = vsel %vm343, %v1002, 0
        %v1058 = vsel %vm343, %v1003, 0
        %v1061 = vsel %vm343, %v1004, 0
        %v1064 = vsel %vm343, %v1005, 0
        %v1067 = vsel %vm343, %v1006, 0
        %v1070 = vsel %vm343, %v1007, 0
        %v1073 = vsel %vm343, %v1008, 0
        %v1076 = vsel %vm343, %v1009, 0
        %v1079 = vsel %vm343, %v1010, 0
        %v1082 = vsel %vm343, %v1011, 0
        %v1085 = vsel %vm343, %v1012, 0
        %v1088 = vsel %vm343, %v1013, 0
        %v1091 = vsel %vm343, %v1014, 0
        %v1094 = vsel %vm343, %v1015, 0
        %v1097 = vsel %vm343, %v1016, 0
        %v1100 = vsel %vm343, %v1017, 0
        %v1103 = vsel %vm343, %v1018, 0
        %v1106 = vsel %vm343, %v1019, 0
        %v1109 = vsel %vm343, %v1020, 0
        %v1112 = vsel %vm343, %v1021, 0
        %v1115 = vsel %vm343, %v1022, 0
        %v1118 = vsel %vm343, %v1023, 0
        %v1121 = vsel %vm343, %v1024, 0
        %v1124 = vsel %vm440, %v1026, 0
        %1126 = vmatprep.subr.mxu0 0.0
        %1127 = vmatpush1.msra.mxu0 0.0
        %1128 = vmatprep.subr.mxu0 0.0
        %1129 = vmatpush1.msra.mxu0 0.0
        %1130 = vmatprep.subr.mxu0 0.0
        %1131 = vmatpush1.msra.mxu0 0.0
        %1132 = vmatprep.subr.mxu0 0.0
        %1133 = vmatpush1.msra.mxu0 0.0
        %1134 = vmatprep.subr.mxu0 0.0
        %1135 = vmatpush1.msra.mxu0 0.0
        %1136 = vmatprep.subr.mxu0 0.0
        %1137 = vmatpush1.msra.mxu0 0.0
        %1138 = vmatprep.subr.mxu0 0.0
        %1139 = vmatpush1.msra.mxu0 0.0
        %1140 = vmatprep.subr.mxu0 0.0
        %1141 = vmatpush1.msra.mxu0 0.0
        %1142 = vmatprep.subr.mxu0 0.0
        %1143 = vmatpush1.msra.mxu0 0.0
        %1144 = vmatprep.subr.mxu0 0.0
        %1145 = vmatpush1.msra.mxu0 0.0
        %1146 = vmatprep.subr.mxu0 0.0
        %1147 = vmatpush1.msra.mxu0 0.0
        %1148 = vmatprep.subr.mxu0 0.0
        %1149 = vmatpush1.msra.mxu0 0.0
        %1150 = vmatprep.subr.mxu0 0.0
        %1151 = vmatpush1.msra.mxu0 0.0
        %1152 = vmatprep.subr.mxu0 0.0
        %1153 = vmatpush1.msra.mxu0 0.0
        %1154 = vmatprep.subr.mxu0 0.0
        %1155 = vmatpush1.msra.mxu0 0.0
        %1156 = vmatprep.subr.mxu0 0.0
        %1157 = vmatpush1.msra.mxu0 %v1124
        %1158 = vmatprep.subr.mxu0 0.0
        %1159 = vmatpush2.msra.mxu0 0.0
        %1160 = vmatprep.subr.mxu0 0.0
        %1161 = vmatpush2.msra.mxu0 0.0
        %1162 = vmatprep.subr.mxu0 0.0
        %1163 = vmatpush2.msra.mxu0 0.0
        %1164 = vmatprep.subr.mxu0 0.0
        %1165 = vmatpush2.msra.mxu0 0.0
        %1166 = vmatprep.subr.mxu0 0.0
        %1167 = vmatpush2.msra.mxu0 0.0
        %1168 = vmatprep.subr.mxu0 0.0
        %1169 = vmatpush2.msra.mxu0 0.0
        %1170 = vmatprep.subr.mxu0 0.0
        %1171 = vmatpush2.msra.mxu0 0.0
        %1172 = vmatprep.subr.mxu0 0.0
        %1173 = vmatpush2.msra.mxu0 0.0
        %1174 = vmatprep.subr.mxu0 0.0
        %1175 = vmatpush2.msra.mxu0 0.0
        %1176 = vmatprep.subr.mxu0 0.0
        %1177 = vmatpush2.msra.mxu0 0.0
        %1178 = vmatprep.subr.mxu0 0.0
        %1179 = vmatpush2.msra.mxu0 0.0
        %1180 = vmatprep.subr.mxu0 0.0
        %1181 = vmatpush2.msra.mxu0 0.0
        %1182 = vmatprep.subr.mxu0 0.0
        %1183 = vmatpush2.msra.mxu0 0.0
        %1184 = vmatprep.subr.mxu0 0.0
        %1185 = vmatpush2.msra.mxu0 0.0
        %1186 = vmatprep.subr.mxu0 0.0
        %1187 = vmatpush2.msra.mxu0 0.0
        %1188 = vmatprep.subr.mxu0 0.0
        %1189 = vmatpush2.msra.mxu0 0.0
        %1190 = vmatprep.mubr.f32.mxu0 0.0
        %1191 = vmatmul.mubr.f32.gmra.mxu0 %v1028
        %v1192 = vpop.f32.mrf.mxu0
        %v1193 = vadd.f32 0.0, %v1192
        %v1194 = vpop.f32.mrf.mxu0
        %1195 = vmatprep.mubr.f32.mxu0 0.0
        %1196 = vmatmul.mubr.f32.gmra.mxu0 %v1031
        %v1197 = vpop.f32.mrf.mxu0
        %v1198 = vadd.f32 0.0, %v1197
        %v1199 = vpop.f32.mrf.mxu0
        %1200 = vmatprep.mubr.f32.mxu0 0.0
        %1201 = vmatmul.mubr.f32.gmra.mxu0 %v1034
        %v1202 = vpop.f32.mrf.mxu0
        %v1203 = vadd.f32 0.0, %v1202
        %v1204 = vpop.f32.mrf.mxu0
        %1205 = vmatprep.mubr.f32.mxu0 0.0
        %1206 = vmatmul.mubr.f32.gmra.mxu0 %v1037
        %v1207 = vpop.f32.mrf.mxu0
        %v1208 = vadd.f32 0.0, %v1207
        %v1209 = vpop.f32.mrf.mxu0
        %1210 = vmatprep.mubr.f32.mxu0 0.0
        %1211 = vmatmul.mubr.f32.gmra.mxu0 %v1040
        %v1212 = vpop.f32.mrf.mxu0
        %v1213 = vadd.f32 0.0, %v1212
        %v1214 = vpop.f32.mrf.mxu0
        %1215 = vmatprep.mubr.f32.mxu0 0.0
        %1216 = vmatmul.mubr.f32.gmra.mxu0 %v1043
        %v1217 = vpop.f32.mrf.mxu0
        %v1218 = vadd.f32 0.0, %v1217
        %v1219 = vpop.f32.mrf.mxu0
        %1220 = vmatprep.mubr.f32.mxu0 0.0
        %1221 = vmatmul.mubr.f32.gmra.mxu0 %v1046
        %v1222 = vpop.f32.mrf.mxu0
        %v1223 = vadd.f32 0.0, %v1222
        %v1224 = vpop.f32.mrf.mxu0
        %1225 = vmatprep.mubr.f32.mxu0 0.0
        %1226 = vmatmul.mubr.f32.gmra.mxu0 %v1049
        %v1227 = vpop.f32.mrf.mxu0
        %v1228 = vadd.f32 0.0, %v1227
        %v1229 = vpop.f32.mrf.mxu0
        %1230 = vmatprep.mubr.f32.mxu0 0.0
        %1231 = vmatmul.mubr.f32.gmra.mxu0 %v1052
        %v1232 = vpop.f32.mrf.mxu0
        %v1233 = vadd.f32 0.0, %v1232
        %v1234 = vpop.f32.mrf.mxu0
        %1235 = vmatprep.mubr.f32.mxu0 0.0
        %1236 = vmatmul.mubr.f32.gmra.mxu0 %v1055
        %v1237 = vpop.f32.mrf.mxu0
        %v1238 = vadd.f32 0.0, %v1237
        %v1239 = vpop.f32.mrf.mxu0
        %1240 = vmatprep.mubr.f32.mxu0 0.0
        %1241 = vmatmul.mubr.f32.gmra.mxu0 %v1058
        %v1242 = vpop.f32.mrf.mxu0
        %v1243 = vadd.f32 0.0, %v1242
        %v1244 = vpop.f32.mrf.mxu0
        %1245 = vmatprep.mubr.f32.mxu0 0.0
        %1246 = vmatmul.mubr.f32.gmra.mxu0 %v1061
        %v1247 = vpop.f32.mrf.mxu0
        %v1248 = vadd.f32 0.0, %v1247
        %v1249 = vpop.f32.mrf.mxu0
        %1250 = vmatprep.mubr.f32.mxu0 0.0
        %1251 = vmatmul.mubr.f32.gmra.mxu0 %v1064
        %v1252 = vpop.f32.mrf.mxu0
        %v1253 = vadd.f32 0.0, %v1252
        %v1254 = vpop.f32.mrf.mxu0
        %1255 = vmatprep.mubr.f32.mxu0 0.0
        %1256 = vmatmul.mubr.f32.gmra.mxu0 %v1067
        %v1257 = vpop.f32.mrf.mxu0
        %v1258 = vadd.f32 0.0, %v1257
        %v1259 = vpop.f32.mrf.mxu0
        %1260 = vmatprep.mubr.f32.mxu0 0.0
        %1261 = vmatmul.mubr.f32.gmra.mxu0 %v1070
        %v1262 = vpop.f32.mrf.mxu0
        %v1263 = vadd.f32 0.0, %v1262
        %v1264 = vpop.f32.mrf.mxu0
        %1265 = vmatprep.mubr.f32.mxu0 0.0
        %1266 = vmatmul.mubr.f32.gmra.mxu0 %v1073
        %v1267 = vpop.f32.mrf.mxu0
        %v1268 = vadd.f32 0.0, %v1267
        %v1269 = vpop.f32.mrf.mxu0
        %1270 = vmatprep.mubr.f32.mxu0 0.0
        %1271 = vmatmul.mubr.f32.gmra.mxu0 %v1076
        %v1272 = vpop.f32.mrf.mxu0
        %v1273 = vadd.f32 0.0, %v1272
        %v1274 = vpop.f32.mrf.mxu0
        %1275 = vmatprep.mubr.f32.mxu0 0.0
        %1276 = vmatmul.mubr.f32.gmra.mxu0 %v1079
        %v1277 = vpop.f32.mrf.mxu0
        %v1278 = vadd.f32 0.0, %v1277
        %v1279 = vpop.f32.mrf.mxu0
        %1280 = vmatprep.mubr.f32.mxu0 0.0
        %1281 = vmatmul.mubr.f32.gmra.mxu0 %v1082
        %v1282 = vpop.f32.mrf.mxu0
        %v1283 = vadd.f32 0.0, %v1282
        %v1284 = vpop.f32.mrf.mxu0
        %1285 = vmatprep.mubr.f32.mxu0 0.0
        %1286 = vmatmul.mubr.f32.gmra.mxu0 %v1085
        %v1287 = vpop.f32.mrf.mxu0
        %v1288 = vadd.f32 0.0, %v1287
        %v1289 = vpop.f32.mrf.mxu0
        %1290 = vmatprep.mubr.f32.mxu0 0.0
        %1291 = vmatmul.mubr.f32.gmra.mxu0 %v1088
        %v1292 = vpop.f32.mrf.mxu0
        %v1293 = vadd.f32 0.0, %v1292
        %v1294 = vpop.f32.mrf.mxu0
        %1295 = vmatprep.mubr.f32.mxu0 0.0
        %1296 = vmatmul.mubr.f32.gmra.mxu0 %v1091
        %v1297 = vpop.f32.mrf.mxu0
        %v1298 = vadd.f32 0.0, %v1297
        %v1299 = vpop.f32.mrf.mxu0
        %1300 = vmatprep.mubr.f32.mxu0 0.0
        %1301 = vmatmul.mubr.f32.gmra.mxu0 %v1094
        %v1302 = vpop.f32.mrf.mxu0
        %v1303 = vadd.f32 0.0, %v1302
        %v1304 = vpop.f32.mrf.mxu0
        %1305 = vmatprep.mubr.f32.mxu0 0.0
        %1306 = vmatmul.mubr.f32.gmra.mxu0 %v1097
        %v1307 = vpop.f32.mrf.mxu0
        %v1308 = vadd.f32 0.0, %v1307
        %v1309 = vpop.f32.mrf.mxu0
        %1310 = vmatprep.mubr.f32.mxu0 0.0
        %1311 = vmatmul.mubr.f32.gmra.mxu0 %v1100
        %v1312 = vpop.f32.mrf.mxu0
        %v1313 = vadd.f32 0.0, %v1312
        %v1314 = vpop.f32.mrf.mxu0
        %1315 = vmatprep.mubr.f32.mxu0 0.0
        %1316 = vmatmul.mubr.f32.gmra.mxu0 %v1103
        %v1317 = vpop.f32.mrf.mxu0
        %v1318 = vadd.f32 0.0, %v1317
        %v1319 = vpop.f32.mrf.mxu0
        %1320 = vmatprep.mubr.f32.mxu0 0.0
        %1321 = vmatmul.mubr.f32.gmra.mxu0 %v1106
        %v1322 = vpop.f32.mrf.mxu0
        %v1323 = vadd.f32 0.0, %v1322
        %v1324 = vpop.f32.mrf.mxu0
        %1325 = vmatprep.mubr.f32.mxu0 0.0
        %1326 = vmatmul.mubr.f32.gmra.mxu0 %v1109
        %v1327 = vpop.f32.mrf.mxu0
        %v1328 = vadd.f32 0.0, %v1327
        %v1329 = vpop.f32.mrf.mxu0
        %1330 = vmatprep.mubr.f32.mxu0 0.0
        %1331 = vmatmul.mubr.f32.gmra.mxu0 %v1112
        %v1332 = vpop.f32.mrf.mxu0
        %v1333 = vadd.f32 0.0, %v1332
        %v1334 = vpop.f32.mrf.mxu0
        %1335 = vmatprep.mubr.f32.mxu0 0.0
        %1336 = vmatmul.mubr.f32.gmra.mxu0 %v1115
        %v1337 = vpop.f32.mrf.mxu0
        %v1338 = vadd.f32 0.0, %v1337
        %v1339 = vpop.f32.mrf.mxu0
        %1340 = vmatprep.mubr.f32.mxu0 0.0
        %1341 = vmatmul.mubr.f32.gmra.mxu0 %v1118
        %v1342 = vpop.f32.mrf.mxu0
        %v1343 = vadd.f32 0.0, %v1342
        %v1344 = vpop.f32.mrf.mxu0
        %1345 = vmatprep.mubr.f32.mxu0 0.0
        %1346 = vmatmul.mubr.f32.gmra.mxu0 %v1121
        %v1347 = vpop.f32.mrf.mxu0
        %v1348 = vadd.f32 0.0, %v1347
        %v1349 = vpop.f32.mrf.mxu0
        %1350 = vdwg.mxu0
        %v1351 = vadd.f32 %v835, %v1193
        %v1352 = vadd.f32 %v840, %v1198
        %v1353 = vadd.f32 %v845, %v1203
        %v1354 = vadd.f32 %v850, %v1208
        %v1355 = vadd.f32 %v855, %v1213
        %v1356 = vadd.f32 %v860, %v1218
        %v1357 = vadd.f32 %v865, %v1223
        %v1358 = vadd.f32 %v870, %v1228
        %v1359 = vadd.f32 %v875, %v1233
        %v1360 = vadd.f32 %v880, %v1238
        %v1361 = vadd.f32 %v885, %v1243
        %v1362 = vadd.f32 %v890, %v1248
        %v1363 = vadd.f32 %v895, %v1253
        %v1364 = vadd.f32 %v900, %v1258
        %v1365 = vadd.f32 %v905, %v1263
        %v1366 = vadd.f32 %v910, %v1268
        %v1367 = vadd.f32 %v915, %v1273
        %v1368 = vadd.f32 %v920, %v1278
        %v1369 = vadd.f32 %v925, %v1283
        %v1370 = vadd.f32 %v930, %v1288
        %v1371 = vadd.f32 %v935, %v1293
        %v1372 = vadd.f32 %v940, %v1298
        %v1373 = vadd.f32 %v945, %v1303
        %v1374 = vadd.f32 %v950, %v1308
        %v1375 = vadd.f32 %v955, %v1313
        %v1376 = vadd.f32 %v960, %v1318
        %v1377 = vadd.f32 %v965, %v1323
        %v1378 = vadd.f32 %v970, %v1328
        %v1379 = vadd.f32 %v975, %v1333
        %v1380 = vadd.f32 %v980, %v1338
        %v1381 = vadd.f32 %v985, %v1343
        %v1382 = vadd.f32 %v990, %v1348
        %s1383 = scalar_lea.vmem %s275, 24
        %v1384 = vld [vmem:[%s1383] sm:$0xff]
        %v1385 = vld [vmem:[%s1383 + $0x8] sm:$0xff]
        %v1386 = vld [vmem:[%s1383 + $0x18] sm:$0xff]
        %v1387 = vld [vmem:[%s1383 + $0x20] sm:$0xff]
        %v1388 = vld [vmem:[%s1383 + $0x30] sm:$0xff]
        %v1389 = vld [vmem:[%s1383 + $0x38] sm:$0xff]
        %v1390 = vld [vmem:[%s1383 + $0x48] sm:$0xff]
        %v1391 = vld [vmem:[%s1383 + $0x50] sm:$0xff]
        %v1392 = vld [vmem:[%s1383 + $0x60] sm:$0xff]
        %v1393 = vld [vmem:[%s1383 + $0x68] sm:$0xff]
        %v1394 = vld [vmem:[%s1383 + $0x78] sm:$0xff]
        %v1395 = vld [vmem:[%s1383 + $0x80] sm:$0xff]
        %v1396 = vld [vmem:[%s1383 + $0x90] sm:$0xff]
        %v1397 = vld [vmem:[%s1383 + $0x98] sm:$0xff]
        %v1398 = vld [vmem:[%s1383 + $0xa8] sm:$0xff]
        %v1399 = vld [vmem:[%s1383 + $0xb0] sm:$0xff]
        %v1400 = vld [vmem:[%s1383 + $0xc0] sm:$0xff]
        %v1401 = vld [vmem:[%s1383 + $0xc8] sm:$0xff]
        %v1402 = vld [vmem:[%s1383 + $0xd8] sm:$0xff]
        %v1403 = vld [vmem:[%s1383 + $0xe0] sm:$0xff]
        %v1404 = vld [vmem:[%s1383 + $0xf0] sm:$0xff]
        %v1405 = vld [vmem:[%s1383 + $0xf8] sm:$0xff]
        %v1406 = vld [vmem:[%s1383 + $0x108] sm:$0xff]
        %v1407 = vld [vmem:[%s1383 + $0x110] sm:$0xff]
        %v1408 = vld [vmem:[%s1383 + $0x120] sm:$0xff]
        %v1409 = vld [vmem:[%s1383 + $0x128] sm:$0xff]
        %v1410 = vld [vmem:[%s1383 + $0x138] sm:$0xff]
        %v1411 = vld [vmem:[%s1383 + $0x140] sm:$0xff]
        %v1412 = vld [vmem:[%s1383 + $0x150] sm:$0xff]
        %v1413 = vld [vmem:[%s1383 + $0x158] sm:$0xff]
        %v1414 = vld [vmem:[%s1383 + $0x168] sm:$0xff]
        %v1415 = vld [vmem:[%s1383 + $0x170] sm:$0xff]
        %s1416 = scalar_lea.vmem %s1, 12
        %v1417 = vld [vmem:[%s1416] sm:$0xf]
        %v1419 = vsel %vm343, %v1384, 0
        %v1422 = vsel %vm343, %v1385, 0
        %v1425 = vsel %vm343, %v1386, 0
        %v1428 = vsel %vm343, %v1387, 0
        %v1431 = vsel %vm343, %v1388, 0
        %v1434 = vsel %vm343, %v1389, 0
        %v1437 = vsel %vm343, %v1390, 0
        %v1440 = vsel %vm343, %v1391, 0
        %v1443 = vsel %vm343, %v1392, 0
        %v1446 = vsel %vm343, %v1393, 0
        %v1449 = vsel %vm343, %v1394, 0
        %v1452 = vsel %vm343, %v1395, 0
        %v1455 = vsel %vm343, %v1396, 0
        %v1458 = vsel %vm343, %v1397, 0
        %v1461 = vsel %vm343, %v1398, 0
        %v1464 = vsel %vm343, %v1399, 0
        %v1467 = vsel %vm343, %v1400, 0
        %v1470 = vsel %vm343, %v1401, 0
        %v1473 = vsel %vm343, %v1402, 0
        %v1476 = vsel %vm343, %v1403, 0
        %v1479 = vsel %vm343, %v1404, 0
        %v1482 = vsel %vm343, %v1405, 0
        %v1485 = vsel %vm343, %v1406, 0
        %v1488 = vsel %vm343, %v1407, 0
        %v1491 = vsel %vm343, %v1408, 0
        %v1494 = vsel %vm343, %v1409, 0
        %v1497 = vsel %vm343, %v1410, 0
        %v1500 = vsel %vm343, %v1411, 0
        %v1503 = vsel %vm343, %v1412, 0
        %v1506 = vsel %vm343, %v1413, 0
        %v1509 = vsel %vm343, %v1414, 0
        %v1512 = vsel %vm343, %v1415, 0
        %v1515 = vsel %vm440, %v1417, 0
        %1517 = vmatprep.subr.mxu0 0.0
        %1518 = vmatpush1.msra.mxu0 0.0
        %1519 = vmatprep.subr.mxu0 0.0
        %1520 = vmatpush1.msra.mxu0 0.0
        %1521 = vmatprep.subr.mxu0 0.0
        %1522 = vmatpush1.msra.mxu0 0.0
        %1523 = vmatprep.subr.mxu0 0.0
        %1524 = vmatpush1.msra.mxu0 0.0
        %1525 = vmatprep.subr.mxu0 0.0
        %1526 = vmatpush1.msra.mxu0 0.0
        %1527 = vmatprep.subr.mxu0 0.0
        %1528 = vmatpush1.msra.mxu0 0.0
        %1529 = vmatprep.subr.mxu0 0.0
        %1530 = vmatpush1.msra.mxu0 0.0
        %1531 = vmatprep.subr.mxu0 0.0
        %1532 = vmatpush1.msra.mxu0 0.0
        %1533 = vmatprep.subr.mxu0 0.0
        %1534 = vmatpush1.msra.mxu0 0.0
        %1535 = vmatprep.subr.mxu0 0.0
        %1536 = vmatpush1.msra.mxu0 0.0
        %1537 = vmatprep.subr.mxu0 0.0
        %1538 = vmatpush1.msra.mxu0 0.0
        %1539 = vmatprep.subr.mxu0 0.0
        %1540 = vmatpush1.msra.mxu0 0.0
        %1541 = vmatprep.subr.mxu0 0.0
        %1542 = vmatpush1.msra.mxu0 0.0
        %1543 = vmatprep.subr.mxu0 0.0
        %1544 = vmatpush1.msra.mxu0 0.0
        %1545 = vmatprep.subr.mxu0 0.0
        %1546 = vmatpush1.msra.mxu0 0.0
        %1547 = vmatprep.subr.mxu0 0.0
        %1548 = vmatpush1.msra.mxu0 %v1515
        %1549 = vmatprep.subr.mxu0 0.0
        %1550 = vmatpush2.msra.mxu0 0.0
        %1551 = vmatprep.subr.mxu0 0.0
        %1552 = vmatpush2.msra.mxu0 0.0
        %1553 = vmatprep.subr.mxu0 0.0
        %1554 = vmatpush2.msra.mxu0 0.0
        %1555 = vmatprep.subr.mxu0 0.0
        %1556 = vmatpush2.msra.mxu0 0.0
        %1557 = vmatprep.subr.mxu0 0.0
        %1558 = vmatpush2.msra.mxu0 0.0
        %1559 = vmatprep.subr.mxu0 0.0
        %1560 = vmatpush2.msra.mxu0 0.0
        %1561 = vmatprep.subr.mxu0 0.0
        %1562 = vmatpush2.msra.mxu0 0.0
        %1563 = vmatprep.subr.mxu0 0.0
        %1564 = vmatpush2.msra.mxu0 0.0
        %1565 = vmatprep.subr.mxu0 0.0
        %1566 = vmatpush2.msra.mxu0 0.0
        %1567 = vmatprep.subr.mxu0 0.0
        %1568 = vmatpush2.msra.mxu0 0.0
        %1569 = vmatprep.subr.mxu0 0.0
        %1570 = vmatpush2.msra.mxu0 0.0
        %1571 = vmatprep.subr.mxu0 0.0
        %1572 = vmatpush2.msra.mxu0 0.0
        %1573 = vmatprep.subr.mxu0 0.0
        %1574 = vmatpush2.msra.mxu0 0.0
        %1575 = vmatprep.subr.mxu0 0.0
        %1576 = vmatpush2.msra.mxu0 0.0
        %1577 = vmatprep.subr.mxu0 0.0
        %1578 = vmatpush2.msra.mxu0 0.0
        %1579 = vmatprep.subr.mxu0 0.0
        %1580 = vmatpush2.msra.mxu0 0.0
        %1581 = vmatprep.mubr.f32.mxu0 0.0
        %1582 = vmatmul.mubr.f32.gmra.mxu0 %v1419
        %v1583 = vpop.f32.mrf.mxu0
        %v1584 = vadd.f32 0.0, %v1583
        %v1585 = vpop.f32.mrf.mxu0
        %1586 = vmatprep.mubr.f32.mxu0 0.0
        %1587 = vmatmul.mubr.f32.gmra.mxu0 %v1422
        %v1588 = vpop.f32.mrf.mxu0
        %v1589 = vadd.f32 0.0, %v1588
        %v1590 = vpop.f32.mrf.mxu0
        %1591 = vmatprep.mubr.f32.mxu0 0.0
        %1592 = vmatmul.mubr.f32.gmra.mxu0 %v1425
        %v1593 = vpop.f32.mrf.mxu0
        %v1594 = vadd.f32 0.0, %v1593
        %v1595 = vpop.f32.mrf.mxu0
        %1596 = vmatprep.mubr.f32.mxu0 0.0
        %1597 = vmatmul.mubr.f32.gmra.mxu0 %v1428
        %v1598 = vpop.f32.mrf.mxu0
        %v1599 = vadd.f32 0.0, %v1598
        %v1600 = vpop.f32.mrf.mxu0
        %1601 = vmatprep.mubr.f32.mxu0 0.0
        %1602 = vmatmul.mubr.f32.gmra.mxu0 %v1431
        %v1603 = vpop.f32.mrf.mxu0
        %v1604 = vadd.f32 0.0, %v1603
        %v1605 = vpop.f32.mrf.mxu0
        %1606 = vmatprep.mubr.f32.mxu0 0.0
        %1607 = vmatmul.mubr.f32.gmra.mxu0 %v1434
        %v1608 = vpop.f32.mrf.mxu0
        %v1609 = vadd.f32 0.0, %v1608
        %v1610 = vpop.f32.mrf.mxu0
        %1611 = vmatprep.mubr.f32.mxu0 0.0
        %1612 = vmatmul.mubr.f32.gmra.mxu0 %v1437
        %v1613 = vpop.f32.mrf.mxu0
        %v1614 = vadd.f32 0.0, %v1613
        %v1615 = vpop.f32.mrf.mxu0
        %1616 = vmatprep.mubr.f32.mxu0 0.0
        %1617 = vmatmul.mubr.f32.gmra.mxu0 %v1440
        %v1618 = vpop.f32.mrf.mxu0
        %v1619 = vadd.f32 0.0, %v1618
        %v1620 = vpop.f32.mrf.mxu0
        %1621 = vmatprep.mubr.f32.mxu0 0.0
        %1622 = vmatmul.mubr.f32.gmra.mxu0 %v1443
        %v1623 = vpop.f32.mrf.mxu0
        %v1624 = vadd.f32 0.0, %v1623
        %v1625 = vpop.f32.mrf.mxu0
        %1626 = vmatprep.mubr.f32.mxu0 0.0
        %1627 = vmatmul.mubr.f32.gmra.mxu0 %v1446
        %v1628 = vpop.f32.mrf.mxu0
        %v1629 = vadd.f32 0.0, %v1628
        %v1630 = vpop.f32.mrf.mxu0
        %1631 = vmatprep.mubr.f32.mxu0 0.0
        %1632 = vmatmul.mubr.f32.gmra.mxu0 %v1449
        %v1633 = vpop.f32.mrf.mxu0
        %v1634 = vadd.f32 0.0, %v1633
        %v1635 = vpop.f32.mrf.mxu0
        %1636 = vmatprep.mubr.f32.mxu0 0.0
        %1637 = vmatmul.mubr.f32.gmra.mxu0 %v1452
        %v1638 = vpop.f32.mrf.mxu0
        %v1639 = vadd.f32 0.0, %v1638
        %v1640 = vpop.f32.mrf.mxu0
        %1641 = vmatprep.mubr.f32.mxu0 0.0
        %1642 = vmatmul.mubr.f32.gmra.mxu0 %v1455
        %v1643 = vpop.f32.mrf.mxu0
        %v1644 = vadd.f32 0.0, %v1643
        %v1645 = vpop.f32.mrf.mxu0
        %1646 = vmatprep.mubr.f32.mxu0 0.0
        %1647 = vmatmul.mubr.f32.gmra.mxu0 %v1458
        %v1648 = vpop.f32.mrf.mxu0
        %v1649 = vadd.f32 0.0, %v1648
        %v1650 = vpop.f32.mrf.mxu0
        %1651 = vmatprep.mubr.f32.mxu0 0.0
        %1652 = vmatmul.mubr.f32.gmra.mxu0 %v1461
        %v1653 = vpop.f32.mrf.mxu0
        %v1654 = vadd.f32 0.0, %v1653
        %v1655 = vpop.f32.mrf.mxu0
        %1656 = vmatprep.mubr.f32.mxu0 0.0
        %1657 = vmatmul.mubr.f32.gmra.mxu0 %v1464
        %v1658 = vpop.f32.mrf.mxu0
        %v1659 = vadd.f32 0.0, %v1658
        %v1660 = vpop.f32.mrf.mxu0
        %1661 = vmatprep.mubr.f32.mxu0 0.0
        %1662 = vmatmul.mubr.f32.gmra.mxu0 %v1467
        %v1663 = vpop.f32.mrf.mxu0
        %v1664 = vadd.f32 0.0, %v1663
        %v1665 = vpop.f32.mrf.mxu0
        %1666 = vmatprep.mubr.f32.mxu0 0.0
        %1667 = vmatmul.mubr.f32.gmra.mxu0 %v1470
        %v1668 = vpop.f32.mrf.mxu0
        %v1669 = vadd.f32 0.0, %v1668
        %v1670 = vpop.f32.mrf.mxu0
        %1671 = vmatprep.mubr.f32.mxu0 0.0
        %1672 = vmatmul.mubr.f32.gmra.mxu0 %v1473
        %v1673 = vpop.f32.mrf.mxu0
        %v1674 = vadd.f32 0.0, %v1673
        %v1675 = vpop.f32.mrf.mxu0
        %1676 = vmatprep.mubr.f32.mxu0 0.0
        %1677 = vmatmul.mubr.f32.gmra.mxu0 %v1476
        %v1678 = vpop.f32.mrf.mxu0
        %v1679 = vadd.f32 0.0, %v1678
        %v1680 = vpop.f32.mrf.mxu0
        %1681 = vmatprep.mubr.f32.mxu0 0.0
        %1682 = vmatmul.mubr.f32.gmra.mxu0 %v1479
        %v1683 = vpop.f32.mrf.mxu0
        %v1684 = vadd.f32 0.0, %v1683
        %v1685 = vpop.f32.mrf.mxu0
        %1686 = vmatprep.mubr.f32.mxu0 0.0
        %1687 = vmatmul.mubr.f32.gmra.mxu0 %v1482
        %v1688 = vpop.f32.mrf.mxu0
        %v1689 = vadd.f32 0.0, %v1688
        %v1690 = vpop.f32.mrf.mxu0
        %1691 = vmatprep.mubr.f32.mxu0 0.0
        %1692 = vmatmul.mubr.f32.gmra.mxu0 %v1485
        %v1693 = vpop.f32.mrf.mxu0
        %v1694 = vadd.f32 0.0, %v1693
        %v1695 = vpop.f32.mrf.mxu0
        %1696 = vmatprep.mubr.f32.mxu0 0.0
        %1697 = vmatmul.mubr.f32.gmra.mxu0 %v1488
        %v1698 = vpop.f32.mrf.mxu0
        %v1699 = vadd.f32 0.0, %v1698
        %v1700 = vpop.f32.mrf.mxu0
        %1701 = vmatprep.mubr.f32.mxu0 0.0
        %1702 = vmatmul.mubr.f32.gmra.mxu0 %v1491
        %v1703 = vpop.f32.mrf.mxu0
        %v1704 = vadd.f32 0.0, %v1703
        %v1705 = vpop.f32.mrf.mxu0
        %1706 = vmatprep.mubr.f32.mxu0 0.0
        %1707 = vmatmul.mubr.f32.gmra.mxu0 %v1494
        %v1708 = vpop.f32.mrf.mxu0
        %v1709 = vadd.f32 0.0, %v1708
        %v1710 = vpop.f32.mrf.mxu0
        %1711 = vmatprep.mubr.f32.mxu0 0.0
        %1712 = vmatmul.mubr.f32.gmra.mxu0 %v1497
        %v1713 = vpop.f32.mrf.mxu0
        %v1714 = vadd.f32 0.0, %v1713
        %v1715 = vpop.f32.mrf.mxu0
        %1716 = vmatprep.mubr.f32.mxu0 0.0
        %1717 = vmatmul.mubr.f32.gmra.mxu0 %v1500
        %v1718 = vpop.f32.mrf.mxu0
        %v1719 = vadd.f32 0.0, %v1718
        %v1720 = vpop.f32.mrf.mxu0
        %1721 = vmatprep.mubr.f32.mxu0 0.0
        %1722 = vmatmul.mubr.f32.gmra.mxu0 %v1503
        %v1723 = vpop.f32.mrf.mxu0
        %v1724 = vadd.f32 0.0, %v1723
        %v1725 = vpop.f32.mrf.mxu0
        %1726 = vmatprep.mubr.f32.mxu0 0.0
        %1727 = vmatmul.mubr.f32.gmra.mxu0 %v1506
        %v1728 = vpop.f32.mrf.mxu0
        %v1729 = vadd.f32 0.0, %v1728
        %v1730 = vpop.f32.mrf.mxu0
        %1731 = vmatprep.mubr.f32.mxu0 0.0
        %1732 = vmatmul.mubr.f32.gmra.mxu0 %v1509
        %v1733 = vpop.f32.mrf.mxu0
        %v1734 = vadd.f32 0.0, %v1733
        %v1735 = vpop.f32.mrf.mxu0
        %1736 = vmatprep.mubr.f32.mxu0 0.0
        %1737 = vmatmul.mubr.f32.gmra.mxu0 %v1512
        %v1738 = vpop.f32.mrf.mxu0
        %v1739 = vadd.f32 0.0, %v1738
        %v1740 = vpop.f32.mrf.mxu0
        %1741 = vdwg.mxu0
        %v1742 = vadd.f32 %v1351, %v1584
        %v1743 = vadd.f32 %v1352, %v1589
        %v1744 = vadd.f32 %v1353, %v1594
        %v1745 = vadd.f32 %v1354, %v1599
        %v1746 = vadd.f32 %v1355, %v1604
        %v1747 = vadd.f32 %v1356, %v1609
        %v1748 = vadd.f32 %v1357, %v1614
        %v1749 = vadd.f32 %v1358, %v1619
        %v1750 = vadd.f32 %v1359, %v1624
        %v1751 = vadd.f32 %v1360, %v1629
        %v1752 = vadd.f32 %v1361, %v1634
        %v1753 = vadd.f32 %v1362, %v1639
        %v1754 = vadd.f32 %v1363, %v1644
        %v1755 = vadd.f32 %v1364, %v1649
        %v1756 = vadd.f32 %v1365, %v1654
        %v1757 = vadd.f32 %v1366, %v1659
        %v1758 = vadd.f32 %v1367, %v1664
        %v1759 = vadd.f32 %v1368, %v1669
        %v1760 = vadd.f32 %v1369, %v1674
        %v1761 = vadd.f32 %v1370, %v1679
        %v1762 = vadd.f32 %v1371, %v1684
        %v1763 = vadd.f32 %v1372, %v1689
        %v1764 = vadd.f32 %v1373, %v1694
        %v1765 = vadd.f32 %v1374, %v1699
        %v1766 = vadd.f32 %v1375, %v1704
        %v1767 = vadd.f32 %v1376, %v1709
        %v1768 = vadd.f32 %v1377, %v1714
        %v1769 = vadd.f32 %v1378, %v1719
        %v1770 = vadd.f32 %v1379, %v1724
        %v1771 = vadd.f32 %v1380, %v1729
        %v1772 = vadd.f32 %v1381, %v1734
        %v1773 = vadd.f32 %v1382, %v1739
        %v1774 = vld [vmem:[%s1383 + $0x1] sm:$0xff]
        %v1775 = vld [vmem:[%s1383 + $0x9] sm:$0xff]
        %v1776 = vld [vmem:[%s1383 + $0x19] sm:$0xff]
        %v1777 = vld [vmem:[%s1383 + $0x21] sm:$0xff]
        %v1778 = vld [vmem:[%s1383 + $0x31] sm:$0xff]
        %v1779 = vld [vmem:[%s1383 + $0x39] sm:$0xff]
        %v1780 = vld [vmem:[%s1383 + $0x49] sm:$0xff]
        %v1781 = vld [vmem:[%s1383 + $0x51] sm:$0xff]
        %v1782 = vld [vmem:[%s1383 + $0x61] sm:$0xff]
        %v1783 = vld [vmem:[%s1383 + $0x69] sm:$0xff]
        %v1784 = vld [vmem:[%s1383 + $0x79] sm:$0xff]
        %v1785 = vld [vmem:[%s1383 + $0x81] sm:$0xff]
        %v1786 = vld [vmem:[%s1383 + $0x91] sm:$0xff]
        %v1787 = vld [vmem:[%s1383 + $0x99] sm:$0xff]
        %v1788 = vld [vmem:[%s1383 + $0xa9] sm:$0xff]
        %v1789 = vld [vmem:[%s1383 + $0xb1] sm:$0xff]
        %v1790 = vld [vmem:[%s1383 + $0xc1] sm:$0xff]
        %v1791 = vld [vmem:[%s1383 + $0xc9] sm:$0xff]
        %v1792 = vld [vmem:[%s1383 + $0xd9] sm:$0xff]
        %v1793 = vld [vmem:[%s1383 + $0xe1] sm:$0xff]
        %v1794 = vld [vmem:[%s1383 + $0xf1] sm:$0xff]
        %v1795 = vld [vmem:[%s1383 + $0xf9] sm:$0xff]
        %v1796 = vld [vmem:[%s1383 + $0x109] sm:$0xff]
        %v1797 = vld [vmem:[%s1383 + $0x111] sm:$0xff]
        %v1798 = vld [vmem:[%s1383 + $0x121] sm:$0xff]
        %v1799 = vld [vmem:[%s1383 + $0x129] sm:$0xff]
        %v1800 = vld [vmem:[%s1383 + $0x139] sm:$0xff]
        %v1801 = vld [vmem:[%s1383 + $0x141] sm:$0xff]
        %v1802 = vld [vmem:[%s1383 + $0x151] sm:$0xff]
        %v1803 = vld [vmem:[%s1383 + $0x159] sm:$0xff]
        %v1804 = vld [vmem:[%s1383 + $0x169] sm:$0xff]
        %v1805 = vld [vmem:[%s1383 + $0x171] sm:$0xff]
        %s1806 = scalar_lea.vmem %s1, 16
        %v1807 = vld [vmem:[%s1806] sm:$0xf]
        %v1809 = vsel %vm343, %v1774, 0
        %v1812 = vsel %vm343, %v1775, 0
        %v1815 = vsel %vm343, %v1776, 0
        %v1818 = vsel %vm343, %v1777, 0
        %v1821 = vsel %vm343, %v1778, 0
        %v1824 = vsel %vm343, %v1779, 0
        %v1827 = vsel %vm343, %v1780, 0
        %v1830 = vsel %vm343, %v1781, 0
        %v1833 = vsel %vm343, %v1782, 0
        %v1836 = vsel %vm343, %v1783, 0
        %v1839 = vsel %vm343, %v1784, 0
        %v1842 = vsel %vm343, %v1785, 0
        %v1845 = vsel %vm343, %v1786, 0
        %v1848 = vsel %vm343, %v1787, 0
        %v1851 = vsel %vm343, %v1788, 0
        %v1854 = vsel %vm343, %v1789, 0
        %v1857 = vsel %vm343, %v1790, 0
        %v1860 = vsel %vm343, %v1791, 0
        %v1863 = vsel %vm343, %v1792, 0
        %v1866 = vsel %vm343, %v1793, 0
        %v1869 = vsel %vm343, %v1794, 0
        %v1872 = vsel %vm343, %v1795, 0
        %v1875 = vsel %vm343, %v1796, 0
        %v1878 = vsel %vm343, %v1797, 0
        %v1881 = vsel %vm343, %v1798, 0
        %v1884 = vsel %vm343, %v1799, 0
        %v1887 = vsel %vm343, %v1800, 0
        %v1890 = vsel %vm343, %v1801, 0
        %v1893 = vsel %vm343, %v1802, 0
        %v1896 = vsel %vm343, %v1803, 0
        %v1899 = vsel %vm343, %v1804, 0
        %v1902 = vsel %vm343, %v1805, 0
        %v1905 = vsel %vm440, %v1807, 0
        %1907 = vmatprep.subr.mxu0 0.0
        %1908 = vmatpush1.msra.mxu0 0.0
        %1909 = vmatprep.subr.mxu0 0.0
        %1910 = vmatpush1.msra.mxu0 0.0
        %1911 = vmatprep.subr.mxu0 0.0
        %1912 = vmatpush1.msra.mxu0 0.0
        %1913 = vmatprep.subr.mxu0 0.0
        %1914 = vmatpush1.msra.mxu0 0.0
        %1915 = vmatprep.subr.mxu0 0.0
        %1916 = vmatpush1.msra.mxu0 0.0
        %1917 = vmatprep.subr.mxu0 0.0
        %1918 = vmatpush1.msra.mxu0 0.0
        %1919 = vmatprep.subr.mxu0 0.0
        %1920 = vmatpush1.msra.mxu0 0.0
        %1921 = vmatprep.subr.mxu0 0.0
        %1922 = vmatpush1.msra.mxu0 0.0
        %1923 = vmatprep.subr.mxu0 0.0
        %1924 = vmatpush1.msra.mxu0 0.0
        %1925 = vmatprep.subr.mxu0 0.0
        %1926 = vmatpush1.msra.mxu0 0.0
        %1927 = vmatprep.subr.mxu0 0.0
        %1928 = vmatpush1.msra.mxu0 0.0
        %1929 = vmatprep.subr.mxu0 0.0
        %1930 = vmatpush1.msra.mxu0 0.0
        %1931 = vmatprep.subr.mxu0 0.0
        %1932 = vmatpush1.msra.mxu0 0.0
        %1933 = vmatprep.subr.mxu0 0.0
        %1934 = vmatpush1.msra.mxu0 0.0
        %1935 = vmatprep.subr.mxu0 0.0
        %1936 = vmatpush1.msra.mxu0 0.0
        %1937 = vmatprep.subr.mxu0 0.0
        %1938 = vmatpush1.msra.mxu0 %v1905
        %1939 = vmatprep.subr.mxu0 0.0
        %1940 = vmatpush2.msra.mxu0 0.0
        %1941 = vmatprep.subr.mxu0 0.0
        %1942 = vmatpush2.msra.mxu0 0.0
        %1943 = vmatprep.subr.mxu0 0.0
        %1944 = vmatpush2.msra.mxu0 0.0
        %1945 = vmatprep.subr.mxu0 0.0
        %1946 = vmatpush2.msra.mxu0 0.0
        %1947 = vmatprep.subr.mxu0 0.0
        %1948 = vmatpush2.msra.mxu0 0.0
        %1949 = vmatprep.subr.mxu0 0.0
        %1950 = vmatpush2.msra.mxu0 0.0
        %1951 = vmatprep.subr.mxu0 0.0
        %1952 = vmatpush2.msra.mxu0 0.0
        %1953 = vmatprep.subr.mxu0 0.0
        %1954 = vmatpush2.msra.mxu0 0.0
        %1955 = vmatprep.subr.mxu0 0.0
        %1956 = vmatpush2.msra.mxu0 0.0
        %1957 = vmatprep.subr.mxu0 0.0
        %1958 = vmatpush2.msra.mxu0 0.0
        %1959 = vmatprep.subr.mxu0 0.0
        %1960 = vmatpush2.msra.mxu0 0.0
        %1961 = vmatprep.subr.mxu0 0.0
        %1962 = vmatpush2.msra.mxu0 0.0
        %1963 = vmatprep.subr.mxu0 0.0
        %1964 = vmatpush2.msra.mxu0 0.0
        %1965 = vmatprep.subr.mxu0 0.0
        %1966 = vmatpush2.msra.mxu0 0.0
        %1967 = vmatprep.subr.mxu0 0.0
        %1968 = vmatpush2.msra.mxu0 0.0
        %1969 = vmatprep.subr.mxu0 0.0
        %1970 = vmatpush2.msra.mxu0 0.0
        %1971 = vmatprep.mubr.f32.mxu0 0.0
        %1972 = vmatmul.mubr.f32.gmra.mxu0 %v1809
        %v1973 = vpop.f32.mrf.mxu0
        %v1974 = vadd.f32 0.0, %v1973
        %v1975 = vpop.f32.mrf.mxu0
        %1976 = vmatprep.mubr.f32.mxu0 0.0
        %1977 = vmatmul.mubr.f32.gmra.mxu0 %v1812
        %v1978 = vpop.f32.mrf.mxu0
        %v1979 = vadd.f32 0.0, %v1978
        %v1980 = vpop.f32.mrf.mxu0
        %1981 = vmatprep.mubr.f32.mxu0 0.0
        %1982 = vmatmul.mubr.f32.gmra.mxu0 %v1815
        %v1983 = vpop.f32.mrf.mxu0
        %v1984 = vadd.f32 0.0, %v1983
        %v1985 = vpop.f32.mrf.mxu0
        %1986 = vmatprep.mubr.f32.mxu0 0.0
        %1987 = vmatmul.mubr.f32.gmra.mxu0 %v1818
        %v1988 = vpop.f32.mrf.mxu0
        %v1989 = vadd.f32 0.0, %v1988
        %v1990 = vpop.f32.mrf.mxu0
        %1991 = vmatprep.mubr.f32.mxu0 0.0
        %1992 = vmatmul.mubr.f32.gmra.mxu0 %v1821
        %v1993 = vpop.f32.mrf.mxu0
        %v1994 = vadd.f32 0.0, %v1993
        %v1995 = vpop.f32.mrf.mxu0
        %1996 = vmatprep.mubr.f32.mxu0 0.0
        %1997 = vmatmul.mubr.f32.gmra.mxu0 %v1824
        %v1998 = vpop.f32.mrf.mxu0
        %v1999 = vadd.f32 0.0, %v1998
        %v2000 = vpop.f32.mrf.mxu0
        %2001 = vmatprep.mubr.f32.mxu0 0.0
        %2002 = vmatmul.mubr.f32.gmra.mxu0 %v1827
        %v2003 = vpop.f32.mrf.mxu0
        %v2004 = vadd.f32 0.0, %v2003
        %v2005 = vpop.f32.mrf.mxu0
        %2006 = vmatprep.mubr.f32.mxu0 0.0
        %2007 = vmatmul.mubr.f32.gmra.mxu0 %v1830
        %v2008 = vpop.f32.mrf.mxu0
        %v2009 = vadd.f32 0.0, %v2008
        %v2010 = vpop.f32.mrf.mxu0
        %2011 = vmatprep.mubr.f32.mxu0 0.0
        %2012 = vmatmul.mubr.f32.gmra.mxu0 %v1833
        %v2013 = vpop.f32.mrf.mxu0
        %v2014 = vadd.f32 0.0, %v2013
        %v2015 = vpop.f32.mrf.mxu0
        %2016 = vmatprep.mubr.f32.mxu0 0.0
        %2017 = vmatmul.mubr.f32.gmra.mxu0 %v1836
        %v2018 = vpop.f32.mrf.mxu0
        %v2019 = vadd.f32 0.0, %v2018
        %v2020 = vpop.f32.mrf.mxu0
        %2021 = vmatprep.mubr.f32.mxu0 0.0
        %2022 = vmatmul.mubr.f32.gmra.mxu0 %v1839
        %v2023 = vpop.f32.mrf.mxu0
        %v2024 = vadd.f32 0.0, %v2023
        %v2025 = vpop.f32.mrf.mxu0
        %2026 = vmatprep.mubr.f32.mxu0 0.0
        %2027 = vmatmul.mubr.f32.gmra.mxu0 %v1842
        %v2028 = vpop.f32.mrf.mxu0
        %v2029 = vadd.f32 0.0, %v2028
        %v2030 = vpop.f32.mrf.mxu0
        %2031 = vmatprep.mubr.f32.mxu0 0.0
        %2032 = vmatmul.mubr.f32.gmra.mxu0 %v1845
        %v2033 = vpop.f32.mrf.mxu0
        %v2034 = vadd.f32 0.0, %v2033
        %v2035 = vpop.f32.mrf.mxu0
        %2036 = vmatprep.mubr.f32.mxu0 0.0
        %2037 = vmatmul.mubr.f32.gmra.mxu0 %v1848
        %v2038 = vpop.f32.mrf.mxu0
        %v2039 = vadd.f32 0.0, %v2038
        %v2040 = vpop.f32.mrf.mxu0
        %2041 = vmatprep.mubr.f32.mxu0 0.0
        %2042 = vmatmul.mubr.f32.gmra.mxu0 %v1851
        %v2043 = vpop.f32.mrf.mxu0
        %v2044 = vadd.f32 0.0, %v2043
        %v2045 = vpop.f32.mrf.mxu0
        %2046 = vmatprep.mubr.f32.mxu0 0.0
        %2047 = vmatmul.mubr.f32.gmra.mxu0 %v1854
        %v2048 = vpop.f32.mrf.mxu0
        %v2049 = vadd.f32 0.0, %v2048
        %v2050 = vpop.f32.mrf.mxu0
        %2051 = vmatprep.mubr.f32.mxu0 0.0
        %2052 = vmatmul.mubr.f32.gmra.mxu0 %v1857
        %v2053 = vpop.f32.mrf.mxu0
        %v2054 = vadd.f32 0.0, %v2053
        %v2055 = vpop.f32.mrf.mxu0
        %2056 = vmatprep.mubr.f32.mxu0 0.0
        %2057 = vmatmul.mubr.f32.gmra.mxu0 %v1860
        %v2058 = vpop.f32.mrf.mxu0
        %v2059 = vadd.f32 0.0, %v2058
        %v2060 = vpop.f32.mrf.mxu0
        %2061 = vmatprep.mubr.f32.mxu0 0.0
        %2062 = vmatmul.mubr.f32.gmra.mxu0 %v1863
        %v2063 = vpop.f32.mrf.mxu0
        %v2064 = vadd.f32 0.0, %v2063
        %v2065 = vpop.f32.mrf.mxu0
        %2066 = vmatprep.mubr.f32.mxu0 0.0
        %2067 = vmatmul.mubr.f32.gmra.mxu0 %v1866
        %v2068 = vpop.f32.mrf.mxu0
        %v2069 = vadd.f32 0.0, %v2068
        %v2070 = vpop.f32.mrf.mxu0
        %2071 = vmatprep.mubr.f32.mxu0 0.0
        %2072 = vmatmul.mubr.f32.gmra.mxu0 %v1869
        %v2073 = vpop.f32.mrf.mxu0
        %v2074 = vadd.f32 0.0, %v2073
        %v2075 = vpop.f32.mrf.mxu0
        %2076 = vmatprep.mubr.f32.mxu0 0.0
        %2077 = vmatmul.mubr.f32.gmra.mxu0 %v1872
        %v2078 = vpop.f32.mrf.mxu0
        %v2079 = vadd.f32 0.0, %v2078
        %v2080 = vpop.f32.mrf.mxu0
        %2081 = vmatprep.mubr.f32.mxu0 0.0
        %2082 = vmatmul.mubr.f32.gmra.mxu0 %v1875
        %v2083 = vpop.f32.mrf.mxu0
        %v2084 = vadd.f32 0.0, %v2083
        %v2085 = vpop.f32.mrf.mxu0
        %2086 = vmatprep.mubr.f32.mxu0 0.0
        %2087 = vmatmul.mubr.f32.gmra.mxu0 %v1878
        %v2088 = vpop.f32.mrf.mxu0
        %v2089 = vadd.f32 0.0, %v2088
        %v2090 = vpop.f32.mrf.mxu0
        %2091 = vmatprep.mubr.f32.mxu0 0.0
        %2092 = vmatmul.mubr.f32.gmra.mxu0 %v1881
        %v2093 = vpop.f32.mrf.mxu0
        %v2094 = vadd.f32 0.0, %v2093
        %v2095 = vpop.f32.mrf.mxu0
        %2096 = vmatprep.mubr.f32.mxu0 0.0
        %2097 = vmatmul.mubr.f32.gmra.mxu0 %v1884
        %v2098 = vpop.f32.mrf.mxu0
        %v2099 = vadd.f32 0.0, %v2098
        %v2100 = vpop.f32.mrf.mxu0
        %2101 = vmatprep.mubr.f32.mxu0 0.0
        %2102 = vmatmul.mubr.f32.gmra.mxu0 %v1887
        %v2103 = vpop.f32.mrf.mxu0
        %v2104 = vadd.f32 0.0, %v2103
        %v2105 = vpop.f32.mrf.mxu0
        %2106 = vmatprep.mubr.f32.mxu0 0.0
        %2107 = vmatmul.mubr.f32.gmra.mxu0 %v1890
        %v2108 = vpop.f32.mrf.mxu0
        %v2109 = vadd.f32 0.0, %v2108
        %v2110 = vpop.f32.mrf.mxu0
        %2111 = vmatprep.mubr.f32.mxu0 0.0
        %2112 = vmatmul.mubr.f32.gmra.mxu0 %v1893
        %v2113 = vpop.f32.mrf.mxu0
        %v2114 = vadd.f32 0.0, %v2113
        %v2115 = vpop.f32.mrf.mxu0
        %2116 = vmatprep.mubr.f32.mxu0 0.0
        %2117 = vmatmul.mubr.f32.gmra.mxu0 %v1896
        %v2118 = vpop.f32.mrf.mxu0
        %v2119 = vadd.f32 0.0, %v2118
        %v2120 = vpop.f32.mrf.mxu0
        %2121 = vmatprep.mubr.f32.mxu0 0.0
        %2122 = vmatmul.mubr.f32.gmra.mxu0 %v1899
        %v2123 = vpop.f32.mrf.mxu0
        %v2124 = vadd.f32 0.0, %v2123
        %v2125 = vpop.f32.mrf.mxu0
        %2126 = vmatprep.mubr.f32.mxu0 0.0
        %2127 = vmatmul.mubr.f32.gmra.mxu0 %v1902
        %v2128 = vpop.f32.mrf.mxu0
        %v2129 = vadd.f32 0.0, %v2128
        %v2130 = vpop.f32.mrf.mxu0
        %2131 = vdwg.mxu0
        %v2132 = vadd.f32 %v1742, %v1974
        %v2133 = vadd.f32 %v1743, %v1979
        %v2134 = vadd.f32 %v1744, %v1984
        %v2135 = vadd.f32 %v1745, %v1989
        %v2136 = vadd.f32 %v1746, %v1994
        %v2137 = vadd.f32 %v1747, %v1999
        %v2138 = vadd.f32 %v1748, %v2004
        %v2139 = vadd.f32 %v1749, %v2009
        %v2140 = vadd.f32 %v1750, %v2014
        %v2141 = vadd.f32 %v1751, %v2019
        %v2142 = vadd.f32 %v1752, %v2024
        %v2143 = vadd.f32 %v1753, %v2029
        %v2144 = vadd.f32 %v1754, %v2034
        %v2145 = vadd.f32 %v1755, %v2039
        %v2146 = vadd.f32 %v1756, %v2044
        %v2147 = vadd.f32 %v1757, %v2049
        %v2148 = vadd.f32 %v1758, %v2054
        %v2149 = vadd.f32 %v1759, %v2059
        %v2150 = vadd.f32 %v1760, %v2064
        %v2151 = vadd.f32 %v1761, %v2069
        %v2152 = vadd.f32 %v1762, %v2074
        %v2153 = vadd.f32 %v1763, %v2079
        %v2154 = vadd.f32 %v1764, %v2084
        %v2155 = vadd.f32 %v1765, %v2089
        %v2156 = vadd.f32 %v1766, %v2094
        %v2157 = vadd.f32 %v1767, %v2099
        %v2158 = vadd.f32 %v1768, %v2104
        %v2159 = vadd.f32 %v1769, %v2109
        %v2160 = vadd.f32 %v1770, %v2114
        %v2161 = vadd.f32 %v1771, %v2119
        %v2162 = vadd.f32 %v1772, %v2124
        %v2163 = vadd.f32 %v1773, %v2129
        %v2164 = vld [vmem:[%s1383 + $0x2] sm:$0xff]
        %v2165 = vld [vmem:[%s1383 + $0xa] sm:$0xff]
        %v2166 = vld [vmem:[%s1383 + $0x1a] sm:$0xff]
        %v2167 = vld [vmem:[%s1383 + $0x22] sm:$0xff]
        %v2168 = vld [vmem:[%s1383 + $0x32] sm:$0xff]
        %v2169 = vld [vmem:[%s1383 + $0x3a] sm:$0xff]
        %v2170 = vld [vmem:[%s1383 + $0x4a] sm:$0xff]
        %v2171 = vld [vmem:[%s1383 + $0x52] sm:$0xff]
        %v2172 = vld [vmem:[%s1383 + $0x62] sm:$0xff]
        %v2173 = vld [vmem:[%s1383 + $0x6a] sm:$0xff]
        %v2174 = vld [vmem:[%s1383 + $0x7a] sm:$0xff]
        %v2175 = vld [vmem:[%s1383 + $0x82] sm:$0xff]
        %v2176 = vld [vmem:[%s1383 + $0x92] sm:$0xff]
        %v2177 = vld [vmem:[%s1383 + $0x9a] sm:$0xff]
        %v2178 = vld [vmem:[%s1383 + $0xaa] sm:$0xff]
        %v2179 = vld [vmem:[%s1383 + $0xb2] sm:$0xff]
        %v2180 = vld [vmem:[%s1383 + $0xc2] sm:$0xff]
        %v2181 = vld [vmem:[%s1383 + $0xca] sm:$0xff]
        %v2182 = vld [vmem:[%s1383 + $0xda] sm:$0xff]
        %v2183 = vld [vmem:[%s1383 + $0xe2] sm:$0xff]
        %v2184 = vld [vmem:[%s1383 + $0xf2] sm:$0xff]
        %v2185 = vld [vmem:[%s1383 + $0xfa] sm:$0xff]
        %v2186 = vld [vmem:[%s1383 + $0x10a] sm:$0xff]
        %v2187 = vld [vmem:[%s1383 + $0x112] sm:$0xff]
        %v2188 = vld [vmem:[%s1383 + $0x122] sm:$0xff]
        %v2189 = vld [vmem:[%s1383 + $0x12a] sm:$0xff]
        %v2190 = vld [vmem:[%s1383 + $0x13a] sm:$0xff]
        %v2191 = vld [vmem:[%s1383 + $0x142] sm:$0xff]
        %v2192 = vld [vmem:[%s1383 + $0x152] sm:$0xff]
        %v2193 = vld [vmem:[%s1383 + $0x15a] sm:$0xff]
        %v2194 = vld [vmem:[%s1383 + $0x16a] sm:$0xff]
        %v2195 = vld [vmem:[%s1383 + $0x172] sm:$0xff]
        %s2196 = scalar_lea.vmem %s1, 20
        %v2197 = vld [vmem:[%s2196] sm:$0xf]
        %v2199 = vsel %vm343, %v2164, 0
        %v2202 = vsel %vm343, %v2165, 0
        %v2205 = vsel %vm343, %v2166, 0
        %v2208 = vsel %vm343, %v2167, 0
        %v2211 = vsel %vm343, %v2168, 0
        %v2214 = vsel %vm343, %v2169, 0
        %v2217 = vsel %vm343, %v2170, 0
        %v2220 = vsel %vm343, %v2171, 0
        %v2223 = vsel %vm343, %v2172, 0
        %v2226 = vsel %vm343, %v2173, 0
        %v2229 = vsel %vm343, %v2174, 0
        %v2232 = vsel %vm343, %v2175, 0
        %v2235 = vsel %vm343, %v2176, 0
        %v2238 = vsel %vm343, %v2177, 0
        %v2241 = vsel %vm343, %v2178, 0
        %v2244 = vsel %vm343, %v2179, 0
        %v2247 = vsel %vm343, %v2180, 0
        %v2250 = vsel %vm343, %v2181, 0
        %v2253 = vsel %vm343, %v2182, 0
        %v2256 = vsel %vm343, %v2183, 0
        %v2259 = vsel %vm343, %v2184, 0
        %v2262 = vsel %vm343, %v2185, 0
        %v2265 = vsel %vm343, %v2186, 0
        %v2268 = vsel %vm343, %v2187, 0
        %v2271 = vsel %vm343, %v2188, 0
        %v2274 = vsel %vm343, %v2189, 0
        %v2277 = vsel %vm343, %v2190, 0
        %v2280 = vsel %vm343, %v2191, 0
        %v2283 = vsel %vm343, %v2192, 0
        %v2286 = vsel %vm343, %v2193, 0
        %v2289 = vsel %vm343, %v2194, 0
        %v2292 = vsel %vm343, %v2195, 0
        %v2295 = vsel %vm440, %v2197, 0
        %2297 = vmatprep.subr.mxu0 0.0
        %2298 = vmatpush1.msra.mxu0 0.0
        %2299 = vmatprep.subr.mxu0 0.0
        %2300 = vmatpush1.msra.mxu0 0.0
        %2301 = vmatprep.subr.mxu0 0.0
        %2302 = vmatpush1.msra.mxu0 0.0
        %2303 = vmatprep.subr.mxu0 0.0
        %2304 = vmatpush1.msra.mxu0 0.0
        %2305 = vmatprep.subr.mxu0 0.0
        %2306 = vmatpush1.msra.mxu0 0.0
        %2307 = vmatprep.subr.mxu0 0.0
        %2308 = vmatpush1.msra.mxu0 0.0
        %2309 = vmatprep.subr.mxu0 0.0
        %2310 = vmatpush1.msra.mxu0 0.0
        %2311 = vmatprep.subr.mxu0 0.0
        %2312 = vmatpush1.msra.mxu0 0.0
        %2313 = vmatprep.subr.mxu0 0.0
        %2314 = vmatpush1.msra.mxu0 0.0
        %2315 = vmatprep.subr.mxu0 0.0
        %2316 = vmatpush1.msra.mxu0 0.0
        %2317 = vmatprep.subr.mxu0 0.0
        %2318 = vmatpush1.msra.mxu0 0.0
        %2319 = vmatprep.subr.mxu0 0.0
        %2320 = vmatpush1.msra.mxu0 0.0
        %2321 = vmatprep.subr.mxu0 0.0
        %2322 = vmatpush1.msra.mxu0 0.0
        %2323 = vmatprep.subr.mxu0 0.0
        %2324 = vmatpush1.msra.mxu0 0.0
        %2325 = vmatprep.subr.mxu0 0.0
        %2326 = vmatpush1.msra.mxu0 0.0
        %2327 = vmatprep.subr.mxu0 0.0
        %2328 = vmatpush1.msra.mxu0 %v2295
        %2329 = vmatprep.subr.mxu0 0.0
        %2330 = vmatpush2.msra.mxu0 0.0
        %2331 = vmatprep.subr.mxu0 0.0
        %2332 = vmatpush2.msra.mxu0 0.0
        %2333 = vmatprep.subr.mxu0 0.0
        %2334 = vmatpush2.msra.mxu0 0.0
        %2335 = vmatprep.subr.mxu0 0.0
        %2336 = vmatpush2.msra.mxu0 0.0
        %2337 = vmatprep.subr.mxu0 0.0
        %2338 = vmatpush2.msra.mxu0 0.0
        %2339 = vmatprep.subr.mxu0 0.0
        %2340 = vmatpush2.msra.mxu0 0.0
        %2341 = vmatprep.subr.mxu0 0.0
        %2342 = vmatpush2.msra.mxu0 0.0
        %2343 = vmatprep.subr.mxu0 0.0
        %2344 = vmatpush2.msra.mxu0 0.0
        %2345 = vmatprep.subr.mxu0 0.0
        %2346 = vmatpush2.msra.mxu0 0.0
        %2347 = vmatprep.subr.mxu0 0.0
        %2348 = vmatpush2.msra.mxu0 0.0
        %2349 = vmatprep.subr.mxu0 0.0
        %2350 = vmatpush2.msra.mxu0 0.0
        %2351 = vmatprep.subr.mxu0 0.0
        %2352 = vmatpush2.msra.mxu0 0.0
        %2353 = vmatprep.subr.mxu0 0.0
        %2354 = vmatpush2.msra.mxu0 0.0
        %2355 = vmatprep.subr.mxu0 0.0
        %2356 = vmatpush2.msra.mxu0 0.0
        %2357 = vmatprep.subr.mxu0 0.0
        %2358 = vmatpush2.msra.mxu0 0.0
        %2359 = vmatprep.subr.mxu0 0.0
        %2360 = vmatpush2.msra.mxu0 0.0
        %2361 = vmatprep.mubr.f32.mxu0 0.0
        %2362 = vmatmul.mubr.f32.gmra.mxu0 %v2199
        %v2363 = vpop.f32.mrf.mxu0
        %v2364 = vadd.f32 0.0, %v2363
        %v2365 = vpop.f32.mrf.mxu0
        %2366 = vmatprep.mubr.f32.mxu0 0.0
        %2367 = vmatmul.mubr.f32.gmra.mxu0 %v2202
        %v2368 = vpop.f32.mrf.mxu0
        %v2369 = vadd.f32 0.0, %v2368
        %v2370 = vpop.f32.mrf.mxu0
        %2371 = vmatprep.mubr.f32.mxu0 0.0
        %2372 = vmatmul.mubr.f32.gmra.mxu0 %v2205
        %v2373 = vpop.f32.mrf.mxu0
        %v2374 = vadd.f32 0.0, %v2373
        %v2375 = vpop.f32.mrf.mxu0
        %2376 = vmatprep.mubr.f32.mxu0 0.0
        %2377 = vmatmul.mubr.f32.gmra.mxu0 %v2208
        %v2378 = vpop.f32.mrf.mxu0
        %v2379 = vadd.f32 0.0, %v2378
        %v2380 = vpop.f32.mrf.mxu0
        %2381 = vmatprep.mubr.f32.mxu0 0.0
        %2382 = vmatmul.mubr.f32.gmra.mxu0 %v2211
        %v2383 = vpop.f32.mrf.mxu0
        %v2384 = vadd.f32 0.0, %v2383
        %v2385 = vpop.f32.mrf.mxu0
        %2386 = vmatprep.mubr.f32.mxu0 0.0
        %2387 = vmatmul.mubr.f32.gmra.mxu0 %v2214
        %v2388 = vpop.f32.mrf.mxu0
        %v2389 = vadd.f32 0.0, %v2388
        %v2390 = vpop.f32.mrf.mxu0
        %2391 = vmatprep.mubr.f32.mxu0 0.0
        %2392 = vmatmul.mubr.f32.gmra.mxu0 %v2217
        %v2393 = vpop.f32.mrf.mxu0
        %v2394 = vadd.f32 0.0, %v2393
        %v2395 = vpop.f32.mrf.mxu0
        %2396 = vmatprep.mubr.f32.mxu0 0.0
        %2397 = vmatmul.mubr.f32.gmra.mxu0 %v2220
        %v2398 = vpop.f32.mrf.mxu0
        %v2399 = vadd.f32 0.0, %v2398
        %v2400 = vpop.f32.mrf.mxu0
        %2401 = vmatprep.mubr.f32.mxu0 0.0
        %2402 = vmatmul.mubr.f32.gmra.mxu0 %v2223
        %v2403 = vpop.f32.mrf.mxu0
        %v2404 = vadd.f32 0.0, %v2403
        %v2405 = vpop.f32.mrf.mxu0
        %2406 = vmatprep.mubr.f32.mxu0 0.0
        %2407 = vmatmul.mubr.f32.gmra.mxu0 %v2226
        %v2408 = vpop.f32.mrf.mxu0
        %v2409 = vadd.f32 0.0, %v2408
        %v2410 = vpop.f32.mrf.mxu0
        %2411 = vmatprep.mubr.f32.mxu0 0.0
        %2412 = vmatmul.mubr.f32.gmra.mxu0 %v2229
        %v2413 = vpop.f32.mrf.mxu0
        %v2414 = vadd.f32 0.0, %v2413
        %v2415 = vpop.f32.mrf.mxu0
        %2416 = vmatprep.mubr.f32.mxu0 0.0
        %2417 = vmatmul.mubr.f32.gmra.mxu0 %v2232
        %v2418 = vpop.f32.mrf.mxu0
        %v2419 = vadd.f32 0.0, %v2418
        %v2420 = vpop.f32.mrf.mxu0
        %2421 = vmatprep.mubr.f32.mxu0 0.0
        %2422 = vmatmul.mubr.f32.gmra.mxu0 %v2235
        %v2423 = vpop.f32.mrf.mxu0
        %v2424 = vadd.f32 0.0, %v2423
        %v2425 = vpop.f32.mrf.mxu0
        %2426 = vmatprep.mubr.f32.mxu0 0.0
        %2427 = vmatmul.mubr.f32.gmra.mxu0 %v2238
        %v2428 = vpop.f32.mrf.mxu0
        %v2429 = vadd.f32 0.0, %v2428
        %v2430 = vpop.f32.mrf.mxu0
        %2431 = vmatprep.mubr.f32.mxu0 0.0
        %2432 = vmatmul.mubr.f32.gmra.mxu0 %v2241
        %v2433 = vpop.f32.mrf.mxu0
        %v2434 = vadd.f32 0.0, %v2433
        %v2435 = vpop.f32.mrf.mxu0
        %2436 = vmatprep.mubr.f32.mxu0 0.0
        %2437 = vmatmul.mubr.f32.gmra.mxu0 %v2244
        %v2438 = vpop.f32.mrf.mxu0
        %v2439 = vadd.f32 0.0, %v2438
        %v2440 = vpop.f32.mrf.mxu0
        %2441 = vmatprep.mubr.f32.mxu0 0.0
        %2442 = vmatmul.mubr.f32.gmra.mxu0 %v2247
        %v2443 = vpop.f32.mrf.mxu0
        %v2444 = vadd.f32 0.0, %v2443
        %v2445 = vpop.f32.mrf.mxu0
        %2446 = vmatprep.mubr.f32.mxu0 0.0
        %2447 = vmatmul.mubr.f32.gmra.mxu0 %v2250
        %v2448 = vpop.f32.mrf.mxu0
        %v2449 = vadd.f32 0.0, %v2448
        %v2450 = vpop.f32.mrf.mxu0
        %2451 = vmatprep.mubr.f32.mxu0 0.0
        %2452 = vmatmul.mubr.f32.gmra.mxu0 %v2253
        %v2453 = vpop.f32.mrf.mxu0
        %v2454 = vadd.f32 0.0, %v2453
        %v2455 = vpop.f32.mrf.mxu0
        %2456 = vmatprep.mubr.f32.mxu0 0.0
        %2457 = vmatmul.mubr.f32.gmra.mxu0 %v2256
        %v2458 = vpop.f32.mrf.mxu0
        %v2459 = vadd.f32 0.0, %v2458
        %v2460 = vpop.f32.mrf.mxu0
        %2461 = vmatprep.mubr.f32.mxu0 0.0
        %2462 = vmatmul.mubr.f32.gmra.mxu0 %v2259
        %v2463 = vpop.f32.mrf.mxu0
        %v2464 = vadd.f32 0.0, %v2463
        %v2465 = vpop.f32.mrf.mxu0
        %2466 = vmatprep.mubr.f32.mxu0 0.0
        %2467 = vmatmul.mubr.f32.gmra.mxu0 %v2262
        %v2468 = vpop.f32.mrf.mxu0
        %v2469 = vadd.f32 0.0, %v2468
        %v2470 = vpop.f32.mrf.mxu0
        %2471 = vmatprep.mubr.f32.mxu0 0.0
        %2472 = vmatmul.mubr.f32.gmra.mxu0 %v2265
        %v2473 = vpop.f32.mrf.mxu0
        %v2474 = vadd.f32 0.0, %v2473
        %v2475 = vpop.f32.mrf.mxu0
        %2476 = vmatprep.mubr.f32.mxu0 0.0
        %2477 = vmatmul.mubr.f32.gmra.mxu0 %v2268
        %v2478 = vpop.f32.mrf.mxu0
        %v2479 = vadd.f32 0.0, %v2478
        %v2480 = vpop.f32.mrf.mxu0
        %2481 = vmatprep.mubr.f32.mxu0 0.0
        %2482 = vmatmul.mubr.f32.gmra.mxu0 %v2271
        %v2483 = vpop.f32.mrf.mxu0
        %v2484 = vadd.f32 0.0, %v2483
        %v2485 = vpop.f32.mrf.mxu0
        %2486 = vmatprep.mubr.f32.mxu0 0.0
        %2487 = vmatmul.mubr.f32.gmra.mxu0 %v2274
        %v2488 = vpop.f32.mrf.mxu0
        %v2489 = vadd.f32 0.0, %v2488
        %v2490 = vpop.f32.mrf.mxu0
        %2491 = vmatprep.mubr.f32.mxu0 0.0
        %2492 = vmatmul.mubr.f32.gmra.mxu0 %v2277
        %v2493 = vpop.f32.mrf.mxu0
        %v2494 = vadd.f32 0.0, %v2493
        %v2495 = vpop.f32.mrf.mxu0
        %2496 = vmatprep.mubr.f32.mxu0 0.0
        %2497 = vmatmul.mubr.f32.gmra.mxu0 %v2280
        %v2498 = vpop.f32.mrf.mxu0
        %v2499 = vadd.f32 0.0, %v2498
        %v2500 = vpop.f32.mrf.mxu0
        %2501 = vmatprep.mubr.f32.mxu0 0.0
        %2502 = vmatmul.mubr.f32.gmra.mxu0 %v2283
        %v2503 = vpop.f32.mrf.mxu0
        %v2504 = vadd.f32 0.0, %v2503
        %v2505 = vpop.f32.mrf.mxu0
        %2506 = vmatprep.mubr.f32.mxu0 0.0
        %2507 = vmatmul.mubr.f32.gmra.mxu0 %v2286
        %v2508 = vpop.f32.mrf.mxu0
        %v2509 = vadd.f32 0.0, %v2508
        %v2510 = vpop.f32.mrf.mxu0
        %2511 = vmatprep.mubr.f32.mxu0 0.0
        %2512 = vmatmul.mubr.f32.gmra.mxu0 %v2289
        %v2513 = vpop.f32.mrf.mxu0
        %v2514 = vadd.f32 0.0, %v2513
        %v2515 = vpop.f32.mrf.mxu0
        %2516 = vmatprep.mubr.f32.mxu0 0.0
        %2517 = vmatmul.mubr.f32.gmra.mxu0 %v2292
        %v2518 = vpop.f32.mrf.mxu0
        %v2519 = vadd.f32 0.0, %v2518
        %v2520 = vpop.f32.mrf.mxu0
        %2521 = vdwg.mxu0
        %v2522 = vadd.f32 %v2132, %v2364
        %v2523 = vadd.f32 %v2133, %v2369
        %v2524 = vadd.f32 %v2134, %v2374
        %v2525 = vadd.f32 %v2135, %v2379
        %v2526 = vadd.f32 %v2136, %v2384
        %v2527 = vadd.f32 %v2137, %v2389
        %v2528 = vadd.f32 %v2138, %v2394
        %v2529 = vadd.f32 %v2139, %v2399
        %v2530 = vadd.f32 %v2140, %v2404
        %v2531 = vadd.f32 %v2141, %v2409
        %v2532 = vadd.f32 %v2142, %v2414
        %v2533 = vadd.f32 %v2143, %v2419
        %v2534 = vadd.f32 %v2144, %v2424
        %v2535 = vadd.f32 %v2145, %v2429
        %v2536 = vadd.f32 %v2146, %v2434
        %v2537 = vadd.f32 %v2147, %v2439
        %v2538 = vadd.f32 %v2148, %v2444
        %v2539 = vadd.f32 %v2149, %v2449
        %v2540 = vadd.f32 %v2150, %v2454
        %v2541 = vadd.f32 %v2151, %v2459
        %v2542 = vadd.f32 %v2152, %v2464
        %v2543 = vadd.f32 %v2153, %v2469
        %v2544 = vadd.f32 %v2154, %v2474
        %v2545 = vadd.f32 %v2155, %v2479
        %v2546 = vadd.f32 %v2156, %v2484
        %v2547 = vadd.f32 %v2157, %v2489
        %v2548 = vadd.f32 %v2158, %v2494
        %v2549 = vadd.f32 %v2159, %v2499
        %v2550 = vadd.f32 %v2160, %v2504
        %v2551 = vadd.f32 %v2161, %v2509
        %v2552 = vadd.f32 %v2162, %v2514
        %v2553 = vadd.f32 %v2163, %v2519
        %s2554 = scalar_lea.vmem %s275, 48
        %v2555 = vld [vmem:[%s2554] sm:$0xff]
        %v2556 = vld [vmem:[%s2554 + $0x8] sm:$0xff]
        %v2557 = vld [vmem:[%s2554 + $0x18] sm:$0xff]
        %v2558 = vld [vmem:[%s2554 + $0x20] sm:$0xff]
        %v2559 = vld [vmem:[%s2554 + $0x30] sm:$0xff]
        %v2560 = vld [vmem:[%s2554 + $0x38] sm:$0xff]
        %v2561 = vld [vmem:[%s2554 + $0x48] sm:$0xff]
        %v2562 = vld [vmem:[%s2554 + $0x50] sm:$0xff]
        %v2563 = vld [vmem:[%s2554 + $0x60] sm:$0xff]
        %v2564 = vld [vmem:[%s2554 + $0x68] sm:$0xff]
        %v2565 = vld [vmem:[%s2554 + $0x78] sm:$0xff]
        %v2566 = vld [vmem:[%s2554 + $0x80] sm:$0xff]
        %v2567 = vld [vmem:[%s2554 + $0x90] sm:$0xff]
        %v2568 = vld [vmem:[%s2554 + $0x98] sm:$0xff]
        %v2569 = vld [vmem:[%s2554 + $0xa8] sm:$0xff]
        %v2570 = vld [vmem:[%s2554 + $0xb0] sm:$0xff]
        %v2571 = vld [vmem:[%s2554 + $0xc0] sm:$0xff]
        %v2572 = vld [vmem:[%s2554 + $0xc8] sm:$0xff]
        %v2573 = vld [vmem:[%s2554 + $0xd8] sm:$0xff]
        %v2574 = vld [vmem:[%s2554 + $0xe0] sm:$0xff]
        %v2575 = vld [vmem:[%s2554 + $0xf0] sm:$0xff]
        %v2576 = vld [vmem:[%s2554 + $0xf8] sm:$0xff]
        %v2577 = vld [vmem:[%s2554 + $0x108] sm:$0xff]
        %v2578 = vld [vmem:[%s2554 + $0x110] sm:$0xff]
        %v2579 = vld [vmem:[%s2554 + $0x120] sm:$0xff]
        %v2580 = vld [vmem:[%s2554 + $0x128] sm:$0xff]
        %v2581 = vld [vmem:[%s2554 + $0x138] sm:$0xff]
        %v2582 = vld [vmem:[%s2554 + $0x140] sm:$0xff]
        %v2583 = vld [vmem:[%s2554 + $0x150] sm:$0xff]
        %v2584 = vld [vmem:[%s2554 + $0x158] sm:$0xff]
        %v2585 = vld [vmem:[%s2554 + $0x168] sm:$0xff]
        %v2586 = vld [vmem:[%s2554 + $0x170] sm:$0xff]
        %s2587 = scalar_lea.vmem %s1, 24
        %v2588 = vld [vmem:[%s2587] sm:$0xf]
        %v2590 = vsel %vm343, %v2555, 0
        %v2593 = vsel %vm343, %v2556, 0
        %v2596 = vsel %vm343, %v2557, 0
        %v2599 = vsel %vm343, %v2558, 0
        %v2602 = vsel %vm343, %v2559, 0
        %v2605 = vsel %vm343, %v2560, 0
        %v2608 = vsel %vm343, %v2561, 0
        %v2611 = vsel %vm343, %v2562, 0
        %v2614 = vsel %vm343, %v2563, 0
        %v2617 = vsel %vm343, %v2564, 0
        %v2620 = vsel %vm343, %v2565, 0
        %v2623 = vsel %vm343, %v2566, 0
        %v2626 = vsel %vm343, %v2567, 0
        %v2629 = vsel %vm343, %v2568, 0
        %v2632 = vsel %vm343, %v2569, 0
        %v2635 = vsel %vm343, %v2570, 0
        %v2638 = vsel %vm343, %v2571, 0
        %v2641 = vsel %vm343, %v2572, 0
        %v2644 = vsel %vm343, %v2573, 0
        %v2647 = vsel %vm343, %v2574, 0
        %v2650 = vsel %vm343, %v2575, 0
        %v2653 = vsel %vm343, %v2576, 0
        %v2656 = vsel %vm343, %v2577, 0
        %v2659 = vsel %vm343, %v2578, 0
        %v2662 = vsel %vm343, %v2579, 0
        %v2665 = vsel %vm343, %v2580, 0
        %v2668 = vsel %vm343, %v2581, 0
        %v2671 = vsel %vm343, %v2582, 0
        %v2674 = vsel %vm343, %v2583, 0
        %v2677 = vsel %vm343, %v2584, 0
        %v2680 = vsel %vm343, %v2585, 0
        %v2683 = vsel %vm343, %v2586, 0
        %v2686 = vsel %vm440, %v2588, 0
        %2688 = vmatprep.subr.mxu0 0.0
        %2689 = vmatpush1.msra.mxu0 0.0
        %2690 = vmatprep.subr.mxu0 0.0
        %2691 = vmatpush1.msra.mxu0 0.0
        %2692 = vmatprep.subr.mxu0 0.0
        %2693 = vmatpush1.msra.mxu0 0.0
        %2694 = vmatprep.subr.mxu0 0.0
        %2695 = vmatpush1.msra.mxu0 0.0
        %2696 = vmatprep.subr.mxu0 0.0
        %2697 = vmatpush1.msra.mxu0 0.0
        %2698 = vmatprep.subr.mxu0 0.0
        %2699 = vmatpush1.msra.mxu0 0.0
        %2700 = vmatprep.subr.mxu0 0.0
        %2701 = vmatpush1.msra.mxu0 0.0
        %2702 = vmatprep.subr.mxu0 0.0
        %2703 = vmatpush1.msra.mxu0 0.0
        %2704 = vmatprep.subr.mxu0 0.0
        %2705 = vmatpush1.msra.mxu0 0.0
        %2706 = vmatprep.subr.mxu0 0.0
        %2707 = vmatpush1.msra.mxu0 0.0
        %2708 = vmatprep.subr.mxu0 0.0
        %2709 = vmatpush1.msra.mxu0 0.0
        %2710 = vmatprep.subr.mxu0 0.0
        %2711 = vmatpush1.msra.mxu0 0.0
        %2712 = vmatprep.subr.mxu0 0.0
        %2713 = vmatpush1.msra.mxu0 0.0
        %2714 = vmatprep.subr.mxu0 0.0
        %2715 = vmatpush1.msra.mxu0 0.0
        %2716 = vmatprep.subr.mxu0 0.0
        %2717 = vmatpush1.msra.mxu0 0.0
        %2718 = vmatprep.subr.mxu0 0.0
        %2719 = vmatpush1.msra.mxu0 %v2686
        %2720 = vmatprep.subr.mxu0 0.0
        %2721 = vmatpush2.msra.mxu0 0.0
        %2722 = vmatprep.subr.mxu0 0.0
        %2723 = vmatpush2.msra.mxu0 0.0
        %2724 = vmatprep.subr.mxu0 0.0
        %2725 = vmatpush2.msra.mxu0 0.0
        %2726 = vmatprep.subr.mxu0 0.0
        %2727 = vmatpush2.msra.mxu0 0.0
        %2728 = vmatprep.subr.mxu0 0.0
        %2729 = vmatpush2.msra.mxu0 0.0
        %2730 = vmatprep.subr.mxu0 0.0
        %2731 = vmatpush2.msra.mxu0 0.0
        %2732 = vmatprep.subr.mxu0 0.0
        %2733 = vmatpush2.msra.mxu0 0.0
        %2734 = vmatprep.subr.mxu0 0.0
        %2735 = vmatpush2.msra.mxu0 0.0
        %2736 = vmatprep.subr.mxu0 0.0
        %2737 = vmatpush2.msra.mxu0 0.0
        %2738 = vmatprep.subr.mxu0 0.0
        %2739 = vmatpush2.msra.mxu0 0.0
        %2740 = vmatprep.subr.mxu0 0.0
        %2741 = vmatpush2.msra.mxu0 0.0
        %2742 = vmatprep.subr.mxu0 0.0
        %2743 = vmatpush2.msra.mxu0 0.0
        %2744 = vmatprep.subr.mxu0 0.0
        %2745 = vmatpush2.msra.mxu0 0.0
        %2746 = vmatprep.subr.mxu0 0.0
        %2747 = vmatpush2.msra.mxu0 0.0
        %2748 = vmatprep.subr.mxu0 0.0
        %2749 = vmatpush2.msra.mxu0 0.0
        %2750 = vmatprep.subr.mxu0 0.0
        %2751 = vmatpush2.msra.mxu0 0.0
        %2752 = vmatprep.mubr.f32.mxu0 0.0
        %2753 = vmatmul.mubr.f32.gmra.mxu0 %v2590
        %v2754 = vpop.f32.mrf.mxu0
        %v2755 = vadd.f32 0.0, %v2754
        %v2756 = vpop.f32.mrf.mxu0
        %2757 = vmatprep.mubr.f32.mxu0 0.0
        %2758 = vmatmul.mubr.f32.gmra.mxu0 %v2593
        %v2759 = vpop.f32.mrf.mxu0
        %v2760 = vadd.f32 0.0, %v2759
        %v2761 = vpop.f32.mrf.mxu0
        %2762 = vmatprep.mubr.f32.mxu0 0.0
        %2763 = vmatmul.mubr.f32.gmra.mxu0 %v2596
        %v2764 = vpop.f32.mrf.mxu0
        %v2765 = vadd.f32 0.0, %v2764
        %v2766 = vpop.f32.mrf.mxu0
        %2767 = vmatprep.mubr.f32.mxu0 0.0
        %2768 = vmatmul.mubr.f32.gmra.mxu0 %v2599
        %v2769 = vpop.f32.mrf.mxu0
        %v2770 = vadd.f32 0.0, %v2769
        %v2771 = vpop.f32.mrf.mxu0
        %2772 = vmatprep.mubr.f32.mxu0 0.0
        %2773 = vmatmul.mubr.f32.gmra.mxu0 %v2602
        %v2774 = vpop.f32.mrf.mxu0
        %v2775 = vadd.f32 0.0, %v2774
        %v2776 = vpop.f32.mrf.mxu0
        %2777 = vmatprep.mubr.f32.mxu0 0.0
        %2778 = vmatmul.mubr.f32.gmra.mxu0 %v2605
        %v2779 = vpop.f32.mrf.mxu0
        %v2780 = vadd.f32 0.0, %v2779
        %v2781 = vpop.f32.mrf.mxu0
        %2782 = vmatprep.mubr.f32.mxu0 0.0
        %2783 = vmatmul.mubr.f32.gmra.mxu0 %v2608
        %v2784 = vpop.f32.mrf.mxu0
        %v2785 = vadd.f32 0.0, %v2784
        %v2786 = vpop.f32.mrf.mxu0
        %2787 = vmatprep.mubr.f32.mxu0 0.0
        %2788 = vmatmul.mubr.f32.gmra.mxu0 %v2611
        %v2789 = vpop.f32.mrf.mxu0
        %v2790 = vadd.f32 0.0, %v2789
        %v2791 = vpop.f32.mrf.mxu0
        %2792 = vmatprep.mubr.f32.mxu0 0.0
        %2793 = vmatmul.mubr.f32.gmra.mxu0 %v2614
        %v2794 = vpop.f32.mrf.mxu0
        %v2795 = vadd.f32 0.0, %v2794
        %v2796 = vpop.f32.mrf.mxu0
        %2797 = vmatprep.mubr.f32.mxu0 0.0
        %2798 = vmatmul.mubr.f32.gmra.mxu0 %v2617
        %v2799 = vpop.f32.mrf.mxu0
        %v2800 = vadd.f32 0.0, %v2799
        %v2801 = vpop.f32.mrf.mxu0
        %2802 = vmatprep.mubr.f32.mxu0 0.0
        %2803 = vmatmul.mubr.f32.gmra.mxu0 %v2620
        %v2804 = vpop.f32.mrf.mxu0
        %v2805 = vadd.f32 0.0, %v2804
        %v2806 = vpop.f32.mrf.mxu0
        %2807 = vmatprep.mubr.f32.mxu0 0.0
        %2808 = vmatmul.mubr.f32.gmra.mxu0 %v2623
        %v2809 = vpop.f32.mrf.mxu0
        %v2810 = vadd.f32 0.0, %v2809
        %v2811 = vpop.f32.mrf.mxu0
        %2812 = vmatprep.mubr.f32.mxu0 0.0
        %2813 = vmatmul.mubr.f32.gmra.mxu0 %v2626
        %v2814 = vpop.f32.mrf.mxu0
        %v2815 = vadd.f32 0.0, %v2814
        %v2816 = vpop.f32.mrf.mxu0
        %2817 = vmatprep.mubr.f32.mxu0 0.0
        %2818 = vmatmul.mubr.f32.gmra.mxu0 %v2629
        %v2819 = vpop.f32.mrf.mxu0
        %v2820 = vadd.f32 0.0, %v2819
        %v2821 = vpop.f32.mrf.mxu0
        %2822 = vmatprep.mubr.f32.mxu0 0.0
        %2823 = vmatmul.mubr.f32.gmra.mxu0 %v2632
        %v2824 = vpop.f32.mrf.mxu0
        %v2825 = vadd.f32 0.0, %v2824
        %v2826 = vpop.f32.mrf.mxu0
        %2827 = vmatprep.mubr.f32.mxu0 0.0
        %2828 = vmatmul.mubr.f32.gmra.mxu0 %v2635
        %v2829 = vpop.f32.mrf.mxu0
        %v2830 = vadd.f32 0.0, %v2829
        %v2831 = vpop.f32.mrf.mxu0
        %2832 = vmatprep.mubr.f32.mxu0 0.0
        %2833 = vmatmul.mubr.f32.gmra.mxu0 %v2638
        %v2834 = vpop.f32.mrf.mxu0
        %v2835 = vadd.f32 0.0, %v2834
        %v2836 = vpop.f32.mrf.mxu0
        %2837 = vmatprep.mubr.f32.mxu0 0.0
        %2838 = vmatmul.mubr.f32.gmra.mxu0 %v2641
        %v2839 = vpop.f32.mrf.mxu0
        %v2840 = vadd.f32 0.0, %v2839
        %v2841 = vpop.f32.mrf.mxu0
        %2842 = vmatprep.mubr.f32.mxu0 0.0
        %2843 = vmatmul.mubr.f32.gmra.mxu0 %v2644
        %v2844 = vpop.f32.mrf.mxu0
        %v2845 = vadd.f32 0.0, %v2844
        %v2846 = vpop.f32.mrf.mxu0
        %2847 = vmatprep.mubr.f32.mxu0 0.0
        %2848 = vmatmul.mubr.f32.gmra.mxu0 %v2647
        %v2849 = vpop.f32.mrf.mxu0
        %v2850 = vadd.f32 0.0, %v2849
        %v2851 = vpop.f32.mrf.mxu0
        %2852 = vmatprep.mubr.f32.mxu0 0.0
        %2853 = vmatmul.mubr.f32.gmra.mxu0 %v2650
        %v2854 = vpop.f32.mrf.mxu0
        %v2855 = vadd.f32 0.0, %v2854
        %v2856 = vpop.f32.mrf.mxu0
        %2857 = vmatprep.mubr.f32.mxu0 0.0
        %2858 = vmatmul.mubr.f32.gmra.mxu0 %v2653
        %v2859 = vpop.f32.mrf.mxu0
        %v2860 = vadd.f32 0.0, %v2859
        %v2861 = vpop.f32.mrf.mxu0
        %2862 = vmatprep.mubr.f32.mxu0 0.0
        %2863 = vmatmul.mubr.f32.gmra.mxu0 %v2656
        %v2864 = vpop.f32.mrf.mxu0
        %v2865 = vadd.f32 0.0, %v2864
        %v2866 = vpop.f32.mrf.mxu0
        %2867 = vmatprep.mubr.f32.mxu0 0.0
        %2868 = vmatmul.mubr.f32.gmra.mxu0 %v2659
        %v2869 = vpop.f32.mrf.mxu0
        %v2870 = vadd.f32 0.0, %v2869
        %v2871 = vpop.f32.mrf.mxu0
        %2872 = vmatprep.mubr.f32.mxu0 0.0
        %2873 = vmatmul.mubr.f32.gmra.mxu0 %v2662
        %v2874 = vpop.f32.mrf.mxu0
        %v2875 = vadd.f32 0.0, %v2874
        %v2876 = vpop.f32.mrf.mxu0
        %2877 = vmatprep.mubr.f32.mxu0 0.0
        %2878 = vmatmul.mubr.f32.gmra.mxu0 %v2665
        %v2879 = vpop.f32.mrf.mxu0
        %v2880 = vadd.f32 0.0, %v2879
        %v2881 = vpop.f32.mrf.mxu0
        %2882 = vmatprep.mubr.f32.mxu0 0.0
        %2883 = vmatmul.mubr.f32.gmra.mxu0 %v2668
        %v2884 = vpop.f32.mrf.mxu0
        %v2885 = vadd.f32 0.0, %v2884
        %v2886 = vpop.f32.mrf.mxu0
        %2887 = vmatprep.mubr.f32.mxu0 0.0
        %2888 = vmatmul.mubr.f32.gmra.mxu0 %v2671
        %v2889 = vpop.f32.mrf.mxu0
        %v2890 = vadd.f32 0.0, %v2889
        %v2891 = vpop.f32.mrf.mxu0
        %2892 = vmatprep.mubr.f32.mxu0 0.0
        %2893 = vmatmul.mubr.f32.gmra.mxu0 %v2674
        %v2894 = vpop.f32.mrf.mxu0
        %v2895 = vadd.f32 0.0, %v2894
        %v2896 = vpop.f32.mrf.mxu0
        %2897 = vmatprep.mubr.f32.mxu0 0.0
        %2898 = vmatmul.mubr.f32.gmra.mxu0 %v2677
        %v2899 = vpop.f32.mrf.mxu0
        %v2900 = vadd.f32 0.0, %v2899
        %v2901 = vpop.f32.mrf.mxu0
        %2902 = vmatprep.mubr.f32.mxu0 0.0
        %2903 = vmatmul.mubr.f32.gmra.mxu0 %v2680
        %v2904 = vpop.f32.mrf.mxu0
        %v2905 = vadd.f32 0.0, %v2904
        %v2906 = vpop.f32.mrf.mxu0
        %2907 = vmatprep.mubr.f32.mxu0 0.0
        %2908 = vmatmul.mubr.f32.gmra.mxu0 %v2683
        %v2909 = vpop.f32.mrf.mxu0
        %v2910 = vadd.f32 0.0, %v2909
        %v2911 = vpop.f32.mrf.mxu0
        %2912 = vdwg.mxu0
        %v2913 = vadd.f32 %v2522, %v2755
        %v2914 = vadd.f32 %v2523, %v2760
        %v2915 = vadd.f32 %v2524, %v2765
        %v2916 = vadd.f32 %v2525, %v2770
        %v2917 = vadd.f32 %v2526, %v2775
        %v2918 = vadd.f32 %v2527, %v2780
        %v2919 = vadd.f32 %v2528, %v2785
        %v2920 = vadd.f32 %v2529, %v2790
        %v2921 = vadd.f32 %v2530, %v2795
        %v2922 = vadd.f32 %v2531, %v2800
        %v2923 = vadd.f32 %v2532, %v2805
        %v2924 = vadd.f32 %v2533, %v2810
        %v2925 = vadd.f32 %v2534, %v2815
        %v2926 = vadd.f32 %v2535, %v2820
        %v2927 = vadd.f32 %v2536, %v2825
        %v2928 = vadd.f32 %v2537, %v2830
        %v2929 = vadd.f32 %v2538, %v2835
        %v2930 = vadd.f32 %v2539, %v2840
        %v2931 = vadd.f32 %v2540, %v2845
        %v2932 = vadd.f32 %v2541, %v2850
        %v2933 = vadd.f32 %v2542, %v2855
        %v2934 = vadd.f32 %v2543, %v2860
        %v2935 = vadd.f32 %v2544, %v2865
        %v2936 = vadd.f32 %v2545, %v2870
        %v2937 = vadd.f32 %v2546, %v2875
        %v2938 = vadd.f32 %v2547, %v2880
        %v2939 = vadd.f32 %v2548, %v2885
        %v2940 = vadd.f32 %v2549, %v2890
        %v2941 = vadd.f32 %v2550, %v2895
        %v2942 = vadd.f32 %v2551, %v2900
        %v2943 = vadd.f32 %v2552, %v2905
        %v2944 = vadd.f32 %v2553, %v2910
        %v2945 = vld [vmem:[%s2554 + $0x1] sm:$0xff]
        %v2946 = vld [vmem:[%s2554 + $0x9] sm:$0xff]
        %v2947 = vld [vmem:[%s2554 + $0x19] sm:$0xff]
        %v2948 = vld [vmem:[%s2554 + $0x21] sm:$0xff]
        %v2949 = vld [vmem:[%s2554 + $0x31] sm:$0xff]
        %v2950 = vld [vmem:[%s2554 + $0x39] sm:$0xff]
        %v2951 = vld [vmem:[%s2554 + $0x49] sm:$0xff]
        %v2952 = vld [vmem:[%s2554 + $0x51] sm:$0xff]
        %v2953 = vld [vmem:[%s2554 + $0x61] sm:$0xff]
        %v2954 = vld [vmem:[%s2554 + $0x69] sm:$0xff]
        %v2955 = vld [vmem:[%s2554 + $0x79] sm:$0xff]
        %v2956 = vld [vmem:[%s2554 + $0x81] sm:$0xff]
        %v2957 = vld [vmem:[%s2554 + $0x91] sm:$0xff]
        %v2958 = vld [vmem:[%s2554 + $0x99] sm:$0xff]
        %v2959 = vld [vmem:[%s2554 + $0xa9] sm:$0xff]
        %v2960 = vld [vmem:[%s2554 + $0xb1] sm:$0xff]
        %v2961 = vld [vmem:[%s2554 + $0xc1] sm:$0xff]
        %v2962 = vld [vmem:[%s2554 + $0xc9] sm:$0xff]
        %v2963 = vld [vmem:[%s2554 + $0xd9] sm:$0xff]
        %v2964 = vld [vmem:[%s2554 + $0xe1] sm:$0xff]
        %v2965 = vld [vmem:[%s2554 + $0xf1] sm:$0xff]
        %v2966 = vld [vmem:[%s2554 + $0xf9] sm:$0xff]
        %v2967 = vld [vmem:[%s2554 + $0x109] sm:$0xff]
        %v2968 = vld [vmem:[%s2554 + $0x111] sm:$0xff]
        %v2969 = vld [vmem:[%s2554 + $0x121] sm:$0xff]
        %v2970 = vld [vmem:[%s2554 + $0x129] sm:$0xff]
        %v2971 = vld [vmem:[%s2554 + $0x139] sm:$0xff]
        %v2972 = vld [vmem:[%s2554 + $0x141] sm:$0xff]
        %v2973 = vld [vmem:[%s2554 + $0x151] sm:$0xff]
        %v2974 = vld [vmem:[%s2554 + $0x159] sm:$0xff]
        %v2975 = vld [vmem:[%s2554 + $0x169] sm:$0xff]
        %v2976 = vld [vmem:[%s2554 + $0x171] sm:$0xff]
        %s2977 = scalar_lea.vmem %s1, 28
        %v2978 = vld [vmem:[%s2977] sm:$0xf]
        %v2980 = vsel %vm343, %v2945, 0
        %v2983 = vsel %vm343, %v2946, 0
        %v2986 = vsel %vm343, %v2947, 0
        %v2989 = vsel %vm343, %v2948, 0
        %v2992 = vsel %vm343, %v2949, 0
        %v2995 = vsel %vm343, %v2950, 0
        %v2998 = vsel %vm343, %v2951, 0
        %v3001 = vsel %vm343, %v2952, 0
        %v3004 = vsel %vm343, %v2953, 0
        %v3007 = vsel %vm343, %v2954, 0
        %v3010 = vsel %vm343, %v2955, 0
        %v3013 = vsel %vm343, %v2956, 0
        %v3016 = vsel %vm343, %v2957, 0
        %v3019 = vsel %vm343, %v2958, 0
        %v3022 = vsel %vm343, %v2959, 0
        %v3025 = vsel %vm343, %v2960, 0
        %v3028 = vsel %vm343, %v2961, 0
        %v3031 = vsel %vm343, %v2962, 0
        %v3034 = vsel %vm343, %v2963, 0
        %v3037 = vsel %vm343, %v2964, 0
        %v3040 = vsel %vm343, %v2965, 0
        %v3043 = vsel %vm343, %v2966, 0
        %v3046 = vsel %vm343, %v2967, 0
        %v3049 = vsel %vm343, %v2968, 0
        %v3052 = vsel %vm343, %v2969, 0
        %v3055 = vsel %vm343, %v2970, 0
        %v3058 = vsel %vm343, %v2971, 0
        %v3061 = vsel %vm343, %v2972, 0
        %v3064 = vsel %vm343, %v2973, 0
        %v3067 = vsel %vm343, %v2974, 0
        %v3070 = vsel %vm343, %v2975, 0
        %v3073 = vsel %vm343, %v2976, 0
        %v3076 = vsel %vm440, %v2978, 0
        %3078 = vmatprep.subr.mxu0 0.0
        %3079 = vmatpush1.msra.mxu0 0.0
        %3080 = vmatprep.subr.mxu0 0.0
        %3081 = vmatpush1.msra.mxu0 0.0
        %3082 = vmatprep.subr.mxu0 0.0
        %3083 = vmatpush1.msra.mxu0 0.0
        %3084 = vmatprep.subr.mxu0 0.0
        %3085 = vmatpush1.msra.mxu0 0.0
        %3086 = vmatprep.subr.mxu0 0.0
        %3087 = vmatpush1.msra.mxu0 0.0
        %3088 = vmatprep.subr.mxu0 0.0
        %3089 = vmatpush1.msra.mxu0 0.0
        %3090 = vmatprep.subr.mxu0 0.0
        %3091 = vmatpush1.msra.mxu0 0.0
        %3092 = vmatprep.subr.mxu0 0.0
        %3093 = vmatpush1.msra.mxu0 0.0
        %3094 = vmatprep.subr.mxu0 0.0
        %3095 = vmatpush1.msra.mxu0 0.0
        %3096 = vmatprep.subr.mxu0 0.0
        %3097 = vmatpush1.msra.mxu0 0.0
        %3098 = vmatprep.subr.mxu0 0.0
        %3099 = vmatpush1.msra.mxu0 0.0
        %3100 = vmatprep.subr.mxu0 0.0
        %3101 = vmatpush1.msra.mxu0 0.0
        %3102 = vmatprep.subr.mxu0 0.0
        %3103 = vmatpush1.msra.mxu0 0.0
        %3104 = vmatprep.subr.mxu0 0.0
        %3105 = vmatpush1.msra.mxu0 0.0
        %3106 = vmatprep.subr.mxu0 0.0
        %3107 = vmatpush1.msra.mxu0 0.0
        %3108 = vmatprep.subr.mxu0 0.0
        %3109 = vmatpush1.msra.mxu0 %v3076
        %3110 = vmatprep.subr.mxu0 0.0
        %3111 = vmatpush2.msra.mxu0 0.0
        %3112 = vmatprep.subr.mxu0 0.0
        %3113 = vmatpush2.msra.mxu0 0.0
        %3114 = vmatprep.subr.mxu0 0.0
        %3115 = vmatpush2.msra.mxu0 0.0
        %3116 = vmatprep.subr.mxu0 0.0
        %3117 = vmatpush2.msra.mxu0 0.0
        %3118 = vmatprep.subr.mxu0 0.0
        %3119 = vmatpush2.msra.mxu0 0.0
        %3120 = vmatprep.subr.mxu0 0.0
        %3121 = vmatpush2.msra.mxu0 0.0
        %3122 = vmatprep.subr.mxu0 0.0
        %3123 = vmatpush2.msra.mxu0 0.0
        %3124 = vmatprep.subr.mxu0 0.0
        %3125 = vmatpush2.msra.mxu0 0.0
        %3126 = vmatprep.subr.mxu0 0.0
        %3127 = vmatpush2.msra.mxu0 0.0
        %3128 = vmatprep.subr.mxu0 0.0
        %3129 = vmatpush2.msra.mxu0 0.0
        %3130 = vmatprep.subr.mxu0 0.0
        %3131 = vmatpush2.msra.mxu0 0.0
        %3132 = vmatprep.subr.mxu0 0.0
        %3133 = vmatpush2.msra.mxu0 0.0
        %3134 = vmatprep.subr.mxu0 0.0
        %3135 = vmatpush2.msra.mxu0 0.0
        %3136 = vmatprep.subr.mxu0 0.0
        %3137 = vmatpush2.msra.mxu0 0.0
        %3138 = vmatprep.subr.mxu0 0.0
        %3139 = vmatpush2.msra.mxu0 0.0
        %3140 = vmatprep.subr.mxu0 0.0
        %3141 = vmatpush2.msra.mxu0 0.0
        %3142 = vmatprep.mubr.f32.mxu0 0.0
        %3143 = vmatmul.mubr.f32.gmra.mxu0 %v2980
        %v3144 = vpop.f32.mrf.mxu0
        %v3145 = vadd.f32 0.0, %v3144
        %v3146 = vpop.f32.mrf.mxu0
        %3147 = vmatprep.mubr.f32.mxu0 0.0
        %3148 = vmatmul.mubr.f32.gmra.mxu0 %v2983
        %v3149 = vpop.f32.mrf.mxu0
        %v3150 = vadd.f32 0.0, %v3149
        %v3151 = vpop.f32.mrf.mxu0
        %3152 = vmatprep.mubr.f32.mxu0 0.0
        %3153 = vmatmul.mubr.f32.gmra.mxu0 %v2986
        %v3154 = vpop.f32.mrf.mxu0
        %v3155 = vadd.f32 0.0, %v3154
        %v3156 = vpop.f32.mrf.mxu0
        %3157 = vmatprep.mubr.f32.mxu0 0.0
        %3158 = vmatmul.mubr.f32.gmra.mxu0 %v2989
        %v3159 = vpop.f32.mrf.mxu0
        %v3160 = vadd.f32 0.0, %v3159
        %v3161 = vpop.f32.mrf.mxu0
        %3162 = vmatprep.mubr.f32.mxu0 0.0
        %3163 = vmatmul.mubr.f32.gmra.mxu0 %v2992
        %v3164 = vpop.f32.mrf.mxu0
        %v3165 = vadd.f32 0.0, %v3164
        %v3166 = vpop.f32.mrf.mxu0
        %3167 = vmatprep.mubr.f32.mxu0 0.0
        %3168 = vmatmul.mubr.f32.gmra.mxu0 %v2995
        %v3169 = vpop.f32.mrf.mxu0
        %v3170 = vadd.f32 0.0, %v3169
        %v3171 = vpop.f32.mrf.mxu0
        %3172 = vmatprep.mubr.f32.mxu0 0.0
        %3173 = vmatmul.mubr.f32.gmra.mxu0 %v2998
        %v3174 = vpop.f32.mrf.mxu0
        %v3175 = vadd.f32 0.0, %v3174
        %v3176 = vpop.f32.mrf.mxu0
        %3177 = vmatprep.mubr.f32.mxu0 0.0
        %3178 = vmatmul.mubr.f32.gmra.mxu0 %v3001
        %v3179 = vpop.f32.mrf.mxu0
        %v3180 = vadd.f32 0.0, %v3179
        %v3181 = vpop.f32.mrf.mxu0
        %3182 = vmatprep.mubr.f32.mxu0 0.0
        %3183 = vmatmul.mubr.f32.gmra.mxu0 %v3004
        %v3184 = vpop.f32.mrf.mxu0
        %v3185 = vadd.f32 0.0, %v3184
        %v3186 = vpop.f32.mrf.mxu0
        %3187 = vmatprep.mubr.f32.mxu0 0.0
        %3188 = vmatmul.mubr.f32.gmra.mxu0 %v3007
        %v3189 = vpop.f32.mrf.mxu0
        %v3190 = vadd.f32 0.0, %v3189
        %v3191 = vpop.f32.mrf.mxu0
        %3192 = vmatprep.mubr.f32.mxu0 0.0
        %3193 = vmatmul.mubr.f32.gmra.mxu0 %v3010
        %v3194 = vpop.f32.mrf.mxu0
        %v3195 = vadd.f32 0.0, %v3194
        %v3196 = vpop.f32.mrf.mxu0
        %3197 = vmatprep.mubr.f32.mxu0 0.0
        %3198 = vmatmul.mubr.f32.gmra.mxu0 %v3013
        %v3199 = vpop.f32.mrf.mxu0
        %v3200 = vadd.f32 0.0, %v3199
        %v3201 = vpop.f32.mrf.mxu0
        %3202 = vmatprep.mubr.f32.mxu0 0.0
        %3203 = vmatmul.mubr.f32.gmra.mxu0 %v3016
        %v3204 = vpop.f32.mrf.mxu0
        %v3205 = vadd.f32 0.0, %v3204
        %v3206 = vpop.f32.mrf.mxu0
        %3207 = vmatprep.mubr.f32.mxu0 0.0
        %3208 = vmatmul.mubr.f32.gmra.mxu0 %v3019
        %v3209 = vpop.f32.mrf.mxu0
        %v3210 = vadd.f32 0.0, %v3209
        %v3211 = vpop.f32.mrf.mxu0
        %3212 = vmatprep.mubr.f32.mxu0 0.0
        %3213 = vmatmul.mubr.f32.gmra.mxu0 %v3022
        %v3214 = vpop.f32.mrf.mxu0
        %v3215 = vadd.f32 0.0, %v3214
        %v3216 = vpop.f32.mrf.mxu0
        %3217 = vmatprep.mubr.f32.mxu0 0.0
        %3218 = vmatmul.mubr.f32.gmra.mxu0 %v3025
        %v3219 = vpop.f32.mrf.mxu0
        %v3220 = vadd.f32 0.0, %v3219
        %v3221 = vpop.f32.mrf.mxu0
        %3222 = vmatprep.mubr.f32.mxu0 0.0
        %3223 = vmatmul.mubr.f32.gmra.mxu0 %v3028
        %v3224 = vpop.f32.mrf.mxu0
        %v3225 = vadd.f32 0.0, %v3224
        %v3226 = vpop.f32.mrf.mxu0
        %3227 = vmatprep.mubr.f32.mxu0 0.0
        %3228 = vmatmul.mubr.f32.gmra.mxu0 %v3031
        %v3229 = vpop.f32.mrf.mxu0
        %v3230 = vadd.f32 0.0, %v3229
        %v3231 = vpop.f32.mrf.mxu0
        %3232 = vmatprep.mubr.f32.mxu0 0.0
        %3233 = vmatmul.mubr.f32.gmra.mxu0 %v3034
        %v3234 = vpop.f32.mrf.mxu0
        %v3235 = vadd.f32 0.0, %v3234
        %v3236 = vpop.f32.mrf.mxu0
        %3237 = vmatprep.mubr.f32.mxu0 0.0
        %3238 = vmatmul.mubr.f32.gmra.mxu0 %v3037
        %v3239 = vpop.f32.mrf.mxu0
        %v3240 = vadd.f32 0.0, %v3239
        %v3241 = vpop.f32.mrf.mxu0
        %3242 = vmatprep.mubr.f32.mxu0 0.0
        %3243 = vmatmul.mubr.f32.gmra.mxu0 %v3040
        %v3244 = vpop.f32.mrf.mxu0
        %v3245 = vadd.f32 0.0, %v3244
        %v3246 = vpop.f32.mrf.mxu0
        %3247 = vmatprep.mubr.f32.mxu0 0.0
        %3248 = vmatmul.mubr.f32.gmra.mxu0 %v3043
        %v3249 = vpop.f32.mrf.mxu0
        %v3250 = vadd.f32 0.0, %v3249
        %v3251 = vpop.f32.mrf.mxu0
        %3252 = vmatprep.mubr.f32.mxu0 0.0
        %3253 = vmatmul.mubr.f32.gmra.mxu0 %v3046
        %v3254 = vpop.f32.mrf.mxu0
        %v3255 = vadd.f32 0.0, %v3254
        %v3256 = vpop.f32.mrf.mxu0
        %3257 = vmatprep.mubr.f32.mxu0 0.0
        %3258 = vmatmul.mubr.f32.gmra.mxu0 %v3049
        %v3259 = vpop.f32.mrf.mxu0
        %v3260 = vadd.f32 0.0, %v3259
        %v3261 = vpop.f32.mrf.mxu0
        %3262 = vmatprep.mubr.f32.mxu0 0.0
        %3263 = vmatmul.mubr.f32.gmra.mxu0 %v3052
        %v3264 = vpop.f32.mrf.mxu0
        %v3265 = vadd.f32 0.0, %v3264
        %v3266 = vpop.f32.mrf.mxu0
        %3267 = vmatprep.mubr.f32.mxu0 0.0
        %3268 = vmatmul.mubr.f32.gmra.mxu0 %v3055
        %v3269 = vpop.f32.mrf.mxu0
        %v3270 = vadd.f32 0.0, %v3269
        %v3271 = vpop.f32.mrf.mxu0
        %3272 = vmatprep.mubr.f32.mxu0 0.0
        %3273 = vmatmul.mubr.f32.gmra.mxu0 %v3058
        %v3274 = vpop.f32.mrf.mxu0
        %v3275 = vadd.f32 0.0, %v3274
        %v3276 = vpop.f32.mrf.mxu0
        %3277 = vmatprep.mubr.f32.mxu0 0.0
        %3278 = vmatmul.mubr.f32.gmra.mxu0 %v3061
        %v3279 = vpop.f32.mrf.mxu0
        %v3280 = vadd.f32 0.0, %v3279
        %v3281 = vpop.f32.mrf.mxu0
        %3282 = vmatprep.mubr.f32.mxu0 0.0
        %3283 = vmatmul.mubr.f32.gmra.mxu0 %v3064
        %v3284 = vpop.f32.mrf.mxu0
        %v3285 = vadd.f32 0.0, %v3284
        %v3286 = vpop.f32.mrf.mxu0
        %3287 = vmatprep.mubr.f32.mxu0 0.0
        %3288 = vmatmul.mubr.f32.gmra.mxu0 %v3067
        %v3289 = vpop.f32.mrf.mxu0
        %v3290 = vadd.f32 0.0, %v3289
        %v3291 = vpop.f32.mrf.mxu0
        %3292 = vmatprep.mubr.f32.mxu0 0.0
        %3293 = vmatmul.mubr.f32.gmra.mxu0 %v3070
        %v3294 = vpop.f32.mrf.mxu0
        %v3295 = vadd.f32 0.0, %v3294
        %v3296 = vpop.f32.mrf.mxu0
        %3297 = vmatprep.mubr.f32.mxu0 0.0
        %3298 = vmatmul.mubr.f32.gmra.mxu0 %v3073
        %v3299 = vpop.f32.mrf.mxu0
        %v3300 = vadd.f32 0.0, %v3299
        %v3301 = vpop.f32.mrf.mxu0
        %3302 = vdwg.mxu0
        %v3303 = vadd.f32 %v2913, %v3145
        %v3304 = vadd.f32 %v2914, %v3150
        %v3305 = vadd.f32 %v2915, %v3155
        %v3306 = vadd.f32 %v2916, %v3160
        %v3307 = vadd.f32 %v2917, %v3165
        %v3308 = vadd.f32 %v2918, %v3170
        %v3309 = vadd.f32 %v2919, %v3175
        %v3310 = vadd.f32 %v2920, %v3180
        %v3311 = vadd.f32 %v2921, %v3185
        %v3312 = vadd.f32 %v2922, %v3190
        %v3313 = vadd.f32 %v2923, %v3195
        %v3314 = vadd.f32 %v2924, %v3200
        %v3315 = vadd.f32 %v2925, %v3205
        %v3316 = vadd.f32 %v2926, %v3210
        %v3317 = vadd.f32 %v2927, %v3215
        %v3318 = vadd.f32 %v2928, %v3220
        %v3319 = vadd.f32 %v2929, %v3225
        %v3320 = vadd.f32 %v2930, %v3230
        %v3321 = vadd.f32 %v2931, %v3235
        %v3322 = vadd.f32 %v2932, %v3240
        %v3323 = vadd.f32 %v2933, %v3245
        %v3324 = vadd.f32 %v2934, %v3250
        %v3325 = vadd.f32 %v2935, %v3255
        %v3326 = vadd.f32 %v2936, %v3260
        %v3327 = vadd.f32 %v2937, %v3265
        %v3328 = vadd.f32 %v2938, %v3270
        %v3329 = vadd.f32 %v2939, %v3275
        %v3330 = vadd.f32 %v2940, %v3280
        %v3331 = vadd.f32 %v2941, %v3285
        %v3332 = vadd.f32 %v2942, %v3290
        %v3333 = vadd.f32 %v2943, %v3295
        %v3334 = vadd.f32 %v2944, %v3300
        %v3335 = vld [vmem:[%s2554 + $0x2] sm:$0xff]
        %v3336 = vld [vmem:[%s2554 + $0xa] sm:$0xff]
        %v3337 = vld [vmem:[%s2554 + $0x1a] sm:$0xff]
        %v3338 = vld [vmem:[%s2554 + $0x22] sm:$0xff]
        %v3339 = vld [vmem:[%s2554 + $0x32] sm:$0xff]
        %v3340 = vld [vmem:[%s2554 + $0x3a] sm:$0xff]
        %v3341 = vld [vmem:[%s2554 + $0x4a] sm:$0xff]
        %v3342 = vld [vmem:[%s2554 + $0x52] sm:$0xff]
        %v3343 = vld [vmem:[%s2554 + $0x62] sm:$0xff]
        %v3344 = vld [vmem:[%s2554 + $0x6a] sm:$0xff]
        %v3345 = vld [vmem:[%s2554 + $0x7a] sm:$0xff]
        %v3346 = vld [vmem:[%s2554 + $0x82] sm:$0xff]
        %v3347 = vld [vmem:[%s2554 + $0x92] sm:$0xff]
        %v3348 = vld [vmem:[%s2554 + $0x9a] sm:$0xff]
        %v3349 = vld [vmem:[%s2554 + $0xaa] sm:$0xff]
        %v3350 = vld [vmem:[%s2554 + $0xb2] sm:$0xff]
        %v3351 = vld [vmem:[%s2554 + $0xc2] sm:$0xff]
        %v3352 = vld [vmem:[%s2554 + $0xca] sm:$0xff]
        %v3353 = vld [vmem:[%s2554 + $0xda] sm:$0xff]
        %v3354 = vld [vmem:[%s2554 + $0xe2] sm:$0xff]
        %v3355 = vld [vmem:[%s2554 + $0xf2] sm:$0xff]
        %v3356 = vld [vmem:[%s2554 + $0xfa] sm:$0xff]
        %v3357 = vld [vmem:[%s2554 + $0x10a] sm:$0xff]
        %v3358 = vld [vmem:[%s2554 + $0x112] sm:$0xff]
        %v3359 = vld [vmem:[%s2554 + $0x122] sm:$0xff]
        %v3360 = vld [vmem:[%s2554 + $0x12a] sm:$0xff]
        %v3361 = vld [vmem:[%s2554 + $0x13a] sm:$0xff]
        %v3362 = vld [vmem:[%s2554 + $0x142] sm:$0xff]
        %v3363 = vld [vmem:[%s2554 + $0x152] sm:$0xff]
        %v3364 = vld [vmem:[%s2554 + $0x15a] sm:$0xff]
        %v3365 = vld [vmem:[%s2554 + $0x16a] sm:$0xff]
        %v3366 = vld [vmem:[%s2554 + $0x172] sm:$0xff]
        %s3367 = scalar_lea.vmem %s1, 32
        %v3368 = vld [vmem:[%s3367] sm:$0xf]
        %v3370 = vsel %vm343, %v3335, 0
        %v3373 = vsel %vm343, %v3336, 0
        %v3376 = vsel %vm343, %v3337, 0
        %v3379 = vsel %vm343, %v3338, 0
        %v3382 = vsel %vm343, %v3339, 0
        %v3385 = vsel %vm343, %v3340, 0
        %v3388 = vsel %vm343, %v3341, 0
        %v3391 = vsel %vm343, %v3342, 0
        %v3394 = vsel %vm343, %v3343, 0
        %v3397 = vsel %vm343, %v3344, 0
        %v3400 = vsel %vm343, %v3345, 0
        %v3403 = vsel %vm343, %v3346, 0
        %v3406 = vsel %vm343, %v3347, 0
        %v3409 = vsel %vm343, %v3348, 0
        %v3412 = vsel %vm343, %v3349, 0
        %v3415 = vsel %vm343, %v3350, 0
        %v3418 = vsel %vm343, %v3351, 0
        %v3421 = vsel %vm343, %v3352, 0
        %v3424 = vsel %vm343, %v3353, 0
        %v3427 = vsel %vm343, %v3354, 0
        %v3430 = vsel %vm343, %v3355, 0
        %v3433 = vsel %vm343, %v3356, 0
        %v3436 = vsel %vm343, %v3357, 0
        %v3439 = vsel %vm343, %v3358, 0
        %v3442 = vsel %vm343, %v3359, 0
        %v3445 = vsel %vm343, %v3360, 0
        %v3448 = vsel %vm343, %v3361, 0
        %v3451 = vsel %vm343, %v3362, 0
        %v3454 = vsel %vm343, %v3363, 0
        %v3457 = vsel %vm343, %v3364, 0
        %v3460 = vsel %vm343, %v3365, 0
        %v3463 = vsel %vm343, %v3366, 0
        %v3466 = vsel %vm440, %v3368, 0
        %3468 = vmatprep.subr.mxu0 0.0
        %3469 = vmatpush1.msra.mxu0 0.0
        %3470 = vmatprep.subr.mxu0 0.0
        %3471 = vmatpush1.msra.mxu0 0.0
        %3472 = vmatprep.subr.mxu0 0.0
        %3473 = vmatpush1.msra.mxu0 0.0
        %3474 = vmatprep.subr.mxu0 0.0
        %3475 = vmatpush1.msra.mxu0 0.0
        %3476 = vmatprep.subr.mxu0 0.0
        %3477 = vmatpush1.msra.mxu0 0.0
        %3478 = vmatprep.subr.mxu0 0.0
        %3479 = vmatpush1.msra.mxu0 0.0
        %3480 = vmatprep.subr.mxu0 0.0
        %3481 = vmatpush1.msra.mxu0 0.0
        %3482 = vmatprep.subr.mxu0 0.0
        %3483 = vmatpush1.msra.mxu0 0.0
        %3484 = vmatprep.subr.mxu0 0.0
        %3485 = vmatpush1.msra.mxu0 0.0
        %3486 = vmatprep.subr.mxu0 0.0
        %3487 = vmatpush1.msra.mxu0 0.0
        %3488 = vmatprep.subr.mxu0 0.0
        %3489 = vmatpush1.msra.mxu0 0.0
        %3490 = vmatprep.subr.mxu0 0.0
        %3491 = vmatpush1.msra.mxu0 0.0
        %3492 = vmatprep.subr.mxu0 0.0
        %3493 = vmatpush1.msra.mxu0 0.0
        %3494 = vmatprep.subr.mxu0 0.0
        %3495 = vmatpush1.msra.mxu0 0.0
        %3496 = vmatprep.subr.mxu0 0.0
        %3497 = vmatpush1.msra.mxu0 0.0
        %3498 = vmatprep.subr.mxu0 0.0
        %3499 = vmatpush1.msra.mxu0 %v3466
        %3500 = vmatprep.subr.mxu0 0.0
        %3501 = vmatpush2.msra.mxu0 0.0
        %3502 = vmatprep.subr.mxu0 0.0
        %3503 = vmatpush2.msra.mxu0 0.0
        %3504 = vmatprep.subr.mxu0 0.0
        %3505 = vmatpush2.msra.mxu0 0.0
        %3506 = vmatprep.subr.mxu0 0.0
        %3507 = vmatpush2.msra.mxu0 0.0
        %3508 = vmatprep.subr.mxu0 0.0
        %3509 = vmatpush2.msra.mxu0 0.0
        %3510 = vmatprep.subr.mxu0 0.0
        %3511 = vmatpush2.msra.mxu0 0.0
        %3512 = vmatprep.subr.mxu0 0.0
        %3513 = vmatpush2.msra.mxu0 0.0
        %3514 = vmatprep.subr.mxu0 0.0
        %3515 = vmatpush2.msra.mxu0 0.0
        %3516 = vmatprep.subr.mxu0 0.0
        %3517 = vmatpush2.msra.mxu0 0.0
        %3518 = vmatprep.subr.mxu0 0.0
        %3519 = vmatpush2.msra.mxu0 0.0
        %3520 = vmatprep.subr.mxu0 0.0
        %3521 = vmatpush2.msra.mxu0 0.0
        %3522 = vmatprep.subr.mxu0 0.0
        %3523 = vmatpush2.msra.mxu0 0.0
        %3524 = vmatprep.subr.mxu0 0.0
        %3525 = vmatpush2.msra.mxu0 0.0
        %3526 = vmatprep.subr.mxu0 0.0
        %3527 = vmatpush2.msra.mxu0 0.0
        %3528 = vmatprep.subr.mxu0 0.0
        %3529 = vmatpush2.msra.mxu0 0.0
        %3530 = vmatprep.subr.mxu0 0.0
        %3531 = vmatpush2.msra.mxu0 0.0
        %3532 = vmatprep.mubr.f32.mxu0 0.0
        %3533 = vmatmul.mubr.f32.gmra.mxu0 %v3370
        %v3534 = vpop.f32.mrf.mxu0
        %v3535 = vadd.f32 0.0, %v3534
        %v3536 = vpop.f32.mrf.mxu0
        %3537 = vmatprep.mubr.f32.mxu0 0.0
        %3538 = vmatmul.mubr.f32.gmra.mxu0 %v3373
        %v3539 = vpop.f32.mrf.mxu0
        %v3540 = vadd.f32 0.0, %v3539
        %v3541 = vpop.f32.mrf.mxu0
        %3542 = vmatprep.mubr.f32.mxu0 0.0
        %3543 = vmatmul.mubr.f32.gmra.mxu0 %v3376
        %v3544 = vpop.f32.mrf.mxu0
        %v3545 = vadd.f32 0.0, %v3544
        %v3546 = vpop.f32.mrf.mxu0
        %3547 = vmatprep.mubr.f32.mxu0 0.0
        %3548 = vmatmul.mubr.f32.gmra.mxu0 %v3379
        %v3549 = vpop.f32.mrf.mxu0
        %v3550 = vadd.f32 0.0, %v3549
        %v3551 = vpop.f32.mrf.mxu0
        %3552 = vmatprep.mubr.f32.mxu0 0.0
        %3553 = vmatmul.mubr.f32.gmra.mxu0 %v3382
        %v3554 = vpop.f32.mrf.mxu0
        %v3555 = vadd.f32 0.0, %v3554
        %v3556 = vpop.f32.mrf.mxu0
        %3557 = vmatprep.mubr.f32.mxu0 0.0
        %3558 = vmatmul.mubr.f32.gmra.mxu0 %v3385
        %v3559 = vpop.f32.mrf.mxu0
        %v3560 = vadd.f32 0.0, %v3559
        %v3561 = vpop.f32.mrf.mxu0
        %3562 = vmatprep.mubr.f32.mxu0 0.0
        %3563 = vmatmul.mubr.f32.gmra.mxu0 %v3388
        %v3564 = vpop.f32.mrf.mxu0
        %v3565 = vadd.f32 0.0, %v3564
        %v3566 = vpop.f32.mrf.mxu0
        %3567 = vmatprep.mubr.f32.mxu0 0.0
        %3568 = vmatmul.mubr.f32.gmra.mxu0 %v3391
        %v3569 = vpop.f32.mrf.mxu0
        %v3570 = vadd.f32 0.0, %v3569
        %v3571 = vpop.f32.mrf.mxu0
        %3572 = vmatprep.mubr.f32.mxu0 0.0
        %3573 = vmatmul.mubr.f32.gmra.mxu0 %v3394
        %v3574 = vpop.f32.mrf.mxu0
        %v3575 = vadd.f32 0.0, %v3574
        %v3576 = vpop.f32.mrf.mxu0
        %3577 = vmatprep.mubr.f32.mxu0 0.0
        %3578 = vmatmul.mubr.f32.gmra.mxu0 %v3397
        %v3579 = vpop.f32.mrf.mxu0
        %v3580 = vadd.f32 0.0, %v3579
        %v3581 = vpop.f32.mrf.mxu0
        %3582 = vmatprep.mubr.f32.mxu0 0.0
        %3583 = vmatmul.mubr.f32.gmra.mxu0 %v3400
        %v3584 = vpop.f32.mrf.mxu0
        %v3585 = vadd.f32 0.0, %v3584
        %v3586 = vpop.f32.mrf.mxu0
        %3587 = vmatprep.mubr.f32.mxu0 0.0
        %3588 = vmatmul.mubr.f32.gmra.mxu0 %v3403
        %v3589 = vpop.f32.mrf.mxu0
        %v3590 = vadd.f32 0.0, %v3589
        %v3591 = vpop.f32.mrf.mxu0
        %3592 = vmatprep.mubr.f32.mxu0 0.0
        %3593 = vmatmul.mubr.f32.gmra.mxu0 %v3406
        %v3594 = vpop.f32.mrf.mxu0
        %v3595 = vadd.f32 0.0, %v3594
        %v3596 = vpop.f32.mrf.mxu0
        %3597 = vmatprep.mubr.f32.mxu0 0.0
        %3598 = vmatmul.mubr.f32.gmra.mxu0 %v3409
        %v3599 = vpop.f32.mrf.mxu0
        %v3600 = vadd.f32 0.0, %v3599
        %v3601 = vpop.f32.mrf.mxu0
        %3602 = vmatprep.mubr.f32.mxu0 0.0
        %3603 = vmatmul.mubr.f32.gmra.mxu0 %v3412
        %v3604 = vpop.f32.mrf.mxu0
        %v3605 = vadd.f32 0.0, %v3604
        %v3606 = vpop.f32.mrf.mxu0
        %3607 = vmatprep.mubr.f32.mxu0 0.0
        %3608 = vmatmul.mubr.f32.gmra.mxu0 %v3415
        %v3609 = vpop.f32.mrf.mxu0
        %v3610 = vadd.f32 0.0, %v3609
        %v3611 = vpop.f32.mrf.mxu0
        %3612 = vmatprep.mubr.f32.mxu0 0.0
        %3613 = vmatmul.mubr.f32.gmra.mxu0 %v3418
        %v3614 = vpop.f32.mrf.mxu0
        %v3615 = vadd.f32 0.0, %v3614
        %v3616 = vpop.f32.mrf.mxu0
        %3617 = vmatprep.mubr.f32.mxu0 0.0
        %3618 = vmatmul.mubr.f32.gmra.mxu0 %v3421
        %v3619 = vpop.f32.mrf.mxu0
        %v3620 = vadd.f32 0.0, %v3619
        %v3621 = vpop.f32.mrf.mxu0
        %3622 = vmatprep.mubr.f32.mxu0 0.0
        %3623 = vmatmul.mubr.f32.gmra.mxu0 %v3424
        %v3624 = vpop.f32.mrf.mxu0
        %v3625 = vadd.f32 0.0, %v3624
        %v3626 = vpop.f32.mrf.mxu0
        %3627 = vmatprep.mubr.f32.mxu0 0.0
        %3628 = vmatmul.mubr.f32.gmra.mxu0 %v3427
        %v3629 = vpop.f32.mrf.mxu0
        %v3630 = vadd.f32 0.0, %v3629
        %v3631 = vpop.f32.mrf.mxu0
        %3632 = vmatprep.mubr.f32.mxu0 0.0
        %3633 = vmatmul.mubr.f32.gmra.mxu0 %v3430
        %v3634 = vpop.f32.mrf.mxu0
        %v3635 = vadd.f32 0.0, %v3634
        %v3636 = vpop.f32.mrf.mxu0
        %3637 = vmatprep.mubr.f32.mxu0 0.0
        %3638 = vmatmul.mubr.f32.gmra.mxu0 %v3433
        %v3639 = vpop.f32.mrf.mxu0
        %v3640 = vadd.f32 0.0, %v3639
        %v3641 = vpop.f32.mrf.mxu0
        %3642 = vmatprep.mubr.f32.mxu0 0.0
        %3643 = vmatmul.mubr.f32.gmra.mxu0 %v3436
        %v3644 = vpop.f32.mrf.mxu0
        %v3645 = vadd.f32 0.0, %v3644
        %v3646 = vpop.f32.mrf.mxu0
        %3647 = vmatprep.mubr.f32.mxu0 0.0
        %3648 = vmatmul.mubr.f32.gmra.mxu0 %v3439
        %v3649 = vpop.f32.mrf.mxu0
        %v3650 = vadd.f32 0.0, %v3649
        %v3651 = vpop.f32.mrf.mxu0
        %3652 = vmatprep.mubr.f32.mxu0 0.0
        %3653 = vmatmul.mubr.f32.gmra.mxu0 %v3442
        %v3654 = vpop.f32.mrf.mxu0
        %v3655 = vadd.f32 0.0, %v3654
        %v3656 = vpop.f32.mrf.mxu0
        %3657 = vmatprep.mubr.f32.mxu0 0.0
        %3658 = vmatmul.mubr.f32.gmra.mxu0 %v3445
        %v3659 = vpop.f32.mrf.mxu0
        %v3660 = vadd.f32 0.0, %v3659
        %v3661 = vpop.f32.mrf.mxu0
        %3662 = vmatprep.mubr.f32.mxu0 0.0
        %3663 = vmatmul.mubr.f32.gmra.mxu0 %v3448
        %v3664 = vpop.f32.mrf.mxu0
        %v3665 = vadd.f32 0.0, %v3664
        %v3666 = vpop.f32.mrf.mxu0
        %3667 = vmatprep.mubr.f32.mxu0 0.0
        %3668 = vmatmul.mubr.f32.gmra.mxu0 %v3451
        %v3669 = vpop.f32.mrf.mxu0
        %v3670 = vadd.f32 0.0, %v3669
        %v3671 = vpop.f32.mrf.mxu0
        %3672 = vmatprep.mubr.f32.mxu0 0.0
        %3673 = vmatmul.mubr.f32.gmra.mxu0 %v3454
        %v3674 = vpop.f32.mrf.mxu0
        %v3675 = vadd.f32 0.0, %v3674
        %v3676 = vpop.f32.mrf.mxu0
        %3677 = vmatprep.mubr.f32.mxu0 0.0
        %3678 = vmatmul.mubr.f32.gmra.mxu0 %v3457
        %v3679 = vpop.f32.mrf.mxu0
        %v3680 = vadd.f32 0.0, %v3679
        %v3681 = vpop.f32.mrf.mxu0
        %3682 = vmatprep.mubr.f32.mxu0 0.0
        %3683 = vmatmul.mubr.f32.gmra.mxu0 %v3460
        %v3684 = vpop.f32.mrf.mxu0
        %v3685 = vadd.f32 0.0, %v3684
        %v3686 = vpop.f32.mrf.mxu0
        %3687 = vmatprep.mubr.f32.mxu0 0.0
        %3688 = vmatmul.mubr.f32.gmra.mxu0 %v3463
        %v3689 = vpop.f32.mrf.mxu0
        %v3690 = vadd.f32 0.0, %v3689
        %v3691 = vpop.f32.mrf.mxu0
        %3692 = vdwg.mxu0
        %v3693 = vadd.f32 %v3303, %v3535
        %v3694 = vadd.f32 %v3304, %v3540
        %v3695 = vadd.f32 %v3305, %v3545
        %v3696 = vadd.f32 %v3306, %v3550
        %v3697 = vadd.f32 %v3307, %v3555
        %v3698 = vadd.f32 %v3308, %v3560
        %v3699 = vadd.f32 %v3309, %v3565
        %v3700 = vadd.f32 %v3310, %v3570
        %v3701 = vadd.f32 %v3311, %v3575
        %v3702 = vadd.f32 %v3312, %v3580
        %v3703 = vadd.f32 %v3313, %v3585
        %v3704 = vadd.f32 %v3314, %v3590
        %v3705 = vadd.f32 %v3315, %v3595
        %v3706 = vadd.f32 %v3316, %v3600
        %v3707 = vadd.f32 %v3317, %v3605
        %v3708 = vadd.f32 %v3318, %v3610
        %v3709 = vadd.f32 %v3319, %v3615
        %v3710 = vadd.f32 %v3320, %v3620
        %v3711 = vadd.f32 %v3321, %v3625
        %v3712 = vadd.f32 %v3322, %v3630
        %v3713 = vadd.f32 %v3323, %v3635
        %v3714 = vadd.f32 %v3324, %v3640
        %v3715 = vadd.f32 %v3325, %v3645
        %v3716 = vadd.f32 %v3326, %v3650
        %v3717 = vadd.f32 %v3327, %v3655
        %v3718 = vadd.f32 %v3328, %v3660
        %v3719 = vadd.f32 %v3329, %v3665
        %v3720 = vadd.f32 %v3330, %v3670
        %v3721 = vadd.f32 %v3331, %v3675
        %v3722 = vadd.f32 %v3332, %v3680
        %v3723 = vadd.f32 %v3333, %v3685
        %v3724 = vadd.f32 %v3334, %v3690
        %v3725 = vld [vmem:[%s2] sm:$0x1]
        %v3727 = vlaneseq
        %v3728 = vshrl.u32 %v3727, 7
        %v3729 = vsub.s32 0, %v3728
        %v3730 = vrot.slane %v3725, %v3729
        %v3732 = vadd.f32 %v3693, %v3730
        %v3733 = vadd.f32 %v3694, %v3730
        %v3734 = vadd.f32 %v3695, %v3730
        %v3735 = vadd.f32 %v3696, %v3730
        %v3736 = vadd.f32 %v3697, %v3730
        %v3737 = vadd.f32 %v3698, %v3730
        %v3738 = vadd.f32 %v3699, %v3730
        %v3739 = vadd.f32 %v3700, %v3730
        %v3740 = vadd.f32 %v3701, %v3730
        %v3741 = vadd.f32 %v3702, %v3730
        %v3742 = vadd.f32 %v3703, %v3730
        %v3743 = vadd.f32 %v3704, %v3730
        %v3744 = vadd.f32 %v3705, %v3730
        %v3745 = vadd.f32 %v3706, %v3730
        %v3746 = vadd.f32 %v3707, %v3730
        %v3747 = vadd.f32 %v3708, %v3730
        %v3748 = vadd.f32 %v3709, %v3730
        %v3749 = vadd.f32 %v3710, %v3730
        %v3750 = vadd.f32 %v3711, %v3730
        %v3751 = vadd.f32 %v3712, %v3730
        %v3752 = vadd.f32 %v3713, %v3730
        %v3753 = vadd.f32 %v3714, %v3730
        %v3754 = vadd.f32 %v3715, %v3730
        %v3755 = vadd.f32 %v3716, %v3730
        %v3756 = vadd.f32 %v3717, %v3730
        %v3757 = vadd.f32 %v3718, %v3730
        %v3758 = vadd.f32 %v3719, %v3730
        %v3759 = vadd.f32 %v3720, %v3730
        %v3760 = vadd.f32 %v3721, %v3730
        %v3761 = vadd.f32 %v3722, %v3730
        %v3762 = vadd.f32 %v3723, %v3730
        %v3763 = vadd.f32 %v3724, %v3730
        %v3764 = vmax.f32 %v3732, 0.0
        %v3765 = vmax.f32 %v3733, 0.0
        %v3766 = vmax.f32 %v3734, 0.0
        %v3767 = vmax.f32 %v3735, 0.0
        %v3768 = vmax.f32 %v3736, 0.0
        %v3769 = vmax.f32 %v3737, 0.0
        %v3770 = vmax.f32 %v3738, 0.0
        %v3771 = vmax.f32 %v3739, 0.0
        %v3772 = vmax.f32 %v3740, 0.0
        %v3773 = vmax.f32 %v3741, 0.0
        %v3774 = vmax.f32 %v3742, 0.0
        %v3775 = vmax.f32 %v3743, 0.0
        %v3776 = vmax.f32 %v3744, 0.0
        %v3777 = vmax.f32 %v3745, 0.0
        %v3778 = vmax.f32 %v3746, 0.0
        %v3779 = vmax.f32 %v3747, 0.0
        %v3780 = vmax.f32 %v3748, 0.0
        %v3781 = vmax.f32 %v3749, 0.0
        %v3782 = vmax.f32 %v3750, 0.0
        %v3783 = vmax.f32 %v3751, 0.0
        %v3784 = vmax.f32 %v3752, 0.0
        %v3785 = vmax.f32 %v3753, 0.0
        %v3786 = vmax.f32 %v3754, 0.0
        %v3787 = vmax.f32 %v3755, 0.0
        %v3788 = vmax.f32 %v3756, 0.0
        %v3789 = vmax.f32 %v3757, 0.0
        %v3790 = vmax.f32 %v3758, 0.0
        %v3791 = vmax.f32 %v3759, 0.0
        %v3792 = vmax.f32 %v3760, 0.0
        %v3793 = vmax.f32 %v3761, 0.0
        %v3794 = vmax.f32 %v3762, 0.0
        %v3795 = vmax.f32 %v3763, 0.0
        %vm3796 = vcmask 64512
        %3797 = vst.msk [vmem:[#allocation2] sm:$0xff] %vm3796, 0.0
        %3798 = vst.msk [vmem:[#allocation2 + $0x8] sm:$0xff] %vm3796, 0.0
        %vm3799 = vcmask 58368
        %3800 = vst.msk [vmem:[#allocation2 + $0x10] sm:$0x3] %vm3799, 0.0
        %3801 = vst.msk [vmem:[#allocation2 + $0x18] sm:$0xff] %vm3796, 0.0
        %3802 = vst.msk [vmem:[#allocation2 + $0x20] sm:$0xff] %vm3796, 0.0
        %3803 = vst.msk [vmem:[#allocation2 + $0x28] sm:$0x3] %vm3799, 0.0
        %3804 = vst.msk [vmem:[#allocation2 + $0x30] sm:$0xff] %vm3796, 0.0
        %3805 = vst.msk [vmem:[#allocation2 + $0x38] sm:$0xff] %vm3796, 0.0
        %3806 = vst.msk [vmem:[#allocation2 + $0x40] sm:$0x3] %vm3799, 0.0
        %3807 = vst.msk [vmem:[#allocation2 + $0x48] sm:$0xff] %vm3796, 0.0
        %3808 = vst.msk [vmem:[#allocation2 + $0x50] sm:$0xff] %vm3796, 0.0
        %3809 = vst.msk [vmem:[#allocation2 + $0x58] sm:$0x3] %vm3799, 0.0
        %3810 = vst.msk [vmem:[#allocation2 + $0x60] sm:$0xff] %vm3796, 0.0
        %3811 = vst.msk [vmem:[#allocation2 + $0x68] sm:$0xff] %vm3796, 0.0
        %3812 = vst.msk [vmem:[#allocation2 + $0x70] sm:$0x3] %vm3799, 0.0
        %3813 = vst.msk [vmem:[#allocation2 + $0x78] sm:$0xff] %vm3796, 0.0
        %3814 = vst.msk [vmem:[#allocation2 + $0x80] sm:$0xff] %vm3796, 0.0
        %3815 = vst.msk [vmem:[#allocation2 + $0x88] sm:$0x3] %vm3799, 0.0
        %3816 = vst.msk [vmem:[#allocation2 + $0x90] sm:$0xff] %vm3796, 0.0
        %3817 = vst.msk [vmem:[#allocation2 + $0x98] sm:$0xff] %vm3796, 0.0
        %3818 = vst.msk [vmem:[#allocation2 + $0xa0] sm:$0x3] %vm3799, 0.0
        %3819 = vst.msk [vmem:[#allocation2 + $0xa8] sm:$0xff] %vm3796, 0.0
        %3820 = vst.msk [vmem:[#allocation2 + $0xb0] sm:$0xff] %vm3796, 0.0
        %3821 = vst.msk [vmem:[#allocation2 + $0xb8] sm:$0x3] %vm3799, 0.0
        %3822 = vst.msk [vmem:[#allocation2 + $0xc0] sm:$0xff] %vm3796, 0.0
        %3823 = vst.msk [vmem:[#allocation2 + $0xc8] sm:$0xff] %vm3796, 0.0
        %3824 = vst.msk [vmem:[#allocation2 + $0xd0] sm:$0x3] %vm3799, 0.0
        %3825 = vst.msk [vmem:[#allocation2 + $0xd8] sm:$0xff] %vm3796, 0.0
        %3826 = vst.msk [vmem:[#allocation2 + $0xe0] sm:$0xff] %vm3796, 0.0
        %3827 = vst.msk [vmem:[#allocation2 + $0xe8] sm:$0x3] %vm3799, 0.0
        %3828 = vst.msk [vmem:[#allocation2 + $0xf0] sm:$0xff] %vm3796, 0.0
        %3829 = vst.msk [vmem:[#allocation2 + $0xf8] sm:$0xff] %vm3796, 0.0
        %3830 = vst.msk [vmem:[#allocation2 + $0x100] sm:$0x3] %vm3799, 0.0
        %3831 = vst.msk [vmem:[#allocation2 + $0x108] sm:$0xff] %vm3796, 0.0
        %3832 = vst.msk [vmem:[#allocation2 + $0x110] sm:$0xff] %vm3796, 0.0
        %3833 = vst.msk [vmem:[#allocation2 + $0x118] sm:$0x3] %vm3799, 0.0
        %3834 = vst.msk [vmem:[#allocation2 + $0x120] sm:$0xff] %vm3796, 0.0
        %3835 = vst.msk [vmem:[#allocation2 + $0x128] sm:$0xff] %vm3796, 0.0
        %3836 = vst.msk [vmem:[#allocation2 + $0x130] sm:$0x3] %vm3799, 0.0
        %3837 = vst.msk [vmem:[#allocation2 + $0x138] sm:$0xff] %vm3796, 0.0
        %3838 = vst.msk [vmem:[#allocation2 + $0x140] sm:$0xff] %vm3796, 0.0
        %3839 = vst.msk [vmem:[#allocation2 + $0x148] sm:$0x3] %vm3799, 0.0
        %3840 = vst.msk [vmem:[#allocation2 + $0x150] sm:$0xff] %vm3796, 0.0
        %3841 = vst.msk [vmem:[#allocation2 + $0x158] sm:$0xff] %vm3796, 0.0
        %3842 = vst.msk [vmem:[#allocation2 + $0x160] sm:$0x3] %vm3799, 0.0
        %3843 = vst.msk [vmem:[#allocation2 + $0x168] sm:$0xff] %vm3796, 0.0
        %3844 = vst.msk [vmem:[#allocation2 + $0x170] sm:$0xff] %vm3796, 0.0
        %3845 = vst.msk [vmem:[#allocation2 + $0x178] sm:$0x3] %vm3799, 0.0
        %3846 = vst.msk [vmem:[#allocation2 + $0x180] sm:$0xff] %vm3796, 0.0
        %3847 = vst.msk [vmem:[#allocation2 + $0x188] sm:$0xff] %vm3796, 0.0
        %3848 = vst.msk [vmem:[#allocation2 + $0x190] sm:$0x3] %vm3799, 0.0
        %3849 = vst.msk [vmem:[#allocation2 + $0x198] sm:$0xff] %vm3796, 0.0
        %3850 = vst.msk [vmem:[#allocation2 + $0x1a0] sm:$0xff] %vm3796, 0.0
        %3851 = vst.msk [vmem:[#allocation2 + $0x1a8] sm:$0x3] %vm3799, 0.0
        %s3852 = scalar_lea.vmem [#allocation2], 24
        %3853 = vst.msk [vmem:[%s3852 + $0x1] sm:$0xff] %vm3796, %v3764
        %3854 = vst.msk [vmem:[%s3852 + $0x9] sm:$0xff] %vm3796, %v3765
        %3855 = vst.msk [vmem:[%s3852 + $0x19] sm:$0xff] %vm3796, %v3766
        %3856 = vst.msk [vmem:[%s3852 + $0x21] sm:$0xff] %vm3796, %v3767
        %3857 = vst.msk [vmem:[%s3852 + $0x31] sm:$0xff] %vm3796, %v3768
        %3858 = vst.msk [vmem:[%s3852 + $0x39] sm:$0xff] %vm3796, %v3769
        %3859 = vst.msk [vmem:[%s3852 + $0x49] sm:$0xff] %vm3796, %v3770
        %3860 = vst.msk [vmem:[%s3852 + $0x51] sm:$0xff] %vm3796, %v3771
        %3861 = vst.msk [vmem:[%s3852 + $0x61] sm:$0xff] %vm3796, %v3772
        %3862 = vst.msk [vmem:[%s3852 + $0x69] sm:$0xff] %vm3796, %v3773
        %3863 = vst.msk [vmem:[%s3852 + $0x79] sm:$0xff] %vm3796, %v3774
        %3864 = vst.msk [vmem:[%s3852 + $0x81] sm:$0xff] %vm3796, %v3775
        %3865 = vst.msk [vmem:[%s3852 + $0x91] sm:$0xff] %vm3796, %v3776
        %3866 = vst.msk [vmem:[%s3852 + $0x99] sm:$0xff] %vm3796, %v3777
        %3867 = vst.msk [vmem:[%s3852 + $0xa9] sm:$0xff] %vm3796, %v3778
        %3868 = vst.msk [vmem:[%s3852 + $0xb1] sm:$0xff] %vm3796, %v3779
        %3869 = vst.msk [vmem:[%s3852 + $0xc1] sm:$0xff] %vm3796, %v3780
        %3870 = vst.msk [vmem:[%s3852 + $0xc9] sm:$0xff] %vm3796, %v3781
        %3871 = vst.msk [vmem:[%s3852 + $0xd9] sm:$0xff] %vm3796, %v3782
        %3872 = vst.msk [vmem:[%s3852 + $0xe1] sm:$0xff] %vm3796, %v3783
        %3873 = vst.msk [vmem:[%s3852 + $0xf1] sm:$0xff] %vm3796, %v3784
        %3874 = vst.msk [vmem:[%s3852 + $0xf9] sm:$0xff] %vm3796, %v3785
        %3875 = vst.msk [vmem:[%s3852 + $0x109] sm:$0xff] %vm3796, %v3786
        %3876 = vst.msk [vmem:[%s3852 + $0x111] sm:$0xff] %vm3796, %v3787
        %3877 = vst.msk [vmem:[%s3852 + $0x121] sm:$0xff] %vm3796, %v3788
        %3878 = vst.msk [vmem:[%s3852 + $0x129] sm:$0xff] %vm3796, %v3789
        %3879 = vst.msk [vmem:[%s3852 + $0x139] sm:$0xff] %vm3796, %v3790
        %3880 = vst.msk [vmem:[%s3852 + $0x141] sm:$0xff] %vm3796, %v3791
        %3881 = vst.msk [vmem:[%s3852 + $0x151] sm:$0xff] %vm3796, %v3792
        %3882 = vst.msk [vmem:[%s3852 + $0x159] sm:$0xff] %vm3796, %v3793
        %3883 = vst.msk [vmem:[%s3852 + $0x169] sm:$0xff] %vm3796, %v3794
        %3884 = vst.msk [vmem:[%s3852 + $0x171] sm:$0xff] %vm3796, %v3795
        %v3885 = vld [vmem:[#allocation2] sm:$0xff]
        %v3886 = vld [vmem:[#allocation2 + $0x8] sm:$0xff]
        %v3887 = vld [vmem:[#allocation2 + $0x18] sm:$0xff]
        %v3888 = vld [vmem:[#allocation2 + $0x20] sm:$0xff]
        %v3889 = vld [vmem:[#allocation2 + $0x30] sm:$0xff]
        %v3890 = vld [vmem:[#allocation2 + $0x38] sm:$0xff]
        %v3891 = vld [vmem:[#allocation2 + $0x48] sm:$0xff]
        %v3892 = vld [vmem:[#allocation2 + $0x50] sm:$0xff]
        %v3893 = vld [vmem:[#allocation2 + $0x60] sm:$0xff]
        %v3894 = vld [vmem:[#allocation2 + $0x68] sm:$0xff]
        %v3895 = vld [vmem:[#allocation2 + $0x78] sm:$0xff]
        %v3896 = vld [vmem:[#allocation2 + $0x80] sm:$0xff]
        %v3897 = vld [vmem:[#allocation2 + $0x90] sm:$0xff]
        %v3898 = vld [vmem:[#allocation2 + $0x98] sm:$0xff]
        %v3899 = vld [vmem:[#allocation2 + $0xa8] sm:$0xff]
        %v3900 = vld [vmem:[#allocation2 + $0xb0] sm:$0xff]
        %v3901 = vld [vmem:[#allocation2 + $0xc0] sm:$0xff]
        %v3902 = vld [vmem:[#allocation2 + $0xc8] sm:$0xff]
        %v3903 = vld [vmem:[#allocation2 + $0xd8] sm:$0xff]
        %v3904 = vld [vmem:[#allocation2 + $0xe0] sm:$0xff]
        %v3905 = vld [vmem:[#allocation2 + $0xf0] sm:$0xff]
        %v3906 = vld [vmem:[#allocation2 + $0xf8] sm:$0xff]
        %v3907 = vld [vmem:[#allocation2 + $0x108] sm:$0xff]
        %v3908 = vld [vmem:[#allocation2 + $0x110] sm:$0xff]
        %v3909 = vld [vmem:[#allocation2 + $0x120] sm:$0xff]
        %v3910 = vld [vmem:[#allocation2 + $0x128] sm:$0xff]
        %v3911 = vld [vmem:[#allocation2 + $0x138] sm:$0xff]
        %v3912 = vld [vmem:[#allocation2 + $0x140] sm:$0xff]
        %v3913 = vld [vmem:[#allocation2 + $0x150] sm:$0xff]
        %v3914 = vld [vmem:[#allocation2 + $0x158] sm:$0xff]
        %v3915 = vld [vmem:[#allocation2 + $0x168] sm:$0xff]
        %v3916 = vld [vmem:[#allocation2 + $0x170] sm:$0xff]
        %v3917 = vld [vmem:[%s3] sm:$0xff]
        %v3918 = vld [vmem:[#allocation2 + $0x1] sm:$0xff]
        %v3919 = vld [vmem:[#allocation2 + $0x9] sm:$0xff]
        %v3920 = vld [vmem:[#allocation2 + $0x19] sm:$0xff]
        %v3921 = vld [vmem:[#allocation2 + $0x21] sm:$0xff]
        %v3922 = vld [vmem:[#allocation2 + $0x31] sm:$0xff]
        %v3923 = vld [vmem:[#allocation2 + $0x39] sm:$0xff]
        %v3924 = vld [vmem:[#allocation2 + $0x49] sm:$0xff]
        %v3925 = vld [vmem:[#allocation2 + $0x51] sm:$0xff]
        %v3926 = vld [vmem:[#allocation2 + $0x61] sm:$0xff]
        %v3927 = vld [vmem:[#allocation2 + $0x69] sm:$0xff]
        %v3928 = vld [vmem:[#allocation2 + $0x79] sm:$0xff]
        %v3929 = vld [vmem:[#allocation2 + $0x81] sm:$0xff]
        %v3930 = vld [vmem:[#allocation2 + $0x91] sm:$0xff]
        %v3931 = vld [vmem:[#allocation2 + $0x99] sm:$0xff]
        %v3932 = vld [vmem:[#allocation2 + $0xa9] sm:$0xff]
        %v3933 = vld [vmem:[#allocation2 + $0xb1] sm:$0xff]
        %v3934 = vld [vmem:[#allocation2 + $0xc1] sm:$0xff]
        %v3935 = vld [vmem:[#allocation2 + $0xc9] sm:$0xff]
        %v3936 = vld [vmem:[#allocation2 + $0xd9] sm:$0xff]
        %v3937 = vld [vmem:[#allocation2 + $0xe1] sm:$0xff]
        %v3938 = vld [vmem:[#allocation2 + $0xf1] sm:$0xff]
        %v3939 = vld [vmem:[#allocation2 + $0xf9] sm:$0xff]
        %v3940 = vld [vmem:[#allocation2 + $0x109] sm:$0xff]
        %v3941 = vld [vmem:[#allocation2 + $0x111] sm:$0xff]
        %v3942 = vld [vmem:[#allocation2 + $0x121] sm:$0xff]
        %v3943 = vld [vmem:[#allocation2 + $0x129] sm:$0xff]
        %v3944 = vld [vmem:[#allocation2 + $0x139] sm:$0xff]
        %v3945 = vld [vmem:[#allocation2 + $0x141] sm:$0xff]
        %v3946 = vld [vmem:[#allocation2 + $0x151] sm:$0xff]
        %v3947 = vld [vmem:[#allocation2 + $0x159] sm:$0xff]
        %v3948 = vld [vmem:[#allocation2 + $0x169] sm:$0xff]
        %v3949 = vld [vmem:[#allocation2 + $0x171] sm:$0xff]
        %s3950 = scalar_lea.vmem %s3, 8
        %v3951 = vld [vmem:[%s3950] sm:$0xff]
        %v3953 = vsel %vm3796, %v3918, 0
        %v3956 = vsel %vm3796, %v3919, 0
        %v3959 = vsel %vm3796, %v3920, 0
        %v3962 = vsel %vm3796, %v3921, 0
        %v3965 = vsel %vm3796, %v3922, 0
        %v3968 = vsel %vm3796, %v3923, 0
        %v3971 = vsel %vm3796, %v3924, 0
        %v3974 = vsel %vm3796, %v3925, 0
        %v3977 = vsel %vm3796, %v3926, 0
        %v3980 = vsel %vm3796, %v3927, 0
        %v3983 = vsel %vm3796, %v3928, 0
        %v3986 = vsel %vm3796, %v3929, 0
        %v3989 = vsel %vm3796, %v3930, 0
        %v3992 = vsel %vm3796, %v3931, 0
        %v3995 = vsel %vm3796, %v3932, 0
        %v3998 = vsel %vm3796, %v3933, 0
        %v4001 = vsel %vm3796, %v3934, 0
        %v4004 = vsel %vm3796, %v3935, 0
        %v4007 = vsel %vm3796, %v3936, 0
        %v4010 = vsel %vm3796, %v3937, 0
        %v4013 = vsel %vm3796, %v3938, 0
        %v4016 = vsel %vm3796, %v3939, 0
        %v4019 = vsel %vm3796, %v3940, 0
        %v4022 = vsel %vm3796, %v3941, 0
        %v4025 = vsel %vm3796, %v3942, 0
        %v4028 = vsel %vm3796, %v3943, 0
        %v4031 = vsel %vm3796, %v3944, 0
        %v4034 = vsel %vm3796, %v3945, 0
        %v4037 = vsel %vm3796, %v3946, 0
        %v4040 = vsel %vm3796, %v3947, 0
        %v4043 = vsel %vm3796, %v3948, 0
        %v4046 = vsel %vm3796, %v3949, 0
        %4048 = vmatprep.subr.mxu0 0.0
        %4049 = vmatpush1.msra.mxu0 0.0
        %4050 = vmatprep.subr.mxu0 0.0
        %4051 = vmatpush1.msra.mxu0 0.0
        %4052 = vmatprep.subr.mxu0 0.0
        %4053 = vmatpush1.msra.mxu0 0.0
        %4054 = vmatprep.subr.mxu0 0.0
        %4055 = vmatpush1.msra.mxu0 0.0
        %4056 = vmatprep.subr.mxu0 0.0
        %4057 = vmatpush1.msra.mxu0 0.0
        %4058 = vmatprep.subr.mxu0 0.0
        %4059 = vmatpush1.msra.mxu0 0.0
        %4060 = vmatprep.subr.mxu0 0.0
        %4061 = vmatpush1.msra.mxu0 0.0
        %4062 = vmatprep.subr.mxu0 0.0
        %4063 = vmatpush1.msra.mxu0 0.0
        %4064 = vmatprep.subr.mxu0 0.0
        %4065 = vmatpush1.msra.mxu0 0.0
        %4066 = vmatprep.subr.mxu0 0.0
        %4067 = vmatpush1.msra.mxu0 0.0
        %4068 = vmatprep.subr.mxu0 0.0
        %4069 = vmatpush1.msra.mxu0 0.0
        %4070 = vmatprep.subr.mxu0 0.0
        %4071 = vmatpush1.msra.mxu0 0.0
        %4072 = vmatprep.subr.mxu0 0.0
        %4073 = vmatpush1.msra.mxu0 0.0
        %4074 = vmatprep.subr.mxu0 0.0
        %4075 = vmatpush1.msra.mxu0 0.0
        %4076 = vmatprep.subr.mxu0 0.0
        %4077 = vmatpush1.msra.mxu0 0.0
        %4078 = vmatprep.subr.mxu0 0.0
        %4079 = vmatpush1.msra.mxu0 %v3951
        %4080 = vmatprep.subr.mxu0 0.0
        %4081 = vmatpush2.msra.mxu0 0.0
        %4082 = vmatprep.subr.mxu0 0.0
        %4083 = vmatpush2.msra.mxu0 0.0
        %4084 = vmatprep.subr.mxu0 0.0
        %4085 = vmatpush2.msra.mxu0 0.0
        %4086 = vmatprep.subr.mxu0 0.0
        %4087 = vmatpush2.msra.mxu0 0.0
        %4088 = vmatprep.subr.mxu0 0.0
        %4089 = vmatpush2.msra.mxu0 0.0
        %4090 = vmatprep.subr.mxu0 0.0
        %4091 = vmatpush2.msra.mxu0 0.0
        %4092 = vmatprep.subr.mxu0 0.0
        %4093 = vmatpush2.msra.mxu0 0.0
        %4094 = vmatprep.subr.mxu0 0.0
        %4095 = vmatpush2.msra.mxu0 0.0
        %4096 = vmatprep.subr.mxu0 0.0
        %4097 = vmatpush2.msra.mxu0 0.0
        %4098 = vmatprep.subr.mxu0 0.0
        %4099 = vmatpush2.msra.mxu0 0.0
        %4100 = vmatprep.subr.mxu0 0.0
        %4101 = vmatpush2.msra.mxu0 0.0
        %4102 = vmatprep.subr.mxu0 0.0
        %4103 = vmatpush2.msra.mxu0 0.0
        %4104 = vmatprep.subr.mxu0 0.0
        %4105 = vmatpush2.msra.mxu0 0.0
        %4106 = vmatprep.subr.mxu0 0.0
        %4107 = vmatpush2.msra.mxu0 0.0
        %4108 = vmatprep.subr.mxu0 0.0
        %4109 = vmatpush2.msra.mxu0 0.0
        %4110 = vmatprep.subr.mxu0 0.0
        %4111 = vmatpush2.msra.mxu0 0.0
        %4112 = vmatprep.mubr.f32.mxu0 0.0
        %4113 = vmatmul.mubr.f32.gmra.mxu0 %v3953
        %v4114 = vpop.f32.mrf.mxu0
        %v4115 = vadd.f32 0.0, %v4114
        %v4116 = vpop.f32.mrf.mxu0
        %4117 = vmatprep.mubr.f32.mxu0 0.0
        %4118 = vmatmul.mubr.f32.gmra.mxu0 %v3956
        %v4119 = vpop.f32.mrf.mxu0
        %v4120 = vadd.f32 0.0, %v4119
        %v4121 = vpop.f32.mrf.mxu0
        %4122 = vmatprep.mubr.f32.mxu0 0.0
        %4123 = vmatmul.mubr.f32.gmra.mxu0 %v3959
        %v4124 = vpop.f32.mrf.mxu0
        %v4125 = vadd.f32 0.0, %v4124
        %v4126 = vpop.f32.mrf.mxu0
        %4127 = vmatprep.mubr.f32.mxu0 0.0
        %4128 = vmatmul.mubr.f32.gmra.mxu0 %v3962
        %v4129 = vpop.f32.mrf.mxu0
        %v4130 = vadd.f32 0.0, %v4129
        %v4131 = vpop.f32.mrf.mxu0
        %4132 = vmatprep.mubr.f32.mxu0 0.0
        %4133 = vmatmul.mubr.f32.gmra.mxu0 %v3965
        %v4134 = vpop.f32.mrf.mxu0
        %v4135 = vadd.f32 0.0, %v4134
        %v4136 = vpop.f32.mrf.mxu0
        %4137 = vmatprep.mubr.f32.mxu0 0.0
        %4138 = vmatmul.mubr.f32.gmra.mxu0 %v3968
        %v4139 = vpop.f32.mrf.mxu0
        %v4140 = vadd.f32 0.0, %v4139
        %v4141 = vpop.f32.mrf.mxu0
        %4142 = vmatprep.mubr.f32.mxu0 0.0
        %4143 = vmatmul.mubr.f32.gmra.mxu0 %v3971
        %v4144 = vpop.f32.mrf.mxu0
        %v4145 = vadd.f32 0.0, %v4144
        %v4146 = vpop.f32.mrf.mxu0
        %4147 = vmatprep.mubr.f32.mxu0 0.0
        %4148 = vmatmul.mubr.f32.gmra.mxu0 %v3974
        %v4149 = vpop.f32.mrf.mxu0
        %v4150 = vadd.f32 0.0, %v4149
        %v4151 = vpop.f32.mrf.mxu0
        %4152 = vmatprep.mubr.f32.mxu0 0.0
        %4153 = vmatmul.mubr.f32.gmra.mxu0 %v3977
        %v4154 = vpop.f32.mrf.mxu0
        %v4155 = vadd.f32 0.0, %v4154
        %v4156 = vpop.f32.mrf.mxu0
        %4157 = vmatprep.mubr.f32.mxu0 0.0
        %4158 = vmatmul.mubr.f32.gmra.mxu0 %v3980
        %v4159 = vpop.f32.mrf.mxu0
        %v4160 = vadd.f32 0.0, %v4159
        %v4161 = vpop.f32.mrf.mxu0
        %4162 = vmatprep.mubr.f32.mxu0 0.0
        %4163 = vmatmul.mubr.f32.gmra.mxu0 %v3983
        %v4164 = vpop.f32.mrf.mxu0
        %v4165 = vadd.f32 0.0, %v4164
        %v4166 = vpop.f32.mrf.mxu0
        %4167 = vmatprep.mubr.f32.mxu0 0.0
        %4168 = vmatmul.mubr.f32.gmra.mxu0 %v3986
        %v4169 = vpop.f32.mrf.mxu0
        %v4170 = vadd.f32 0.0, %v4169
        %v4171 = vpop.f32.mrf.mxu0
        %4172 = vmatprep.mubr.f32.mxu0 0.0
        %4173 = vmatmul.mubr.f32.gmra.mxu0 %v3989
        %v4174 = vpop.f32.mrf.mxu0
        %v4175 = vadd.f32 0.0, %v4174
        %v4176 = vpop.f32.mrf.mxu0
        %4177 = vmatprep.mubr.f32.mxu0 0.0
        %4178 = vmatmul.mubr.f32.gmra.mxu0 %v3992
        %v4179 = vpop.f32.mrf.mxu0
        %v4180 = vadd.f32 0.0, %v4179
        %v4181 = vpop.f32.mrf.mxu0
        %4182 = vmatprep.mubr.f32.mxu0 0.0
        %4183 = vmatmul.mubr.f32.gmra.mxu0 %v3995
        %v4184 = vpop.f32.mrf.mxu0
        %v4185 = vadd.f32 0.0, %v4184
        %v4186 = vpop.f32.mrf.mxu0
        %4187 = vmatprep.mubr.f32.mxu0 0.0
        %4188 = vmatmul.mubr.f32.gmra.mxu0 %v3998
        %v4189 = vpop.f32.mrf.mxu0
        %v4190 = vadd.f32 0.0, %v4189
        %v4191 = vpop.f32.mrf.mxu0
        %4192 = vmatprep.mubr.f32.mxu0 0.0
        %4193 = vmatmul.mubr.f32.gmra.mxu0 %v4001
        %v4194 = vpop.f32.mrf.mxu0
        %v4195 = vadd.f32 0.0, %v4194
        %v4196 = vpop.f32.mrf.mxu0
        %4197 = vmatprep.mubr.f32.mxu0 0.0
        %4198 = vmatmul.mubr.f32.gmra.mxu0 %v4004
        %v4199 = vpop.f32.mrf.mxu0
        %v4200 = vadd.f32 0.0, %v4199
        %v4201 = vpop.f32.mrf.mxu0
        %4202 = vmatprep.mubr.f32.mxu0 0.0
        %4203 = vmatmul.mubr.f32.gmra.mxu0 %v4007
        %v4204 = vpop.f32.mrf.mxu0
        %v4205 = vadd.f32 0.0, %v4204
        %v4206 = vpop.f32.mrf.mxu0
        %4207 = vmatprep.mubr.f32.mxu0 0.0
        %4208 = vmatmul.mubr.f32.gmra.mxu0 %v4010
        %v4209 = vpop.f32.mrf.mxu0
        %v4210 = vadd.f32 0.0, %v4209
        %v4211 = vpop.f32.mrf.mxu0
        %4212 = vmatprep.mubr.f32.mxu0 0.0
        %4213 = vmatmul.mubr.f32.gmra.mxu0 %v4013
        %v4214 = vpop.f32.mrf.mxu0
        %v4215 = vadd.f32 0.0, %v4214
        %v4216 = vpop.f32.mrf.mxu0
        %4217 = vmatprep.mubr.f32.mxu0 0.0
        %4218 = vmatmul.mubr.f32.gmra.mxu0 %v4016
        %v4219 = vpop.f32.mrf.mxu0
        %v4220 = vadd.f32 0.0, %v4219
        %v4221 = vpop.f32.mrf.mxu0
        %4222 = vmatprep.mubr.f32.mxu0 0.0
        %4223 = vmatmul.mubr.f32.gmra.mxu0 %v4019
        %v4224 = vpop.f32.mrf.mxu0
        %v4225 = vadd.f32 0.0, %v4224
        %v4226 = vpop.f32.mrf.mxu0
        %4227 = vmatprep.mubr.f32.mxu0 0.0
        %4228 = vmatmul.mubr.f32.gmra.mxu0 %v4022
        %v4229 = vpop.f32.mrf.mxu0
        %v4230 = vadd.f32 0.0, %v4229
        %v4231 = vpop.f32.mrf.mxu0
        %4232 = vmatprep.mubr.f32.mxu0 0.0
        %4233 = vmatmul.mubr.f32.gmra.mxu0 %v4025
        %v4234 = vpop.f32.mrf.mxu0
        %v4235 = vadd.f32 0.0, %v4234
        %v4236 = vpop.f32.mrf.mxu0
        %4237 = vmatprep.mubr.f32.mxu0 0.0
        %4238 = vmatmul.mubr.f32.gmra.mxu0 %v4028
        %v4239 = vpop.f32.mrf.mxu0
        %v4240 = vadd.f32 0.0, %v4239
        %v4241 = vpop.f32.mrf.mxu0
        %4242 = vmatprep.mubr.f32.mxu0 0.0
        %4243 = vmatmul.mubr.f32.gmra.mxu0 %v4031
        %v4244 = vpop.f32.mrf.mxu0
        %v4245 = vadd.f32 0.0, %v4244
        %v4246 = vpop.f32.mrf.mxu0
        %4247 = vmatprep.mubr.f32.mxu0 0.0
        %4248 = vmatmul.mubr.f32.gmra.mxu0 %v4034
        %v4249 = vpop.f32.mrf.mxu0
        %v4250 = vadd.f32 0.0, %v4249
        %v4251 = vpop.f32.mrf.mxu0
        %4252 = vmatprep.mubr.f32.mxu0 0.0
        %4253 = vmatmul.mubr.f32.gmra.mxu0 %v4037
        %v4254 = vpop.f32.mrf.mxu0
        %v4255 = vadd.f32 0.0, %v4254
        %v4256 = vpop.f32.mrf.mxu0
        %4257 = vmatprep.mubr.f32.mxu0 0.0
        %4258 = vmatmul.mubr.f32.gmra.mxu0 %v4040
        %v4259 = vpop.f32.mrf.mxu0
        %v4260 = vadd.f32 0.0, %v4259
        %v4261 = vpop.f32.mrf.mxu0
        %4262 = vmatprep.mubr.f32.mxu0 0.0
        %4263 = vmatmul.mubr.f32.gmra.mxu0 %v4043
        %v4264 = vpop.f32.mrf.mxu0
        %v4265 = vadd.f32 0.0, %v4264
        %v4266 = vpop.f32.mrf.mxu0
        %4267 = vmatprep.mubr.f32.mxu0 0.0
        %4268 = vmatmul.mubr.f32.gmra.mxu0 %v4046
        %v4269 = vpop.f32.mrf.mxu0
        %v4270 = vadd.f32 0.0, %v4269
        %v4271 = vpop.f32.mrf.mxu0
        %4272 = vdwg.mxu0
        %v4274 = vsel %vm3796, %v3885, 0
        %v4277 = vsel %vm3796, %v3886, 0
        %v4280 = vsel %vm3796, %v3887, 0
        %v4283 = vsel %vm3796, %v3888, 0
        %v4286 = vsel %vm3796, %v3889, 0
        %v4289 = vsel %vm3796, %v3890, 0
        %v4292 = vsel %vm3796, %v3891, 0
        %v4295 = vsel %vm3796, %v3892, 0
        %v4298 = vsel %vm3796, %v3893, 0
        %v4301 = vsel %vm3796, %v3894, 0
        %v4304 = vsel %vm3796, %v3895, 0
        %v4307 = vsel %vm3796, %v3896, 0
        %v4310 = vsel %vm3796, %v3897, 0
        %v4313 = vsel %vm3796, %v3898, 0
        %v4316 = vsel %vm3796, %v3899, 0
        %v4319 = vsel %vm3796, %v3900, 0
        %v4322 = vsel %vm3796, %v3901, 0
        %v4325 = vsel %vm3796, %v3902, 0
        %v4328 = vsel %vm3796, %v3903, 0
        %v4331 = vsel %vm3796, %v3904, 0
        %v4334 = vsel %vm3796, %v3905, 0
        %v4337 = vsel %vm3796, %v3906, 0
        %v4340 = vsel %vm3796, %v3907, 0
        %v4343 = vsel %vm3796, %v3908, 0
        %v4346 = vsel %vm3796, %v3909, 0
        %v4349 = vsel %vm3796, %v3910, 0
        %v4352 = vsel %vm3796, %v3911, 0
        %v4355 = vsel %vm3796, %v3912, 0
        %v4358 = vsel %vm3796, %v3913, 0
        %v4361 = vsel %vm3796, %v3914, 0
        %v4364 = vsel %vm3796, %v3915, 0
        %v4367 = vsel %vm3796, %v3916, 0
        %4369 = vmatprep.subr.mxu0 0.0
        %4370 = vmatpush1.msra.mxu0 0.0
        %4371 = vmatprep.subr.mxu0 0.0
        %4372 = vmatpush1.msra.mxu0 0.0
        %4373 = vmatprep.subr.mxu0 0.0
        %4374 = vmatpush1.msra.mxu0 0.0
        %4375 = vmatprep.subr.mxu0 0.0
        %4376 = vmatpush1.msra.mxu0 0.0
        %4377 = vmatprep.subr.mxu0 0.0
        %4378 = vmatpush1.msra.mxu0 0.0
        %4379 = vmatprep.subr.mxu0 0.0
        %4380 = vmatpush1.msra.mxu0 0.0
        %4381 = vmatprep.subr.mxu0 0.0
        %4382 = vmatpush1.msra.mxu0 0.0
        %4383 = vmatprep.subr.mxu0 0.0
        %4384 = vmatpush1.msra.mxu0 0.0
        %4385 = vmatprep.subr.mxu0 0.0
        %4386 = vmatpush1.msra.mxu0 0.0
        %4387 = vmatprep.subr.mxu0 0.0
        %4388 = vmatpush1.msra.mxu0 0.0
        %4389 = vmatprep.subr.mxu0 0.0
        %4390 = vmatpush1.msra.mxu0 0.0
        %4391 = vmatprep.subr.mxu0 0.0
        %4392 = vmatpush1.msra.mxu0 0.0
        %4393 = vmatprep.subr.mxu0 0.0
        %4394 = vmatpush1.msra.mxu0 0.0
        %4395 = vmatprep.subr.mxu0 0.0
        %4396 = vmatpush1.msra.mxu0 0.0
        %4397 = vmatprep.subr.mxu0 0.0
        %4398 = vmatpush1.msra.mxu0 0.0
        %4399 = vmatprep.subr.mxu0 0.0
        %4400 = vmatpush1.msra.mxu0 %v3917
        %4401 = vmatprep.subr.mxu0 0.0
        %4402 = vmatpush2.msra.mxu0 0.0
        %4403 = vmatprep.subr.mxu0 0.0
        %4404 = vmatpush2.msra.mxu0 0.0
        %4405 = vmatprep.subr.mxu0 0.0
        %4406 = vmatpush2.msra.mxu0 0.0
        %4407 = vmatprep.subr.mxu0 0.0
        %4408 = vmatpush2.msra.mxu0 0.0
        %4409 = vmatprep.subr.mxu0 0.0
        %4410 = vmatpush2.msra.mxu0 0.0
        %4411 = vmatprep.subr.mxu0 0.0
        %4412 = vmatpush2.msra.mxu0 0.0
        %4413 = vmatprep.subr.mxu0 0.0
        %4414 = vmatpush2.msra.mxu0 0.0
        %4415 = vmatprep.subr.mxu0 0.0
        %4416 = vmatpush2.msra.mxu0 0.0
        %4417 = vmatprep.subr.mxu0 0.0
        %4418 = vmatpush2.msra.mxu0 0.0
        %4419 = vmatprep.subr.mxu0 0.0
        %4420 = vmatpush2.msra.mxu0 0.0
        %4421 = vmatprep.subr.mxu0 0.0
        %4422 = vmatpush2.msra.mxu0 0.0
        %4423 = vmatprep.subr.mxu0 0.0
        %4424 = vmatpush2.msra.mxu0 0.0
        %4425 = vmatprep.subr.mxu0 0.0
        %4426 = vmatpush2.msra.mxu0 0.0
        %4427 = vmatprep.subr.mxu0 0.0
        %4428 = vmatpush2.msra.mxu0 0.0
        %4429 = vmatprep.subr.mxu0 0.0
        %4430 = vmatpush2.msra.mxu0 0.0
        %4431 = vmatprep.subr.mxu0 0.0
        %4432 = vmatpush2.msra.mxu0 0.0
        %4433 = vmatprep.mubr.f32.mxu0 0.0
        %4434 = vmatmul.mubr.f32.gmra.mxu0 %v4274
        %v4435 = vpop.f32.mrf.mxu0
        %v4436 = vadd.f32 %v4115, %v4435
        %v4437 = vpop.f32.mrf.mxu0
        %4438 = vmatprep.mubr.f32.mxu0 0.0
        %4439 = vmatmul.mubr.f32.gmra.mxu0 %v4277
        %v4440 = vpop.f32.mrf.mxu0
        %v4441 = vadd.f32 %v4120, %v4440
        %v4442 = vpop.f32.mrf.mxu0
        %4443 = vmatprep.mubr.f32.mxu0 0.0
        %4444 = vmatmul.mubr.f32.gmra.mxu0 %v4280
        %v4445 = vpop.f32.mrf.mxu0
        %v4446 = vadd.f32 %v4125, %v4445
        %v4447 = vpop.f32.mrf.mxu0
        %4448 = vmatprep.mubr.f32.mxu0 0.0
        %4449 = vmatmul.mubr.f32.gmra.mxu0 %v4283
        %v4450 = vpop.f32.mrf.mxu0
        %v4451 = vadd.f32 %v4130, %v4450
        %v4452 = vpop.f32.mrf.mxu0
        %4453 = vmatprep.mubr.f32.mxu0 0.0
        %4454 = vmatmul.mubr.f32.gmra.mxu0 %v4286
        %v4455 = vpop.f32.mrf.mxu0
        %v4456 = vadd.f32 %v4135, %v4455
        %v4457 = vpop.f32.mrf.mxu0
        %4458 = vmatprep.mubr.f32.mxu0 0.0
        %4459 = vmatmul.mubr.f32.gmra.mxu0 %v4289
        %v4460 = vpop.f32.mrf.mxu0
        %v4461 = vadd.f32 %v4140, %v4460
        %v4462 = vpop.f32.mrf.mxu0
        %4463 = vmatprep.mubr.f32.mxu0 0.0
        %4464 = vmatmul.mubr.f32.gmra.mxu0 %v4292
        %v4465 = vpop.f32.mrf.mxu0
        %v4466 = vadd.f32 %v4145, %v4465
        %v4467 = vpop.f32.mrf.mxu0
        %4468 = vmatprep.mubr.f32.mxu0 0.0
        %4469 = vmatmul.mubr.f32.gmra.mxu0 %v4295
        %v4470 = vpop.f32.mrf.mxu0
        %v4471 = vadd.f32 %v4150, %v4470
        %v4472 = vpop.f32.mrf.mxu0
        %4473 = vmatprep.mubr.f32.mxu0 0.0
        %4474 = vmatmul.mubr.f32.gmra.mxu0 %v4298
        %v4475 = vpop.f32.mrf.mxu0
        %v4476 = vadd.f32 %v4155, %v4475
        %v4477 = vpop.f32.mrf.mxu0
        %4478 = vmatprep.mubr.f32.mxu0 0.0
        %4479 = vmatmul.mubr.f32.gmra.mxu0 %v4301
        %v4480 = vpop.f32.mrf.mxu0
        %v4481 = vadd.f32 %v4160, %v4480
        %v4482 = vpop.f32.mrf.mxu0
        %4483 = vmatprep.mubr.f32.mxu0 0.0
        %4484 = vmatmul.mubr.f32.gmra.mxu0 %v4304
        %v4485 = vpop.f32.mrf.mxu0
        %v4486 = vadd.f32 %v4165, %v4485
        %v4487 = vpop.f32.mrf.mxu0
        %4488 = vmatprep.mubr.f32.mxu0 0.0
        %4489 = vmatmul.mubr.f32.gmra.mxu0 %v4307
        %v4490 = vpop.f32.mrf.mxu0
        %v4491 = vadd.f32 %v4170, %v4490
        %v4492 = vpop.f32.mrf.mxu0
        %4493 = vmatprep.mubr.f32.mxu0 0.0
        %4494 = vmatmul.mubr.f32.gmra.mxu0 %v4310
        %v4495 = vpop.f32.mrf.mxu0
        %v4496 = vadd.f32 %v4175, %v4495
        %v4497 = vpop.f32.mrf.mxu0
        %4498 = vmatprep.mubr.f32.mxu0 0.0
        %4499 = vmatmul.mubr.f32.gmra.mxu0 %v4313
        %v4500 = vpop.f32.mrf.mxu0
        %v4501 = vadd.f32 %v4180, %v4500
        %v4502 = vpop.f32.mrf.mxu0
        %4503 = vmatprep.mubr.f32.mxu0 0.0
        %4504 = vmatmul.mubr.f32.gmra.mxu0 %v4316
        %v4505 = vpop.f32.mrf.mxu0
        %v4506 = vadd.f32 %v4185, %v4505
        %v4507 = vpop.f32.mrf.mxu0
        %4508 = vmatprep.mubr.f32.mxu0 0.0
        %4509 = vmatmul.mubr.f32.gmra.mxu0 %v4319
        %v4510 = vpop.f32.mrf.mxu0
        %v4511 = vadd.f32 %v4190, %v4510
        %v4512 = vpop.f32.mrf.mxu0
        %4513 = vmatprep.mubr.f32.mxu0 0.0
        %4514 = vmatmul.mubr.f32.gmra.mxu0 %v4322
        %v4515 = vpop.f32.mrf.mxu0
        %v4516 = vadd.f32 %v4195, %v4515
        %v4517 = vpop.f32.mrf.mxu0
        %4518 = vmatprep.mubr.f32.mxu0 0.0
        %4519 = vmatmul.mubr.f32.gmra.mxu0 %v4325
        %v4520 = vpop.f32.mrf.mxu0
        %v4521 = vadd.f32 %v4200, %v4520
        %v4522 = vpop.f32.mrf.mxu0
        %4523 = vmatprep.mubr.f32.mxu0 0.0
        %4524 = vmatmul.mubr.f32.gmra.mxu0 %v4328
        %v4525 = vpop.f32.mrf.mxu0
        %v4526 = vadd.f32 %v4205, %v4525
        %v4527 = vpop.f32.mrf.mxu0
        %4528 = vmatprep.mubr.f32.mxu0 0.0
        %4529 = vmatmul.mubr.f32.gmra.mxu0 %v4331
        %v4530 = vpop.f32.mrf.mxu0
        %v4531 = vadd.f32 %v4210, %v4530
        %v4532 = vpop.f32.mrf.mxu0
        %4533 = vmatprep.mubr.f32.mxu0 0.0
        %4534 = vmatmul.mubr.f32.gmra.mxu0 %v4334
        %v4535 = vpop.f32.mrf.mxu0
        %v4536 = vadd.f32 %v4215, %v4535
        %v4537 = vpop.f32.mrf.mxu0
        %4538 = vmatprep.mubr.f32.mxu0 0.0
        %4539 = vmatmul.mubr.f32.gmra.mxu0 %v4337
        %v4540 = vpop.f32.mrf.mxu0
        %v4541 = vadd.f32 %v4220, %v4540
        %v4542 = vpop.f32.mrf.mxu0
        %4543 = vmatprep.mubr.f32.mxu0 0.0
        %4544 = vmatmul.mubr.f32.gmra.mxu0 %v4340
        %v4545 = vpop.f32.mrf.mxu0
        %v4546 = vadd.f32 %v4225, %v4545
        %v4547 = vpop.f32.mrf.mxu0
        %4548 = vmatprep.mubr.f32.mxu0 0.0
        %4549 = vmatmul.mubr.f32.gmra.mxu0 %v4343
        %v4550 = vpop.f32.mrf.mxu0
        %v4551 = vadd.f32 %v4230, %v4550
        %v4552 = vpop.f32.mrf.mxu0
        %4553 = vmatprep.mubr.f32.mxu0 0.0
        %4554 = vmatmul.mubr.f32.gmra.mxu0 %v4346
        %v4555 = vpop.f32.mrf.mxu0
        %v4556 = vadd.f32 %v4235, %v4555
        %v4557 = vpop.f32.mrf.mxu0
        %4558 = vmatprep.mubr.f32.mxu0 0.0
        %4559 = vmatmul.mubr.f32.gmra.mxu0 %v4349
        %v4560 = vpop.f32.mrf.mxu0
        %v4561 = vadd.f32 %v4240, %v4560
        %v4562 = vpop.f32.mrf.mxu0
        %4563 = vmatprep.mubr.f32.mxu0 0.0
        %4564 = vmatmul.mubr.f32.gmra.mxu0 %v4352
        %v4565 = vpop.f32.mrf.mxu0
        %v4566 = vadd.f32 %v4245, %v4565
        %v4567 = vpop.f32.mrf.mxu0
        %4568 = vmatprep.mubr.f32.mxu0 0.0
        %4569 = vmatmul.mubr.f32.gmra.mxu0 %v4355
        %v4570 = vpop.f32.mrf.mxu0
        %v4571 = vadd.f32 %v4250, %v4570
        %v4572 = vpop.f32.mrf.mxu0
        %4573 = vmatprep.mubr.f32.mxu0 0.0
        %4574 = vmatmul.mubr.f32.gmra.mxu0 %v4358
        %v4575 = vpop.f32.mrf.mxu0
        %v4576 = vadd.f32 %v4255, %v4575
        %v4577 = vpop.f32.mrf.mxu0
        %4578 = vmatprep.mubr.f32.mxu0 0.0
        %4579 = vmatmul.mubr.f32.gmra.mxu0 %v4361
        %v4580 = vpop.f32.mrf.mxu0
        %v4581 = vadd.f32 %v4260, %v4580
        %v4582 = vpop.f32.mrf.mxu0
        %4583 = vmatprep.mubr.f32.mxu0 0.0
        %4584 = vmatmul.mubr.f32.gmra.mxu0 %v4364
        %v4585 = vpop.f32.mrf.mxu0
        %v4586 = vadd.f32 %v4265, %v4585
        %v4587 = vpop.f32.mrf.mxu0
        %4588 = vmatprep.mubr.f32.mxu0 0.0
        %4589 = vmatmul.mubr.f32.gmra.mxu0 %v4367
        %v4590 = vpop.f32.mrf.mxu0
        %v4591 = vadd.f32 %v4270, %v4590
        %v4592 = vpop.f32.mrf.mxu0
        %4593 = vdwg.mxu0
        %v4594 = vld [vmem:[#allocation2 + $0x2] sm:$0xff]
        %v4595 = vld [vmem:[#allocation2 + $0xa] sm:$0xff]
        %v4596 = vld [vmem:[#allocation2 + $0x1a] sm:$0xff]
        %v4597 = vld [vmem:[#allocation2 + $0x22] sm:$0xff]
        %v4598 = vld [vmem:[#allocation2 + $0x32] sm:$0xff]
        %v4599 = vld [vmem:[#allocation2 + $0x3a] sm:$0xff]
        %v4600 = vld [vmem:[#allocation2 + $0x4a] sm:$0xff]
        %v4601 = vld [vmem:[#allocation2 + $0x52] sm:$0xff]
        %v4602 = vld [vmem:[#allocation2 + $0x62] sm:$0xff]
        %v4603 = vld [vmem:[#allocation2 + $0x6a] sm:$0xff]
        %v4604 = vld [vmem:[#allocation2 + $0x7a] sm:$0xff]
        %v4605 = vld [vmem:[#allocation2 + $0x82] sm:$0xff]
        %v4606 = vld [vmem:[#allocation2 + $0x92] sm:$0xff]
        %v4607 = vld [vmem:[#allocation2 + $0x9a] sm:$0xff]
        %v4608 = vld [vmem:[#allocation2 + $0xaa] sm:$0xff]
        %v4609 = vld [vmem:[#allocation2 + $0xb2] sm:$0xff]
        %v4610 = vld [vmem:[#allocation2 + $0xc2] sm:$0xff]
        %v4611 = vld [vmem:[#allocation2 + $0xca] sm:$0xff]
        %v4612 = vld [vmem:[#allocation2 + $0xda] sm:$0xff]
        %v4613 = vld [vmem:[#allocation2 + $0xe2] sm:$0xff]
        %v4614 = vld [vmem:[#allocation2 + $0xf2] sm:$0xff]
        %v4615 = vld [vmem:[#allocation2 + $0xfa] sm:$0xff]
        %v4616 = vld [vmem:[#allocation2 + $0x10a] sm:$0xff]
        %v4617 = vld [vmem:[#allocation2 + $0x112] sm:$0xff]
        %v4618 = vld [vmem:[#allocation2 + $0x122] sm:$0xff]
        %v4619 = vld [vmem:[#allocation2 + $0x12a] sm:$0xff]
        %v4620 = vld [vmem:[#allocation2 + $0x13a] sm:$0xff]
        %v4621 = vld [vmem:[#allocation2 + $0x142] sm:$0xff]
        %v4622 = vld [vmem:[#allocation2 + $0x152] sm:$0xff]
        %v4623 = vld [vmem:[#allocation2 + $0x15a] sm:$0xff]
        %v4624 = vld [vmem:[#allocation2 + $0x16a] sm:$0xff]
        %v4625 = vld [vmem:[#allocation2 + $0x172] sm:$0xff]
        %s4626 = scalar_lea.vmem %s3, 16
        %v4627 = vld [vmem:[%s4626] sm:$0xff]
        %v4629 = vsel %vm3796, %v4594, 0
        %v4632 = vsel %vm3796, %v4595, 0
        %v4635 = vsel %vm3796, %v4596, 0
        %v4638 = vsel %vm3796, %v4597, 0
        %v4641 = vsel %vm3796, %v4598, 0
        %v4644 = vsel %vm3796, %v4599, 0
        %v4647 = vsel %vm3796, %v4600, 0
        %v4650 = vsel %vm3796, %v4601, 0
        %v4653 = vsel %vm3796, %v4602, 0
        %v4656 = vsel %vm3796, %v4603, 0
        %v4659 = vsel %vm3796, %v4604, 0
        %v4662 = vsel %vm3796, %v4605, 0
        %v4665 = vsel %vm3796, %v4606, 0
        %v4668 = vsel %vm3796, %v4607, 0
        %v4671 = vsel %vm3796, %v4608, 0
        %v4674 = vsel %vm3796, %v4609, 0
        %v4677 = vsel %vm3796, %v4610, 0
        %v4680 = vsel %vm3796, %v4611, 0
        %v4683 = vsel %vm3796, %v4612, 0
        %v4686 = vsel %vm3796, %v4613, 0
        %v4689 = vsel %vm3796, %v4614, 0
        %v4692 = vsel %vm3796, %v4615, 0
        %v4695 = vsel %vm3796, %v4616, 0
        %v4698 = vsel %vm3796, %v4617, 0
        %v4701 = vsel %vm3796, %v4618, 0
        %v4704 = vsel %vm3796, %v4619, 0
        %v4707 = vsel %vm3796, %v4620, 0
        %v4710 = vsel %vm3796, %v4621, 0
        %v4713 = vsel %vm3796, %v4622, 0
        %v4716 = vsel %vm3796, %v4623, 0
        %v4719 = vsel %vm3796, %v4624, 0
        %v4722 = vsel %vm3796, %v4625, 0
        %4724 = vmatprep.subr.mxu0 0.0
        %4725 = vmatpush1.msra.mxu0 0.0
        %4726 = vmatprep.subr.mxu0 0.0
        %4727 = vmatpush1.msra.mxu0 0.0
        %4728 = vmatprep.subr.mxu0 0.0
        %4729 = vmatpush1.msra.mxu0 0.0
        %4730 = vmatprep.subr.mxu0 0.0
        %4731 = vmatpush1.msra.mxu0 0.0
        %4732 = vmatprep.subr.mxu0 0.0
        %4733 = vmatpush1.msra.mxu0 0.0
        %4734 = vmatprep.subr.mxu0 0.0
        %4735 = vmatpush1.msra.mxu0 0.0
        %4736 = vmatprep.subr.mxu0 0.0
        %4737 = vmatpush1.msra.mxu0 0.0
        %4738 = vmatprep.subr.mxu0 0.0
        %4739 = vmatpush1.msra.mxu0 0.0
        %4740 = vmatprep.subr.mxu0 0.0
        %4741 = vmatpush1.msra.mxu0 0.0
        %4742 = vmatprep.subr.mxu0 0.0
        %4743 = vmatpush1.msra.mxu0 0.0
        %4744 = vmatprep.subr.mxu0 0.0
        %4745 = vmatpush1.msra.mxu0 0.0
        %4746 = vmatprep.subr.mxu0 0.0
        %4747 = vmatpush1.msra.mxu0 0.0
        %4748 = vmatprep.subr.mxu0 0.0
        %4749 = vmatpush1.msra.mxu0 0.0
        %4750 = vmatprep.subr.mxu0 0.0
        %4751 = vmatpush1.msra.mxu0 0.0
        %4752 = vmatprep.subr.mxu0 0.0
        %4753 = vmatpush1.msra.mxu0 0.0
        %4754 = vmatprep.subr.mxu0 0.0
        %4755 = vmatpush1.msra.mxu0 %v4627
        %4756 = vmatprep.subr.mxu0 0.0
        %4757 = vmatpush2.msra.mxu0 0.0
        %4758 = vmatprep.subr.mxu0 0.0
        %4759 = vmatpush2.msra.mxu0 0.0
        %4760 = vmatprep.subr.mxu0 0.0
        %4761 = vmatpush2.msra.mxu0 0.0
        %4762 = vmatprep.subr.mxu0 0.0
        %4763 = vmatpush2.msra.mxu0 0.0
        %4764 = vmatprep.subr.mxu0 0.0
        %4765 = vmatpush2.msra.mxu0 0.0
        %4766 = vmatprep.subr.mxu0 0.0
        %4767 = vmatpush2.msra.mxu0 0.0
        %4768 = vmatprep.subr.mxu0 0.0
        %4769 = vmatpush2.msra.mxu0 0.0
        %4770 = vmatprep.subr.mxu0 0.0
        %4771 = vmatpush2.msra.mxu0 0.0
        %4772 = vmatprep.subr.mxu0 0.0
        %4773 = vmatpush2.msra.mxu0 0.0
        %4774 = vmatprep.subr.mxu0 0.0
        %4775 = vmatpush2.msra.mxu0 0.0
        %4776 = vmatprep.subr.mxu0 0.0
        %4777 = vmatpush2.msra.mxu0 0.0
        %4778 = vmatprep.subr.mxu0 0.0
        %4779 = vmatpush2.msra.mxu0 0.0
        %4780 = vmatprep.subr.mxu0 0.0
        %4781 = vmatpush2.msra.mxu0 0.0
        %4782 = vmatprep.subr.mxu0 0.0
        %4783 = vmatpush2.msra.mxu0 0.0
        %4784 = vmatprep.subr.mxu0 0.0
        %4785 = vmatpush2.msra.mxu0 0.0
        %4786 = vmatprep.subr.mxu0 0.0
        %4787 = vmatpush2.msra.mxu0 0.0
        %4788 = vmatprep.mubr.f32.mxu0 0.0
        %4789 = vmatmul.mubr.f32.gmra.mxu0 %v4629
        %v4790 = vpop.f32.mrf.mxu0
        %v4791 = vadd.f32 0.0, %v4790
        %v4792 = vpop.f32.mrf.mxu0
        %4793 = vmatprep.mubr.f32.mxu0 0.0
        %4794 = vmatmul.mubr.f32.gmra.mxu0 %v4632
        %v4795 = vpop.f32.mrf.mxu0
        %v4796 = vadd.f32 0.0, %v4795
        %v4797 = vpop.f32.mrf.mxu0
        %4798 = vmatprep.mubr.f32.mxu0 0.0
        %4799 = vmatmul.mubr.f32.gmra.mxu0 %v4635
        %v4800 = vpop.f32.mrf.mxu0
        %v4801 = vadd.f32 0.0, %v4800
        %v4802 = vpop.f32.mrf.mxu0
        %4803 = vmatprep.mubr.f32.mxu0 0.0
        %4804 = vmatmul.mubr.f32.gmra.mxu0 %v4638
        %v4805 = vpop.f32.mrf.mxu0
        %v4806 = vadd.f32 0.0, %v4805
        %v4807 = vpop.f32.mrf.mxu0
        %4808 = vmatprep.mubr.f32.mxu0 0.0
        %4809 = vmatmul.mubr.f32.gmra.mxu0 %v4641
        %v4810 = vpop.f32.mrf.mxu0
        %v4811 = vadd.f32 0.0, %v4810
        %v4812 = vpop.f32.mrf.mxu0
        %4813 = vmatprep.mubr.f32.mxu0 0.0
        %4814 = vmatmul.mubr.f32.gmra.mxu0 %v4644
        %v4815 = vpop.f32.mrf.mxu0
        %v4816 = vadd.f32 0.0, %v4815
        %v4817 = vpop.f32.mrf.mxu0
        %4818 = vmatprep.mubr.f32.mxu0 0.0
        %4819 = vmatmul.mubr.f32.gmra.mxu0 %v4647
        %v4820 = vpop.f32.mrf.mxu0
        %v4821 = vadd.f32 0.0, %v4820
        %v4822 = vpop.f32.mrf.mxu0
        %4823 = vmatprep.mubr.f32.mxu0 0.0
        %4824 = vmatmul.mubr.f32.gmra.mxu0 %v4650
        %v4825 = vpop.f32.mrf.mxu0
        %v4826 = vadd.f32 0.0, %v4825
        %v4827 = vpop.f32.mrf.mxu0
        %4828 = vmatprep.mubr.f32.mxu0 0.0
        %4829 = vmatmul.mubr.f32.gmra.mxu0 %v4653
        %v4830 = vpop.f32.mrf.mxu0
        %v4831 = vadd.f32 0.0, %v4830
        %v4832 = vpop.f32.mrf.mxu0
        %4833 = vmatprep.mubr.f32.mxu0 0.0
        %4834 = vmatmul.mubr.f32.gmra.mxu0 %v4656
        %v4835 = vpop.f32.mrf.mxu0
        %v4836 = vadd.f32 0.0, %v4835
        %v4837 = vpop.f32.mrf.mxu0
        %4838 = vmatprep.mubr.f32.mxu0 0.0
        %4839 = vmatmul.mubr.f32.gmra.mxu0 %v4659
        %v4840 = vpop.f32.mrf.mxu0
        %v4841 = vadd.f32 0.0, %v4840
        %v4842 = vpop.f32.mrf.mxu0
        %4843 = vmatprep.mubr.f32.mxu0 0.0
        %4844 = vmatmul.mubr.f32.gmra.mxu0 %v4662
        %v4845 = vpop.f32.mrf.mxu0
        %v4846 = vadd.f32 0.0, %v4845
        %v4847 = vpop.f32.mrf.mxu0
        %4848 = vmatprep.mubr.f32.mxu0 0.0
        %4849 = vmatmul.mubr.f32.gmra.mxu0 %v4665
        %v4850 = vpop.f32.mrf.mxu0
        %v4851 = vadd.f32 0.0, %v4850
        %v4852 = vpop.f32.mrf.mxu0
        %4853 = vmatprep.mubr.f32.mxu0 0.0
        %4854 = vmatmul.mubr.f32.gmra.mxu0 %v4668
        %v4855 = vpop.f32.mrf.mxu0
        %v4856 = vadd.f32 0.0, %v4855
        %v4857 = vpop.f32.mrf.mxu0
        %4858 = vmatprep.mubr.f32.mxu0 0.0
        %4859 = vmatmul.mubr.f32.gmra.mxu0 %v4671
        %v4860 = vpop.f32.mrf.mxu0
        %v4861 = vadd.f32 0.0, %v4860
        %v4862 = vpop.f32.mrf.mxu0
        %4863 = vmatprep.mubr.f32.mxu0 0.0
        %4864 = vmatmul.mubr.f32.gmra.mxu0 %v4674
        %v4865 = vpop.f32.mrf.mxu0
        %v4866 = vadd.f32 0.0, %v4865
        %v4867 = vpop.f32.mrf.mxu0
        %4868 = vmatprep.mubr.f32.mxu0 0.0
        %4869 = vmatmul.mubr.f32.gmra.mxu0 %v4677
        %v4870 = vpop.f32.mrf.mxu0
        %v4871 = vadd.f32 0.0, %v4870
        %v4872 = vpop.f32.mrf.mxu0
        %4873 = vmatprep.mubr.f32.mxu0 0.0
        %4874 = vmatmul.mubr.f32.gmra.mxu0 %v4680
        %v4875 = vpop.f32.mrf.mxu0
        %v4876 = vadd.f32 0.0, %v4875
        %v4877 = vpop.f32.mrf.mxu0
        %4878 = vmatprep.mubr.f32.mxu0 0.0
        %4879 = vmatmul.mubr.f32.gmra.mxu0 %v4683
        %v4880 = vpop.f32.mrf.mxu0
        %v4881 = vadd.f32 0.0, %v4880
        %v4882 = vpop.f32.mrf.mxu0
        %4883 = vmatprep.mubr.f32.mxu0 0.0
        %4884 = vmatmul.mubr.f32.gmra.mxu0 %v4686
        %v4885 = vpop.f32.mrf.mxu0
        %v4886 = vadd.f32 0.0, %v4885
        %v4887 = vpop.f32.mrf.mxu0
        %4888 = vmatprep.mubr.f32.mxu0 0.0
        %4889 = vmatmul.mubr.f32.gmra.mxu0 %v4689
        %v4890 = vpop.f32.mrf.mxu0
        %v4891 = vadd.f32 0.0, %v4890
        %v4892 = vpop.f32.mrf.mxu0
        %4893 = vmatprep.mubr.f32.mxu0 0.0
        %4894 = vmatmul.mubr.f32.gmra.mxu0 %v4692
        %v4895 = vpop.f32.mrf.mxu0
        %v4896 = vadd.f32 0.0, %v4895
        %v4897 = vpop.f32.mrf.mxu0
        %4898 = vmatprep.mubr.f32.mxu0 0.0
        %4899 = vmatmul.mubr.f32.gmra.mxu0 %v4695
        %v4900 = vpop.f32.mrf.mxu0
        %v4901 = vadd.f32 0.0, %v4900
        %v4902 = vpop.f32.mrf.mxu0
        %4903 = vmatprep.mubr.f32.mxu0 0.0
        %4904 = vmatmul.mubr.f32.gmra.mxu0 %v4698
        %v4905 = vpop.f32.mrf.mxu0
        %v4906 = vadd.f32 0.0, %v4905
        %v4907 = vpop.f32.mrf.mxu0
        %4908 = vmatprep.mubr.f32.mxu0 0.0
        %4909 = vmatmul.mubr.f32.gmra.mxu0 %v4701
        %v4910 = vpop.f32.mrf.mxu0
        %v4911 = vadd.f32 0.0, %v4910
        %v4912 = vpop.f32.mrf.mxu0
        %4913 = vmatprep.mubr.f32.mxu0 0.0
        %4914 = vmatmul.mubr.f32.gmra.mxu0 %v4704
        %v4915 = vpop.f32.mrf.mxu0
        %v4916 = vadd.f32 0.0, %v4915
        %v4917 = vpop.f32.mrf.mxu0
        %4918 = vmatprep.mubr.f32.mxu0 0.0
        %4919 = vmatmul.mubr.f32.gmra.mxu0 %v4707
        %v4920 = vpop.f32.mrf.mxu0
        %v4921 = vadd.f32 0.0, %v4920
        %v4922 = vpop.f32.mrf.mxu0
        %4923 = vmatprep.mubr.f32.mxu0 0.0
        %4924 = vmatmul.mubr.f32.gmra.mxu0 %v4710
        %v4925 = vpop.f32.mrf.mxu0
        %v4926 = vadd.f32 0.0, %v4925
        %v4927 = vpop.f32.mrf.mxu0
        %4928 = vmatprep.mubr.f32.mxu0 0.0
        %4929 = vmatmul.mubr.f32.gmra.mxu0 %v4713
        %v4930 = vpop.f32.mrf.mxu0
        %v4931 = vadd.f32 0.0, %v4930
        %v4932 = vpop.f32.mrf.mxu0
        %4933 = vmatprep.mubr.f32.mxu0 0.0
        %4934 = vmatmul.mubr.f32.gmra.mxu0 %v4716
        %v4935 = vpop.f32.mrf.mxu0
        %v4936 = vadd.f32 0.0, %v4935
        %v4937 = vpop.f32.mrf.mxu0
        %4938 = vmatprep.mubr.f32.mxu0 0.0
        %4939 = vmatmul.mubr.f32.gmra.mxu0 %v4719
        %v4940 = vpop.f32.mrf.mxu0
        %v4941 = vadd.f32 0.0, %v4940
        %v4942 = vpop.f32.mrf.mxu0
        %4943 = vmatprep.mubr.f32.mxu0 0.0
        %4944 = vmatmul.mubr.f32.gmra.mxu0 %v4722
        %v4945 = vpop.f32.mrf.mxu0
        %v4946 = vadd.f32 0.0, %v4945
        %v4947 = vpop.f32.mrf.mxu0
        %4948 = vdwg.mxu0
        %v4949 = vadd.f32 %v4436, %v4791
        %v4950 = vadd.f32 %v4441, %v4796
        %v4951 = vadd.f32 %v4446, %v4801
        %v4952 = vadd.f32 %v4451, %v4806
        %v4953 = vadd.f32 %v4456, %v4811
        %v4954 = vadd.f32 %v4461, %v4816
        %v4955 = vadd.f32 %v4466, %v4821
        %v4956 = vadd.f32 %v4471, %v4826
        %v4957 = vadd.f32 %v4476, %v4831
        %v4958 = vadd.f32 %v4481, %v4836
        %v4959 = vadd.f32 %v4486, %v4841
        %v4960 = vadd.f32 %v4491, %v4846
        %v4961 = vadd.f32 %v4496, %v4851
        %v4962 = vadd.f32 %v4501, %v4856
        %v4963 = vadd.f32 %v4506, %v4861
        %v4964 = vadd.f32 %v4511, %v4866
        %v4965 = vadd.f32 %v4516, %v4871
        %v4966 = vadd.f32 %v4521, %v4876
        %v4967 = vadd.f32 %v4526, %v4881
        %v4968 = vadd.f32 %v4531, %v4886
        %v4969 = vadd.f32 %v4536, %v4891
        %v4970 = vadd.f32 %v4541, %v4896
        %v4971 = vadd.f32 %v4546, %v4901
        %v4972 = vadd.f32 %v4551, %v4906
        %v4973 = vadd.f32 %v4556, %v4911
        %v4974 = vadd.f32 %v4561, %v4916
        %v4975 = vadd.f32 %v4566, %v4921
        %v4976 = vadd.f32 %v4571, %v4926
        %v4977 = vadd.f32 %v4576, %v4931
        %v4978 = vadd.f32 %v4581, %v4936
        %v4979 = vadd.f32 %v4586, %v4941
        %v4980 = vadd.f32 %v4591, %v4946
        %v4981 = vld [vmem:[%s3852] sm:$0xff]
        %v4982 = vld [vmem:[%s3852 + $0x8] sm:$0xff]
        %v4983 = vld [vmem:[%s3852 + $0x18] sm:$0xff]
        %v4984 = vld [vmem:[%s3852 + $0x20] sm:$0xff]
        %v4985 = vld [vmem:[%s3852 + $0x30] sm:$0xff]
        %v4986 = vld [vmem:[%s3852 + $0x38] sm:$0xff]
        %v4987 = vld [vmem:[%s3852 + $0x48] sm:$0xff]
        %v4988 = vld [vmem:[%s3852 + $0x50] sm:$0xff]
        %v4989 = vld [vmem:[%s3852 + $0x60] sm:$0xff]
        %v4990 = vld [vmem:[%s3852 + $0x68] sm:$0xff]
        %v4991 = vld [vmem:[%s3852 + $0x78] sm:$0xff]
        %v4992 = vld [vmem:[%s3852 + $0x80] sm:$0xff]
        %v4993 = vld [vmem:[%s3852 + $0x90] sm:$0xff]
        %v4994 = vld [vmem:[%s3852 + $0x98] sm:$0xff]
        %v4995 = vld [vmem:[%s3852 + $0xa8] sm:$0xff]
        %v4996 = vld [vmem:[%s3852 + $0xb0] sm:$0xff]
        %v4997 = vld [vmem:[%s3852 + $0xc0] sm:$0xff]
        %v4998 = vld [vmem:[%s3852 + $0xc8] sm:$0xff]
        %v4999 = vld [vmem:[%s3852 + $0xd8] sm:$0xff]
        %v5000 = vld [vmem:[%s3852 + $0xe0] sm:$0xff]
        %v5001 = vld [vmem:[%s3852 + $0xf0] sm:$0xff]
        %v5002 = vld [vmem:[%s3852 + $0xf8] sm:$0xff]
        %v5003 = vld [vmem:[%s3852 + $0x108] sm:$0xff]
        %v5004 = vld [vmem:[%s3852 + $0x110] sm:$0xff]
        %v5005 = vld [vmem:[%s3852 + $0x120] sm:$0xff]
        %v5006 = vld [vmem:[%s3852 + $0x128] sm:$0xff]
        %v5007 = vld [vmem:[%s3852 + $0x138] sm:$0xff]
        %v5008 = vld [vmem:[%s3852 + $0x140] sm:$0xff]
        %v5009 = vld [vmem:[%s3852 + $0x150] sm:$0xff]
        %v5010 = vld [vmem:[%s3852 + $0x158] sm:$0xff]
        %v5011 = vld [vmem:[%s3852 + $0x168] sm:$0xff]
        %v5012 = vld [vmem:[%s3852 + $0x170] sm:$0xff]
        %s5013 = scalar_lea.vmem %s3, 24
        %v5014 = vld [vmem:[%s5013] sm:$0xff]
        %v5016 = vsel %vm3796, %v4981, 0
        %v5019 = vsel %vm3796, %v4982, 0
        %v5022 = vsel %vm3796, %v4983, 0
        %v5025 = vsel %vm3796, %v4984, 0
        %v5028 = vsel %vm3796, %v4985, 0
        %v5031 = vsel %vm3796, %v4986, 0
        %v5034 = vsel %vm3796, %v4987, 0
        %v5037 = vsel %vm3796, %v4988, 0
        %v5040 = vsel %vm3796, %v4989, 0
        %v5043 = vsel %vm3796, %v4990, 0
        %v5046 = vsel %vm3796, %v4991, 0
        %v5049 = vsel %vm3796, %v4992, 0
        %v5052 = vsel %vm3796, %v4993, 0
        %v5055 = vsel %vm3796, %v4994, 0
        %v5058 = vsel %vm3796, %v4995, 0
        %v5061 = vsel %vm3796, %v4996, 0
        %v5064 = vsel %vm3796, %v4997, 0
        %v5067 = vsel %vm3796, %v4998, 0
        %v5070 = vsel %vm3796, %v4999, 0
        %v5073 = vsel %vm3796, %v5000, 0
        %v5076 = vsel %vm3796, %v5001, 0
        %v5079 = vsel %vm3796, %v5002, 0
        %v5082 = vsel %vm3796, %v5003, 0
        %v5085 = vsel %vm3796, %v5004, 0
        %v5088 = vsel %vm3796, %v5005, 0
        %v5091 = vsel %vm3796, %v5006, 0
        %v5094 = vsel %vm3796, %v5007, 0
        %v5097 = vsel %vm3796, %v5008, 0
        %v5100 = vsel %vm3796, %v5009, 0
        %v5103 = vsel %vm3796, %v5010, 0
        %v5106 = vsel %vm3796, %v5011, 0
        %v5109 = vsel %vm3796, %v5012, 0
        %5111 = vmatprep.subr.mxu0 0.0
        %5112 = vmatpush1.msra.mxu0 0.0
        %5113 = vmatprep.subr.mxu0 0.0
        %5114 = vmatpush1.msra.mxu0 0.0
        %5115 = vmatprep.subr.mxu0 0.0
        %5116 = vmatpush1.msra.mxu0 0.0
        %5117 = vmatprep.subr.mxu0 0.0
        %5118 = vmatpush1.msra.mxu0 0.0
        %5119 = vmatprep.subr.mxu0 0.0
        %5120 = vmatpush1.msra.mxu0 0.0
        %5121 = vmatprep.subr.mxu0 0.0
        %5122 = vmatpush1.msra.mxu0 0.0
        %5123 = vmatprep.subr.mxu0 0.0
        %5124 = vmatpush1.msra.mxu0 0.0
        %5125 = vmatprep.subr.mxu0 0.0
        %5126 = vmatpush1.msra.mxu0 0.0
        %5127 = vmatprep.subr.mxu0 0.0
        %5128 = vmatpush1.msra.mxu0 0.0
        %5129 = vmatprep.subr.mxu0 0.0
        %5130 = vmatpush1.msra.mxu0 0.0
        %5131 = vmatprep.subr.mxu0 0.0
        %5132 = vmatpush1.msra.mxu0 0.0
        %5133 = vmatprep.subr.mxu0 0.0
        %5134 = vmatpush1.msra.mxu0 0.0
        %5135 = vmatprep.subr.mxu0 0.0
        %5136 = vmatpush1.msra.mxu0 0.0
        %5137 = vmatprep.subr.mxu0 0.0
        %5138 = vmatpush1.msra.mxu0 0.0
        %5139 = vmatprep.subr.mxu0 0.0
        %5140 = vmatpush1.msra.mxu0 0.0
        %5141 = vmatprep.subr.mxu0 0.0
        %5142 = vmatpush1.msra.mxu0 %v5014
        %5143 = vmatprep.subr.mxu0 0.0
        %5144 = vmatpush2.msra.mxu0 0.0
        %5145 = vmatprep.subr.mxu0 0.0
        %5146 = vmatpush2.msra.mxu0 0.0
        %5147 = vmatprep.subr.mxu0 0.0
        %5148 = vmatpush2.msra.mxu0 0.0
        %5149 = vmatprep.subr.mxu0 0.0
        %5150 = vmatpush2.msra.mxu0 0.0
        %5151 = vmatprep.subr.mxu0 0.0
        %5152 = vmatpush2.msra.mxu0 0.0
        %5153 = vmatprep.subr.mxu0 0.0
        %5154 = vmatpush2.msra.mxu0 0.0
        %5155 = vmatprep.subr.mxu0 0.0
        %5156 = vmatpush2.msra.mxu0 0.0
        %5157 = vmatprep.subr.mxu0 0.0
        %5158 = vmatpush2.msra.mxu0 0.0
        %5159 = vmatprep.subr.mxu0 0.0
        %5160 = vmatpush2.msra.mxu0 0.0
        %5161 = vmatprep.subr.mxu0 0.0
        %5162 = vmatpush2.msra.mxu0 0.0
        %5163 = vmatprep.subr.mxu0 0.0
        %5164 = vmatpush2.msra.mxu0 0.0
        %5165 = vmatprep.subr.mxu0 0.0
        %5166 = vmatpush2.msra.mxu0 0.0
        %5167 = vmatprep.subr.mxu0 0.0
        %5168 = vmatpush2.msra.mxu0 0.0
        %5169 = vmatprep.subr.mxu0 0.0
        %5170 = vmatpush2.msra.mxu0 0.0
        %5171 = vmatprep.subr.mxu0 0.0
        %5172 = vmatpush2.msra.mxu0 0.0
        %5173 = vmatprep.subr.mxu0 0.0
        %5174 = vmatpush2.msra.mxu0 0.0
        %5175 = vmatprep.mubr.f32.mxu0 0.0
        %5176 = vmatmul.mubr.f32.gmra.mxu0 %v5016
        %v5177 = vpop.f32.mrf.mxu0
        %v5178 = vadd.f32 0.0, %v5177
        %v5179 = vpop.f32.mrf.mxu0
        %5180 = vmatprep.mubr.f32.mxu0 0.0
        %5181 = vmatmul.mubr.f32.gmra.mxu0 %v5019
        %v5182 = vpop.f32.mrf.mxu0
        %v5183 = vadd.f32 0.0, %v5182
        %v5184 = vpop.f32.mrf.mxu0
        %5185 = vmatprep.mubr.f32.mxu0 0.0
        %5186 = vmatmul.mubr.f32.gmra.mxu0 %v5022
        %v5187 = vpop.f32.mrf.mxu0
        %v5188 = vadd.f32 0.0, %v5187
        %v5189 = vpop.f32.mrf.mxu0
        %5190 = vmatprep.mubr.f32.mxu0 0.0
        %5191 = vmatmul.mubr.f32.gmra.mxu0 %v5025
        %v5192 = vpop.f32.mrf.mxu0
        %v5193 = vadd.f32 0.0, %v5192
        %v5194 = vpop.f32.mrf.mxu0
        %5195 = vmatprep.mubr.f32.mxu0 0.0
        %5196 = vmatmul.mubr.f32.gmra.mxu0 %v5028
        %v5197 = vpop.f32.mrf.mxu0
        %v5198 = vadd.f32 0.0, %v5197
        %v5199 = vpop.f32.mrf.mxu0
        %5200 = vmatprep.mubr.f32.mxu0 0.0
        %5201 = vmatmul.mubr.f32.gmra.mxu0 %v5031
        %v5202 = vpop.f32.mrf.mxu0
        %v5203 = vadd.f32 0.0, %v5202
        %v5204 = vpop.f32.mrf.mxu0
        %5205 = vmatprep.mubr.f32.mxu0 0.0
        %5206 = vmatmul.mubr.f32.gmra.mxu0 %v5034
        %v5207 = vpop.f32.mrf.mxu0
        %v5208 = vadd.f32 0.0, %v5207
        %v5209 = vpop.f32.mrf.mxu0
        %5210 = vmatprep.mubr.f32.mxu0 0.0
        %5211 = vmatmul.mubr.f32.gmra.mxu0 %v5037
        %v5212 = vpop.f32.mrf.mxu0
        %v5213 = vadd.f32 0.0, %v5212
        %v5214 = vpop.f32.mrf.mxu0
        %5215 = vmatprep.mubr.f32.mxu0 0.0
        %5216 = vmatmul.mubr.f32.gmra.mxu0 %v5040
        %v5217 = vpop.f32.mrf.mxu0
        %v5218 = vadd.f32 0.0, %v5217
        %v5219 = vpop.f32.mrf.mxu0
        %5220 = vmatprep.mubr.f32.mxu0 0.0
        %5221 = vmatmul.mubr.f32.gmra.mxu0 %v5043
        %v5222 = vpop.f32.mrf.mxu0
        %v5223 = vadd.f32 0.0, %v5222
        %v5224 = vpop.f32.mrf.mxu0
        %5225 = vmatprep.mubr.f32.mxu0 0.0
        %5226 = vmatmul.mubr.f32.gmra.mxu0 %v5046
        %v5227 = vpop.f32.mrf.mxu0
        %v5228 = vadd.f32 0.0, %v5227
        %v5229 = vpop.f32.mrf.mxu0
        %5230 = vmatprep.mubr.f32.mxu0 0.0
        %5231 = vmatmul.mubr.f32.gmra.mxu0 %v5049
        %v5232 = vpop.f32.mrf.mxu0
        %v5233 = vadd.f32 0.0, %v5232
        %v5234 = vpop.f32.mrf.mxu0
        %5235 = vmatprep.mubr.f32.mxu0 0.0
        %5236 = vmatmul.mubr.f32.gmra.mxu0 %v5052
        %v5237 = vpop.f32.mrf.mxu0
        %v5238 = vadd.f32 0.0, %v5237
        %v5239 = vpop.f32.mrf.mxu0
        %5240 = vmatprep.mubr.f32.mxu0 0.0
        %5241 = vmatmul.mubr.f32.gmra.mxu0 %v5055
        %v5242 = vpop.f32.mrf.mxu0
        %v5243 = vadd.f32 0.0, %v5242
        %v5244 = vpop.f32.mrf.mxu0
        %5245 = vmatprep.mubr.f32.mxu0 0.0
        %5246 = vmatmul.mubr.f32.gmra.mxu0 %v5058
        %v5247 = vpop.f32.mrf.mxu0
        %v5248 = vadd.f32 0.0, %v5247
        %v5249 = vpop.f32.mrf.mxu0
        %5250 = vmatprep.mubr.f32.mxu0 0.0
        %5251 = vmatmul.mubr.f32.gmra.mxu0 %v5061
        %v5252 = vpop.f32.mrf.mxu0
        %v5253 = vadd.f32 0.0, %v5252
        %v5254 = vpop.f32.mrf.mxu0
        %5255 = vmatprep.mubr.f32.mxu0 0.0
        %5256 = vmatmul.mubr.f32.gmra.mxu0 %v5064
        %v5257 = vpop.f32.mrf.mxu0
        %v5258 = vadd.f32 0.0, %v5257
        %v5259 = vpop.f32.mrf.mxu0
        %5260 = vmatprep.mubr.f32.mxu0 0.0
        %5261 = vmatmul.mubr.f32.gmra.mxu0 %v5067
        %v5262 = vpop.f32.mrf.mxu0
        %v5263 = vadd.f32 0.0, %v5262
        %v5264 = vpop.f32.mrf.mxu0
        %5265 = vmatprep.mubr.f32.mxu0 0.0
        %5266 = vmatmul.mubr.f32.gmra.mxu0 %v5070
        %v5267 = vpop.f32.mrf.mxu0
        %v5268 = vadd.f32 0.0, %v5267
        %v5269 = vpop.f32.mrf.mxu0
        %5270 = vmatprep.mubr.f32.mxu0 0.0
        %5271 = vmatmul.mubr.f32.gmra.mxu0 %v5073
        %v5272 = vpop.f32.mrf.mxu0
        %v5273 = vadd.f32 0.0, %v5272
        %v5274 = vpop.f32.mrf.mxu0
        %5275 = vmatprep.mubr.f32.mxu0 0.0
        %5276 = vmatmul.mubr.f32.gmra.mxu0 %v5076
        %v5277 = vpop.f32.mrf.mxu0
        %v5278 = vadd.f32 0.0, %v5277
        %v5279 = vpop.f32.mrf.mxu0
        %5280 = vmatprep.mubr.f32.mxu0 0.0
        %5281 = vmatmul.mubr.f32.gmra.mxu0 %v5079
        %v5282 = vpop.f32.mrf.mxu0
        %v5283 = vadd.f32 0.0, %v5282
        %v5284 = vpop.f32.mrf.mxu0
        %5285 = vmatprep.mubr.f32.mxu0 0.0
        %5286 = vmatmul.mubr.f32.gmra.mxu0 %v5082
        %v5287 = vpop.f32.mrf.mxu0
        %v5288 = vadd.f32 0.0, %v5287
        %v5289 = vpop.f32.mrf.mxu0
        %5290 = vmatprep.mubr.f32.mxu0 0.0
        %5291 = vmatmul.mubr.f32.gmra.mxu0 %v5085
        %v5292 = vpop.f32.mrf.mxu0
        %v5293 = vadd.f32 0.0, %v5292
        %v5294 = vpop.f32.mrf.mxu0
        %5295 = vmatprep.mubr.f32.mxu0 0.0
        %5296 = vmatmul.mubr.f32.gmra.mxu0 %v5088
        %v5297 = vpop.f32.mrf.mxu0
        %v5298 = vadd.f32 0.0, %v5297
        %v5299 = vpop.f32.mrf.mxu0
        %5300 = vmatprep.mubr.f32.mxu0 0.0
        %5301 = vmatmul.mubr.f32.gmra.mxu0 %v5091
        %v5302 = vpop.f32.mrf.mxu0
        %v5303 = vadd.f32 0.0, %v5302
        %v5304 = vpop.f32.mrf.mxu0
        %5305 = vmatprep.mubr.f32.mxu0 0.0
        %5306 = vmatmul.mubr.f32.gmra.mxu0 %v5094
        %v5307 = vpop.f32.mrf.mxu0
        %v5308 = vadd.f32 0.0, %v5307
        %v5309 = vpop.f32.mrf.mxu0
        %5310 = vmatprep.mubr.f32.mxu0 0.0
        %5311 = vmatmul.mubr.f32.gmra.mxu0 %v5097
        %v5312 = vpop.f32.mrf.mxu0
        %v5313 = vadd.f32 0.0, %v5312
        %v5314 = vpop.f32.mrf.mxu0
        %5315 = vmatprep.mubr.f32.mxu0 0.0
        %5316 = vmatmul.mubr.f32.gmra.mxu0 %v5100
        %v5317 = vpop.f32.mrf.mxu0
        %v5318 = vadd.f32 0.0, %v5317
        %v5319 = vpop.f32.mrf.mxu0
        %5320 = vmatprep.mubr.f32.mxu0 0.0
        %5321 = vmatmul.mubr.f32.gmra.mxu0 %v5103
        %v5322 = vpop.f32.mrf.mxu0
        %v5323 = vadd.f32 0.0, %v5322
        %v5324 = vpop.f32.mrf.mxu0
        %5325 = vmatprep.mubr.f32.mxu0 0.0
        %5326 = vmatmul.mubr.f32.gmra.mxu0 %v5106
        %v5327 = vpop.f32.mrf.mxu0
        %v5328 = vadd.f32 0.0, %v5327
        %v5329 = vpop.f32.mrf.mxu0
        %5330 = vmatprep.mubr.f32.mxu0 0.0
        %5331 = vmatmul.mubr.f32.gmra.mxu0 %v5109
        %v5332 = vpop.f32.mrf.mxu0
        %v5333 = vadd.f32 0.0, %v5332
        %v5334 = vpop.f32.mrf.mxu0
        %5335 = vdwg.mxu0
        %v5336 = vadd.f32 %v4949, %v5178
        %v5337 = vadd.f32 %v4950, %v5183
        %v5338 = vadd.f32 %v4951, %v5188
        %v5339 = vadd.f32 %v4952, %v5193
        %v5340 = vadd.f32 %v4953, %v5198
        %v5341 = vadd.f32 %v4954, %v5203
        %v5342 = vadd.f32 %v4955, %v5208
        %v5343 = vadd.f32 %v4956, %v5213
        %v5344 = vadd.f32 %v4957, %v5218
        %v5345 = vadd.f32 %v4958, %v5223
        %v5346 = vadd.f32 %v4959, %v5228
        %v5347 = vadd.f32 %v4960, %v5233
        %v5348 = vadd.f32 %v4961, %v5238
        %v5349 = vadd.f32 %v4962, %v5243
        %v5350 = vadd.f32 %v4963, %v5248
        %v5351 = vadd.f32 %v4964, %v5253
        %v5352 = vadd.f32 %v4965, %v5258
        %v5353 = vadd.f32 %v4966, %v5263
        %v5354 = vadd.f32 %v4967, %v5268
        %v5355 = vadd.f32 %v4968, %v5273
        %v5356 = vadd.f32 %v4969, %v5278
        %v5357 = vadd.f32 %v4970, %v5283
        %v5358 = vadd.f32 %v4971, %v5288
        %v5359 = vadd.f32 %v4972, %v5293
        %v5360 = vadd.f32 %v4973, %v5298
        %v5361 = vadd.f32 %v4974, %v5303
        %v5362 = vadd.f32 %v4975, %v5308
        %v5363 = vadd.f32 %v4976, %v5313
        %v5364 = vadd.f32 %v4977, %v5318
        %v5365 = vadd.f32 %v4978, %v5323
        %v5366 = vadd.f32 %v4979, %v5328
        %v5367 = vadd.f32 %v4980, %v5333
        %v5368 = vld [vmem:[%s3852 + $0x1] sm:$0xff]
        %v5369 = vld [vmem:[%s3852 + $0x9] sm:$0xff]
        %v5370 = vld [vmem:[%s3852 + $0x19] sm:$0xff]
        %v5371 = vld [vmem:[%s3852 + $0x21] sm:$0xff]
        %v5372 = vld [vmem:[%s3852 + $0x31] sm:$0xff]
        %v5373 = vld [vmem:[%s3852 + $0x39] sm:$0xff]
        %v5374 = vld [vmem:[%s3852 + $0x49] sm:$0xff]
        %v5375 = vld [vmem:[%s3852 + $0x51] sm:$0xff]
        %v5376 = vld [vmem:[%s3852 + $0x61] sm:$0xff]
        %v5377 = vld [vmem:[%s3852 + $0x69] sm:$0xff]
        %v5378 = vld [vmem:[%s3852 + $0x79] sm:$0xff]
        %v5379 = vld [vmem:[%s3852 + $0x81] sm:$0xff]
        %v5380 = vld [vmem:[%s3852 + $0x91] sm:$0xff]
        %v5381 = vld [vmem:[%s3852 + $0x99] sm:$0xff]
        %v5382 = vld [vmem:[%s3852 + $0xa9] sm:$0xff]
        %v5383 = vld [vmem:[%s3852 + $0xb1] sm:$0xff]
        %v5384 = vld [vmem:[%s3852 + $0xc1] sm:$0xff]
        %v5385 = vld [vmem:[%s3852 + $0xc9] sm:$0xff]
        %v5386 = vld [vmem:[%s3852 + $0xd9] sm:$0xff]
        %v5387 = vld [vmem:[%s3852 + $0xe1] sm:$0xff]
        %v5388 = vld [vmem:[%s3852 + $0xf1] sm:$0xff]
        %v5389 = vld [vmem:[%s3852 + $0xf9] sm:$0xff]
        %v5390 = vld [vmem:[%s3852 + $0x109] sm:$0xff]
        %v5391 = vld [vmem:[%s3852 + $0x111] sm:$0xff]
        %v5392 = vld [vmem:[%s3852 + $0x121] sm:$0xff]
        %v5393 = vld [vmem:[%s3852 + $0x129] sm:$0xff]
        %v5394 = vld [vmem:[%s3852 + $0x139] sm:$0xff]
        %v5395 = vld [vmem:[%s3852 + $0x141] sm:$0xff]
        %v5396 = vld [vmem:[%s3852 + $0x151] sm:$0xff]
        %v5397 = vld [vmem:[%s3852 + $0x159] sm:$0xff]
        %v5398 = vld [vmem:[%s3852 + $0x169] sm:$0xff]
        %v5399 = vld [vmem:[%s3852 + $0x171] sm:$0xff]
        %s5400 = scalar_lea.vmem %s3, 32
        %v5401 = vld [vmem:[%s5400] sm:$0xff]
        %v5403 = vsel %vm3796, %v5368, 0
        %v5406 = vsel %vm3796, %v5369, 0
        %v5409 = vsel %vm3796, %v5370, 0
        %v5412 = vsel %vm3796, %v5371, 0
        %v5415 = vsel %vm3796, %v5372, 0
        %v5418 = vsel %vm3796, %v5373, 0
        %v5421 = vsel %vm3796, %v5374, 0
        %v5424 = vsel %vm3796, %v5375, 0
        %v5427 = vsel %vm3796, %v5376, 0
        %v5430 = vsel %vm3796, %v5377, 0
        %v5433 = vsel %vm3796, %v5378, 0
        %v5436 = vsel %vm3796, %v5379, 0
        %v5439 = vsel %vm3796, %v5380, 0
        %v5442 = vsel %vm3796, %v5381, 0
        %v5445 = vsel %vm3796, %v5382, 0
        %v5448 = vsel %vm3796, %v5383, 0
        %v5451 = vsel %vm3796, %v5384, 0
        %v5454 = vsel %vm3796, %v5385, 0
        %v5457 = vsel %vm3796, %v5386, 0
        %v5460 = vsel %vm3796, %v5387, 0
        %v5463 = vsel %vm3796, %v5388, 0
        %v5466 = vsel %vm3796, %v5389, 0
        %v5469 = vsel %vm3796, %v5390, 0
        %v5472 = vsel %vm3796, %v5391, 0
        %v5475 = vsel %vm3796, %v5392, 0
        %v5478 = vsel %vm3796, %v5393, 0
        %v5481 = vsel %vm3796, %v5394, 0
        %v5484 = vsel %vm3796, %v5395, 0
        %v5487 = vsel %vm3796, %v5396, 0
        %v5490 = vsel %vm3796, %v5397, 0
        %v5493 = vsel %vm3796, %v5398, 0
        %v5496 = vsel %vm3796, %v5399, 0
        %5498 = vmatprep.subr.mxu0 0.0
        %5499 = vmatpush1.msra.mxu0 0.0
        %5500 = vmatprep.subr.mxu0 0.0
        %5501 = vmatpush1.msra.mxu0 0.0
        %5502 = vmatprep.subr.mxu0 0.0
        %5503 = vmatpush1.msra.mxu0 0.0
        %5504 = vmatprep.subr.mxu0 0.0
        %5505 = vmatpush1.msra.mxu0 0.0
        %5506 = vmatprep.subr.mxu0 0.0
        %5507 = vmatpush1.msra.mxu0 0.0
        %5508 = vmatprep.subr.mxu0 0.0
        %5509 = vmatpush1.msra.mxu0 0.0
        %5510 = vmatprep.subr.mxu0 0.0
        %5511 = vmatpush1.msra.mxu0 0.0
        %5512 = vmatprep.subr.mxu0 0.0
        %5513 = vmatpush1.msra.mxu0 0.0
        %5514 = vmatprep.subr.mxu0 0.0
        %5515 = vmatpush1.msra.mxu0 0.0
        %5516 = vmatprep.subr.mxu0 0.0
        %5517 = vmatpush1.msra.mxu0 0.0
        %5518 = vmatprep.subr.mxu0 0.0
        %5519 = vmatpush1.msra.mxu0 0.0
        %5520 = vmatprep.subr.mxu0 0.0
        %5521 = vmatpush1.msra.mxu0 0.0
        %5522 = vmatprep.subr.mxu0 0.0
        %5523 = vmatpush1.msra.mxu0 0.0
        %5524 = vmatprep.subr.mxu0 0.0
        %5525 = vmatpush1.msra.mxu0 0.0
        %5526 = vmatprep.subr.mxu0 0.0
        %5527 = vmatpush1.msra.mxu0 0.0
        %5528 = vmatprep.subr.mxu0 0.0
        %5529 = vmatpush1.msra.mxu0 %v5401
        %5530 = vmatprep.subr.mxu0 0.0
        %5531 = vmatpush2.msra.mxu0 0.0
        %5532 = vmatprep.subr.mxu0 0.0
        %5533 = vmatpush2.msra.mxu0 0.0
        %5534 = vmatprep.subr.mxu0 0.0
        %5535 = vmatpush2.msra.mxu0 0.0
        %5536 = vmatprep.subr.mxu0 0.0
        %5537 = vmatpush2.msra.mxu0 0.0
        %5538 = vmatprep.subr.mxu0 0.0
        %5539 = vmatpush2.msra.mxu0 0.0
        %5540 = vmatprep.subr.mxu0 0.0
        %5541 = vmatpush2.msra.mxu0 0.0
        %5542 = vmatprep.subr.mxu0 0.0
        %5543 = vmatpush2.msra.mxu0 0.0
        %5544 = vmatprep.subr.mxu0 0.0
        %5545 = vmatpush2.msra.mxu0 0.0
        %5546 = vmatprep.subr.mxu0 0.0
        %5547 = vmatpush2.msra.mxu0 0.0
        %5548 = vmatprep.subr.mxu0 0.0
        %5549 = vmatpush2.msra.mxu0 0.0
        %5550 = vmatprep.subr.mxu0 0.0
        %5551 = vmatpush2.msra.mxu0 0.0
        %5552 = vmatprep.subr.mxu0 0.0
        %5553 = vmatpush2.msra.mxu0 0.0
        %5554 = vmatprep.subr.mxu0 0.0
        %5555 = vmatpush2.msra.mxu0 0.0
        %5556 = vmatprep.subr.mxu0 0.0
        %5557 = vmatpush2.msra.mxu0 0.0
        %5558 = vmatprep.subr.mxu0 0.0
        %5559 = vmatpush2.msra.mxu0 0.0
        %5560 = vmatprep.subr.mxu0 0.0
        %5561 = vmatpush2.msra.mxu0 0.0
        %5562 = vmatprep.mubr.f32.mxu0 0.0
        %5563 = vmatmul.mubr.f32.gmra.mxu0 %v5403
        %v5564 = vpop.f32.mrf.mxu0
        %v5565 = vadd.f32 0.0, %v5564
        %v5566 = vpop.f32.mrf.mxu0
        %5567 = vmatprep.mubr.f32.mxu0 0.0
        %5568 = vmatmul.mubr.f32.gmra.mxu0 %v5406
        %v5569 = vpop.f32.mrf.mxu0
        %v5570 = vadd.f32 0.0, %v5569
        %v5571 = vpop.f32.mrf.mxu0
        %5572 = vmatprep.mubr.f32.mxu0 0.0
        %5573 = vmatmul.mubr.f32.gmra.mxu0 %v5409
        %v5574 = vpop.f32.mrf.mxu0
        %v5575 = vadd.f32 0.0, %v5574
        %v5576 = vpop.f32.mrf.mxu0
        %5577 = vmatprep.mubr.f32.mxu0 0.0
        %5578 = vmatmul.mubr.f32.gmra.mxu0 %v5412
        %v5579 = vpop.f32.mrf.mxu0
        %v5580 = vadd.f32 0.0, %v5579
        %v5581 = vpop.f32.mrf.mxu0
        %5582 = vmatprep.mubr.f32.mxu0 0.0
        %5583 = vmatmul.mubr.f32.gmra.mxu0 %v5415
        %v5584 = vpop.f32.mrf.mxu0
        %v5585 = vadd.f32 0.0, %v5584
        %v5586 = vpop.f32.mrf.mxu0
        %5587 = vmatprep.mubr.f32.mxu0 0.0
        %5588 = vmatmul.mubr.f32.gmra.mxu0 %v5418
        %v5589 = vpop.f32.mrf.mxu0
        %v5590 = vadd.f32 0.0, %v5589
        %v5591 = vpop.f32.mrf.mxu0
        %5592 = vmatprep.mubr.f32.mxu0 0.0
        %5593 = vmatmul.mubr.f32.gmra.mxu0 %v5421
        %v5594 = vpop.f32.mrf.mxu0
        %v5595 = vadd.f32 0.0, %v5594
        %v5596 = vpop.f32.mrf.mxu0
        %5597 = vmatprep.mubr.f32.mxu0 0.0
        %5598 = vmatmul.mubr.f32.gmra.mxu0 %v5424
        %v5599 = vpop.f32.mrf.mxu0
        %v5600 = vadd.f32 0.0, %v5599
        %v5601 = vpop.f32.mrf.mxu0
        %5602 = vmatprep.mubr.f32.mxu0 0.0
        %5603 = vmatmul.mubr.f32.gmra.mxu0 %v5427
        %v5604 = vpop.f32.mrf.mxu0
        %v5605 = vadd.f32 0.0, %v5604
        %v5606 = vpop.f32.mrf.mxu0
        %5607 = vmatprep.mubr.f32.mxu0 0.0
        %5608 = vmatmul.mubr.f32.gmra.mxu0 %v5430
        %v5609 = vpop.f32.mrf.mxu0
        %v5610 = vadd.f32 0.0, %v5609
        %v5611 = vpop.f32.mrf.mxu0
        %5612 = vmatprep.mubr.f32.mxu0 0.0
        %5613 = vmatmul.mubr.f32.gmra.mxu0 %v5433
        %v5614 = vpop.f32.mrf.mxu0
        %v5615 = vadd.f32 0.0, %v5614
        %v5616 = vpop.f32.mrf.mxu0
        %5617 = vmatprep.mubr.f32.mxu0 0.0
        %5618 = vmatmul.mubr.f32.gmra.mxu0 %v5436
        %v5619 = vpop.f32.mrf.mxu0
        %v5620 = vadd.f32 0.0, %v5619
        %v5621 = vpop.f32.mrf.mxu0
        %5622 = vmatprep.mubr.f32.mxu0 0.0
        %5623 = vmatmul.mubr.f32.gmra.mxu0 %v5439
        %v5624 = vpop.f32.mrf.mxu0
        %v5625 = vadd.f32 0.0, %v5624
        %v5626 = vpop.f32.mrf.mxu0
        %5627 = vmatprep.mubr.f32.mxu0 0.0
        %5628 = vmatmul.mubr.f32.gmra.mxu0 %v5442
        %v5629 = vpop.f32.mrf.mxu0
        %v5630 = vadd.f32 0.0, %v5629
        %v5631 = vpop.f32.mrf.mxu0
        %5632 = vmatprep.mubr.f32.mxu0 0.0
        %5633 = vmatmul.mubr.f32.gmra.mxu0 %v5445
        %v5634 = vpop.f32.mrf.mxu0
        %v5635 = vadd.f32 0.0, %v5634
        %v5636 = vpop.f32.mrf.mxu0
        %5637 = vmatprep.mubr.f32.mxu0 0.0
        %5638 = vmatmul.mubr.f32.gmra.mxu0 %v5448
        %v5639 = vpop.f32.mrf.mxu0
        %v5640 = vadd.f32 0.0, %v5639
        %v5641 = vpop.f32.mrf.mxu0
        %5642 = vmatprep.mubr.f32.mxu0 0.0
        %5643 = vmatmul.mubr.f32.gmra.mxu0 %v5451
        %v5644 = vpop.f32.mrf.mxu0
        %v5645 = vadd.f32 0.0, %v5644
        %v5646 = vpop.f32.mrf.mxu0
        %5647 = vmatprep.mubr.f32.mxu0 0.0
        %5648 = vmatmul.mubr.f32.gmra.mxu0 %v5454
        %v5649 = vpop.f32.mrf.mxu0
        %v5650 = vadd.f32 0.0, %v5649
        %v5651 = vpop.f32.mrf.mxu0
        %5652 = vmatprep.mubr.f32.mxu0 0.0
        %5653 = vmatmul.mubr.f32.gmra.mxu0 %v5457
        %v5654 = vpop.f32.mrf.mxu0
        %v5655 = vadd.f32 0.0, %v5654
        %v5656 = vpop.f32.mrf.mxu0
        %5657 = vmatprep.mubr.f32.mxu0 0.0
        %5658 = vmatmul.mubr.f32.gmra.mxu0 %v5460
        %v5659 = vpop.f32.mrf.mxu0
        %v5660 = vadd.f32 0.0, %v5659
        %v5661 = vpop.f32.mrf.mxu0
        %5662 = vmatprep.mubr.f32.mxu0 0.0
        %5663 = vmatmul.mubr.f32.gmra.mxu0 %v5463
        %v5664 = vpop.f32.mrf.mxu0
        %v5665 = vadd.f32 0.0, %v5664
        %v5666 = vpop.f32.mrf.mxu0
        %5667 = vmatprep.mubr.f32.mxu0 0.0
        %5668 = vmatmul.mubr.f32.gmra.mxu0 %v5466
        %v5669 = vpop.f32.mrf.mxu0
        %v5670 = vadd.f32 0.0, %v5669
        %v5671 = vpop.f32.mrf.mxu0
        %5672 = vmatprep.mubr.f32.mxu0 0.0
        %5673 = vmatmul.mubr.f32.gmra.mxu0 %v5469
        %v5674 = vpop.f32.mrf.mxu0
        %v5675 = vadd.f32 0.0, %v5674
        %v5676 = vpop.f32.mrf.mxu0
        %5677 = vmatprep.mubr.f32.mxu0 0.0
        %5678 = vmatmul.mubr.f32.gmra.mxu0 %v5472
        %v5679 = vpop.f32.mrf.mxu0
        %v5680 = vadd.f32 0.0, %v5679
        %v5681 = vpop.f32.mrf.mxu0
        %5682 = vmatprep.mubr.f32.mxu0 0.0
        %5683 = vmatmul.mubr.f32.gmra.mxu0 %v5475
        %v5684 = vpop.f32.mrf.mxu0
        %v5685 = vadd.f32 0.0, %v5684
        %v5686 = vpop.f32.mrf.mxu0
        %5687 = vmatprep.mubr.f32.mxu0 0.0
        %5688 = vmatmul.mubr.f32.gmra.mxu0 %v5478
        %v5689 = vpop.f32.mrf.mxu0
        %v5690 = vadd.f32 0.0, %v5689
        %v5691 = vpop.f32.mrf.mxu0
        %5692 = vmatprep.mubr.f32.mxu0 0.0
        %5693 = vmatmul.mubr.f32.gmra.mxu0 %v5481
        %v5694 = vpop.f32.mrf.mxu0
        %v5695 = vadd.f32 0.0, %v5694
        %v5696 = vpop.f32.mrf.mxu0
        %5697 = vmatprep.mubr.f32.mxu0 0.0
        %5698 = vmatmul.mubr.f32.gmra.mxu0 %v5484
        %v5699 = vpop.f32.mrf.mxu0
        %v5700 = vadd.f32 0.0, %v5699
        %v5701 = vpop.f32.mrf.mxu0
        %5702 = vmatprep.mubr.f32.mxu0 0.0
        %5703 = vmatmul.mubr.f32.gmra.mxu0 %v5487
        %v5704 = vpop.f32.mrf.mxu0
        %v5705 = vadd.f32 0.0, %v5704
        %v5706 = vpop.f32.mrf.mxu0
        %5707 = vmatprep.mubr.f32.mxu0 0.0
        %5708 = vmatmul.mubr.f32.gmra.mxu0 %v5490
        %v5709 = vpop.f32.mrf.mxu0
        %v5710 = vadd.f32 0.0, %v5709
        %v5711 = vpop.f32.mrf.mxu0
        %5712 = vmatprep.mubr.f32.mxu0 0.0
        %5713 = vmatmul.mubr.f32.gmra.mxu0 %v5493
        %v5714 = vpop.f32.mrf.mxu0
        %v5715 = vadd.f32 0.0, %v5714
        %v5716 = vpop.f32.mrf.mxu0
        %5717 = vmatprep.mubr.f32.mxu0 0.0
        %5718 = vmatmul.mubr.f32.gmra.mxu0 %v5496
        %v5719 = vpop.f32.mrf.mxu0
        %v5720 = vadd.f32 0.0, %v5719
        %v5721 = vpop.f32.mrf.mxu0
        %5722 = vdwg.mxu0
        %v5723 = vadd.f32 %v5336, %v5565
        %v5724 = vadd.f32 %v5337, %v5570
        %v5725 = vadd.f32 %v5338, %v5575
        %v5726 = vadd.f32 %v5339, %v5580
        %v5727 = vadd.f32 %v5340, %v5585
        %v5728 = vadd.f32 %v5341, %v5590
        %v5729 = vadd.f32 %v5342, %v5595
        %v5730 = vadd.f32 %v5343, %v5600
        %v5731 = vadd.f32 %v5344, %v5605
        %v5732 = vadd.f32 %v5345, %v5610
        %v5733 = vadd.f32 %v5346, %v5615
        %v5734 = vadd.f32 %v5347, %v5620
        %v5735 = vadd.f32 %v5348, %v5625
        %v5736 = vadd.f32 %v5349, %v5630
        %v5737 = vadd.f32 %v5350, %v5635
        %v5738 = vadd.f32 %v5351, %v5640
        %v5739 = vadd.f32 %v5352, %v5645
        %v5740 = vadd.f32 %v5353, %v5650
        %v5741 = vadd.f32 %v5354, %v5655
        %v5742 = vadd.f32 %v5355, %v5660
        %v5743 = vadd.f32 %v5356, %v5665
        %v5744 = vadd.f32 %v5357, %v5670
        %v5745 = vadd.f32 %v5358, %v5675
        %v5746 = vadd.f32 %v5359, %v5680
        %v5747 = vadd.f32 %v5360, %v5685
        %v5748 = vadd.f32 %v5361, %v5690
        %v5749 = vadd.f32 %v5362, %v5695
        %v5750 = vadd.f32 %v5363, %v5700
        %v5751 = vadd.f32 %v5364, %v5705
        %v5752 = vadd.f32 %v5365, %v5710
        %v5753 = vadd.f32 %v5366, %v5715
        %v5754 = vadd.f32 %v5367, %v5720
        %v5755 = vld [vmem:[%s3852 + $0x2] sm:$0xff]
        %v5756 = vld [vmem:[%s3852 + $0xa] sm:$0xff]
        %v5757 = vld [vmem:[%s3852 + $0x1a] sm:$0xff]
        %v5758 = vld [vmem:[%s3852 + $0x22] sm:$0xff]
        %v5759 = vld [vmem:[%s3852 + $0x32] sm:$0xff]
        %v5760 = vld [vmem:[%s3852 + $0x3a] sm:$0xff]
        %v5761 = vld [vmem:[%s3852 + $0x4a] sm:$0xff]
        %v5762 = vld [vmem:[%s3852 + $0x52] sm:$0xff]
        %v5763 = vld [vmem:[%s3852 + $0x62] sm:$0xff]
        %v5764 = vld [vmem:[%s3852 + $0x6a] sm:$0xff]
        %v5765 = vld [vmem:[%s3852 + $0x7a] sm:$0xff]
        %v5766 = vld [vmem:[%s3852 + $0x82] sm:$0xff]
        %v5767 = vld [vmem:[%s3852 + $0x92] sm:$0xff]
        %v5768 = vld [vmem:[%s3852 + $0x9a] sm:$0xff]
        %v5769 = vld [vmem:[%s3852 + $0xaa] sm:$0xff]
        %v5770 = vld [vmem:[%s3852 + $0xb2] sm:$0xff]
        %v5771 = vld [vmem:[%s3852 + $0xc2] sm:$0xff]
        %v5772 = vld [vmem:[%s3852 + $0xca] sm:$0xff]
        %v5773 = vld [vmem:[%s3852 + $0xda] sm:$0xff]
        %v5774 = vld [vmem:[%s3852 + $0xe2] sm:$0xff]
        %v5775 = vld [vmem:[%s3852 + $0xf2] sm:$0xff]
        %v5776 = vld [vmem:[%s3852 + $0xfa] sm:$0xff]
        %v5777 = vld [vmem:[%s3852 + $0x10a] sm:$0xff]
        %v5778 = vld [vmem:[%s3852 + $0x112] sm:$0xff]
        %v5779 = vld [vmem:[%s3852 + $0x122] sm:$0xff]
        %v5780 = vld [vmem:[%s3852 + $0x12a] sm:$0xff]
        %v5781 = vld [vmem:[%s3852 + $0x13a] sm:$0xff]
        %v5782 = vld [vmem:[%s3852 + $0x142] sm:$0xff]
        %v5783 = vld [vmem:[%s3852 + $0x152] sm:$0xff]
        %v5784 = vld [vmem:[%s3852 + $0x15a] sm:$0xff]
        %v5785 = vld [vmem:[%s3852 + $0x16a] sm:$0xff]
        %v5786 = vld [vmem:[%s3852 + $0x172] sm:$0xff]
        %s5787 = scalar_lea.vmem %s3, 40
        %v5788 = vld [vmem:[%s5787] sm:$0xff]
        %v5790 = vsel %vm3796, %v5755, 0
        %v5793 = vsel %vm3796, %v5756, 0
        %v5796 = vsel %vm3796, %v5757, 0
        %v5799 = vsel %vm3796, %v5758, 0
        %v5802 = vsel %vm3796, %v5759, 0
        %v5805 = vsel %vm3796, %v5760, 0
        %v5808 = vsel %vm3796, %v5761, 0
        %v5811 = vsel %vm3796, %v5762, 0
        %v5814 = vsel %vm3796, %v5763, 0
        %v5817 = vsel %vm3796, %v5764, 0
        %v5820 = vsel %vm3796, %v5765, 0
        %v5823 = vsel %vm3796, %v5766, 0
        %v5826 = vsel %vm3796, %v5767, 0
        %v5829 = vsel %vm3796, %v5768, 0
        %v5832 = vsel %vm3796, %v5769, 0
        %v5835 = vsel %vm3796, %v5770, 0
        %v5838 = vsel %vm3796, %v5771, 0
        %v5841 = vsel %vm3796, %v5772, 0
        %v5844 = vsel %vm3796, %v5773, 0
        %v5847 = vsel %vm3796, %v5774, 0
        %v5850 = vsel %vm3796, %v5775, 0
        %v5853 = vsel %vm3796, %v5776, 0
        %v5856 = vsel %vm3796, %v5777, 0
        %v5859 = vsel %vm3796, %v5778, 0
        %v5862 = vsel %vm3796, %v5779, 0
        %v5865 = vsel %vm3796, %v5780, 0
        %v5868 = vsel %vm3796, %v5781, 0
        %v5871 = vsel %vm3796, %v5782, 0
        %v5874 = vsel %vm3796, %v5783, 0
        %v5877 = vsel %vm3796, %v5784, 0
        %v5880 = vsel %vm3796, %v5785, 0
        %v5883 = vsel %vm3796, %v5786, 0
        %5885 = vmatprep.subr.mxu0 0.0
        %5886 = vmatpush1.msra.mxu0 0.0
        %5887 = vmatprep.subr.mxu0 0.0
        %5888 = vmatpush1.msra.mxu0 0.0
        %5889 = vmatprep.subr.mxu0 0.0
        %5890 = vmatpush1.msra.mxu0 0.0
        %5891 = vmatprep.subr.mxu0 0.0
        %5892 = vmatpush1.msra.mxu0 0.0
        %5893 = vmatprep.subr.mxu0 0.0
        %5894 = vmatpush1.msra.mxu0 0.0
        %5895 = vmatprep.subr.mxu0 0.0
        %5896 = vmatpush1.msra.mxu0 0.0
        %5897 = vmatprep.subr.mxu0 0.0
        %5898 = vmatpush1.msra.mxu0 0.0
        %5899 = vmatprep.subr.mxu0 0.0
        %5900 = vmatpush1.msra.mxu0 0.0
        %5901 = vmatprep.subr.mxu0 0.0
        %5902 = vmatpush1.msra.mxu0 0.0
        %5903 = vmatprep.subr.mxu0 0.0
        %5904 = vmatpush1.msra.mxu0 0.0
        %5905 = vmatprep.subr.mxu0 0.0
        %5906 = vmatpush1.msra.mxu0 0.0
        %5907 = vmatprep.subr.mxu0 0.0
        %5908 = vmatpush1.msra.mxu0 0.0
        %5909 = vmatprep.subr.mxu0 0.0
        %5910 = vmatpush1.msra.mxu0 0.0
        %5911 = vmatprep.subr.mxu0 0.0
        %5912 = vmatpush1.msra.mxu0 0.0
        %5913 = vmatprep.subr.mxu0 0.0
        %5914 = vmatpush1.msra.mxu0 0.0
        %5915 = vmatprep.subr.mxu0 0.0
        %5916 = vmatpush1.msra.mxu0 %v5788
        %5917 = vmatprep.subr.mxu0 0.0
        %5918 = vmatpush2.msra.mxu0 0.0
        %5919 = vmatprep.subr.mxu0 0.0
        %5920 = vmatpush2.msra.mxu0 0.0
        %5921 = vmatprep.subr.mxu0 0.0
        %5922 = vmatpush2.msra.mxu0 0.0
        %5923 = vmatprep.subr.mxu0 0.0
        %5924 = vmatpush2.msra.mxu0 0.0
        %5925 = vmatprep.subr.mxu0 0.0
        %5926 = vmatpush2.msra.mxu0 0.0
        %5927 = vmatprep.subr.mxu0 0.0
        %5928 = vmatpush2.msra.mxu0 0.0
        %5929 = vmatprep.subr.mxu0 0.0
        %5930 = vmatpush2.msra.mxu0 0.0
        %5931 = vmatprep.subr.mxu0 0.0
        %5932 = vmatpush2.msra.mxu0 0.0
        %5933 = vmatprep.subr.mxu0 0.0
        %5934 = vmatpush2.msra.mxu0 0.0
        %5935 = vmatprep.subr.mxu0 0.0
        %5936 = vmatpush2.msra.mxu0 0.0
        %5937 = vmatprep.subr.mxu0 0.0
        %5938 = vmatpush2.msra.mxu0 0.0
        %5939 = vmatprep.subr.mxu0 0.0
        %5940 = vmatpush2.msra.mxu0 0.0
        %5941 = vmatprep.subr.mxu0 0.0
        %5942 = vmatpush2.msra.mxu0 0.0
        %5943 = vmatprep.subr.mxu0 0.0
        %5944 = vmatpush2.msra.mxu0 0.0
        %5945 = vmatprep.subr.mxu0 0.0
        %5946 = vmatpush2.msra.mxu0 0.0
        %5947 = vmatprep.subr.mxu0 0.0
        %5948 = vmatpush2.msra.mxu0 0.0
        %5949 = vmatprep.mubr.f32.mxu0 0.0
        %5950 = vmatmul.mubr.f32.gmra.mxu0 %v5790
        %v5951 = vpop.f32.mrf.mxu0
        %v5952 = vadd.f32 0.0, %v5951
        %v5953 = vpop.f32.mrf.mxu0
        %5954 = vmatprep.mubr.f32.mxu0 0.0
        %5955 = vmatmul.mubr.f32.gmra.mxu0 %v5793
        %v5956 = vpop.f32.mrf.mxu0
        %v5957 = vadd.f32 0.0, %v5956
        %v5958 = vpop.f32.mrf.mxu0
        %5959 = vmatprep.mubr.f32.mxu0 0.0
        %5960 = vmatmul.mubr.f32.gmra.mxu0 %v5796
        %v5961 = vpop.f32.mrf.mxu0
        %v5962 = vadd.f32 0.0, %v5961
        %v5963 = vpop.f32.mrf.mxu0
        %5964 = vmatprep.mubr.f32.mxu0 0.0
        %5965 = vmatmul.mubr.f32.gmra.mxu0 %v5799
        %v5966 = vpop.f32.mrf.mxu0
        %v5967 = vadd.f32 0.0, %v5966
        %v5968 = vpop.f32.mrf.mxu0
        %5969 = vmatprep.mubr.f32.mxu0 0.0
        %5970 = vmatmul.mubr.f32.gmra.mxu0 %v5802
        %v5971 = vpop.f32.mrf.mxu0
        %v5972 = vadd.f32 0.0, %v5971
        %v5973 = vpop.f32.mrf.mxu0
        %5974 = vmatprep.mubr.f32.mxu0 0.0
        %5975 = vmatmul.mubr.f32.gmra.mxu0 %v5805
        %v5976 = vpop.f32.mrf.mxu0
        %v5977 = vadd.f32 0.0, %v5976
        %v5978 = vpop.f32.mrf.mxu0
        %5979 = vmatprep.mubr.f32.mxu0 0.0
        %5980 = vmatmul.mubr.f32.gmra.mxu0 %v5808
        %v5981 = vpop.f32.mrf.mxu0
        %v5982 = vadd.f32 0.0, %v5981
        %v5983 = vpop.f32.mrf.mxu0
        %5984 = vmatprep.mubr.f32.mxu0 0.0
        %5985 = vmatmul.mubr.f32.gmra.mxu0 %v5811
        %v5986 = vpop.f32.mrf.mxu0
        %v5987 = vadd.f32 0.0, %v5986
        %v5988 = vpop.f32.mrf.mxu0
        %5989 = vmatprep.mubr.f32.mxu0 0.0
        %5990 = vmatmul.mubr.f32.gmra.mxu0 %v5814
        %v5991 = vpop.f32.mrf.mxu0
        %v5992 = vadd.f32 0.0, %v5991
        %v5993 = vpop.f32.mrf.mxu0
        %5994 = vmatprep.mubr.f32.mxu0 0.0
        %5995 = vmatmul.mubr.f32.gmra.mxu0 %v5817
        %v5996 = vpop.f32.mrf.mxu0
        %v5997 = vadd.f32 0.0, %v5996
        %v5998 = vpop.f32.mrf.mxu0
        %5999 = vmatprep.mubr.f32.mxu0 0.0
        %6000 = vmatmul.mubr.f32.gmra.mxu0 %v5820
        %v6001 = vpop.f32.mrf.mxu0
        %v6002 = vadd.f32 0.0, %v6001
        %v6003 = vpop.f32.mrf.mxu0
        %6004 = vmatprep.mubr.f32.mxu0 0.0
        %6005 = vmatmul.mubr.f32.gmra.mxu0 %v5823
        %v6006 = vpop.f32.mrf.mxu0
        %v6007 = vadd.f32 0.0, %v6006
        %v6008 = vpop.f32.mrf.mxu0
        %6009 = vmatprep.mubr.f32.mxu0 0.0
        %6010 = vmatmul.mubr.f32.gmra.mxu0 %v5826
        %v6011 = vpop.f32.mrf.mxu0
        %v6012 = vadd.f32 0.0, %v6011
        %v6013 = vpop.f32.mrf.mxu0
        %6014 = vmatprep.mubr.f32.mxu0 0.0
        %6015 = vmatmul.mubr.f32.gmra.mxu0 %v5829
        %v6016 = vpop.f32.mrf.mxu0
        %v6017 = vadd.f32 0.0, %v6016
        %v6018 = vpop.f32.mrf.mxu0
        %6019 = vmatprep.mubr.f32.mxu0 0.0
        %6020 = vmatmul.mubr.f32.gmra.mxu0 %v5832
        %v6021 = vpop.f32.mrf.mxu0
        %v6022 = vadd.f32 0.0, %v6021
        %v6023 = vpop.f32.mrf.mxu0
        %6024 = vmatprep.mubr.f32.mxu0 0.0
        %6025 = vmatmul.mubr.f32.gmra.mxu0 %v5835
        %v6026 = vpop.f32.mrf.mxu0
        %v6027 = vadd.f32 0.0, %v6026
        %v6028 = vpop.f32.mrf.mxu0
        %6029 = vmatprep.mubr.f32.mxu0 0.0
        %6030 = vmatmul.mubr.f32.gmra.mxu0 %v5838
        %v6031 = vpop.f32.mrf.mxu0
        %v6032 = vadd.f32 0.0, %v6031
        %v6033 = vpop.f32.mrf.mxu0
        %6034 = vmatprep.mubr.f32.mxu0 0.0
        %6035 = vmatmul.mubr.f32.gmra.mxu0 %v5841
        %v6036 = vpop.f32.mrf.mxu0
        %v6037 = vadd.f32 0.0, %v6036
        %v6038 = vpop.f32.mrf.mxu0
        %6039 = vmatprep.mubr.f32.mxu0 0.0
        %6040 = vmatmul.mubr.f32.gmra.mxu0 %v5844
        %v6041 = vpop.f32.mrf.mxu0
        %v6042 = vadd.f32 0.0, %v6041
        %v6043 = vpop.f32.mrf.mxu0
        %6044 = vmatprep.mubr.f32.mxu0 0.0
        %6045 = vmatmul.mubr.f32.gmra.mxu0 %v5847
        %v6046 = vpop.f32.mrf.mxu0
        %v6047 = vadd.f32 0.0, %v6046
        %v6048 = vpop.f32.mrf.mxu0
        %6049 = vmatprep.mubr.f32.mxu0 0.0
        %6050 = vmatmul.mubr.f32.gmra.mxu0 %v5850
        %v6051 = vpop.f32.mrf.mxu0
        %v6052 = vadd.f32 0.0, %v6051
        %v6053 = vpop.f32.mrf.mxu0
        %6054 = vmatprep.mubr.f32.mxu0 0.0
        %6055 = vmatmul.mubr.f32.gmra.mxu0 %v5853
        %v6056 = vpop.f32.mrf.mxu0
        %v6057 = vadd.f32 0.0, %v6056
        %v6058 = vpop.f32.mrf.mxu0
        %6059 = vmatprep.mubr.f32.mxu0 0.0
        %6060 = vmatmul.mubr.f32.gmra.mxu0 %v5856
        %v6061 = vpop.f32.mrf.mxu0
        %v6062 = vadd.f32 0.0, %v6061
        %v6063 = vpop.f32.mrf.mxu0
        %6064 = vmatprep.mubr.f32.mxu0 0.0
        %6065 = vmatmul.mubr.f32.gmra.mxu0 %v5859
        %v6066 = vpop.f32.mrf.mxu0
        %v6067 = vadd.f32 0.0, %v6066
        %v6068 = vpop.f32.mrf.mxu0
        %6069 = vmatprep.mubr.f32.mxu0 0.0
        %6070 = vmatmul.mubr.f32.gmra.mxu0 %v5862
        %v6071 = vpop.f32.mrf.mxu0
        %v6072 = vadd.f32 0.0, %v6071
        %v6073 = vpop.f32.mrf.mxu0
        %6074 = vmatprep.mubr.f32.mxu0 0.0
        %6075 = vmatmul.mubr.f32.gmra.mxu0 %v5865
        %v6076 = vpop.f32.mrf.mxu0
        %v6077 = vadd.f32 0.0, %v6076
        %v6078 = vpop.f32.mrf.mxu0
        %6079 = vmatprep.mubr.f32.mxu0 0.0
        %6080 = vmatmul.mubr.f32.gmra.mxu0 %v5868
        %v6081 = vpop.f32.mrf.mxu0
        %v6082 = vadd.f32 0.0, %v6081
        %v6083 = vpop.f32.mrf.mxu0
        %6084 = vmatprep.mubr.f32.mxu0 0.0
        %6085 = vmatmul.mubr.f32.gmra.mxu0 %v5871
        %v6086 = vpop.f32.mrf.mxu0
        %v6087 = vadd.f32 0.0, %v6086
        %v6088 = vpop.f32.mrf.mxu0
        %6089 = vmatprep.mubr.f32.mxu0 0.0
        %6090 = vmatmul.mubr.f32.gmra.mxu0 %v5874
        %v6091 = vpop.f32.mrf.mxu0
        %v6092 = vadd.f32 0.0, %v6091
        %v6093 = vpop.f32.mrf.mxu0
        %6094 = vmatprep.mubr.f32.mxu0 0.0
        %6095 = vmatmul.mubr.f32.gmra.mxu0 %v5877
        %v6096 = vpop.f32.mrf.mxu0
        %v6097 = vadd.f32 0.0, %v6096
        %v6098 = vpop.f32.mrf.mxu0
        %6099 = vmatprep.mubr.f32.mxu0 0.0
        %6100 = vmatmul.mubr.f32.gmra.mxu0 %v5880
        %v6101 = vpop.f32.mrf.mxu0
        %v6102 = vadd.f32 0.0, %v6101
        %v6103 = vpop.f32.mrf.mxu0
        %6104 = vmatprep.mubr.f32.mxu0 0.0
        %6105 = vmatmul.mubr.f32.gmra.mxu0 %v5883
        %v6106 = vpop.f32.mrf.mxu0
        %v6107 = vadd.f32 0.0, %v6106
        %v6108 = vpop.f32.mrf.mxu0
        %6109 = vdwg.mxu0
        %v6110 = vadd.f32 %v5723, %v5952
        %v6111 = vadd.f32 %v5724, %v5957
        %v6112 = vadd.f32 %v5725, %v5962
        %v6113 = vadd.f32 %v5726, %v5967
        %v6114 = vadd.f32 %v5727, %v5972
        %v6115 = vadd.f32 %v5728, %v5977
        %v6116 = vadd.f32 %v5729, %v5982
        %v6117 = vadd.f32 %v5730, %v5987
        %v6118 = vadd.f32 %v5731, %v5992
        %v6119 = vadd.f32 %v5732, %v5997
        %v6120 = vadd.f32 %v5733, %v6002
        %v6121 = vadd.f32 %v5734, %v6007
        %v6122 = vadd.f32 %v5735, %v6012
        %v6123 = vadd.f32 %v5736, %v6017
        %v6124 = vadd.f32 %v5737, %v6022
        %v6125 = vadd.f32 %v5738, %v6027
        %v6126 = vadd.f32 %v5739, %v6032
        %v6127 = vadd.f32 %v5740, %v6037
        %v6128 = vadd.f32 %v5741, %v6042
        %v6129 = vadd.f32 %v5742, %v6047
        %v6130 = vadd.f32 %v5743, %v6052
        %v6131 = vadd.f32 %v5744, %v6057
        %v6132 = vadd.f32 %v5745, %v6062
        %v6133 = vadd.f32 %v5746, %v6067
        %v6134 = vadd.f32 %v5747, %v6072
        %v6135 = vadd.f32 %v5748, %v6077
        %v6136 = vadd.f32 %v5749, %v6082
        %v6137 = vadd.f32 %v5750, %v6087
        %v6138 = vadd.f32 %v5751, %v6092
        %v6139 = vadd.f32 %v5752, %v6097
        %v6140 = vadd.f32 %v5753, %v6102
        %v6141 = vadd.f32 %v5754, %v6107
        %s6142 = scalar_lea.vmem [#allocation2], 48
        %v6143 = vld [vmem:[%s6142] sm:$0xff]
        %v6144 = vld [vmem:[%s6142 + $0x8] sm:$0xff]
        %v6145 = vld [vmem:[%s6142 + $0x18] sm:$0xff]
        %v6146 = vld [vmem:[%s6142 + $0x20] sm:$0xff]
        %v6147 = vld [vmem:[%s6142 + $0x30] sm:$0xff]
        %v6148 = vld [vmem:[%s6142 + $0x38] sm:$0xff]
        %v6149 = vld [vmem:[%s6142 + $0x48] sm:$0xff]
        %v6150 = vld [vmem:[%s6142 + $0x50] sm:$0xff]
        %v6151 = vld [vmem:[%s6142 + $0x60] sm:$0xff]
        %v6152 = vld [vmem:[%s6142 + $0x68] sm:$0xff]
        %v6153 = vld [vmem:[%s6142 + $0x78] sm:$0xff]
        %v6154 = vld [vmem:[%s6142 + $0x80] sm:$0xff]
        %v6155 = vld [vmem:[%s6142 + $0x90] sm:$0xff]
        %v6156 = vld [vmem:[%s6142 + $0x98] sm:$0xff]
        %v6157 = vld [vmem:[%s6142 + $0xa8] sm:$0xff]
        %v6158 = vld [vmem:[%s6142 + $0xb0] sm:$0xff]
        %v6159 = vld [vmem:[%s6142 + $0xc0] sm:$0xff]
        %v6160 = vld [vmem:[%s6142 + $0xc8] sm:$0xff]
        %v6161 = vld [vmem:[%s6142 + $0xd8] sm:$0xff]
        %v6162 = vld [vmem:[%s6142 + $0xe0] sm:$0xff]
        %v6163 = vld [vmem:[%s6142 + $0xf0] sm:$0xff]
        %v6164 = vld [vmem:[%s6142 + $0xf8] sm:$0xff]
        %v6165 = vld [vmem:[%s6142 + $0x108] sm:$0xff]
        %v6166 = vld [vmem:[%s6142 + $0x110] sm:$0xff]
        %v6167 = vld [vmem:[%s6142 + $0x120] sm:$0xff]
        %v6168 = vld [vmem:[%s6142 + $0x128] sm:$0xff]
        %v6169 = vld [vmem:[%s6142 + $0x138] sm:$0xff]
        %v6170 = vld [vmem:[%s6142 + $0x140] sm:$0xff]
        %v6171 = vld [vmem:[%s6142 + $0x150] sm:$0xff]
        %v6172 = vld [vmem:[%s6142 + $0x158] sm:$0xff]
        %v6173 = vld [vmem:[%s6142 + $0x168] sm:$0xff]
        %v6174 = vld [vmem:[%s6142 + $0x170] sm:$0xff]
        %s6175 = scalar_lea.vmem %s3, 48
        %v6176 = vld [vmem:[%s6175] sm:$0xff]
        %v6178 = vsel %vm3796, %v6143, 0
        %v6181 = vsel %vm3796, %v6144, 0
        %v6184 = vsel %vm3796, %v6145, 0
        %v6187 = vsel %vm3796, %v6146, 0
        %v6190 = vsel %vm3796, %v6147, 0
        %v6193 = vsel %vm3796, %v6148, 0
        %v6196 = vsel %vm3796, %v6149, 0
        %v6199 = vsel %vm3796, %v6150, 0
        %v6202 = vsel %vm3796, %v6151, 0
        %v6205 = vsel %vm3796, %v6152, 0
        %v6208 = vsel %vm3796, %v6153, 0
        %v6211 = vsel %vm3796, %v6154, 0
        %v6214 = vsel %vm3796, %v6155, 0
        %v6217 = vsel %vm3796, %v6156, 0
        %v6220 = vsel %vm3796, %v6157, 0
        %v6223 = vsel %vm3796, %v6158, 0
        %v6226 = vsel %vm3796, %v6159, 0
        %v6229 = vsel %vm3796, %v6160, 0
        %v6232 = vsel %vm3796, %v6161, 0
        %v6235 = vsel %vm3796, %v6162, 0
        %v6238 = vsel %vm3796, %v6163, 0
        %v6241 = vsel %vm3796, %v6164, 0
        %v6244 = vsel %vm3796, %v6165, 0
        %v6247 = vsel %vm3796, %v6166, 0
        %v6250 = vsel %vm3796, %v6167, 0
        %v6253 = vsel %vm3796, %v6168, 0
        %v6256 = vsel %vm3796, %v6169, 0
        %v6259 = vsel %vm3796, %v6170, 0
        %v6262 = vsel %vm3796, %v6171, 0
        %v6265 = vsel %vm3796, %v6172, 0
        %v6268 = vsel %vm3796, %v6173, 0
        %v6271 = vsel %vm3796, %v6174, 0
        %6273 = vmatprep.subr.mxu0 0.0
        %6274 = vmatpush1.msra.mxu0 0.0
        %6275 = vmatprep.subr.mxu0 0.0
        %6276 = vmatpush1.msra.mxu0 0.0
        %6277 = vmatprep.subr.mxu0 0.0
        %6278 = vmatpush1.msra.mxu0 0.0
        %6279 = vmatprep.subr.mxu0 0.0
        %6280 = vmatpush1.msra.mxu0 0.0
        %6281 = vmatprep.subr.mxu0 0.0
        %6282 = vmatpush1.msra.mxu0 0.0
        %6283 = vmatprep.subr.mxu0 0.0
        %6284 = vmatpush1.msra.mxu0 0.0
        %6285 = vmatprep.subr.mxu0 0.0
        %6286 = vmatpush1.msra.mxu0 0.0
        %6287 = vmatprep.subr.mxu0 0.0
        %6288 = vmatpush1.msra.mxu0 0.0
        %6289 = vmatprep.subr.mxu0 0.0
        %6290 = vmatpush1.msra.mxu0 0.0
        %6291 = vmatprep.subr.mxu0 0.0
        %6292 = vmatpush1.msra.mxu0 0.0
        %6293 = vmatprep.subr.mxu0 0.0
        %6294 = vmatpush1.msra.mxu0 0.0
        %6295 = vmatprep.subr.mxu0 0.0
        %6296 = vmatpush1.msra.mxu0 0.0
        %6297 = vmatprep.subr.mxu0 0.0
        %6298 = vmatpush1.msra.mxu0 0.0
        %6299 = vmatprep.subr.mxu0 0.0
        %6300 = vmatpush1.msra.mxu0 0.0
        %6301 = vmatprep.subr.mxu0 0.0
        %6302 = vmatpush1.msra.mxu0 0.0
        %6303 = vmatprep.subr.mxu0 0.0
        %6304 = vmatpush1.msra.mxu0 %v6176
        %6305 = vmatprep.subr.mxu0 0.0
        %6306 = vmatpush2.msra.mxu0 0.0
        %6307 = vmatprep.subr.mxu0 0.0
        %6308 = vmatpush2.msra.mxu0 0.0
        %6309 = vmatprep.subr.mxu0 0.0
        %6310 = vmatpush2.msra.mxu0 0.0
        %6311 = vmatprep.subr.mxu0 0.0
        %6312 = vmatpush2.msra.mxu0 0.0
        %6313 = vmatprep.subr.mxu0 0.0
        %6314 = vmatpush2.msra.mxu0 0.0
        %6315 = vmatprep.subr.mxu0 0.0
        %6316 = vmatpush2.msra.mxu0 0.0
        %6317 = vmatprep.subr.mxu0 0.0
        %6318 = vmatpush2.msra.mxu0 0.0
        %6319 = vmatprep.subr.mxu0 0.0
        %6320 = vmatpush2.msra.mxu0 0.0
        %6321 = vmatprep.subr.mxu0 0.0
        %6322 = vmatpush2.msra.mxu0 0.0
        %6323 = vmatprep.subr.mxu0 0.0
        %6324 = vmatpush2.msra.mxu0 0.0
        %6325 = vmatprep.subr.mxu0 0.0
        %6326 = vmatpush2.msra.mxu0 0.0
        %6327 = vmatprep.subr.mxu0 0.0
        %6328 = vmatpush2.msra.mxu0 0.0
        %6329 = vmatprep.subr.mxu0 0.0
        %6330 = vmatpush2.msra.mxu0 0.0
        %6331 = vmatprep.subr.mxu0 0.0
        %6332 = vmatpush2.msra.mxu0 0.0
        %6333 = vmatprep.subr.mxu0 0.0
        %6334 = vmatpush2.msra.mxu0 0.0
        %6335 = vmatprep.subr.mxu0 0.0
        %6336 = vmatpush2.msra.mxu0 0.0
        %6337 = vmatprep.mubr.f32.mxu0 0.0
        %6338 = vmatmul.mubr.f32.gmra.mxu0 %v6178
        %v6339 = vpop.f32.mrf.mxu0
        %v6340 = vadd.f32 0.0, %v6339
        %v6341 = vpop.f32.mrf.mxu0
        %6342 = vmatprep.mubr.f32.mxu0 0.0
        %6343 = vmatmul.mubr.f32.gmra.mxu0 %v6181
        %v6344 = vpop.f32.mrf.mxu0
        %v6345 = vadd.f32 0.0, %v6344
        %v6346 = vpop.f32.mrf.mxu0
        %6347 = vmatprep.mubr.f32.mxu0 0.0
        %6348 = vmatmul.mubr.f32.gmra.mxu0 %v6184
        %v6349 = vpop.f32.mrf.mxu0
        %v6350 = vadd.f32 0.0, %v6349
        %v6351 = vpop.f32.mrf.mxu0
        %6352 = vmatprep.mubr.f32.mxu0 0.0
        %6353 = vmatmul.mubr.f32.gmra.mxu0 %v6187
        %v6354 = vpop.f32.mrf.mxu0
        %v6355 = vadd.f32 0.0, %v6354
        %v6356 = vpop.f32.mrf.mxu0
        %6357 = vmatprep.mubr.f32.mxu0 0.0
        %6358 = vmatmul.mubr.f32.gmra.mxu0 %v6190
        %v6359 = vpop.f32.mrf.mxu0
        %v6360 = vadd.f32 0.0, %v6359
        %v6361 = vpop.f32.mrf.mxu0
        %6362 = vmatprep.mubr.f32.mxu0 0.0
        %6363 = vmatmul.mubr.f32.gmra.mxu0 %v6193
        %v6364 = vpop.f32.mrf.mxu0
        %v6365 = vadd.f32 0.0, %v6364
        %v6366 = vpop.f32.mrf.mxu0
        %6367 = vmatprep.mubr.f32.mxu0 0.0
        %6368 = vmatmul.mubr.f32.gmra.mxu0 %v6196
        %v6369 = vpop.f32.mrf.mxu0
        %v6370 = vadd.f32 0.0, %v6369
        %v6371 = vpop.f32.mrf.mxu0
        %6372 = vmatprep.mubr.f32.mxu0 0.0
        %6373 = vmatmul.mubr.f32.gmra.mxu0 %v6199
        %v6374 = vpop.f32.mrf.mxu0
        %v6375 = vadd.f32 0.0, %v6374
        %v6376 = vpop.f32.mrf.mxu0
        %6377 = vmatprep.mubr.f32.mxu0 0.0
        %6378 = vmatmul.mubr.f32.gmra.mxu0 %v6202
        %v6379 = vpop.f32.mrf.mxu0
        %v6380 = vadd.f32 0.0, %v6379
        %v6381 = vpop.f32.mrf.mxu0
        %6382 = vmatprep.mubr.f32.mxu0 0.0
        %6383 = vmatmul.mubr.f32.gmra.mxu0 %v6205
        %v6384 = vpop.f32.mrf.mxu0
        %v6385 = vadd.f32 0.0, %v6384
        %v6386 = vpop.f32.mrf.mxu0
        %6387 = vmatprep.mubr.f32.mxu0 0.0
        %6388 = vmatmul.mubr.f32.gmra.mxu0 %v6208
        %v6389 = vpop.f32.mrf.mxu0
        %v6390 = vadd.f32 0.0, %v6389
        %v6391 = vpop.f32.mrf.mxu0
        %6392 = vmatprep.mubr.f32.mxu0 0.0
        %6393 = vmatmul.mubr.f32.gmra.mxu0 %v6211
        %v6394 = vpop.f32.mrf.mxu0
        %v6395 = vadd.f32 0.0, %v6394
        %v6396 = vpop.f32.mrf.mxu0
        %6397 = vmatprep.mubr.f32.mxu0 0.0
        %6398 = vmatmul.mubr.f32.gmra.mxu0 %v6214
        %v6399 = vpop.f32.mrf.mxu0
        %v6400 = vadd.f32 0.0, %v6399
        %v6401 = vpop.f32.mrf.mxu0
        %6402 = vmatprep.mubr.f32.mxu0 0.0
        %6403 = vmatmul.mubr.f32.gmra.mxu0 %v6217
        %v6404 = vpop.f32.mrf.mxu0
        %v6405 = vadd.f32 0.0, %v6404
        %v6406 = vpop.f32.mrf.mxu0
        %6407 = vmatprep.mubr.f32.mxu0 0.0
        %6408 = vmatmul.mubr.f32.gmra.mxu0 %v6220
        %v6409 = vpop.f32.mrf.mxu0
        %v6410 = vadd.f32 0.0, %v6409
        %v6411 = vpop.f32.mrf.mxu0
        %6412 = vmatprep.mubr.f32.mxu0 0.0
        %6413 = vmatmul.mubr.f32.gmra.mxu0 %v6223
        %v6414 = vpop.f32.mrf.mxu0
        %v6415 = vadd.f32 0.0, %v6414
        %v6416 = vpop.f32.mrf.mxu0
        %6417 = vmatprep.mubr.f32.mxu0 0.0
        %6418 = vmatmul.mubr.f32.gmra.mxu0 %v6226
        %v6419 = vpop.f32.mrf.mxu0
        %v6420 = vadd.f32 0.0, %v6419
        %v6421 = vpop.f32.mrf.mxu0
        %6422 = vmatprep.mubr.f32.mxu0 0.0
        %6423 = vmatmul.mubr.f32.gmra.mxu0 %v6229
        %v6424 = vpop.f32.mrf.mxu0
        %v6425 = vadd.f32 0.0, %v6424
        %v6426 = vpop.f32.mrf.mxu0
        %6427 = vmatprep.mubr.f32.mxu0 0.0
        %6428 = vmatmul.mubr.f32.gmra.mxu0 %v6232
        %v6429 = vpop.f32.mrf.mxu0
        %v6430 = vadd.f32 0.0, %v6429
        %v6431 = vpop.f32.mrf.mxu0
        %6432 = vmatprep.mubr.f32.mxu0 0.0
        %6433 = vmatmul.mubr.f32.gmra.mxu0 %v6235
        %v6434 = vpop.f32.mrf.mxu0
        %v6435 = vadd.f32 0.0, %v6434
        %v6436 = vpop.f32.mrf.mxu0
        %6437 = vmatprep.mubr.f32.mxu0 0.0
        %6438 = vmatmul.mubr.f32.gmra.mxu0 %v6238
        %v6439 = vpop.f32.mrf.mxu0
        %v6440 = vadd.f32 0.0, %v6439
        %v6441 = vpop.f32.mrf.mxu0
        %6442 = vmatprep.mubr.f32.mxu0 0.0
        %6443 = vmatmul.mubr.f32.gmra.mxu0 %v6241
        %v6444 = vpop.f32.mrf.mxu0
        %v6445 = vadd.f32 0.0, %v6444
        %v6446 = vpop.f32.mrf.mxu0
        %6447 = vmatprep.mubr.f32.mxu0 0.0
        %6448 = vmatmul.mubr.f32.gmra.mxu0 %v6244
        %v6449 = vpop.f32.mrf.mxu0
        %v6450 = vadd.f32 0.0, %v6449
        %v6451 = vpop.f32.mrf.mxu0
        %6452 = vmatprep.mubr.f32.mxu0 0.0
        %6453 = vmatmul.mubr.f32.gmra.mxu0 %v6247
        %v6454 = vpop.f32.mrf.mxu0
        %v6455 = vadd.f32 0.0, %v6454
        %v6456 = vpop.f32.mrf.mxu0
        %6457 = vmatprep.mubr.f32.mxu0 0.0
        %6458 = vmatmul.mubr.f32.gmra.mxu0 %v6250
        %v6459 = vpop.f32.mrf.mxu0
        %v6460 = vadd.f32 0.0, %v6459
        %v6461 = vpop.f32.mrf.mxu0
        %6462 = vmatprep.mubr.f32.mxu0 0.0
        %6463 = vmatmul.mubr.f32.gmra.mxu0 %v6253
        %v6464 = vpop.f32.mrf.mxu0
        %v6465 = vadd.f32 0.0, %v6464
        %v6466 = vpop.f32.mrf.mxu0
        %6467 = vmatprep.mubr.f32.mxu0 0.0
        %6468 = vmatmul.mubr.f32.gmra.mxu0 %v6256
        %v6469 = vpop.f32.mrf.mxu0
        %v6470 = vadd.f32 0.0, %v6469
        %v6471 = vpop.f32.mrf.mxu0
        %6472 = vmatprep.mubr.f32.mxu0 0.0
        %6473 = vmatmul.mubr.f32.gmra.mxu0 %v6259
        %v6474 = vpop.f32.mrf.mxu0
        %v6475 = vadd.f32 0.0, %v6474
        %v6476 = vpop.f32.mrf.mxu0
        %6477 = vmatprep.mubr.f32.mxu0 0.0
        %6478 = vmatmul.mubr.f32.gmra.mxu0 %v6262
        %v6479 = vpop.f32.mrf.mxu0
        %v6480 = vadd.f32 0.0, %v6479
        %v6481 = vpop.f32.mrf.mxu0
        %6482 = vmatprep.mubr.f32.mxu0 0.0
        %6483 = vmatmul.mubr.f32.gmra.mxu0 %v6265
        %v6484 = vpop.f32.mrf.mxu0
        %v6485 = vadd.f32 0.0, %v6484
        %v6486 = vpop.f32.mrf.mxu0
        %6487 = vmatprep.mubr.f32.mxu0 0.0
        %6488 = vmatmul.mubr.f32.gmra.mxu0 %v6268
        %v6489 = vpop.f32.mrf.mxu0
        %v6490 = vadd.f32 0.0, %v6489
        %v6491 = vpop.f32.mrf.mxu0
        %6492 = vmatprep.mubr.f32.mxu0 0.0
        %6493 = vmatmul.mubr.f32.gmra.mxu0 %v6271
        %v6494 = vpop.f32.mrf.mxu0
        %v6495 = vadd.f32 0.0, %v6494
        %v6496 = vpop.f32.mrf.mxu0
        %6497 = vdwg.mxu0
        %v6498 = vadd.f32 %v6110, %v6340
        %v6499 = vadd.f32 %v6111, %v6345
        %v6500 = vadd.f32 %v6112, %v6350
        %v6501 = vadd.f32 %v6113, %v6355
        %v6502 = vadd.f32 %v6114, %v6360
        %v6503 = vadd.f32 %v6115, %v6365
        %v6504 = vadd.f32 %v6116, %v6370
        %v6505 = vadd.f32 %v6117, %v6375
        %v6506 = vadd.f32 %v6118, %v6380
        %v6507 = vadd.f32 %v6119, %v6385
        %v6508 = vadd.f32 %v6120, %v6390
        %v6509 = vadd.f32 %v6121, %v6395
        %v6510 = vadd.f32 %v6122, %v6400
        %v6511 = vadd.f32 %v6123, %v6405
        %v6512 = vadd.f32 %v6124, %v6410
        %v6513 = vadd.f32 %v6125, %v6415
        %v6514 = vadd.f32 %v6126, %v6420
        %v6515 = vadd.f32 %v6127, %v6425
        %v6516 = vadd.f32 %v6128, %v6430
        %v6517 = vadd.f32 %v6129, %v6435
        %v6518 = vadd.f32 %v6130, %v6440
        %v6519 = vadd.f32 %v6131, %v6445
        %v6520 = vadd.f32 %v6132, %v6450
        %v6521 = vadd.f32 %v6133, %v6455
        %v6522 = vadd.f32 %v6134, %v6460
        %v6523 = vadd.f32 %v6135, %v6465
        %v6524 = vadd.f32 %v6136, %v6470
        %v6525 = vadd.f32 %v6137, %v6475
        %v6526 = vadd.f32 %v6138, %v6480
        %v6527 = vadd.f32 %v6139, %v6485
        %v6528 = vadd.f32 %v6140, %v6490
        %v6529 = vadd.f32 %v6141, %v6495
        %v6530 = vld [vmem:[%s6142 + $0x1] sm:$0xff]
        %v6531 = vld [vmem:[%s6142 + $0x9] sm:$0xff]
        %v6532 = vld [vmem:[%s6142 + $0x19] sm:$0xff]
        %v6533 = vld [vmem:[%s6142 + $0x21] sm:$0xff]
        %v6534 = vld [vmem:[%s6142 + $0x31] sm:$0xff]
        %v6535 = vld [vmem:[%s6142 + $0x39] sm:$0xff]
        %v6536 = vld [vmem:[%s6142 + $0x49] sm:$0xff]
        %v6537 = vld [vmem:[%s6142 + $0x51] sm:$0xff]
        %v6538 = vld [vmem:[%s6142 + $0x61] sm:$0xff]
        %v6539 = vld [vmem:[%s6142 + $0x69] sm:$0xff]
        %v6540 = vld [vmem:[%s6142 + $0x79] sm:$0xff]
        %v6541 = vld [vmem:[%s6142 + $0x81] sm:$0xff]
        %v6542 = vld [vmem:[%s6142 + $0x91] sm:$0xff]
        %v6543 = vld [vmem:[%s6142 + $0x99] sm:$0xff]
        %v6544 = vld [vmem:[%s6142 + $0xa9] sm:$0xff]
        %v6545 = vld [vmem:[%s6142 + $0xb1] sm:$0xff]
        %v6546 = vld [vmem:[%s6142 + $0xc1] sm:$0xff]
        %v6547 = vld [vmem:[%s6142 + $0xc9] sm:$0xff]
        %v6548 = vld [vmem:[%s6142 + $0xd9] sm:$0xff]
        %v6549 = vld [vmem:[%s6142 + $0xe1] sm:$0xff]
        %v6550 = vld [vmem:[%s6142 + $0xf1] sm:$0xff]
        %v6551 = vld [vmem:[%s6142 + $0xf9] sm:$0xff]
        %v6552 = vld [vmem:[%s6142 + $0x109] sm:$0xff]
        %v6553 = vld [vmem:[%s6142 + $0x111] sm:$0xff]
        %v6554 = vld [vmem:[%s6142 + $0x121] sm:$0xff]
        %v6555 = vld [vmem:[%s6142 + $0x129] sm:$0xff]
        %v6556 = vld [vmem:[%s6142 + $0x139] sm:$0xff]
        %v6557 = vld [vmem:[%s6142 + $0x141] sm:$0xff]
        %v6558 = vld [vmem:[%s6142 + $0x151] sm:$0xff]
        %v6559 = vld [vmem:[%s6142 + $0x159] sm:$0xff]
        %v6560 = vld [vmem:[%s6142 + $0x169] sm:$0xff]
        %v6561 = vld [vmem:[%s6142 + $0x171] sm:$0xff]
        %s6562 = scalar_lea.vmem %s3, 56
        %v6563 = vld [vmem:[%s6562] sm:$0xff]
        %v6565 = vsel %vm3796, %v6530, 0
        %v6568 = vsel %vm3796, %v6531, 0
        %v6571 = vsel %vm3796, %v6532, 0
        %v6574 = vsel %vm3796, %v6533, 0
        %v6577 = vsel %vm3796, %v6534, 0
        %v6580 = vsel %vm3796, %v6535, 0
        %v6583 = vsel %vm3796, %v6536, 0
        %v6586 = vsel %vm3796, %v6537, 0
        %v6589 = vsel %vm3796, %v6538, 0
        %v6592 = vsel %vm3796, %v6539, 0
        %v6595 = vsel %vm3796, %v6540, 0
        %v6598 = vsel %vm3796, %v6541, 0
        %v6601 = vsel %vm3796, %v6542, 0
        %v6604 = vsel %vm3796, %v6543, 0
        %v6607 = vsel %vm3796, %v6544, 0
        %v6610 = vsel %vm3796, %v6545, 0
        %v6613 = vsel %vm3796, %v6546, 0
        %v6616 = vsel %vm3796, %v6547, 0
        %v6619 = vsel %vm3796, %v6548, 0
        %v6622 = vsel %vm3796, %v6549, 0
        %v6625 = vsel %vm3796, %v6550, 0
        %v6628 = vsel %vm3796, %v6551, 0
        %v6631 = vsel %vm3796, %v6552, 0
        %v6634 = vsel %vm3796, %v6553, 0
        %v6637 = vsel %vm3796, %v6554, 0
        %v6640 = vsel %vm3796, %v6555, 0
        %v6643 = vsel %vm3796, %v6556, 0
        %v6646 = vsel %vm3796, %v6557, 0
        %v6649 = vsel %vm3796, %v6558, 0
        %v6652 = vsel %vm3796, %v6559, 0
        %v6655 = vsel %vm3796, %v6560, 0
        %v6658 = vsel %vm3796, %v6561, 0
        %6660 = vmatprep.subr.mxu0 0.0
        %6661 = vmatpush1.msra.mxu0 0.0
        %6662 = vmatprep.subr.mxu0 0.0
        %6663 = vmatpush1.msra.mxu0 0.0
        %6664 = vmatprep.subr.mxu0 0.0
        %6665 = vmatpush1.msra.mxu0 0.0
        %6666 = vmatprep.subr.mxu0 0.0
        %6667 = vmatpush1.msra.mxu0 0.0
        %6668 = vmatprep.subr.mxu0 0.0
        %6669 = vmatpush1.msra.mxu0 0.0
        %6670 = vmatprep.subr.mxu0 0.0
        %6671 = vmatpush1.msra.mxu0 0.0
        %6672 = vmatprep.subr.mxu0 0.0
        %6673 = vmatpush1.msra.mxu0 0.0
        %6674 = vmatprep.subr.mxu0 0.0
        %6675 = vmatpush1.msra.mxu0 0.0
        %6676 = vmatprep.subr.mxu0 0.0
        %6677 = vmatpush1.msra.mxu0 0.0
        %6678 = vmatprep.subr.mxu0 0.0
        %6679 = vmatpush1.msra.mxu0 0.0
        %6680 = vmatprep.subr.mxu0 0.0
        %6681 = vmatpush1.msra.mxu0 0.0
        %6682 = vmatprep.subr.mxu0 0.0
        %6683 = vmatpush1.msra.mxu0 0.0
        %6684 = vmatprep.subr.mxu0 0.0
        %6685 = vmatpush1.msra.mxu0 0.0
        %6686 = vmatprep.subr.mxu0 0.0
        %6687 = vmatpush1.msra.mxu0 0.0
        %6688 = vmatprep.subr.mxu0 0.0
        %6689 = vmatpush1.msra.mxu0 0.0
        %6690 = vmatprep.subr.mxu0 0.0
        %6691 = vmatpush1.msra.mxu0 %v6563
        %6692 = vmatprep.subr.mxu0 0.0
        %6693 = vmatpush2.msra.mxu0 0.0
        %6694 = vmatprep.subr.mxu0 0.0
        %6695 = vmatpush2.msra.mxu0 0.0
        %6696 = vmatprep.subr.mxu0 0.0
        %6697 = vmatpush2.msra.mxu0 0.0
        %6698 = vmatprep.subr.mxu0 0.0
        %6699 = vmatpush2.msra.mxu0 0.0
        %6700 = vmatprep.subr.mxu0 0.0
        %6701 = vmatpush2.msra.mxu0 0.0
        %6702 = vmatprep.subr.mxu0 0.0
        %6703 = vmatpush2.msra.mxu0 0.0
        %6704 = vmatprep.subr.mxu0 0.0
        %6705 = vmatpush2.msra.mxu0 0.0
        %6706 = vmatprep.subr.mxu0 0.0
        %6707 = vmatpush2.msra.mxu0 0.0
        %6708 = vmatprep.subr.mxu0 0.0
        %6709 = vmatpush2.msra.mxu0 0.0
        %6710 = vmatprep.subr.mxu0 0.0
        %6711 = vmatpush2.msra.mxu0 0.0
        %6712 = vmatprep.subr.mxu0 0.0
        %6713 = vmatpush2.msra.mxu0 0.0
        %6714 = vmatprep.subr.mxu0 0.0
        %6715 = vmatpush2.msra.mxu0 0.0
        %6716 = vmatprep.subr.mxu0 0.0
        %6717 = vmatpush2.msra.mxu0 0.0
        %6718 = vmatprep.subr.mxu0 0.0
        %6719 = vmatpush2.msra.mxu0 0.0
        %6720 = vmatprep.subr.mxu0 0.0
        %6721 = vmatpush2.msra.mxu0 0.0
        %6722 = vmatprep.subr.mxu0 0.0
        %6723 = vmatpush2.msra.mxu0 0.0
        %6724 = vmatprep.mubr.f32.mxu0 0.0
        %6725 = vmatmul.mubr.f32.gmra.mxu0 %v6565
        %v6726 = vpop.f32.mrf.mxu0
        %v6727 = vadd.f32 0.0, %v6726
        %v6728 = vpop.f32.mrf.mxu0
        %6729 = vmatprep.mubr.f32.mxu0 0.0
        %6730 = vmatmul.mubr.f32.gmra.mxu0 %v6568
        %v6731 = vpop.f32.mrf.mxu0
        %v6732 = vadd.f32 0.0, %v6731
        %v6733 = vpop.f32.mrf.mxu0
        %6734 = vmatprep.mubr.f32.mxu0 0.0
        %6735 = vmatmul.mubr.f32.gmra.mxu0 %v6571
        %v6736 = vpop.f32.mrf.mxu0
        %v6737 = vadd.f32 0.0, %v6736
        %v6738 = vpop.f32.mrf.mxu0
        %6739 = vmatprep.mubr.f32.mxu0 0.0
        %6740 = vmatmul.mubr.f32.gmra.mxu0 %v6574
        %v6741 = vpop.f32.mrf.mxu0
        %v6742 = vadd.f32 0.0, %v6741
        %v6743 = vpop.f32.mrf.mxu0
        %6744 = vmatprep.mubr.f32.mxu0 0.0
        %6745 = vmatmul.mubr.f32.gmra.mxu0 %v6577
        %v6746 = vpop.f32.mrf.mxu0
        %v6747 = vadd.f32 0.0, %v6746
        %v6748 = vpop.f32.mrf.mxu0
        %6749 = vmatprep.mubr.f32.mxu0 0.0
        %6750 = vmatmul.mubr.f32.gmra.mxu0 %v6580
        %v6751 = vpop.f32.mrf.mxu0
        %v6752 = vadd.f32 0.0, %v6751
        %v6753 = vpop.f32.mrf.mxu0
        %6754 = vmatprep.mubr.f32.mxu0 0.0
        %6755 = vmatmul.mubr.f32.gmra.mxu0 %v6583
        %v6756 = vpop.f32.mrf.mxu0
        %v6757 = vadd.f32 0.0, %v6756
        %v6758 = vpop.f32.mrf.mxu0
        %6759 = vmatprep.mubr.f32.mxu0 0.0
        %6760 = vmatmul.mubr.f32.gmra.mxu0 %v6586
        %v6761 = vpop.f32.mrf.mxu0
        %v6762 = vadd.f32 0.0, %v6761
        %v6763 = vpop.f32.mrf.mxu0
        %6764 = vmatprep.mubr.f32.mxu0 0.0
        %6765 = vmatmul.mubr.f32.gmra.mxu0 %v6589
        %v6766 = vpop.f32.mrf.mxu0
        %v6767 = vadd.f32 0.0, %v6766
        %v6768 = vpop.f32.mrf.mxu0
        %6769 = vmatprep.mubr.f32.mxu0 0.0
        %6770 = vmatmul.mubr.f32.gmra.mxu0 %v6592
        %v6771 = vpop.f32.mrf.mxu0
        %v6772 = vadd.f32 0.0, %v6771
        %v6773 = vpop.f32.mrf.mxu0
        %6774 = vmatprep.mubr.f32.mxu0 0.0
        %6775 = vmatmul.mubr.f32.gmra.mxu0 %v6595
        %v6776 = vpop.f32.mrf.mxu0
        %v6777 = vadd.f32 0.0, %v6776
        %v6778 = vpop.f32.mrf.mxu0
        %6779 = vmatprep.mubr.f32.mxu0 0.0
        %6780 = vmatmul.mubr.f32.gmra.mxu0 %v6598
        %v6781 = vpop.f32.mrf.mxu0
        %v6782 = vadd.f32 0.0, %v6781
        %v6783 = vpop.f32.mrf.mxu0
        %6784 = vmatprep.mubr.f32.mxu0 0.0
        %6785 = vmatmul.mubr.f32.gmra.mxu0 %v6601
        %v6786 = vpop.f32.mrf.mxu0
        %v6787 = vadd.f32 0.0, %v6786
        %v6788 = vpop.f32.mrf.mxu0
        %6789 = vmatprep.mubr.f32.mxu0 0.0
        %6790 = vmatmul.mubr.f32.gmra.mxu0 %v6604
        %v6791 = vpop.f32.mrf.mxu0
        %v6792 = vadd.f32 0.0, %v6791
        %v6793 = vpop.f32.mrf.mxu0
        %6794 = vmatprep.mubr.f32.mxu0 0.0
        %6795 = vmatmul.mubr.f32.gmra.mxu0 %v6607
        %v6796 = vpop.f32.mrf.mxu0
        %v6797 = vadd.f32 0.0, %v6796
        %v6798 = vpop.f32.mrf.mxu0
        %6799 = vmatprep.mubr.f32.mxu0 0.0
        %6800 = vmatmul.mubr.f32.gmra.mxu0 %v6610
        %v6801 = vpop.f32.mrf.mxu0
        %v6802 = vadd.f32 0.0, %v6801
        %v6803 = vpop.f32.mrf.mxu0
        %6804 = vmatprep.mubr.f32.mxu0 0.0
        %6805 = vmatmul.mubr.f32.gmra.mxu0 %v6613
        %v6806 = vpop.f32.mrf.mxu0
        %v6807 = vadd.f32 0.0, %v6806
        %v6808 = vpop.f32.mrf.mxu0
        %6809 = vmatprep.mubr.f32.mxu0 0.0
        %6810 = vmatmul.mubr.f32.gmra.mxu0 %v6616
        %v6811 = vpop.f32.mrf.mxu0
        %v6812 = vadd.f32 0.0, %v6811
        %v6813 = vpop.f32.mrf.mxu0
        %6814 = vmatprep.mubr.f32.mxu0 0.0
        %6815 = vmatmul.mubr.f32.gmra.mxu0 %v6619
        %v6816 = vpop.f32.mrf.mxu0
        %v6817 = vadd.f32 0.0, %v6816
        %v6818 = vpop.f32.mrf.mxu0
        %6819 = vmatprep.mubr.f32.mxu0 0.0
        %6820 = vmatmul.mubr.f32.gmra.mxu0 %v6622
        %v6821 = vpop.f32.mrf.mxu0
        %v6822 = vadd.f32 0.0, %v6821
        %v6823 = vpop.f32.mrf.mxu0
        %6824 = vmatprep.mubr.f32.mxu0 0.0
        %6825 = vmatmul.mubr.f32.gmra.mxu0 %v6625
        %v6826 = vpop.f32.mrf.mxu0
        %v6827 = vadd.f32 0.0, %v6826
        %v6828 = vpop.f32.mrf.mxu0
        %6829 = vmatprep.mubr.f32.mxu0 0.0
        %6830 = vmatmul.mubr.f32.gmra.mxu0 %v6628
        %v6831 = vpop.f32.mrf.mxu0
        %v6832 = vadd.f32 0.0, %v6831
        %v6833 = vpop.f32.mrf.mxu0
        %6834 = vmatprep.mubr.f32.mxu0 0.0
        %6835 = vmatmul.mubr.f32.gmra.mxu0 %v6631
        %v6836 = vpop.f32.mrf.mxu0
        %v6837 = vadd.f32 0.0, %v6836
        %v6838 = vpop.f32.mrf.mxu0
        %6839 = vmatprep.mubr.f32.mxu0 0.0
        %6840 = vmatmul.mubr.f32.gmra.mxu0 %v6634
        %v6841 = vpop.f32.mrf.mxu0
        %v6842 = vadd.f32 0.0, %v6841
        %v6843 = vpop.f32.mrf.mxu0
        %6844 = vmatprep.mubr.f32.mxu0 0.0
        %6845 = vmatmul.mubr.f32.gmra.mxu0 %v6637
        %v6846 = vpop.f32.mrf.mxu0
        %v6847 = vadd.f32 0.0, %v6846
        %v6848 = vpop.f32.mrf.mxu0
        %6849 = vmatprep.mubr.f32.mxu0 0.0
        %6850 = vmatmul.mubr.f32.gmra.mxu0 %v6640
        %v6851 = vpop.f32.mrf.mxu0
        %v6852 = vadd.f32 0.0, %v6851
        %v6853 = vpop.f32.mrf.mxu0
        %6854 = vmatprep.mubr.f32.mxu0 0.0
        %6855 = vmatmul.mubr.f32.gmra.mxu0 %v6643
        %v6856 = vpop.f32.mrf.mxu0
        %v6857 = vadd.f32 0.0, %v6856
        %v6858 = vpop.f32.mrf.mxu0
        %6859 = vmatprep.mubr.f32.mxu0 0.0
        %6860 = vmatmul.mubr.f32.gmra.mxu0 %v6646
        %v6861 = vpop.f32.mrf.mxu0
        %v6862 = vadd.f32 0.0, %v6861
        %v6863 = vpop.f32.mrf.mxu0
        %6864 = vmatprep.mubr.f32.mxu0 0.0
        %6865 = vmatmul.mubr.f32.gmra.mxu0 %v6649
        %v6866 = vpop.f32.mrf.mxu0
        %v6867 = vadd.f32 0.0, %v6866
        %v6868 = vpop.f32.mrf.mxu0
        %6869 = vmatprep.mubr.f32.mxu0 0.0
        %6870 = vmatmul.mubr.f32.gmra.mxu0 %v6652
        %v6871 = vpop.f32.mrf.mxu0
        %v6872 = vadd.f32 0.0, %v6871
        %v6873 = vpop.f32.mrf.mxu0
        %6874 = vmatprep.mubr.f32.mxu0 0.0
        %6875 = vmatmul.mubr.f32.gmra.mxu0 %v6655
        %v6876 = vpop.f32.mrf.mxu0
        %v6877 = vadd.f32 0.0, %v6876
        %v6878 = vpop.f32.mrf.mxu0
        %6879 = vmatprep.mubr.f32.mxu0 0.0
        %6880 = vmatmul.mubr.f32.gmra.mxu0 %v6658
        %v6881 = vpop.f32.mrf.mxu0
        %v6882 = vadd.f32 0.0, %v6881
        %v6883 = vpop.f32.mrf.mxu0
        %6884 = vdwg.mxu0
        %v6885 = vadd.f32 %v6498, %v6727
        %v6886 = vadd.f32 %v6499, %v6732
        %v6887 = vadd.f32 %v6500, %v6737
        %v6888 = vadd.f32 %v6501, %v6742
        %v6889 = vadd.f32 %v6502, %v6747
        %v6890 = vadd.f32 %v6503, %v6752
        %v6891 = vadd.f32 %v6504, %v6757
        %v6892 = vadd.f32 %v6505, %v6762
        %v6893 = vadd.f32 %v6506, %v6767
        %v6894 = vadd.f32 %v6507, %v6772
        %v6895 = vadd.f32 %v6508, %v6777
        %v6896 = vadd.f32 %v6509, %v6782
        %v6897 = vadd.f32 %v6510, %v6787
        %v6898 = vadd.f32 %v6511, %v6792
        %v6899 = vadd.f32 %v6512, %v6797
        %v6900 = vadd.f32 %v6513, %v6802
        %v6901 = vadd.f32 %v6514, %v6807
        %v6902 = vadd.f32 %v6515, %v6812
        %v6903 = vadd.f32 %v6516, %v6817
        %v6904 = vadd.f32 %v6517, %v6822
        %v6905 = vadd.f32 %v6518, %v6827
        %v6906 = vadd.f32 %v6519, %v6832
        %v6907 = vadd.f32 %v6520, %v6837
        %v6908 = vadd.f32 %v6521, %v6842
        %v6909 = vadd.f32 %v6522, %v6847
        %v6910 = vadd.f32 %v6523, %v6852
        %v6911 = vadd.f32 %v6524, %v6857
        %v6912 = vadd.f32 %v6525, %v6862
        %v6913 = vadd.f32 %v6526, %v6867
        %v6914 = vadd.f32 %v6527, %v6872
        %v6915 = vadd.f32 %v6528, %v6877
        %v6916 = vadd.f32 %v6529, %v6882
        %v6917 = vld [vmem:[%s6142 + $0x2] sm:$0xff]
        %v6918 = vld [vmem:[%s6142 + $0xa] sm:$0xff]
        %v6919 = vld [vmem:[%s6142 + $0x1a] sm:$0xff]
        %v6920 = vld [vmem:[%s6142 + $0x22] sm:$0xff]
        %v6921 = vld [vmem:[%s6142 + $0x32] sm:$0xff]
        %v6922 = vld [vmem:[%s6142 + $0x3a] sm:$0xff]
        %v6923 = vld [vmem:[%s6142 + $0x4a] sm:$0xff]
        %v6924 = vld [vmem:[%s6142 + $0x52] sm:$0xff]
        %v6925 = vld [vmem:[%s6142 + $0x62] sm:$0xff]
        %v6926 = vld [vmem:[%s6142 + $0x6a] sm:$0xff]
        %v6927 = vld [vmem:[%s6142 + $0x7a] sm:$0xff]
        %v6928 = vld [vmem:[%s6142 + $0x82] sm:$0xff]
        %v6929 = vld [vmem:[%s6142 + $0x92] sm:$0xff]
        %v6930 = vld [vmem:[%s6142 + $0x9a] sm:$0xff]
        %v6931 = vld [vmem:[%s6142 + $0xaa] sm:$0xff]
        %v6932 = vld [vmem:[%s6142 + $0xb2] sm:$0xff]
        %v6933 = vld [vmem:[%s6142 + $0xc2] sm:$0xff]
        %v6934 = vld [vmem:[%s6142 + $0xca] sm:$0xff]
        %v6935 = vld [vmem:[%s6142 + $0xda] sm:$0xff]
        %v6936 = vld [vmem:[%s6142 + $0xe2] sm:$0xff]
        %v6937 = vld [vmem:[%s6142 + $0xf2] sm:$0xff]
        %v6938 = vld [vmem:[%s6142 + $0xfa] sm:$0xff]
        %v6939 = vld [vmem:[%s6142 + $0x10a] sm:$0xff]
        %v6940 = vld [vmem:[%s6142 + $0x112] sm:$0xff]
        %v6941 = vld [vmem:[%s6142 + $0x122] sm:$0xff]
        %v6942 = vld [vmem:[%s6142 + $0x12a] sm:$0xff]
        %v6943 = vld [vmem:[%s6142 + $0x13a] sm:$0xff]
        %v6944 = vld [vmem:[%s6142 + $0x142] sm:$0xff]
        %v6945 = vld [vmem:[%s6142 + $0x152] sm:$0xff]
        %v6946 = vld [vmem:[%s6142 + $0x15a] sm:$0xff]
        %v6947 = vld [vmem:[%s6142 + $0x16a] sm:$0xff]
        %v6948 = vld [vmem:[%s6142 + $0x172] sm:$0xff]
        %s6949 = scalar_lea.vmem %s3, 64
        %v6950 = vld [vmem:[%s6949] sm:$0xff]
        %v6952 = vsel %vm3796, %v6917, 0
        %v6955 = vsel %vm3796, %v6918, 0
        %v6958 = vsel %vm3796, %v6919, 0
        %v6961 = vsel %vm3796, %v6920, 0
        %v6964 = vsel %vm3796, %v6921, 0
        %v6967 = vsel %vm3796, %v6922, 0
        %v6970 = vsel %vm3796, %v6923, 0
        %v6973 = vsel %vm3796, %v6924, 0
        %v6976 = vsel %vm3796, %v6925, 0
        %v6979 = vsel %vm3796, %v6926, 0
        %v6982 = vsel %vm3796, %v6927, 0
        %v6985 = vsel %vm3796, %v6928, 0
        %v6988 = vsel %vm3796, %v6929, 0
        %v6991 = vsel %vm3796, %v6930, 0
        %v6994 = vsel %vm3796, %v6931, 0
        %v6997 = vsel %vm3796, %v6932, 0
        %v7000 = vsel %vm3796, %v6933, 0
        %v7003 = vsel %vm3796, %v6934, 0
        %v7006 = vsel %vm3796, %v6935, 0
        %v7009 = vsel %vm3796, %v6936, 0
        %v7012 = vsel %vm3796, %v6937, 0
        %v7015 = vsel %vm3796, %v6938, 0
        %v7018 = vsel %vm3796, %v6939, 0
        %v7021 = vsel %vm3796, %v6940, 0
        %v7024 = vsel %vm3796, %v6941, 0
        %v7027 = vsel %vm3796, %v6942, 0
        %v7030 = vsel %vm3796, %v6943, 0
        %v7033 = vsel %vm3796, %v6944, 0
        %v7036 = vsel %vm3796, %v6945, 0
        %v7039 = vsel %vm3796, %v6946, 0
        %v7042 = vsel %vm3796, %v6947, 0
        %v7045 = vsel %vm3796, %v6948, 0
        %7047 = vmatprep.subr.mxu0 0.0
        %7048 = vmatpush1.msra.mxu0 0.0
        %7049 = vmatprep.subr.mxu0 0.0
        %7050 = vmatpush1.msra.mxu0 0.0
        %7051 = vmatprep.subr.mxu0 0.0
        %7052 = vmatpush1.msra.mxu0 0.0
        %7053 = vmatprep.subr.mxu0 0.0
        %7054 = vmatpush1.msra.mxu0 0.0
        %7055 = vmatprep.subr.mxu0 0.0
        %7056 = vmatpush1.msra.mxu0 0.0
        %7057 = vmatprep.subr.mxu0 0.0
        %7058 = vmatpush1.msra.mxu0 0.0
        %7059 = vmatprep.subr.mxu0 0.0
        %7060 = vmatpush1.msra.mxu0 0.0
        %7061 = vmatprep.subr.mxu0 0.0
        %7062 = vmatpush1.msra.mxu0 0.0
        %7063 = vmatprep.subr.mxu0 0.0
        %7064 = vmatpush1.msra.mxu0 0.0
        %7065 = vmatprep.subr.mxu0 0.0
        %7066 = vmatpush1.msra.mxu0 0.0
        %7067 = vmatprep.subr.mxu0 0.0
        %7068 = vmatpush1.msra.mxu0 0.0
        %7069 = vmatprep.subr.mxu0 0.0
        %7070 = vmatpush1.msra.mxu0 0.0
        %7071 = vmatprep.subr.mxu0 0.0
        %7072 = vmatpush1.msra.mxu0 0.0
        %7073 = vmatprep.subr.mxu0 0.0
        %7074 = vmatpush1.msra.mxu0 0.0
        %7075 = vmatprep.subr.mxu0 0.0
        %7076 = vmatpush1.msra.mxu0 0.0
        %7077 = vmatprep.subr.mxu0 0.0
        %7078 = vmatpush1.msra.mxu0 %v6950
        %7079 = vmatprep.subr.mxu0 0.0
        %7080 = vmatpush2.msra.mxu0 0.0
        %7081 = vmatprep.subr.mxu0 0.0
        %7082 = vmatpush2.msra.mxu0 0.0
        %7083 = vmatprep.subr.mxu0 0.0
        %7084 = vmatpush2.msra.mxu0 0.0
        %7085 = vmatprep.subr.mxu0 0.0
        %7086 = vmatpush2.msra.mxu0 0.0
        %7087 = vmatprep.subr.mxu0 0.0
        %7088 = vmatpush2.msra.mxu0 0.0
        %7089 = vmatprep.subr.mxu0 0.0
        %7090 = vmatpush2.msra.mxu0 0.0
        %7091 = vmatprep.subr.mxu0 0.0
        %7092 = vmatpush2.msra.mxu0 0.0
        %7093 = vmatprep.subr.mxu0 0.0
        %7094 = vmatpush2.msra.mxu0 0.0
        %7095 = vmatprep.subr.mxu0 0.0
        %7096 = vmatpush2.msra.mxu0 0.0
        %7097 = vmatprep.subr.mxu0 0.0
        %7098 = vmatpush2.msra.mxu0 0.0
        %7099 = vmatprep.subr.mxu0 0.0
        %7100 = vmatpush2.msra.mxu0 0.0
        %7101 = vmatprep.subr.mxu0 0.0
        %7102 = vmatpush2.msra.mxu0 0.0
        %7103 = vmatprep.subr.mxu0 0.0
        %7104 = vmatpush2.msra.mxu0 0.0
        %7105 = vmatprep.subr.mxu0 0.0
        %7106 = vmatpush2.msra.mxu0 0.0
        %7107 = vmatprep.subr.mxu0 0.0
        %7108 = vmatpush2.msra.mxu0 0.0
        %7109 = vmatprep.subr.mxu0 0.0
        %7110 = vmatpush2.msra.mxu0 0.0
        %7111 = vmatprep.mubr.f32.mxu0 0.0
        %7112 = vmatmul.mubr.f32.gmra.mxu0 %v6952
        %v7113 = vpop.f32.mrf.mxu0
        %v7114 = vadd.f32 0.0, %v7113
        %v7115 = vpop.f32.mrf.mxu0
        %7116 = vmatprep.mubr.f32.mxu0 0.0
        %7117 = vmatmul.mubr.f32.gmra.mxu0 %v6955
        %v7118 = vpop.f32.mrf.mxu0
        %v7119 = vadd.f32 0.0, %v7118
        %v7120 = vpop.f32.mrf.mxu0
        %7121 = vmatprep.mubr.f32.mxu0 0.0
        %7122 = vmatmul.mubr.f32.gmra.mxu0 %v6958
        %v7123 = vpop.f32.mrf.mxu0
        %v7124 = vadd.f32 0.0, %v7123
        %v7125 = vpop.f32.mrf.mxu0
        %7126 = vmatprep.mubr.f32.mxu0 0.0
        %7127 = vmatmul.mubr.f32.gmra.mxu0 %v6961
        %v7128 = vpop.f32.mrf.mxu0
        %v7129 = vadd.f32 0.0, %v7128
        %v7130 = vpop.f32.mrf.mxu0
        %7131 = vmatprep.mubr.f32.mxu0 0.0
        %7132 = vmatmul.mubr.f32.gmra.mxu0 %v6964
        %v7133 = vpop.f32.mrf.mxu0
        %v7134 = vadd.f32 0.0, %v7133
        %v7135 = vpop.f32.mrf.mxu0
        %7136 = vmatprep.mubr.f32.mxu0 0.0
        %7137 = vmatmul.mubr.f32.gmra.mxu0 %v6967
        %v7138 = vpop.f32.mrf.mxu0
        %v7139 = vadd.f32 0.0, %v7138
        %v7140 = vpop.f32.mrf.mxu0
        %7141 = vmatprep.mubr.f32.mxu0 0.0
        %7142 = vmatmul.mubr.f32.gmra.mxu0 %v6970
        %v7143 = vpop.f32.mrf.mxu0
        %v7144 = vadd.f32 0.0, %v7143
        %v7145 = vpop.f32.mrf.mxu0
        %7146 = vmatprep.mubr.f32.mxu0 0.0
        %7147 = vmatmul.mubr.f32.gmra.mxu0 %v6973
        %v7148 = vpop.f32.mrf.mxu0
        %v7149 = vadd.f32 0.0, %v7148
        %v7150 = vpop.f32.mrf.mxu0
        %7151 = vmatprep.mubr.f32.mxu0 0.0
        %7152 = vmatmul.mubr.f32.gmra.mxu0 %v6976
        %v7153 = vpop.f32.mrf.mxu0
        %v7154 = vadd.f32 0.0, %v7153
        %v7155 = vpop.f32.mrf.mxu0
        %7156 = vmatprep.mubr.f32.mxu0 0.0
        %7157 = vmatmul.mubr.f32.gmra.mxu0 %v6979
        %v7158 = vpop.f32.mrf.mxu0
        %v7159 = vadd.f32 0.0, %v7158
        %v7160 = vpop.f32.mrf.mxu0
        %7161 = vmatprep.mubr.f32.mxu0 0.0
        %7162 = vmatmul.mubr.f32.gmra.mxu0 %v6982
        %v7163 = vpop.f32.mrf.mxu0
        %v7164 = vadd.f32 0.0, %v7163
        %v7165 = vpop.f32.mrf.mxu0
        %7166 = vmatprep.mubr.f32.mxu0 0.0
        %7167 = vmatmul.mubr.f32.gmra.mxu0 %v6985
        %v7168 = vpop.f32.mrf.mxu0
        %v7169 = vadd.f32 0.0, %v7168
        %v7170 = vpop.f32.mrf.mxu0
        %7171 = vmatprep.mubr.f32.mxu0 0.0
        %7172 = vmatmul.mubr.f32.gmra.mxu0 %v6988
        %v7173 = vpop.f32.mrf.mxu0
        %v7174 = vadd.f32 0.0, %v7173
        %v7175 = vpop.f32.mrf.mxu0
        %7176 = vmatprep.mubr.f32.mxu0 0.0
        %7177 = vmatmul.mubr.f32.gmra.mxu0 %v6991
        %v7178 = vpop.f32.mrf.mxu0
        %v7179 = vadd.f32 0.0, %v7178
        %v7180 = vpop.f32.mrf.mxu0
        %7181 = vmatprep.mubr.f32.mxu0 0.0
        %7182 = vmatmul.mubr.f32.gmra.mxu0 %v6994
        %v7183 = vpop.f32.mrf.mxu0
        %v7184 = vadd.f32 0.0, %v7183
        %v7185 = vpop.f32.mrf.mxu0
        %7186 = vmatprep.mubr.f32.mxu0 0.0
        %7187 = vmatmul.mubr.f32.gmra.mxu0 %v6997
        %v7188 = vpop.f32.mrf.mxu0
        %v7189 = vadd.f32 0.0, %v7188
        %v7190 = vpop.f32.mrf.mxu0
        %7191 = vmatprep.mubr.f32.mxu0 0.0
        %7192 = vmatmul.mubr.f32.gmra.mxu0 %v7000
        %v7193 = vpop.f32.mrf.mxu0
        %v7194 = vadd.f32 0.0, %v7193
        %v7195 = vpop.f32.mrf.mxu0
        %7196 = vmatprep.mubr.f32.mxu0 0.0
        %7197 = vmatmul.mubr.f32.gmra.mxu0 %v7003
        %v7198 = vpop.f32.mrf.mxu0
        %v7199 = vadd.f32 0.0, %v7198
        %v7200 = vpop.f32.mrf.mxu0
        %7201 = vmatprep.mubr.f32.mxu0 0.0
        %7202 = vmatmul.mubr.f32.gmra.mxu0 %v7006
        %v7203 = vpop.f32.mrf.mxu0
        %v7204 = vadd.f32 0.0, %v7203
        %v7205 = vpop.f32.mrf.mxu0
        %7206 = vmatprep.mubr.f32.mxu0 0.0
        %7207 = vmatmul.mubr.f32.gmra.mxu0 %v7009
        %v7208 = vpop.f32.mrf.mxu0
        %v7209 = vadd.f32 0.0, %v7208
        %v7210 = vpop.f32.mrf.mxu0
        %7211 = vmatprep.mubr.f32.mxu0 0.0
        %7212 = vmatmul.mubr.f32.gmra.mxu0 %v7012
        %v7213 = vpop.f32.mrf.mxu0
        %v7214 = vadd.f32 0.0, %v7213
        %v7215 = vpop.f32.mrf.mxu0
        %7216 = vmatprep.mubr.f32.mxu0 0.0
        %7217 = vmatmul.mubr.f32.gmra.mxu0 %v7015
        %v7218 = vpop.f32.mrf.mxu0
        %v7219 = vadd.f32 0.0, %v7218
        %v7220 = vpop.f32.mrf.mxu0
        %7221 = vmatprep.mubr.f32.mxu0 0.0
        %7222 = vmatmul.mubr.f32.gmra.mxu0 %v7018
        %v7223 = vpop.f32.mrf.mxu0
        %v7224 = vadd.f32 0.0, %v7223
        %v7225 = vpop.f32.mrf.mxu0
        %7226 = vmatprep.mubr.f32.mxu0 0.0
        %7227 = vmatmul.mubr.f32.gmra.mxu0 %v7021
        %v7228 = vpop.f32.mrf.mxu0
        %v7229 = vadd.f32 0.0, %v7228
        %v7230 = vpop.f32.mrf.mxu0
        %7231 = vmatprep.mubr.f32.mxu0 0.0
        %7232 = vmatmul.mubr.f32.gmra.mxu0 %v7024
        %v7233 = vpop.f32.mrf.mxu0
        %v7234 = vadd.f32 0.0, %v7233
        %v7235 = vpop.f32.mrf.mxu0
        %7236 = vmatprep.mubr.f32.mxu0 0.0
        %7237 = vmatmul.mubr.f32.gmra.mxu0 %v7027
        %v7238 = vpop.f32.mrf.mxu0
        %v7239 = vadd.f32 0.0, %v7238
        %v7240 = vpop.f32.mrf.mxu0
        %7241 = vmatprep.mubr.f32.mxu0 0.0
        %7242 = vmatmul.mubr.f32.gmra.mxu0 %v7030
        %v7243 = vpop.f32.mrf.mxu0
        %v7244 = vadd.f32 0.0, %v7243
        %v7245 = vpop.f32.mrf.mxu0
        %7246 = vmatprep.mubr.f32.mxu0 0.0
        %7247 = vmatmul.mubr.f32.gmra.mxu0 %v7033
        %v7248 = vpop.f32.mrf.mxu0
        %v7249 = vadd.f32 0.0, %v7248
        %v7250 = vpop.f32.mrf.mxu0
        %7251 = vmatprep.mubr.f32.mxu0 0.0
        %7252 = vmatmul.mubr.f32.gmra.mxu0 %v7036
        %v7253 = vpop.f32.mrf.mxu0
        %v7254 = vadd.f32 0.0, %v7253
        %v7255 = vpop.f32.mrf.mxu0
        %7256 = vmatprep.mubr.f32.mxu0 0.0
        %7257 = vmatmul.mubr.f32.gmra.mxu0 %v7039
        %v7258 = vpop.f32.mrf.mxu0
        %v7259 = vadd.f32 0.0, %v7258
        %v7260 = vpop.f32.mrf.mxu0
        %7261 = vmatprep.mubr.f32.mxu0 0.0
        %7262 = vmatmul.mubr.f32.gmra.mxu0 %v7042
        %v7263 = vpop.f32.mrf.mxu0
        %v7264 = vadd.f32 0.0, %v7263
        %v7265 = vpop.f32.mrf.mxu0
        %7266 = vmatprep.mubr.f32.mxu0 0.0
        %7267 = vmatmul.mubr.f32.gmra.mxu0 %v7045
        %v7268 = vpop.f32.mrf.mxu0
        %v7269 = vadd.f32 0.0, %v7268
        %v7270 = vpop.f32.mrf.mxu0
        %7271 = vdwg.mxu0
        %v7272 = vadd.f32 %v6885, %v7114
        %v7273 = vadd.f32 %v6886, %v7119
        %v7274 = vadd.f32 %v6887, %v7124
        %v7275 = vadd.f32 %v6888, %v7129
        %v7276 = vadd.f32 %v6889, %v7134
        %v7277 = vadd.f32 %v6890, %v7139
        %v7278 = vadd.f32 %v6891, %v7144
        %v7279 = vadd.f32 %v6892, %v7149
        %v7280 = vadd.f32 %v6893, %v7154
        %v7281 = vadd.f32 %v6894, %v7159
        %v7282 = vadd.f32 %v6895, %v7164
        %v7283 = vadd.f32 %v6896, %v7169
        %v7284 = vadd.f32 %v6897, %v7174
        %v7285 = vadd.f32 %v6898, %v7179
        %v7286 = vadd.f32 %v6899, %v7184
        %v7287 = vadd.f32 %v6900, %v7189
        %v7288 = vadd.f32 %v6901, %v7194
        %v7289 = vadd.f32 %v6902, %v7199
        %v7290 = vadd.f32 %v6903, %v7204
        %v7291 = vadd.f32 %v6904, %v7209
        %v7292 = vadd.f32 %v6905, %v7214
        %v7293 = vadd.f32 %v6906, %v7219
        %v7294 = vadd.f32 %v6907, %v7224
        %v7295 = vadd.f32 %v6908, %v7229
        %v7296 = vadd.f32 %v6909, %v7234
        %v7297 = vadd.f32 %v6910, %v7239
        %v7298 = vadd.f32 %v6911, %v7244
        %v7299 = vadd.f32 %v6912, %v7249
        %v7300 = vadd.f32 %v6913, %v7254
        %v7301 = vadd.f32 %v6914, %v7259
        %v7302 = vadd.f32 %v6915, %v7264
        %v7303 = vadd.f32 %v6916, %v7269
        %v7304 = vld [vmem:[%s4] sm:$0x1]
        %v7306 = vlaneseq
        %v7307 = vshrl.u32 %v7306, 7
        %v7308 = vsub.s32 0, %v7307
        %v7309 = vrot.slane %v7304, %v7308
        %v7311 = vadd.f32 %v7272, %v7309
        %v7312 = vadd.f32 %v7273, %v7309
        %v7313 = vadd.f32 %v7274, %v7309
        %v7314 = vadd.f32 %v7275, %v7309
        %v7315 = vadd.f32 %v7276, %v7309
        %v7316 = vadd.f32 %v7277, %v7309
        %v7317 = vadd.f32 %v7278, %v7309
        %v7318 = vadd.f32 %v7279, %v7309
        %v7319 = vadd.f32 %v7280, %v7309
        %v7320 = vadd.f32 %v7281, %v7309
        %v7321 = vadd.f32 %v7282, %v7309
        %v7322 = vadd.f32 %v7283, %v7309
        %v7323 = vadd.f32 %v7284, %v7309
        %v7324 = vadd.f32 %v7285, %v7309
        %v7325 = vadd.f32 %v7286, %v7309
        %v7326 = vadd.f32 %v7287, %v7309
        %v7327 = vadd.f32 %v7288, %v7309
        %v7328 = vadd.f32 %v7289, %v7309
        %v7329 = vadd.f32 %v7290, %v7309
        %v7330 = vadd.f32 %v7291, %v7309
        %v7331 = vadd.f32 %v7292, %v7309
        %v7332 = vadd.f32 %v7293, %v7309
        %v7333 = vadd.f32 %v7294, %v7309
        %v7334 = vadd.f32 %v7295, %v7309
        %v7335 = vadd.f32 %v7296, %v7309
        %v7336 = vadd.f32 %v7297, %v7309
        %v7337 = vadd.f32 %v7298, %v7309
        %v7338 = vadd.f32 %v7299, %v7309
        %v7339 = vadd.f32 %v7300, %v7309
        %v7340 = vadd.f32 %v7301, %v7309
        %v7341 = vadd.f32 %v7302, %v7309
        %v7342 = vadd.f32 %v7303, %v7309
        %v7343 = vmax.f32 %v7311, 0.0
        %v7344 = vmax.f32 %v7312, 0.0
        %v7345 = vmax.f32 %v7313, 0.0
        %v7346 = vmax.f32 %v7314, 0.0
        %v7347 = vmax.f32 %v7315, 0.0
        %v7348 = vmax.f32 %v7316, 0.0
        %v7349 = vmax.f32 %v7317, 0.0
        %v7350 = vmax.f32 %v7318, 0.0
        %v7351 = vmax.f32 %v7319, 0.0
        %v7352 = vmax.f32 %v7320, 0.0
        %v7353 = vmax.f32 %v7321, 0.0
        %v7354 = vmax.f32 %v7322, 0.0
        %v7355 = vmax.f32 %v7323, 0.0
        %v7356 = vmax.f32 %v7324, 0.0
        %v7357 = vmax.f32 %v7325, 0.0
        %v7358 = vmax.f32 %v7326, 0.0
        %v7359 = vmax.f32 %v7327, 0.0
        %v7360 = vmax.f32 %v7328, 0.0
        %v7361 = vmax.f32 %v7329, 0.0
        %v7362 = vmax.f32 %v7330, 0.0
        %v7363 = vmax.f32 %v7331, 0.0
        %v7364 = vmax.f32 %v7332, 0.0
        %v7365 = vmax.f32 %v7333, 0.0
        %v7366 = vmax.f32 %v7334, 0.0
        %v7367 = vmax.f32 %v7335, 0.0
        %v7368 = vmax.f32 %v7336, 0.0
        %v7369 = vmax.f32 %v7337, 0.0
        %v7370 = vmax.f32 %v7338, 0.0
        %v7371 = vmax.f32 %v7339, 0.0
        %v7372 = vmax.f32 %v7340, 0.0
        %v7373 = vmax.f32 %v7341, 0.0
        %v7374 = vmax.f32 %v7342, 0.0
        %7375 = vst.msk [vmem:[#allocation3] sm:$0xff] %vm3796, %v7343
        %7376 = vst.msk [vmem:[#allocation3 + $0x8] sm:$0xff] %vm3796, %v7344
        %7377 = vst.msk [vmem:[#allocation3 + $0x10] sm:$0xff] %vm3796, %v7345
        %7378 = vst.msk [vmem:[#allocation3 + $0x18] sm:$0xff] %vm3796, %v7346
        %7379 = vst.msk [vmem:[#allocation3 + $0x20] sm:$0xff] %vm3796, %v7347
        %7380 = vst.msk [vmem:[#allocation3 + $0x28] sm:$0xff] %vm3796, %v7348
        %7381 = vst.msk [vmem:[#allocation3 + $0x30] sm:$0xff] %vm3796, %v7349
        %7382 = vst.msk [vmem:[#allocation3 + $0x38] sm:$0xff] %vm3796, %v7350
        %7383 = vst.msk [vmem:[#allocation3 + $0x40] sm:$0xff] %vm3796, %v7351
        %7384 = vst.msk [vmem:[#allocation3 + $0x48] sm:$0xff] %vm3796, %v7352
        %7385 = vst.msk [vmem:[#allocation3 + $0x50] sm:$0xff] %vm3796, %v7353
        %7386 = vst.msk [vmem:[#allocation3 + $0x58] sm:$0xff] %vm3796, %v7354
        %7387 = vst.msk [vmem:[#allocation3 + $0x60] sm:$0xff] %vm3796, %v7355
        %7388 = vst.msk [vmem:[#allocation3 + $0x68] sm:$0xff] %vm3796, %v7356
        %7389 = vst.msk [vmem:[#allocation3 + $0x70] sm:$0xff] %vm3796, %v7357
        %7390 = vst.msk [vmem:[#allocation3 + $0x78] sm:$0xff] %vm3796, %v7358
        %7391 = vst.msk [vmem:[#allocation3 + $0x80] sm:$0xff] %vm3796, %v7359
        %7392 = vst.msk [vmem:[#allocation3 + $0x88] sm:$0xff] %vm3796, %v7360
        %7393 = vst.msk [vmem:[#allocation3 + $0x90] sm:$0xff] %vm3796, %v7361
        %7394 = vst.msk [vmem:[#allocation3 + $0x98] sm:$0xff] %vm3796, %v7362
        %7395 = vst.msk [vmem:[#allocation3 + $0xa0] sm:$0xff] %vm3796, %v7363
        %7396 = vst.msk [vmem:[#allocation3 + $0xa8] sm:$0xff] %vm3796, %v7364
        %7397 = vst.msk [vmem:[#allocation3 + $0xb0] sm:$0xff] %vm3796, %v7365
        %7398 = vst.msk [vmem:[#allocation3 + $0xb8] sm:$0xff] %vm3796, %v7366
        %7399 = vst.msk [vmem:[#allocation3 + $0xc0] sm:$0xff] %vm3796, %v7367
        %7400 = vst.msk [vmem:[#allocation3 + $0xc8] sm:$0xff] %vm3796, %v7368
        %7401 = vst.msk [vmem:[#allocation3 + $0xd0] sm:$0xff] %vm3796, %v7369
        %7402 = vst.msk [vmem:[#allocation3 + $0xd8] sm:$0xff] %vm3796, %v7370
        %7403 = vst.msk [vmem:[#allocation3 + $0xe0] sm:$0xff] %vm3796, %v7371
        %7404 = vst.msk [vmem:[#allocation3 + $0xe8] sm:$0xff] %vm3796, %v7372
        %7405 = vst.msk [vmem:[#allocation3 + $0xf0] sm:$0xff] %vm3796, %v7373
        %7406 = vst.msk [vmem:[#allocation3 + $0xf8] sm:$0xff] %vm3796, %v7374
        %v7407 = vld [vmem:[#allocation3] sm:$0xff]
        %v7408 = vld [vmem:[#allocation3 + $0x8] sm:$0xff]
        %v7409 = vld [vmem:[#allocation3 + $0x20] sm:$0xff]
        %v7410 = vld [vmem:[#allocation3 + $0x28] sm:$0xff]
        %v7411 = vld [vmem:[#allocation3 + $0x40] sm:$0xff]
        %v7412 = vld [vmem:[#allocation3 + $0x48] sm:$0xff]
        %v7413 = vld [vmem:[#allocation3 + $0x60] sm:$0xff]
        %v7414 = vld [vmem:[#allocation3 + $0x68] sm:$0xff]
        %v7415 = vld [vmem:[#allocation3 + $0x80] sm:$0xff]
        %v7416 = vld [vmem:[#allocation3 + $0x88] sm:$0xff]
        %v7417 = vld [vmem:[#allocation3 + $0xa0] sm:$0xff]
        %v7418 = vld [vmem:[#allocation3 + $0xa8] sm:$0xff]
        %v7419 = vld [vmem:[#allocation3 + $0xc0] sm:$0xff]
        %v7420 = vld [vmem:[#allocation3 + $0xc8] sm:$0xff]
        %v7421 = vld [vmem:[#allocation3 + $0xe0] sm:$0xff]
        %v7422 = vld [vmem:[#allocation3 + $0xe8] sm:$0xff]
        %s7423 = scalar_lea.vmem [#allocation3], 16
        %v7424 = vld [vmem:[%s7423] sm:$0xff]
        %v7425 = vld [vmem:[%s7423 + $0x8] sm:$0xff]
        %v7426 = vld [vmem:[%s7423 + $0x20] sm:$0xff]
        %v7427 = vld [vmem:[%s7423 + $0x28] sm:$0xff]
        %v7428 = vld [vmem:[%s7423 + $0x40] sm:$0xff]
        %v7429 = vld [vmem:[%s7423 + $0x48] sm:$0xff]
        %v7430 = vld [vmem:[%s7423 + $0x60] sm:$0xff]
        %v7431 = vld [vmem:[%s7423 + $0x68] sm:$0xff]
        %v7432 = vld [vmem:[%s7423 + $0x80] sm:$0xff]
        %v7433 = vld [vmem:[%s7423 + $0x88] sm:$0xff]
        %v7434 = vld [vmem:[%s7423 + $0xa0] sm:$0xff]
        %v7435 = vld [vmem:[%s7423 + $0xa8] sm:$0xff]
        %v7436 = vld [vmem:[%s7423 + $0xc0] sm:$0xff]
        %v7437 = vld [vmem:[%s7423 + $0xc8] sm:$0xff]
        %v7438 = vld [vmem:[%s7423 + $0xe0] sm:$0xff]
        %v7439 = vld [vmem:[%s7423 + $0xe8] sm:$0xff]
        %v7440 = vmax.f32 %v7407, %v7424
        %v7441 = vmax.f32 %v7408, %v7425
        %v7442 = vmax.f32 %v7409, %v7426
        %v7443 = vmax.f32 %v7410, %v7427
        %v7444 = vmax.f32 %v7411, %v7428
        %v7445 = vmax.f32 %v7412, %v7429
        %v7446 = vmax.f32 %v7413, %v7430
        %v7447 = vmax.f32 %v7414, %v7431
        %v7448 = vmax.f32 %v7415, %v7432
        %v7449 = vmax.f32 %v7416, %v7433
        %v7450 = vmax.f32 %v7417, %v7434
        %v7451 = vmax.f32 %v7418, %v7435
        %v7452 = vmax.f32 %v7419, %v7436
        %v7453 = vmax.f32 %v7420, %v7437
        %v7454 = vmax.f32 %v7421, %v7438
        %v7455 = vmax.f32 %v7422, %v7439
        %7456 = vst.msk [vmem:[#allocation4] sm:$0xff] %vm3796, %v7440
        %7457 = vst.msk [vmem:[#allocation4 + $0x8] sm:$0xff] %vm3796, %v7441
        %7458 = vst.msk [vmem:[#allocation4 + $0x10] sm:$0xff] %vm3796, %v7442
        %7459 = vst.msk [vmem:[#allocation4 + $0x18] sm:$0xff] %vm3796, %v7443
        %7460 = vst.msk [vmem:[#allocation4 + $0x20] sm:$0xff] %vm3796, %v7444
        %7461 = vst.msk [vmem:[#allocation4 + $0x28] sm:$0xff] %vm3796, %v7445
        %7462 = vst.msk [vmem:[#allocation4 + $0x30] sm:$0xff] %vm3796, %v7446
        %7463 = vst.msk [vmem:[#allocation4 + $0x38] sm:$0xff] %vm3796, %v7447
        %7464 = vst.msk [vmem:[#allocation4 + $0x40] sm:$0xff] %vm3796, %v7448
        %7465 = vst.msk [vmem:[#allocation4 + $0x48] sm:$0xff] %vm3796, %v7449
        %7466 = vst.msk [vmem:[#allocation4 + $0x50] sm:$0xff] %vm3796, %v7450
        %7467 = vst.msk [vmem:[#allocation4 + $0x58] sm:$0xff] %vm3796, %v7451
        %7468 = vst.msk [vmem:[#allocation4 + $0x60] sm:$0xff] %vm3796, %v7452
        %7469 = vst.msk [vmem:[#allocation4 + $0x68] sm:$0xff] %vm3796, %v7453
        %7470 = vst.msk [vmem:[#allocation4 + $0x70] sm:$0xff] %vm3796, %v7454
        %7471 = vst.msk [vmem:[#allocation4 + $0x78] sm:$0xff] %vm3796, %v7455
        %v7472 = vld [vmem:[#allocation4] ss:$2 sm:$0xff]
        %s7473 = scalar_lea.vmem [#allocation4], 16
        %v7474 = vld [vmem:[%s7473] ss:$2 sm:$0xff]
        %s7475 = scalar_lea.vmem [#allocation4], 32
        %v7476 = vld [vmem:[%s7475] ss:$2 sm:$0xff]
        %s7477 = scalar_lea.vmem [#allocation4], 48
        %v7478 = vld [vmem:[%s7477] ss:$2 sm:$0xff]
        %s7479 = scalar_lea.vmem [#allocation4], 64
        %v7480 = vld [vmem:[%s7479] ss:$2 sm:$0xff]
        %s7481 = scalar_lea.vmem [#allocation4], 80
        %v7482 = vld [vmem:[%s7481] ss:$2 sm:$0xff]
        %s7483 = scalar_lea.vmem [#allocation4], 96
        %v7484 = vld [vmem:[%s7483] ss:$2 sm:$0xff]
        %s7485 = scalar_lea.vmem [#allocation4], 112
        %v7486 = vld [vmem:[%s7485] ss:$2 sm:$0xff]
        %s7487 = scalar_lea.vmem [#allocation4], 1
        %v7488 = vld [vmem:[%s7487] ss:$2 sm:$0xff]
        %s7489 = scalar_lea.vmem [#allocation4], 17
        %v7490 = vld [vmem:[%s7489] ss:$2 sm:$0xff]
        %s7491 = scalar_lea.vmem [#allocation4], 33
        %v7492 = vld [vmem:[%s7491] ss:$2 sm:$0xff]
        %s7493 = scalar_lea.vmem [#allocation4], 49
        %v7494 = vld [vmem:[%s7493] ss:$2 sm:$0xff]
        %s7495 = scalar_lea.vmem [#allocation4], 65
        %v7496 = vld [vmem:[%s7495] ss:$2 sm:$0xff]
        %s7497 = scalar_lea.vmem [#allocation4], 81
        %v7498 = vld [vmem:[%s7497] ss:$2 sm:$0xff]
        %s7499 = scalar_lea.vmem [#allocation4], 97
        %v7500 = vld [vmem:[%s7499] ss:$2 sm:$0xff]
        %s7501 = scalar_lea.vmem [#allocation4], 113
        %v7502 = vld [vmem:[%s7501] ss:$2 sm:$0xff]
        %v7503 = vmax.f32 %v7472, %v7488
        %v7504 = vmax.f32 %v7474, %v7490
        %v7505 = vmax.f32 %v7476, %v7492
        %v7506 = vmax.f32 %v7478, %v7494
        %v7507 = vmax.f32 %v7480, %v7496
        %v7508 = vmax.f32 %v7482, %v7498
        %v7509 = vmax.f32 %v7484, %v7500
        %v7510 = vmax.f32 %v7486, %v7502
        %7511 = vst.msk [vmem:[#allocation5] sm:$0xff] %vm3796, 0.0
        %7512 = vst.msk [vmem:[#allocation5 + $0x8] sm:$0x3] %vm3799, 0.0
        %7513 = vst.msk [vmem:[#allocation5 + $0x10] sm:$0xff] %vm3796, 0.0
        %7514 = vst.msk [vmem:[#allocation5 + $0x18] sm:$0x3] %vm3799, 0.0
        %7515 = vst.msk [vmem:[#allocation5 + $0x20] sm:$0xff] %vm3796, 0.0
        %7516 = vst.msk [vmem:[#allocation5 + $0x28] sm:$0x3] %vm3799, 0.0
        %7517 = vst.msk [vmem:[#allocation5 + $0x30] sm:$0xff] %vm3796, 0.0
        %7518 = vst.msk [vmem:[#allocation5 + $0x38] sm:$0x3] %vm3799, 0.0
        %7519 = vst.msk [vmem:[#allocation5 + $0x40] sm:$0xff] %vm3796, 0.0
        %7520 = vst.msk [vmem:[#allocation5 + $0x48] sm:$0x3] %vm3799, 0.0
        %7521 = vst.msk [vmem:[#allocation5 + $0x50] sm:$0xff] %vm3796, 0.0
        %7522 = vst.msk [vmem:[#allocation5 + $0x58] sm:$0x3] %vm3799, 0.0
        %7523 = vst.msk [vmem:[#allocation5 + $0x60] sm:$0xff] %vm3796, 0.0
        %7524 = vst.msk [vmem:[#allocation5 + $0x68] sm:$0x3] %vm3799, 0.0
        %7525 = vst.msk [vmem:[#allocation5 + $0x70] sm:$0xff] %vm3796, 0.0
        %7526 = vst.msk [vmem:[#allocation5 + $0x78] sm:$0x3] %vm3799, 0.0
        %7527 = vst.msk [vmem:[#allocation5 + $0x80] sm:$0xff] %vm3796, 0.0
        %7528 = vst.msk [vmem:[#allocation5 + $0x88] sm:$0x3] %vm3799, 0.0
        %7529 = vst.msk [vmem:[#allocation5 + $0x90] sm:$0xff] %vm3796, 0.0
        %7530 = vst.msk [vmem:[#allocation5 + $0x98] sm:$0x3] %vm3799, 0.0
        %s7531 = scalar_lea.vmem [#allocation5], 16
        %7532 = vst.msk [vmem:[%s7531 + $0x1] sm:$0xff] %vm3796, %v7503
        %7533 = vst.msk [vmem:[%s7531 + $0x11] sm:$0xff] %vm3796, %v7504
        %7534 = vst.msk [vmem:[%s7531 + $0x21] sm:$0xff] %vm3796, %v7505
        %7535 = vst.msk [vmem:[%s7531 + $0x31] sm:$0xff] %vm3796, %v7506
        %7536 = vst.msk [vmem:[%s7531 + $0x41] sm:$0xff] %vm3796, %v7507
        %7537 = vst.msk [vmem:[%s7531 + $0x51] sm:$0xff] %vm3796, %v7508
        %7538 = vst.msk [vmem:[%s7531 + $0x61] sm:$0xff] %vm3796, %v7509
        %7539 = vst.msk [vmem:[%s7531 + $0x71] sm:$0xff] %vm3796, %v7510
        %v7540 = vld [vmem:[#allocation5] sm:$0xff]
        %v7541 = vld [vmem:[#allocation5 + $0x10] sm:$0xff]
        %v7542 = vld [vmem:[#allocation5 + $0x20] sm:$0xff]
        %v7543 = vld [vmem:[#allocation5 + $0x30] sm:$0xff]
        %v7544 = vld [vmem:[#allocation5 + $0x40] sm:$0xff]
        %v7545 = vld [vmem:[#allocation5 + $0x50] sm:$0xff]
        %v7546 = vld [vmem:[#allocation5 + $0x60] sm:$0xff]
        %v7547 = vld [vmem:[#allocation5 + $0x70] sm:$0xff]
        %v7548 = vld [vmem:[%s5] sm:$0xff]
        %v7549 = vld [vmem:[#allocation5 + $0x1] sm:$0xff]
        %v7550 = vld [vmem:[#allocation5 + $0x11] sm:$0xff]
        %v7551 = vld [vmem:[#allocation5 + $0x21] sm:$0xff]
        %v7552 = vld [vmem:[#allocation5 + $0x31] sm:$0xff]
        %v7553 = vld [vmem:[#allocation5 + $0x41] sm:$0xff]
        %v7554 = vld [vmem:[#allocation5 + $0x51] sm:$0xff]
        %v7555 = vld [vmem:[#allocation5 + $0x61] sm:$0xff]
        %v7556 = vld [vmem:[#allocation5 + $0x71] sm:$0xff]
        %s7557 = scalar_lea.vmem %s5, 8
        %v7558 = vld [vmem:[%s7557] sm:$0xff]
        %v7560 = vsel %vm3796, %v7549, 0
        %v7563 = vsel %vm3796, %v7550, 0
        %v7566 = vsel %vm3796, %v7551, 0
        %v7569 = vsel %vm3796, %v7552, 0
        %v7572 = vsel %vm3796, %v7553, 0
        %v7575 = vsel %vm3796, %v7554, 0
        %v7578 = vsel %vm3796, %v7555, 0
        %v7581 = vsel %vm3796, %v7556, 0
        %7583 = vmatprep.subr.mxu0 0.0
        %7584 = vmatpush1.msra.mxu0 0.0
        %7585 = vmatprep.subr.mxu0 0.0
        %7586 = vmatpush1.msra.mxu0 0.0
        %7587 = vmatprep.subr.mxu0 0.0
        %7588 = vmatpush1.msra.mxu0 0.0
        %7589 = vmatprep.subr.mxu0 0.0
        %7590 = vmatpush1.msra.mxu0 0.0
        %7591 = vmatprep.subr.mxu0 0.0
        %7592 = vmatpush1.msra.mxu0 0.0
        %7593 = vmatprep.subr.mxu0 0.0
        %7594 = vmatpush1.msra.mxu0 0.0
        %7595 = vmatprep.subr.mxu0 0.0
        %7596 = vmatpush1.msra.mxu0 0.0
        %7597 = vmatprep.subr.mxu0 0.0
        %7598 = vmatpush1.msra.mxu0 0.0
        %7599 = vmatprep.subr.mxu0 0.0
        %7600 = vmatpush1.msra.mxu0 0.0
        %7601 = vmatprep.subr.mxu0 0.0
        %7602 = vmatpush1.msra.mxu0 0.0
        %7603 = vmatprep.subr.mxu0 0.0
        %7604 = vmatpush1.msra.mxu0 0.0
        %7605 = vmatprep.subr.mxu0 0.0
        %7606 = vmatpush1.msra.mxu0 0.0
        %7607 = vmatprep.subr.mxu0 0.0
        %7608 = vmatpush1.msra.mxu0 0.0
        %7609 = vmatprep.subr.mxu0 0.0
        %7610 = vmatpush1.msra.mxu0 0.0
        %7611 = vmatprep.subr.mxu0 0.0
        %7612 = vmatpush1.msra.mxu0 0.0
        %7613 = vmatprep.subr.mxu0 0.0
        %7614 = vmatpush1.msra.mxu0 %v7558
        %7615 = vmatprep.subr.mxu0 0.0
        %7616 = vmatpush2.msra.mxu0 0.0
        %7617 = vmatprep.subr.mxu0 0.0
        %7618 = vmatpush2.msra.mxu0 0.0
        %7619 = vmatprep.subr.mxu0 0.0
        %7620 = vmatpush2.msra.mxu0 0.0
        %7621 = vmatprep.subr.mxu0 0.0
        %7622 = vmatpush2.msra.mxu0 0.0
        %7623 = vmatprep.subr.mxu0 0.0
        %7624 = vmatpush2.msra.mxu0 0.0
        %7625 = vmatprep.subr.mxu0 0.0
        %7626 = vmatpush2.msra.mxu0 0.0
        %7627 = vmatprep.subr.mxu0 0.0
        %7628 = vmatpush2.msra.mxu0 0.0
        %7629 = vmatprep.subr.mxu0 0.0
        %7630 = vmatpush2.msra.mxu0 0.0
        %7631 = vmatprep.subr.mxu0 0.0
        %7632 = vmatpush2.msra.mxu0 0.0
        %7633 = vmatprep.subr.mxu0 0.0
        %7634 = vmatpush2.msra.mxu0 0.0
        %7635 = vmatprep.subr.mxu0 0.0
        %7636 = vmatpush2.msra.mxu0 0.0
        %7637 = vmatprep.subr.mxu0 0.0
        %7638 = vmatpush2.msra.mxu0 0.0
        %7639 = vmatprep.subr.mxu0 0.0
        %7640 = vmatpush2.msra.mxu0 0.0
        %7641 = vmatprep.subr.mxu0 0.0
        %7642 = vmatpush2.msra.mxu0 0.0
        %7643 = vmatprep.subr.mxu0 0.0
        %7644 = vmatpush2.msra.mxu0 0.0
        %7645 = vmatprep.subr.mxu0 0.0
        %7646 = vmatpush2.msra.mxu0 0.0
        %7647 = vmatprep.mubr.f32.mxu0 0.0
        %7648 = vmatmul.mubr.f32.gmra.mxu0 %v7560
        %v7649 = vpop.f32.mrf.mxu0
        %v7650 = vadd.f32 0.0, %v7649
        %v7651 = vpop.f32.mrf.mxu0
        %7652 = vmatprep.mubr.f32.mxu0 0.0
        %7653 = vmatmul.mubr.f32.gmra.mxu0 %v7563
        %v7654 = vpop.f32.mrf.mxu0
        %v7655 = vadd.f32 0.0, %v7654
        %v7656 = vpop.f32.mrf.mxu0
        %7657 = vmatprep.mubr.f32.mxu0 0.0
        %7658 = vmatmul.mubr.f32.gmra.mxu0 %v7566
        %v7659 = vpop.f32.mrf.mxu0
        %v7660 = vadd.f32 0.0, %v7659
        %v7661 = vpop.f32.mrf.mxu0
        %7662 = vmatprep.mubr.f32.mxu0 0.0
        %7663 = vmatmul.mubr.f32.gmra.mxu0 %v7569
        %v7664 = vpop.f32.mrf.mxu0
        %v7665 = vadd.f32 0.0, %v7664
        %v7666 = vpop.f32.mrf.mxu0
        %7667 = vmatprep.mubr.f32.mxu0 0.0
        %7668 = vmatmul.mubr.f32.gmra.mxu0 %v7572
        %v7669 = vpop.f32.mrf.mxu0
        %v7670 = vadd.f32 0.0, %v7669
        %v7671 = vpop.f32.mrf.mxu0
        %7672 = vmatprep.mubr.f32.mxu0 0.0
        %7673 = vmatmul.mubr.f32.gmra.mxu0 %v7575
        %v7674 = vpop.f32.mrf.mxu0
        %v7675 = vadd.f32 0.0, %v7674
        %v7676 = vpop.f32.mrf.mxu0
        %7677 = vmatprep.mubr.f32.mxu0 0.0
        %7678 = vmatmul.mubr.f32.gmra.mxu0 %v7578
        %v7679 = vpop.f32.mrf.mxu0
        %v7680 = vadd.f32 0.0, %v7679
        %v7681 = vpop.f32.mrf.mxu0
        %7682 = vmatprep.mubr.f32.mxu0 0.0
        %7683 = vmatmul.mubr.f32.gmra.mxu0 %v7581
        %v7684 = vpop.f32.mrf.mxu0
        %v7685 = vadd.f32 0.0, %v7684
        %v7686 = vpop.f32.mrf.mxu0
        %7687 = vdwg.mxu0
        %v7689 = vsel %vm3796, %v7540, 0
        %v7692 = vsel %vm3796, %v7541, 0
        %v7695 = vsel %vm3796, %v7542, 0
        %v7698 = vsel %vm3796, %v7543, 0
        %v7701 = vsel %vm3796, %v7544, 0
        %v7704 = vsel %vm3796, %v7545, 0
        %v7707 = vsel %vm3796, %v7546, 0
        %v7710 = vsel %vm3796, %v7547, 0
        %7712 = vmatprep.subr.mxu0 0.0
        %7713 = vmatpush1.msra.mxu0 0.0
        %7714 = vmatprep.subr.mxu0 0.0
        %7715 = vmatpush1.msra.mxu0 0.0
        %7716 = vmatprep.subr.mxu0 0.0
        %7717 = vmatpush1.msra.mxu0 0.0
        %7718 = vmatprep.subr.mxu0 0.0
        %7719 = vmatpush1.msra.mxu0 0.0
        %7720 = vmatprep.subr.mxu0 0.0
        %7721 = vmatpush1.msra.mxu0 0.0
        %7722 = vmatprep.subr.mxu0 0.0
        %7723 = vmatpush1.msra.mxu0 0.0
        %7724 = vmatprep.subr.mxu0 0.0
        %7725 = vmatpush1.msra.mxu0 0.0
        %7726 = vmatprep.subr.mxu0 0.0
        %7727 = vmatpush1.msra.mxu0 0.0
        %7728 = vmatprep.subr.mxu0 0.0
        %7729 = vmatpush1.msra.mxu0 0.0
        %7730 = vmatprep.subr.mxu0 0.0
        %7731 = vmatpush1.msra.mxu0 0.0
        %7732 = vmatprep.subr.mxu0 0.0
        %7733 = vmatpush1.msra.mxu0 0.0
        %7734 = vmatprep.subr.mxu0 0.0
        %7735 = vmatpush1.msra.mxu0 0.0
        %7736 = vmatprep.subr.mxu0 0.0
        %7737 = vmatpush1.msra.mxu0 0.0
        %7738 = vmatprep.subr.mxu0 0.0
        %7739 = vmatpush1.msra.mxu0 0.0
        %7740 = vmatprep.subr.mxu0 0.0
        %7741 = vmatpush1.msra.mxu0 0.0
        %7742 = vmatprep.subr.mxu0 0.0
        %7743 = vmatpush1.msra.mxu0 %v7548
        %7744 = vmatprep.subr.mxu0 0.0
        %7745 = vmatpush2.msra.mxu0 0.0
        %7746 = vmatprep.subr.mxu0 0.0
        %7747 = vmatpush2.msra.mxu0 0.0
        %7748 = vmatprep.subr.mxu0 0.0
        %7749 = vmatpush2.msra.mxu0 0.0
        %7750 = vmatprep.subr.mxu0 0.0
        %7751 = vmatpush2.msra.mxu0 0.0
        %7752 = vmatprep.subr.mxu0 0.0
        %7753 = vmatpush2.msra.mxu0 0.0
        %7754 = vmatprep.subr.mxu0 0.0
        %7755 = vmatpush2.msra.mxu0 0.0
        %7756 = vmatprep.subr.mxu0 0.0
        %7757 = vmatpush2.msra.mxu0 0.0
        %7758 = vmatprep.subr.mxu0 0.0
        %7759 = vmatpush2.msra.mxu0 0.0
        %7760 = vmatprep.subr.mxu0 0.0
        %7761 = vmatpush2.msra.mxu0 0.0
        %7762 = vmatprep.subr.mxu0 0.0
        %7763 = vmatpush2.msra.mxu0 0.0
        %7764 = vmatprep.subr.mxu0 0.0
        %7765 = vmatpush2.msra.mxu0 0.0
        %7766 = vmatprep.subr.mxu0 0.0
        %7767 = vmatpush2.msra.mxu0 0.0
        %7768 = vmatprep.subr.mxu0 0.0
        %7769 = vmatpush2.msra.mxu0 0.0
        %7770 = vmatprep.subr.mxu0 0.0
        %7771 = vmatpush2.msra.mxu0 0.0
        %7772 = vmatprep.subr.mxu0 0.0
        %7773 = vmatpush2.msra.mxu0 0.0
        %7774 = vmatprep.subr.mxu0 0.0
        %7775 = vmatpush2.msra.mxu0 0.0
        %7776 = vmatprep.mubr.f32.mxu0 0.0
        %7777 = vmatmul.mubr.f32.gmra.mxu0 %v7689
        %v7778 = vpop.f32.mrf.mxu0
        %v7779 = vadd.f32 %v7650, %v7778
        %v7780 = vpop.f32.mrf.mxu0
        %7781 = vmatprep.mubr.f32.mxu0 0.0
        %7782 = vmatmul.mubr.f32.gmra.mxu0 %v7692
        %v7783 = vpop.f32.mrf.mxu0
        %v7784 = vadd.f32 %v7655, %v7783
        %v7785 = vpop.f32.mrf.mxu0
        %7786 = vmatprep.mubr.f32.mxu0 0.0
        %7787 = vmatmul.mubr.f32.gmra.mxu0 %v7695
        %v7788 = vpop.f32.mrf.mxu0
        %v7789 = vadd.f32 %v7660, %v7788
        %v7790 = vpop.f32.mrf.mxu0
        %7791 = vmatprep.mubr.f32.mxu0 0.0
        %7792 = vmatmul.mubr.f32.gmra.mxu0 %v7698
        %v7793 = vpop.f32.mrf.mxu0
        %v7794 = vadd.f32 %v7665, %v7793
        %v7795 = vpop.f32.mrf.mxu0
        %7796 = vmatprep.mubr.f32.mxu0 0.0
        %7797 = vmatmul.mubr.f32.gmra.mxu0 %v7701
        %v7798 = vpop.f32.mrf.mxu0
        %v7799 = vadd.f32 %v7670, %v7798
        %v7800 = vpop.f32.mrf.mxu0
        %7801 = vmatprep.mubr.f32.mxu0 0.0
        %7802 = vmatmul.mubr.f32.gmra.mxu0 %v7704
        %v7803 = vpop.f32.mrf.mxu0
        %v7804 = vadd.f32 %v7675, %v7803
        %v7805 = vpop.f32.mrf.mxu0
        %7806 = vmatprep.mubr.f32.mxu0 0.0
        %7807 = vmatmul.mubr.f32.gmra.mxu0 %v7707
        %v7808 = vpop.f32.mrf.mxu0
        %v7809 = vadd.f32 %v7680, %v7808
        %v7810 = vpop.f32.mrf.mxu0
        %7811 = vmatprep.mubr.f32.mxu0 0.0
        %7812 = vmatmul.mubr.f32.gmra.mxu0 %v7710
        %v7813 = vpop.f32.mrf.mxu0
        %v7814 = vadd.f32 %v7685, %v7813
        %v7815 = vpop.f32.mrf.mxu0
        %7816 = vdwg.mxu0
        %v7817 = vld [vmem:[#allocation5 + $0x2] sm:$0xff]
        %v7818 = vld [vmem:[#allocation5 + $0x12] sm:$0xff]
        %v7819 = vld [vmem:[#allocation5 + $0x22] sm:$0xff]
        %v7820 = vld [vmem:[#allocation5 + $0x32] sm:$0xff]
        %v7821 = vld [vmem:[#allocation5 + $0x42] sm:$0xff]
        %v7822 = vld [vmem:[#allocation5 + $0x52] sm:$0xff]
        %v7823 = vld [vmem:[#allocation5 + $0x62] sm:$0xff]
        %v7824 = vld [vmem:[#allocation5 + $0x72] sm:$0xff]
        %s7825 = scalar_lea.vmem %s5, 16
        %v7826 = vld [vmem:[%s7825] sm:$0xff]
        %v7828 = vsel %vm3796, %v7817, 0
        %v7831 = vsel %vm3796, %v7818, 0
        %v7834 = vsel %vm3796, %v7819, 0
        %v7837 = vsel %vm3796, %v7820, 0
        %v7840 = vsel %vm3796, %v7821, 0
        %v7843 = vsel %vm3796, %v7822, 0
        %v7846 = vsel %vm3796, %v7823, 0
        %v7849 = vsel %vm3796, %v7824, 0
        %7851 = vmatprep.subr.mxu0 0.0
        %7852 = vmatpush1.msra.mxu0 0.0
        %7853 = vmatprep.subr.mxu0 0.0
        %7854 = vmatpush1.msra.mxu0 0.0
        %7855 = vmatprep.subr.mxu0 0.0
        %7856 = vmatpush1.msra.mxu0 0.0
        %7857 = vmatprep.subr.mxu0 0.0
        %7858 = vmatpush1.msra.mxu0 0.0
        %7859 = vmatprep.subr.mxu0 0.0
        %7860 = vmatpush1.msra.mxu0 0.0
        %7861 = vmatprep.subr.mxu0 0.0
        %7862 = vmatpush1.msra.mxu0 0.0
        %7863 = vmatprep.subr.mxu0 0.0
        %7864 = vmatpush1.msra.mxu0 0.0
        %7865 = vmatprep.subr.mxu0 0.0
        %7866 = vmatpush1.msra.mxu0 0.0
        %7867 = vmatprep.subr.mxu0 0.0
        %7868 = vmatpush1.msra.mxu0 0.0
        %7869 = vmatprep.subr.mxu0 0.0
        %7870 = vmatpush1.msra.mxu0 0.0
        %7871 = vmatprep.subr.mxu0 0.0
        %7872 = vmatpush1.msra.mxu0 0.0
        %7873 = vmatprep.subr.mxu0 0.0
        %7874 = vmatpush1.msra.mxu0 0.0
        %7875 = vmatprep.subr.mxu0 0.0
        %7876 = vmatpush1.msra.mxu0 0.0
        %7877 = vmatprep.subr.mxu0 0.0
        %7878 = vmatpush1.msra.mxu0 0.0
        %7879 = vmatprep.subr.mxu0 0.0
        %7880 = vmatpush1.msra.mxu0 0.0
        %7881 = vmatprep.subr.mxu0 0.0
        %7882 = vmatpush1.msra.mxu0 %v7826
        %7883 = vmatprep.subr.mxu0 0.0
        %7884 = vmatpush2.msra.mxu0 0.0
        %7885 = vmatprep.subr.mxu0 0.0
        %7886 = vmatpush2.msra.mxu0 0.0
        %7887 = vmatprep.subr.mxu0 0.0
        %7888 = vmatpush2.msra.mxu0 0.0
        %7889 = vmatprep.subr.mxu0 0.0
        %7890 = vmatpush2.msra.mxu0 0.0
        %7891 = vmatprep.subr.mxu0 0.0
        %7892 = vmatpush2.msra.mxu0 0.0
        %7893 = vmatprep.subr.mxu0 0.0
        %7894 = vmatpush2.msra.mxu0 0.0
        %7895 = vmatprep.subr.mxu0 0.0
        %7896 = vmatpush2.msra.mxu0 0.0
        %7897 = vmatprep.subr.mxu0 0.0
        %7898 = vmatpush2.msra.mxu0 0.0
        %7899 = vmatprep.subr.mxu0 0.0
        %7900 = vmatpush2.msra.mxu0 0.0
        %7901 = vmatprep.subr.mxu0 0.0
        %7902 = vmatpush2.msra.mxu0 0.0
        %7903 = vmatprep.subr.mxu0 0.0
        %7904 = vmatpush2.msra.mxu0 0.0
        %7905 = vmatprep.subr.mxu0 0.0
        %7906 = vmatpush2.msra.mxu0 0.0
        %7907 = vmatprep.subr.mxu0 0.0
        %7908 = vmatpush2.msra.mxu0 0.0
        %7909 = vmatprep.subr.mxu0 0.0
        %7910 = vmatpush2.msra.mxu0 0.0
        %7911 = vmatprep.subr.mxu0 0.0
        %7912 = vmatpush2.msra.mxu0 0.0
        %7913 = vmatprep.subr.mxu0 0.0
        %7914 = vmatpush2.msra.mxu0 0.0
        %7915 = vmatprep.mubr.f32.mxu0 0.0
        %7916 = vmatmul.mubr.f32.gmra.mxu0 %v7828
        %v7917 = vpop.f32.mrf.mxu0
        %v7918 = vadd.f32 0.0, %v7917
        %v7919 = vpop.f32.mrf.mxu0
        %7920 = vmatprep.mubr.f32.mxu0 0.0
        %7921 = vmatmul.mubr.f32.gmra.mxu0 %v7831
        %v7922 = vpop.f32.mrf.mxu0
        %v7923 = vadd.f32 0.0, %v7922
        %v7924 = vpop.f32.mrf.mxu0
        %7925 = vmatprep.mubr.f32.mxu0 0.0
        %7926 = vmatmul.mubr.f32.gmra.mxu0 %v7834
        %v7927 = vpop.f32.mrf.mxu0
        %v7928 = vadd.f32 0.0, %v7927
        %v7929 = vpop.f32.mrf.mxu0
        %7930 = vmatprep.mubr.f32.mxu0 0.0
        %7931 = vmatmul.mubr.f32.gmra.mxu0 %v7837
        %v7932 = vpop.f32.mrf.mxu0
        %v7933 = vadd.f32 0.0, %v7932
        %v7934 = vpop.f32.mrf.mxu0
        %7935 = vmatprep.mubr.f32.mxu0 0.0
        %7936 = vmatmul.mubr.f32.gmra.mxu0 %v7840
        %v7937 = vpop.f32.mrf.mxu0
        %v7938 = vadd.f32 0.0, %v7937
        %v7939 = vpop.f32.mrf.mxu0
        %7940 = vmatprep.mubr.f32.mxu0 0.0
        %7941 = vmatmul.mubr.f32.gmra.mxu0 %v7843
        %v7942 = vpop.f32.mrf.mxu0
        %v7943 = vadd.f32 0.0, %v7942
        %v7944 = vpop.f32.mrf.mxu0
        %7945 = vmatprep.mubr.f32.mxu0 0.0
        %7946 = vmatmul.mubr.f32.gmra.mxu0 %v7846
        %v7947 = vpop.f32.mrf.mxu0
        %v7948 = vadd.f32 0.0, %v7947
        %v7949 = vpop.f32.mrf.mxu0
        %7950 = vmatprep.mubr.f32.mxu0 0.0
        %7951 = vmatmul.mubr.f32.gmra.mxu0 %v7849
        %v7952 = vpop.f32.mrf.mxu0
        %v7953 = vadd.f32 0.0, %v7952
        %v7954 = vpop.f32.mrf.mxu0
        %7955 = vdwg.mxu0
        %v7956 = vadd.f32 %v7779, %v7918
        %v7957 = vadd.f32 %v7784, %v7923
        %v7958 = vadd.f32 %v7789, %v7928
        %v7959 = vadd.f32 %v7794, %v7933
        %v7960 = vadd.f32 %v7799, %v7938
        %v7961 = vadd.f32 %v7804, %v7943
        %v7962 = vadd.f32 %v7809, %v7948
        %v7963 = vadd.f32 %v7814, %v7953
        %v7964 = vld [vmem:[%s7531] sm:$0xff]
        %v7965 = vld [vmem:[%s7531 + $0x10] sm:$0xff]
        %v7966 = vld [vmem:[%s7531 + $0x20] sm:$0xff]
        %v7967 = vld [vmem:[%s7531 + $0x30] sm:$0xff]
        %v7968 = vld [vmem:[%s7531 + $0x40] sm:$0xff]
        %v7969 = vld [vmem:[%s7531 + $0x50] sm:$0xff]
        %v7970 = vld [vmem:[%s7531 + $0x60] sm:$0xff]
        %v7971 = vld [vmem:[%s7531 + $0x70] sm:$0xff]
        %s7972 = scalar_lea.vmem %s5, 24
        %v7973 = vld [vmem:[%s7972] sm:$0xff]
        %v7975 = vsel %vm3796, %v7964, 0
        %v7978 = vsel %vm3796, %v7965, 0
        %v7981 = vsel %vm3796, %v7966, 0
        %v7984 = vsel %vm3796, %v7967, 0
        %v7987 = vsel %vm3796, %v7968, 0
        %v7990 = vsel %vm3796, %v7969, 0
        %v7993 = vsel %vm3796, %v7970, 0
        %v7996 = vsel %vm3796, %v7971, 0
        %7998 = vmatprep.subr.mxu0 0.0
        %7999 = vmatpush1.msra.mxu0 0.0
        %8000 = vmatprep.subr.mxu0 0.0
        %8001 = vmatpush1.msra.mxu0 0.0
        %8002 = vmatprep.subr.mxu0 0.0
        %8003 = vmatpush1.msra.mxu0 0.0
        %8004 = vmatprep.subr.mxu0 0.0
        %8005 = vmatpush1.msra.mxu0 0.0
        %8006 = vmatprep.subr.mxu0 0.0
        %8007 = vmatpush1.msra.mxu0 0.0
        %8008 = vmatprep.subr.mxu0 0.0
        %8009 = vmatpush1.msra.mxu0 0.0
        %8010 = vmatprep.subr.mxu0 0.0
        %8011 = vmatpush1.msra.mxu0 0.0
        %8012 = vmatprep.subr.mxu0 0.0
        %8013 = vmatpush1.msra.mxu0 0.0
        %8014 = vmatprep.subr.mxu0 0.0
        %8015 = vmatpush1.msra.mxu0 0.0
        %8016 = vmatprep.subr.mxu0 0.0
        %8017 = vmatpush1.msra.mxu0 0.0
        %8018 = vmatprep.subr.mxu0 0.0
        %8019 = vmatpush1.msra.mxu0 0.0
        %8020 = vmatprep.subr.mxu0 0.0
        %8021 = vmatpush1.msra.mxu0 0.0
        %8022 = vmatprep.subr.mxu0 0.0
        %8023 = vmatpush1.msra.mxu0 0.0
        %8024 = vmatprep.subr.mxu0 0.0
        %8025 = vmatpush1.msra.mxu0 0.0
        %8026 = vmatprep.subr.mxu0 0.0
        %8027 = vmatpush1.msra.mxu0 0.0
        %8028 = vmatprep.subr.mxu0 0.0
        %8029 = vmatpush1.msra.mxu0 %v7973
        %8030 = vmatprep.subr.mxu0 0.0
        %8031 = vmatpush2.msra.mxu0 0.0
        %8032 = vmatprep.subr.mxu0 0.0
        %8033 = vmatpush2.msra.mxu0 0.0
        %8034 = vmatprep.subr.mxu0 0.0
        %8035 = vmatpush2.msra.mxu0 0.0
        %8036 = vmatprep.subr.mxu0 0.0
        %8037 = vmatpush2.msra.mxu0 0.0
        %8038 = vmatprep.subr.mxu0 0.0
        %8039 = vmatpush2.msra.mxu0 0.0
        %8040 = vmatprep.subr.mxu0 0.0
        %8041 = vmatpush2.msra.mxu0 0.0
        %8042 = vmatprep.subr.mxu0 0.0
        %8043 = vmatpush2.msra.mxu0 0.0
        %8044 = vmatprep.subr.mxu0 0.0
        %8045 = vmatpush2.msra.mxu0 0.0
        %8046 = vmatprep.subr.mxu0 0.0
        %8047 = vmatpush2.msra.mxu0 0.0
        %8048 = vmatprep.subr.mxu0 0.0
        %8049 = vmatpush2.msra.mxu0 0.0
        %8050 = vmatprep.subr.mxu0 0.0
        %8051 = vmatpush2.msra.mxu0 0.0
        %8052 = vmatprep.subr.mxu0 0.0
        %8053 = vmatpush2.msra.mxu0 0.0
        %8054 = vmatprep.subr.mxu0 0.0
        %8055 = vmatpush2.msra.mxu0 0.0
        %8056 = vmatprep.subr.mxu0 0.0
        %8057 = vmatpush2.msra.mxu0 0.0
        %8058 = vmatprep.subr.mxu0 0.0
        %8059 = vmatpush2.msra.mxu0 0.0
        %8060 = vmatprep.subr.mxu0 0.0
        %8061 = vmatpush2.msra.mxu0 0.0
        %8062 = vmatprep.mubr.f32.mxu0 0.0
        %8063 = vmatmul.mubr.f32.gmra.mxu0 %v7975
        %v8064 = vpop.f32.mrf.mxu0
        %v8065 = vadd.f32 0.0, %v8064
        %v8066 = vpop.f32.mrf.mxu0
        %8067 = vmatprep.mubr.f32.mxu0 0.0
        %8068 = vmatmul.mubr.f32.gmra.mxu0 %v7978
        %v8069 = vpop.f32.mrf.mxu0
        %v8070 = vadd.f32 0.0, %v8069
        %v8071 = vpop.f32.mrf.mxu0
        %8072 = vmatprep.mubr.f32.mxu0 0.0
        %8073 = vmatmul.mubr.f32.gmra.mxu0 %v7981
        %v8074 = vpop.f32.mrf.mxu0
        %v8075 = vadd.f32 0.0, %v8074
        %v8076 = vpop.f32.mrf.mxu0
        %8077 = vmatprep.mubr.f32.mxu0 0.0
        %8078 = vmatmul.mubr.f32.gmra.mxu0 %v7984
        %v8079 = vpop.f32.mrf.mxu0
        %v8080 = vadd.f32 0.0, %v8079
        %v8081 = vpop.f32.mrf.mxu0
        %8082 = vmatprep.mubr.f32.mxu0 0.0
        %8083 = vmatmul.mubr.f32.gmra.mxu0 %v7987
        %v8084 = vpop.f32.mrf.mxu0
        %v8085 = vadd.f32 0.0, %v8084
        %v8086 = vpop.f32.mrf.mxu0
        %8087 = vmatprep.mubr.f32.mxu0 0.0
        %8088 = vmatmul.mubr.f32.gmra.mxu0 %v7990
        %v8089 = vpop.f32.mrf.mxu0
        %v8090 = vadd.f32 0.0, %v8089
        %v8091 = vpop.f32.mrf.mxu0
        %8092 = vmatprep.mubr.f32.mxu0 0.0
        %8093 = vmatmul.mubr.f32.gmra.mxu0 %v7993
        %v8094 = vpop.f32.mrf.mxu0
        %v8095 = vadd.f32 0.0, %v8094
        %v8096 = vpop.f32.mrf.mxu0
        %8097 = vmatprep.mubr.f32.mxu0 0.0
        %8098 = vmatmul.mubr.f32.gmra.mxu0 %v7996
        %v8099 = vpop.f32.mrf.mxu0
        %v8100 = vadd.f32 0.0, %v8099
        %v8101 = vpop.f32.mrf.mxu0
        %8102 = vdwg.mxu0
        %v8103 = vadd.f32 %v7956, %v8065
        %v8104 = vadd.f32 %v7957, %v8070
        %v8105 = vadd.f32 %v7958, %v8075
        %v8106 = vadd.f32 %v7959, %v8080
        %v8107 = vadd.f32 %v7960, %v8085
        %v8108 = vadd.f32 %v7961, %v8090
        %v8109 = vadd.f32 %v7962, %v8095
        %v8110 = vadd.f32 %v7963, %v8100
        %v8111 = vld [vmem:[%s7531 + $0x1] sm:$0xff]
        %v8112 = vld [vmem:[%s7531 + $0x11] sm:$0xff]
        %v8113 = vld [vmem:[%s7531 + $0x21] sm:$0xff]
        %v8114 = vld [vmem:[%s7531 + $0x31] sm:$0xff]
        %v8115 = vld [vmem:[%s7531 + $0x41] sm:$0xff]
        %v8116 = vld [vmem:[%s7531 + $0x51] sm:$0xff]
        %v8117 = vld [vmem:[%s7531 + $0x61] sm:$0xff]
        %v8118 = vld [vmem:[%s7531 + $0x71] sm:$0xff]
        %s8119 = scalar_lea.vmem %s5, 32
        %v8120 = vld [vmem:[%s8119] sm:$0xff]
        %v8122 = vsel %vm3796, %v8111, 0
        %v8125 = vsel %vm3796, %v8112, 0
        %v8128 = vsel %vm3796, %v8113, 0
        %v8131 = vsel %vm3796, %v8114, 0
        %v8134 = vsel %vm3796, %v8115, 0
        %v8137 = vsel %vm3796, %v8116, 0
        %v8140 = vsel %vm3796, %v8117, 0
        %v8143 = vsel %vm3796, %v8118, 0
        %8145 = vmatprep.subr.mxu0 0.0
        %8146 = vmatpush1.msra.mxu0 0.0
        %8147 = vmatprep.subr.mxu0 0.0
        %8148 = vmatpush1.msra.mxu0 0.0
        %8149 = vmatprep.subr.mxu0 0.0
        %8150 = vmatpush1.msra.mxu0 0.0
        %8151 = vmatprep.subr.mxu0 0.0
        %8152 = vmatpush1.msra.mxu0 0.0
        %8153 = vmatprep.subr.mxu0 0.0
        %8154 = vmatpush1.msra.mxu0 0.0
        %8155 = vmatprep.subr.mxu0 0.0
        %8156 = vmatpush1.msra.mxu0 0.0
        %8157 = vmatprep.subr.mxu0 0.0
        %8158 = vmatpush1.msra.mxu0 0.0
        %8159 = vmatprep.subr.mxu0 0.0
        %8160 = vmatpush1.msra.mxu0 0.0
        %8161 = vmatprep.subr.mxu0 0.0
        %8162 = vmatpush1.msra.mxu0 0.0
        %8163 = vmatprep.subr.mxu0 0.0
        %8164 = vmatpush1.msra.mxu0 0.0
        %8165 = vmatprep.subr.mxu0 0.0
        %8166 = vmatpush1.msra.mxu0 0.0
        %8167 = vmatprep.subr.mxu0 0.0
        %8168 = vmatpush1.msra.mxu0 0.0
        %8169 = vmatprep.subr.mxu0 0.0
        %8170 = vmatpush1.msra.mxu0 0.0
        %8171 = vmatprep.subr.mxu0 0.0
        %8172 = vmatpush1.msra.mxu0 0.0
        %8173 = vmatprep.subr.mxu0 0.0
        %8174 = vmatpush1.msra.mxu0 0.0
        %8175 = vmatprep.subr.mxu0 0.0
        %8176 = vmatpush1.msra.mxu0 %v8120
        %8177 = vmatprep.subr.mxu0 0.0
        %8178 = vmatpush2.msra.mxu0 0.0
        %8179 = vmatprep.subr.mxu0 0.0
        %8180 = vmatpush2.msra.mxu0 0.0
        %8181 = vmatprep.subr.mxu0 0.0
        %8182 = vmatpush2.msra.mxu0 0.0
        %8183 = vmatprep.subr.mxu0 0.0
        %8184 = vmatpush2.msra.mxu0 0.0
        %8185 = vmatprep.subr.mxu0 0.0
        %8186 = vmatpush2.msra.mxu0 0.0
        %8187 = vmatprep.subr.mxu0 0.0
        %8188 = vmatpush2.msra.mxu0 0.0
        %8189 = vmatprep.subr.mxu0 0.0
        %8190 = vmatpush2.msra.mxu0 0.0
        %8191 = vmatprep.subr.mxu0 0.0
        %8192 = vmatpush2.msra.mxu0 0.0
        %8193 = vmatprep.subr.mxu0 0.0
        %8194 = vmatpush2.msra.mxu0 0.0
        %8195 = vmatprep.subr.mxu0 0.0
        %8196 = vmatpush2.msra.mxu0 0.0
        %8197 = vmatprep.subr.mxu0 0.0
        %8198 = vmatpush2.msra.mxu0 0.0
        %8199 = vmatprep.subr.mxu0 0.0
        %8200 = vmatpush2.msra.mxu0 0.0
        %8201 = vmatprep.subr.mxu0 0.0
        %8202 = vmatpush2.msra.mxu0 0.0
        %8203 = vmatprep.subr.mxu0 0.0
        %8204 = vmatpush2.msra.mxu0 0.0
        %8205 = vmatprep.subr.mxu0 0.0
        %8206 = vmatpush2.msra.mxu0 0.0
        %8207 = vmatprep.subr.mxu0 0.0
        %8208 = vmatpush2.msra.mxu0 0.0
        %8209 = vmatprep.mubr.f32.mxu0 0.0
        %8210 = vmatmul.mubr.f32.gmra.mxu0 %v8122
        %v8211 = vpop.f32.mrf.mxu0
        %v8212 = vadd.f32 0.0, %v8211
        %v8213 = vpop.f32.mrf.mxu0
        %8214 = vmatprep.mubr.f32.mxu0 0.0
        %8215 = vmatmul.mubr.f32.gmra.mxu0 %v8125
        %v8216 = vpop.f32.mrf.mxu0
        %v8217 = vadd.f32 0.0, %v8216
        %v8218 = vpop.f32.mrf.mxu0
        %8219 = vmatprep.mubr.f32.mxu0 0.0
        %8220 = vmatmul.mubr.f32.gmra.mxu0 %v8128
        %v8221 = vpop.f32.mrf.mxu0
        %v8222 = vadd.f32 0.0, %v8221
        %v8223 = vpop.f32.mrf.mxu0
        %8224 = vmatprep.mubr.f32.mxu0 0.0
        %8225 = vmatmul.mubr.f32.gmra.mxu0 %v8131
        %v8226 = vpop.f32.mrf.mxu0
        %v8227 = vadd.f32 0.0, %v8226
        %v8228 = vpop.f32.mrf.mxu0
        %8229 = vmatprep.mubr.f32.mxu0 0.0
        %8230 = vmatmul.mubr.f32.gmra.mxu0 %v8134
        %v8231 = vpop.f32.mrf.mxu0
        %v8232 = vadd.f32 0.0, %v8231
        %v8233 = vpop.f32.mrf.mxu0
        %8234 = vmatprep.mubr.f32.mxu0 0.0
        %8235 = vmatmul.mubr.f32.gmra.mxu0 %v8137
        %v8236 = vpop.f32.mrf.mxu0
        %v8237 = vadd.f32 0.0, %v8236
        %v8238 = vpop.f32.mrf.mxu0
        %8239 = vmatprep.mubr.f32.mxu0 0.0
        %8240 = vmatmul.mubr.f32.gmra.mxu0 %v8140
        %v8241 = vpop.f32.mrf.mxu0
        %v8242 = vadd.f32 0.0, %v8241
        %v8243 = vpop.f32.mrf.mxu0
        %8244 = vmatprep.mubr.f32.mxu0 0.0
        %8245 = vmatmul.mubr.f32.gmra.mxu0 %v8143
        %v8246 = vpop.f32.mrf.mxu0
        %v8247 = vadd.f32 0.0, %v8246
        %v8248 = vpop.f32.mrf.mxu0
        %8249 = vdwg.mxu0
        %v8250 = vadd.f32 %v8103, %v8212
        %v8251 = vadd.f32 %v8104, %v8217
        %v8252 = vadd.f32 %v8105, %v8222
        %v8253 = vadd.f32 %v8106, %v8227
        %v8254 = vadd.f32 %v8107, %v8232
        %v8255 = vadd.f32 %v8108, %v8237
        %v8256 = vadd.f32 %v8109, %v8242
        %v8257 = vadd.f32 %v8110, %v8247
        %v8258 = vld [vmem:[%s7531 + $0x2] sm:$0xff]
        %v8259 = vld [vmem:[%s7531 + $0x12] sm:$0xff]
        %v8260 = vld [vmem:[%s7531 + $0x22] sm:$0xff]
        %v8261 = vld [vmem:[%s7531 + $0x32] sm:$0xff]
        %v8262 = vld [vmem:[%s7531 + $0x42] sm:$0xff]
        %v8263 = vld [vmem:[%s7531 + $0x52] sm:$0xff]
        %v8264 = vld [vmem:[%s7531 + $0x62] sm:$0xff]
        %v8265 = vld [vmem:[%s7531 + $0x72] sm:$0xff]
        %s8266 = scalar_lea.vmem %s5, 40
        %v8267 = vld [vmem:[%s8266] sm:$0xff]
        %v8269 = vsel %vm3796, %v8258, 0
        %v8272 = vsel %vm3796, %v8259, 0
        %v8275 = vsel %vm3796, %v8260, 0
        %v8278 = vsel %vm3796, %v8261, 0
        %v8281 = vsel %vm3796, %v8262, 0
        %v8284 = vsel %vm3796, %v8263, 0
        %v8287 = vsel %vm3796, %v8264, 0
        %v8290 = vsel %vm3796, %v8265, 0
        %8292 = vmatprep.subr.mxu0 0.0
        %8293 = vmatpush1.msra.mxu0 0.0
        %8294 = vmatprep.subr.mxu0 0.0
        %8295 = vmatpush1.msra.mxu0 0.0
        %8296 = vmatprep.subr.mxu0 0.0
        %8297 = vmatpush1.msra.mxu0 0.0
        %8298 = vmatprep.subr.mxu0 0.0
        %8299 = vmatpush1.msra.mxu0 0.0
        %8300 = vmatprep.subr.mxu0 0.0
        %8301 = vmatpush1.msra.mxu0 0.0
        %8302 = vmatprep.subr.mxu0 0.0
        %8303 = vmatpush1.msra.mxu0 0.0
        %8304 = vmatprep.subr.mxu0 0.0
        %8305 = vmatpush1.msra.mxu0 0.0
        %8306 = vmatprep.subr.mxu0 0.0
        %8307 = vmatpush1.msra.mxu0 0.0
        %8308 = vmatprep.subr.mxu0 0.0
        %8309 = vmatpush1.msra.mxu0 0.0
        %8310 = vmatprep.subr.mxu0 0.0
        %8311 = vmatpush1.msra.mxu0 0.0
        %8312 = vmatprep.subr.mxu0 0.0
        %8313 = vmatpush1.msra.mxu0 0.0
        %8314 = vmatprep.subr.mxu0 0.0
        %8315 = vmatpush1.msra.mxu0 0.0
        %8316 = vmatprep.subr.mxu0 0.0
        %8317 = vmatpush1.msra.mxu0 0.0
        %8318 = vmatprep.subr.mxu0 0.0
        %8319 = vmatpush1.msra.mxu0 0.0
        %8320 = vmatprep.subr.mxu0 0.0
        %8321 = vmatpush1.msra.mxu0 0.0
        %8322 = vmatprep.subr.mxu0 0.0
        %8323 = vmatpush1.msra.mxu0 %v8267
        %8324 = vmatprep.subr.mxu0 0.0
        %8325 = vmatpush2.msra.mxu0 0.0
        %8326 = vmatprep.subr.mxu0 0.0
        %8327 = vmatpush2.msra.mxu0 0.0
        %8328 = vmatprep.subr.mxu0 0.0
        %8329 = vmatpush2.msra.mxu0 0.0
        %8330 = vmatprep.subr.mxu0 0.0
        %8331 = vmatpush2.msra.mxu0 0.0
        %8332 = vmatprep.subr.mxu0 0.0
        %8333 = vmatpush2.msra.mxu0 0.0
        %8334 = vmatprep.subr.mxu0 0.0
        %8335 = vmatpush2.msra.mxu0 0.0
        %8336 = vmatprep.subr.mxu0 0.0
        %8337 = vmatpush2.msra.mxu0 0.0
        %8338 = vmatprep.subr.mxu0 0.0
        %8339 = vmatpush2.msra.mxu0 0.0
        %8340 = vmatprep.subr.mxu0 0.0
        %8341 = vmatpush2.msra.mxu0 0.0
        %8342 = vmatprep.subr.mxu0 0.0
        %8343 = vmatpush2.msra.mxu0 0.0
        %8344 = vmatprep.subr.mxu0 0.0
        %8345 = vmatpush2.msra.mxu0 0.0
        %8346 = vmatprep.subr.mxu0 0.0
        %8347 = vmatpush2.msra.mxu0 0.0
        %8348 = vmatprep.subr.mxu0 0.0
        %8349 = vmatpush2.msra.mxu0 0.0
        %8350 = vmatprep.subr.mxu0 0.0
        %8351 = vmatpush2.msra.mxu0 0.0
        %8352 = vmatprep.subr.mxu0 0.0
        %8353 = vmatpush2.msra.mxu0 0.0
        %8354 = vmatprep.subr.mxu0 0.0
        %8355 = vmatpush2.msra.mxu0 0.0
        %8356 = vmatprep.mubr.f32.mxu0 0.0
        %8357 = vmatmul.mubr.f32.gmra.mxu0 %v8269
        %v8358 = vpop.f32.mrf.mxu0
        %v8359 = vadd.f32 0.0, %v8358
        %v8360 = vpop.f32.mrf.mxu0
        %8361 = vmatprep.mubr.f32.mxu0 0.0
        %8362 = vmatmul.mubr.f32.gmra.mxu0 %v8272
        %v8363 = vpop.f32.mrf.mxu0
        %v8364 = vadd.f32 0.0, %v8363
        %v8365 = vpop.f32.mrf.mxu0
        %8366 = vmatprep.mubr.f32.mxu0 0.0
        %8367 = vmatmul.mubr.f32.gmra.mxu0 %v8275
        %v8368 = vpop.f32.mrf.mxu0
        %v8369 = vadd.f32 0.0, %v8368
        %v8370 = vpop.f32.mrf.mxu0
        %8371 = vmatprep.mubr.f32.mxu0 0.0
        %8372 = vmatmul.mubr.f32.gmra.mxu0 %v8278
        %v8373 = vpop.f32.mrf.mxu0
        %v8374 = vadd.f32 0.0, %v8373
        %v8375 = vpop.f32.mrf.mxu0
        %8376 = vmatprep.mubr.f32.mxu0 0.0
        %8377 = vmatmul.mubr.f32.gmra.mxu0 %v8281
        %v8378 = vpop.f32.mrf.mxu0
        %v8379 = vadd.f32 0.0, %v8378
        %v8380 = vpop.f32.mrf.mxu0
        %8381 = vmatprep.mubr.f32.mxu0 0.0
        %8382 = vmatmul.mubr.f32.gmra.mxu0 %v8284
        %v8383 = vpop.f32.mrf.mxu0
        %v8384 = vadd.f32 0.0, %v8383
        %v8385 = vpop.f32.mrf.mxu0
        %8386 = vmatprep.mubr.f32.mxu0 0.0
        %8387 = vmatmul.mubr.f32.gmra.mxu0 %v8287
        %v8388 = vpop.f32.mrf.mxu0
        %v8389 = vadd.f32 0.0, %v8388
        %v8390 = vpop.f32.mrf.mxu0
        %8391 = vmatprep.mubr.f32.mxu0 0.0
        %8392 = vmatmul.mubr.f32.gmra.mxu0 %v8290
        %v8393 = vpop.f32.mrf.mxu0
        %v8394 = vadd.f32 0.0, %v8393
        %v8395 = vpop.f32.mrf.mxu0
        %8396 = vdwg.mxu0
        %v8397 = vadd.f32 %v8250, %v8359
        %v8398 = vadd.f32 %v8251, %v8364
        %v8399 = vadd.f32 %v8252, %v8369
        %v8400 = vadd.f32 %v8253, %v8374
        %v8401 = vadd.f32 %v8254, %v8379
        %v8402 = vadd.f32 %v8255, %v8384
        %v8403 = vadd.f32 %v8256, %v8389
        %v8404 = vadd.f32 %v8257, %v8394
        %s8405 = scalar_lea.vmem [#allocation5], 32
        %v8406 = vld [vmem:[%s8405] sm:$0xff]
        %v8407 = vld [vmem:[%s8405 + $0x10] sm:$0xff]
        %v8408 = vld [vmem:[%s8405 + $0x20] sm:$0xff]
        %v8409 = vld [vmem:[%s8405 + $0x30] sm:$0xff]
        %v8410 = vld [vmem:[%s8405 + $0x40] sm:$0xff]
        %v8411 = vld [vmem:[%s8405 + $0x50] sm:$0xff]
        %v8412 = vld [vmem:[%s8405 + $0x60] sm:$0xff]
        %v8413 = vld [vmem:[%s8405 + $0x70] sm:$0xff]
        %s8414 = scalar_lea.vmem %s5, 48
        %v8415 = vld [vmem:[%s8414] sm:$0xff]
        %v8417 = vsel %vm3796, %v8406, 0
        %v8420 = vsel %vm3796, %v8407, 0
        %v8423 = vsel %vm3796, %v8408, 0
        %v8426 = vsel %vm3796, %v8409, 0
        %v8429 = vsel %vm3796, %v8410, 0
        %v8432 = vsel %vm3796, %v8411, 0
        %v8435 = vsel %vm3796, %v8412, 0
        %v8438 = vsel %vm3796, %v8413, 0
        %8440 = vmatprep.subr.mxu0 0.0
        %8441 = vmatpush1.msra.mxu0 0.0
        %8442 = vmatprep.subr.mxu0 0.0
        %8443 = vmatpush1.msra.mxu0 0.0
        %8444 = vmatprep.subr.mxu0 0.0
        %8445 = vmatpush1.msra.mxu0 0.0
        %8446 = vmatprep.subr.mxu0 0.0
        %8447 = vmatpush1.msra.mxu0 0.0
        %8448 = vmatprep.subr.mxu0 0.0
        %8449 = vmatpush1.msra.mxu0 0.0
        %8450 = vmatprep.subr.mxu0 0.0
        %8451 = vmatpush1.msra.mxu0 0.0
        %8452 = vmatprep.subr.mxu0 0.0
        %8453 = vmatpush1.msra.mxu0 0.0
        %8454 = vmatprep.subr.mxu0 0.0
        %8455 = vmatpush1.msra.mxu0 0.0
        %8456 = vmatprep.subr.mxu0 0.0
        %8457 = vmatpush1.msra.mxu0 0.0
        %8458 = vmatprep.subr.mxu0 0.0
        %8459 = vmatpush1.msra.mxu0 0.0
        %8460 = vmatprep.subr.mxu0 0.0
        %8461 = vmatpush1.msra.mxu0 0.0
        %8462 = vmatprep.subr.mxu0 0.0
        %8463 = vmatpush1.msra.mxu0 0.0
        %8464 = vmatprep.subr.mxu0 0.0
        %8465 = vmatpush1.msra.mxu0 0.0
        %8466 = vmatprep.subr.mxu0 0.0
        %8467 = vmatpush1.msra.mxu0 0.0
        %8468 = vmatprep.subr.mxu0 0.0
        %8469 = vmatpush1.msra.mxu0 0.0
        %8470 = vmatprep.subr.mxu0 0.0
        %8471 = vmatpush1.msra.mxu0 %v8415
        %8472 = vmatprep.subr.mxu0 0.0
        %8473 = vmatpush2.msra.mxu0 0.0
        %8474 = vmatprep.subr.mxu0 0.0
        %8475 = vmatpush2.msra.mxu0 0.0
        %8476 = vmatprep.subr.mxu0 0.0
        %8477 = vmatpush2.msra.mxu0 0.0
        %8478 = vmatprep.subr.mxu0 0.0
        %8479 = vmatpush2.msra.mxu0 0.0
        %8480 = vmatprep.subr.mxu0 0.0
        %8481 = vmatpush2.msra.mxu0 0.0
        %8482 = vmatprep.subr.mxu0 0.0
        %8483 = vmatpush2.msra.mxu0 0.0
        %8484 = vmatprep.subr.mxu0 0.0
        %8485 = vmatpush2.msra.mxu0 0.0
        %8486 = vmatprep.subr.mxu0 0.0
        %8487 = vmatpush2.msra.mxu0 0.0
        %8488 = vmatprep.subr.mxu0 0.0
        %8489 = vmatpush2.msra.mxu0 0.0
        %8490 = vmatprep.subr.mxu0 0.0
        %8491 = vmatpush2.msra.mxu0 0.0
        %8492 = vmatprep.subr.mxu0 0.0
        %8493 = vmatpush2.msra.mxu0 0.0
        %8494 = vmatprep.subr.mxu0 0.0
        %8495 = vmatpush2.msra.mxu0 0.0
        %8496 = vmatprep.subr.mxu0 0.0
        %8497 = vmatpush2.msra.mxu0 0.0
        %8498 = vmatprep.subr.mxu0 0.0
        %8499 = vmatpush2.msra.mxu0 0.0
        %8500 = vmatprep.subr.mxu0 0.0
        %8501 = vmatpush2.msra.mxu0 0.0
        %8502 = vmatprep.subr.mxu0 0.0
        %8503 = vmatpush2.msra.mxu0 0.0
        %8504 = vmatprep.mubr.f32.mxu0 0.0
        %8505 = vmatmul.mubr.f32.gmra.mxu0 %v8417
        %v8506 = vpop.f32.mrf.mxu0
        %v8507 = vadd.f32 0.0, %v8506
        %v8508 = vpop.f32.mrf.mxu0
        %8509 = vmatprep.mubr.f32.mxu0 0.0
        %8510 = vmatmul.mubr.f32.gmra.mxu0 %v8420
        %v8511 = vpop.f32.mrf.mxu0
        %v8512 = vadd.f32 0.0, %v8511
        %v8513 = vpop.f32.mrf.mxu0
        %8514 = vmatprep.mubr.f32.mxu0 0.0
        %8515 = vmatmul.mubr.f32.gmra.mxu0 %v8423
        %v8516 = vpop.f32.mrf.mxu0
        %v8517 = vadd.f32 0.0, %v8516
        %v8518 = vpop.f32.mrf.mxu0
        %8519 = vmatprep.mubr.f32.mxu0 0.0
        %8520 = vmatmul.mubr.f32.gmra.mxu0 %v8426
        %v8521 = vpop.f32.mrf.mxu0
        %v8522 = vadd.f32 0.0, %v8521
        %v8523 = vpop.f32.mrf.mxu0
        %8524 = vmatprep.mubr.f32.mxu0 0.0
        %8525 = vmatmul.mubr.f32.gmra.mxu0 %v8429
        %v8526 = vpop.f32.mrf.mxu0
        %v8527 = vadd.f32 0.0, %v8526
        %v8528 = vpop.f32.mrf.mxu0
        %8529 = vmatprep.mubr.f32.mxu0 0.0
        %8530 = vmatmul.mubr.f32.gmra.mxu0 %v8432
        %v8531 = vpop.f32.mrf.mxu0
        %v8532 = vadd.f32 0.0, %v8531
        %v8533 = vpop.f32.mrf.mxu0
        %8534 = vmatprep.mubr.f32.mxu0 0.0
        %8535 = vmatmul.mubr.f32.gmra.mxu0 %v8435
        %v8536 = vpop.f32.mrf.mxu0
        %v8537 = vadd.f32 0.0, %v8536
        %v8538 = vpop.f32.mrf.mxu0
        %8539 = vmatprep.mubr.f32.mxu0 0.0
        %8540 = vmatmul.mubr.f32.gmra.mxu0 %v8438
        %v8541 = vpop.f32.mrf.mxu0
        %v8542 = vadd.f32 0.0, %v8541
        %v8543 = vpop.f32.mrf.mxu0
        %8544 = vdwg.mxu0
        %v8545 = vadd.f32 %v8397, %v8507
        %v8546 = vadd.f32 %v8398, %v8512
        %v8547 = vadd.f32 %v8399, %v8517
        %v8548 = vadd.f32 %v8400, %v8522
        %v8549 = vadd.f32 %v8401, %v8527
        %v8550 = vadd.f32 %v8402, %v8532
        %v8551 = vadd.f32 %v8403, %v8537
        %v8552 = vadd.f32 %v8404, %v8542
        %v8553 = vld [vmem:[%s8405 + $0x1] sm:$0xff]
        %v8554 = vld [vmem:[%s8405 + $0x11] sm:$0xff]
        %v8555 = vld [vmem:[%s8405 + $0x21] sm:$0xff]
        %v8556 = vld [vmem:[%s8405 + $0x31] sm:$0xff]
        %v8557 = vld [vmem:[%s8405 + $0x41] sm:$0xff]
        %v8558 = vld [vmem:[%s8405 + $0x51] sm:$0xff]
        %v8559 = vld [vmem:[%s8405 + $0x61] sm:$0xff]
        %v8560 = vld [vmem:[%s8405 + $0x71] sm:$0xff]
        %s8561 = scalar_lea.vmem %s5, 56
        %v8562 = vld [vmem:[%s8561] sm:$0xff]
        %v8564 = vsel %vm3796, %v8553, 0
        %v8567 = vsel %vm3796, %v8554, 0
        %v8570 = vsel %vm3796, %v8555, 0
        %v8573 = vsel %vm3796, %v8556, 0
        %v8576 = vsel %vm3796, %v8557, 0
        %v8579 = vsel %vm3796, %v8558, 0
        %v8582 = vsel %vm3796, %v8559, 0
        %v8585 = vsel %vm3796, %v8560, 0
        %8587 = vmatprep.subr.mxu0 0.0
        %8588 = vmatpush1.msra.mxu0 0.0
        %8589 = vmatprep.subr.mxu0 0.0
        %8590 = vmatpush1.msra.mxu0 0.0
        %8591 = vmatprep.subr.mxu0 0.0
        %8592 = vmatpush1.msra.mxu0 0.0
        %8593 = vmatprep.subr.mxu0 0.0
        %8594 = vmatpush1.msra.mxu0 0.0
        %8595 = vmatprep.subr.mxu0 0.0
        %8596 = vmatpush1.msra.mxu0 0.0
        %8597 = vmatprep.subr.mxu0 0.0
        %8598 = vmatpush1.msra.mxu0 0.0
        %8599 = vmatprep.subr.mxu0 0.0
        %8600 = vmatpush1.msra.mxu0 0.0
        %8601 = vmatprep.subr.mxu0 0.0
        %8602 = vmatpush1.msra.mxu0 0.0
        %8603 = vmatprep.subr.mxu0 0.0
        %8604 = vmatpush1.msra.mxu0 0.0
        %8605 = vmatprep.subr.mxu0 0.0
        %8606 = vmatpush1.msra.mxu0 0.0
        %8607 = vmatprep.subr.mxu0 0.0
        %8608 = vmatpush1.msra.mxu0 0.0
        %8609 = vmatprep.subr.mxu0 0.0
        %8610 = vmatpush1.msra.mxu0 0.0
        %8611 = vmatprep.subr.mxu0 0.0
        %8612 = vmatpush1.msra.mxu0 0.0
        %8613 = vmatprep.subr.mxu0 0.0
        %8614 = vmatpush1.msra.mxu0 0.0
        %8615 = vmatprep.subr.mxu0 0.0
        %8616 = vmatpush1.msra.mxu0 0.0
        %8617 = vmatprep.subr.mxu0 0.0
        %8618 = vmatpush1.msra.mxu0 %v8562
        %8619 = vmatprep.subr.mxu0 0.0
        %8620 = vmatpush2.msra.mxu0 0.0
        %8621 = vmatprep.subr.mxu0 0.0
        %8622 = vmatpush2.msra.mxu0 0.0
        %8623 = vmatprep.subr.mxu0 0.0
        %8624 = vmatpush2.msra.mxu0 0.0
        %8625 = vmatprep.subr.mxu0 0.0
        %8626 = vmatpush2.msra.mxu0 0.0
        %8627 = vmatprep.subr.mxu0 0.0
        %8628 = vmatpush2.msra.mxu0 0.0
        %8629 = vmatprep.subr.mxu0 0.0
        %8630 = vmatpush2.msra.mxu0 0.0
        %8631 = vmatprep.subr.mxu0 0.0
        %8632 = vmatpush2.msra.mxu0 0.0
        %8633 = vmatprep.subr.mxu0 0.0
        %8634 = vmatpush2.msra.mxu0 0.0
        %8635 = vmatprep.subr.mxu0 0.0
        %8636 = vmatpush2.msra.mxu0 0.0
        %8637 = vmatprep.subr.mxu0 0.0
        %8638 = vmatpush2.msra.mxu0 0.0
        %8639 = vmatprep.subr.mxu0 0.0
        %8640 = vmatpush2.msra.mxu0 0.0
        %8641 = vmatprep.subr.mxu0 0.0
        %8642 = vmatpush2.msra.mxu0 0.0
        %8643 = vmatprep.subr.mxu0 0.0
        %8644 = vmatpush2.msra.mxu0 0.0
        %8645 = vmatprep.subr.mxu0 0.0
        %8646 = vmatpush2.msra.mxu0 0.0
        %8647 = vmatprep.subr.mxu0 0.0
        %8648 = vmatpush2.msra.mxu0 0.0
        %8649 = vmatprep.subr.mxu0 0.0
        %8650 = vmatpush2.msra.mxu0 0.0
        %8651 = vmatprep.mubr.f32.mxu0 0.0
        %8652 = vmatmul.mubr.f32.gmra.mxu0 %v8564
        %v8653 = vpop.f32.mrf.mxu0
        %v8654 = vadd.f32 0.0, %v8653
        %v8655 = vpop.f32.mrf.mxu0
        %8656 = vmatprep.mubr.f32.mxu0 0.0
        %8657 = vmatmul.mubr.f32.gmra.mxu0 %v8567
        %v8658 = vpop.f32.mrf.mxu0
        %v8659 = vadd.f32 0.0, %v8658
        %v8660 = vpop.f32.mrf.mxu0
        %8661 = vmatprep.mubr.f32.mxu0 0.0
        %8662 = vmatmul.mubr.f32.gmra.mxu0 %v8570
        %v8663 = vpop.f32.mrf.mxu0
        %v8664 = vadd.f32 0.0, %v8663
        %v8665 = vpop.f32.mrf.mxu0
        %8666 = vmatprep.mubr.f32.mxu0 0.0
        %8667 = vmatmul.mubr.f32.gmra.mxu0 %v8573
        %v8668 = vpop.f32.mrf.mxu0
        %v8669 = vadd.f32 0.0, %v8668
        %v8670 = vpop.f32.mrf.mxu0
        %8671 = vmatprep.mubr.f32.mxu0 0.0
        %8672 = vmatmul.mubr.f32.gmra.mxu0 %v8576
        %v8673 = vpop.f32.mrf.mxu0
        %v8674 = vadd.f32 0.0, %v8673
        %v8675 = vpop.f32.mrf.mxu0
        %8676 = vmatprep.mubr.f32.mxu0 0.0
        %8677 = vmatmul.mubr.f32.gmra.mxu0 %v8579
        %v8678 = vpop.f32.mrf.mxu0
        %v8679 = vadd.f32 0.0, %v8678
        %v8680 = vpop.f32.mrf.mxu0
        %8681 = vmatprep.mubr.f32.mxu0 0.0
        %8682 = vmatmul.mubr.f32.gmra.mxu0 %v8582
        %v8683 = vpop.f32.mrf.mxu0
        %v8684 = vadd.f32 0.0, %v8683
        %v8685 = vpop.f32.mrf.mxu0
        %8686 = vmatprep.mubr.f32.mxu0 0.0
        %8687 = vmatmul.mubr.f32.gmra.mxu0 %v8585
        %v8688 = vpop.f32.mrf.mxu0
        %v8689 = vadd.f32 0.0, %v8688
        %v8690 = vpop.f32.mrf.mxu0
        %8691 = vdwg.mxu0
        %v8692 = vadd.f32 %v8545, %v8654
        %v8693 = vadd.f32 %v8546, %v8659
        %v8694 = vadd.f32 %v8547, %v8664
        %v8695 = vadd.f32 %v8548, %v8669
        %v8696 = vadd.f32 %v8549, %v8674
        %v8697 = vadd.f32 %v8550, %v8679
        %v8698 = vadd.f32 %v8551, %v8684
        %v8699 = vadd.f32 %v8552, %v8689
        %v8700 = vld [vmem:[%s8405 + $0x2] sm:$0xff]
        %v8701 = vld [vmem:[%s8405 + $0x12] sm:$0xff]
        %v8702 = vld [vmem:[%s8405 + $0x22] sm:$0xff]
        %v8703 = vld [vmem:[%s8405 + $0x32] sm:$0xff]
        %v8704 = vld [vmem:[%s8405 + $0x42] sm:$0xff]
        %v8705 = vld [vmem:[%s8405 + $0x52] sm:$0xff]
        %v8706 = vld [vmem:[%s8405 + $0x62] sm:$0xff]
        %v8707 = vld [vmem:[%s8405 + $0x72] sm:$0xff]
        %s8708 = scalar_lea.vmem %s5, 64
        %v8709 = vld [vmem:[%s8708] sm:$0xff]
        %v8711 = vsel %vm3796, %v8700, 0
        %v8714 = vsel %vm3796, %v8701, 0
        %v8717 = vsel %vm3796, %v8702, 0
        %v8720 = vsel %vm3796, %v8703, 0
        %v8723 = vsel %vm3796, %v8704, 0
        %v8726 = vsel %vm3796, %v8705, 0
        %v8729 = vsel %vm3796, %v8706, 0
        %v8732 = vsel %vm3796, %v8707, 0
        %8734 = vmatprep.subr.mxu0 0.0
        %8735 = vmatpush1.msra.mxu0 0.0
        %8736 = vmatprep.subr.mxu0 0.0
        %8737 = vmatpush1.msra.mxu0 0.0
        %8738 = vmatprep.subr.mxu0 0.0
        %8739 = vmatpush1.msra.mxu0 0.0
        %8740 = vmatprep.subr.mxu0 0.0
        %8741 = vmatpush1.msra.mxu0 0.0
        %8742 = vmatprep.subr.mxu0 0.0
        %8743 = vmatpush1.msra.mxu0 0.0
        %8744 = vmatprep.subr.mxu0 0.0
        %8745 = vmatpush1.msra.mxu0 0.0
        %8746 = vmatprep.subr.mxu0 0.0
        %8747 = vmatpush1.msra.mxu0 0.0
        %8748 = vmatprep.subr.mxu0 0.0
        %8749 = vmatpush1.msra.mxu0 0.0
        %8750 = vmatprep.subr.mxu0 0.0
        %8751 = vmatpush1.msra.mxu0 0.0
        %8752 = vmatprep.subr.mxu0 0.0
        %8753 = vmatpush1.msra.mxu0 0.0
        %8754 = vmatprep.subr.mxu0 0.0
        %8755 = vmatpush1.msra.mxu0 0.0
        %8756 = vmatprep.subr.mxu0 0.0
        %8757 = vmatpush1.msra.mxu0 0.0
        %8758 = vmatprep.subr.mxu0 0.0
        %8759 = vmatpush1.msra.mxu0 0.0
        %8760 = vmatprep.subr.mxu0 0.0
        %8761 = vmatpush1.msra.mxu0 0.0
        %8762 = vmatprep.subr.mxu0 0.0
        %8763 = vmatpush1.msra.mxu0 0.0
        %8764 = vmatprep.subr.mxu0 0.0
        %8765 = vmatpush1.msra.mxu0 %v8709
        %8766 = vmatprep.subr.mxu0 0.0
        %8767 = vmatpush2.msra.mxu0 0.0
        %8768 = vmatprep.subr.mxu0 0.0
        %8769 = vmatpush2.msra.mxu0 0.0
        %8770 = vmatprep.subr.mxu0 0.0
        %8771 = vmatpush2.msra.mxu0 0.0
        %8772 = vmatprep.subr.mxu0 0.0
        %8773 = vmatpush2.msra.mxu0 0.0
        %8774 = vmatprep.subr.mxu0 0.0
        %8775 = vmatpush2.msra.mxu0 0.0
        %8776 = vmatprep.subr.mxu0 0.0
        %8777 = vmatpush2.msra.mxu0 0.0
        %8778 = vmatprep.subr.mxu0 0.0
        %8779 = vmatpush2.msra.mxu0 0.0
        %8780 = vmatprep.subr.mxu0 0.0
        %8781 = vmatpush2.msra.mxu0 0.0
        %8782 = vmatprep.subr.mxu0 0.0
        %8783 = vmatpush2.msra.mxu0 0.0
        %8784 = vmatprep.subr.mxu0 0.0
        %8785 = vmatpush2.msra.mxu0 0.0
        %8786 = vmatprep.subr.mxu0 0.0
        %8787 = vmatpush2.msra.mxu0 0.0
        %8788 = vmatprep.subr.mxu0 0.0
        %8789 = vmatpush2.msra.mxu0 0.0
        %8790 = vmatprep.subr.mxu0 0.0
        %8791 = vmatpush2.msra.mxu0 0.0
        %8792 = vmatprep.subr.mxu0 0.0
        %8793 = vmatpush2.msra.mxu0 0.0
        %8794 = vmatprep.subr.mxu0 0.0
        %8795 = vmatpush2.msra.mxu0 0.0
        %8796 = vmatprep.subr.mxu0 0.0
        %8797 = vmatpush2.msra.mxu0 0.0
        %8798 = vmatprep.mubr.f32.mxu0 0.0
        %8799 = vmatmul.mubr.f32.gmra.mxu0 %v8711
        %v8800 = vpop.f32.mrf.mxu0
        %v8801 = vadd.f32 0.0, %v8800
        %v8802 = vpop.f32.mrf.mxu0
        %8803 = vmatprep.mubr.f32.mxu0 0.0
        %8804 = vmatmul.mubr.f32.gmra.mxu0 %v8714
        %v8805 = vpop.f32.mrf.mxu0
        %v8806 = vadd.f32 0.0, %v8805
        %v8807 = vpop.f32.mrf.mxu0
        %8808 = vmatprep.mubr.f32.mxu0 0.0
        %8809 = vmatmul.mubr.f32.gmra.mxu0 %v8717
        %v8810 = vpop.f32.mrf.mxu0
        %v8811 = vadd.f32 0.0, %v8810
        %v8812 = vpop.f32.mrf.mxu0
        %8813 = vmatprep.mubr.f32.mxu0 0.0
        %8814 = vmatmul.mubr.f32.gmra.mxu0 %v8720
        %v8815 = vpop.f32.mrf.mxu0
        %v8816 = vadd.f32 0.0, %v8815
        %v8817 = vpop.f32.mrf.mxu0
        %8818 = vmatprep.mubr.f32.mxu0 0.0
        %8819 = vmatmul.mubr.f32.gmra.mxu0 %v8723
        %v8820 = vpop.f32.mrf.mxu0
        %v8821 = vadd.f32 0.0, %v8820
        %v8822 = vpop.f32.mrf.mxu0
        %8823 = vmatprep.mubr.f32.mxu0 0.0
        %8824 = vmatmul.mubr.f32.gmra.mxu0 %v8726
        %v8825 = vpop.f32.mrf.mxu0
        %v8826 = vadd.f32 0.0, %v8825
        %v8827 = vpop.f32.mrf.mxu0
        %8828 = vmatprep.mubr.f32.mxu0 0.0
        %8829 = vmatmul.mubr.f32.gmra.mxu0 %v8729
        %v8830 = vpop.f32.mrf.mxu0
        %v8831 = vadd.f32 0.0, %v8830
        %v8832 = vpop.f32.mrf.mxu0
        %8833 = vmatprep.mubr.f32.mxu0 0.0
        %8834 = vmatmul.mubr.f32.gmra.mxu0 %v8732
        %v8835 = vpop.f32.mrf.mxu0
        %v8836 = vadd.f32 0.0, %v8835
        %v8837 = vpop.f32.mrf.mxu0
        %8838 = vdwg.mxu0
        %v8839 = vadd.f32 %v8692, %v8801
        %v8840 = vadd.f32 %v8693, %v8806
        %v8841 = vadd.f32 %v8694, %v8811
        %v8842 = vadd.f32 %v8695, %v8816
        %v8843 = vadd.f32 %v8696, %v8821
        %v8844 = vadd.f32 %v8697, %v8826
        %v8845 = vadd.f32 %v8698, %v8831
        %v8846 = vadd.f32 %v8699, %v8836
        %v8847 = vld [vmem:[%s6] sm:$0x1]
        %v8849 = vlaneseq
        %v8850 = vshrl.u32 %v8849, 7
        %v8851 = vsub.s32 0, %v8850
        %v8852 = vrot.slane %v8847, %v8851
        %v8854 = vadd.f32 %v8839, %v8852
        %v8855 = vadd.f32 %v8840, %v8852
        %v8856 = vadd.f32 %v8841, %v8852
        %v8857 = vadd.f32 %v8842, %v8852
        %v8858 = vadd.f32 %v8843, %v8852
        %v8859 = vadd.f32 %v8844, %v8852
        %v8860 = vadd.f32 %v8845, %v8852
        %v8861 = vadd.f32 %v8846, %v8852
        %v8862 = vmax.f32 %v8854, 0.0
        %v8863 = vmax.f32 %v8855, 0.0
        %v8864 = vmax.f32 %v8856, 0.0
        %v8865 = vmax.f32 %v8857, 0.0
        %v8866 = vmax.f32 %v8858, 0.0
        %v8867 = vmax.f32 %v8859, 0.0
        %v8868 = vmax.f32 %v8860, 0.0
        %v8869 = vmax.f32 %v8861, 0.0
        %vm8870 = vcmask 130048
        %8871 = vst.msk [vmem:[#allocation6] sm:$0xff] %vm8870, %v8862
        %8872 = vst.msk [vmem:[#allocation6 + $0x8] sm:$0xff] %vm8870, %v8863
        %8873 = vst.msk [vmem:[#allocation6 + $0x10] sm:$0xff] %vm8870, %v8864
        %8874 = vst.msk [vmem:[#allocation6 + $0x18] sm:$0xff] %vm8870, %v8865
        %8875 = vst.msk [vmem:[#allocation6 + $0x20] sm:$0xff] %vm8870, %v8866
        %8876 = vst.msk [vmem:[#allocation6 + $0x28] sm:$0xff] %vm8870, %v8867
        %8877 = vst.msk [vmem:[#allocation6 + $0x30] sm:$0xff] %vm8870, %v8868
        %8878 = vst.msk [vmem:[#allocation6 + $0x38] sm:$0xff] %vm8870, %v8869
        %v8879 = vld [vmem:[#allocation6] sm:$0xff]
        %v8880 = vld [vmem:[#allocation6 + $0x10] sm:$0xff]
        %v8881 = vld [vmem:[#allocation6 + $0x20] sm:$0xff]
        %v8882 = vld [vmem:[#allocation6 + $0x30] sm:$0xff]
        %s8883 = scalar_lea.vmem [#allocation6], 8
        %v8884 = vld [vmem:[%s8883] sm:$0xff]
        %v8885 = vld [vmem:[%s8883 + $0x10] sm:$0xff]
        %v8886 = vld [vmem:[%s8883 + $0x20] sm:$0xff]
        %v8887 = vld [vmem:[%s8883 + $0x30] sm:$0xff]
        %v8888 = vmax.f32 %v8879, %v8884
        %v8889 = vmax.f32 %v8880, %v8885
        %v8890 = vmax.f32 %v8881, %v8886
        %v8891 = vmax.f32 %v8882, %v8887
        %8892 = vst.msk [vmem:[#allocation7] sm:$0xff] %vm8870, %v8888
        %8893 = vst.msk [vmem:[#allocation7 + $0x8] sm:$0xff] %vm8870, %v8889
        %8894 = vst.msk [vmem:[#allocation7 + $0x10] sm:$0xff] %vm8870, %v8890
        %8895 = vst.msk [vmem:[#allocation7 + $0x18] sm:$0xff] %vm8870, %v8891
        %v8896 = vld [vmem:[#allocation7] ss:$2 sm:$0xf]
        %s8897 = scalar_lea.vmem [#allocation7], 8
        %v8898 = vld [vmem:[%s8897] ss:$2 sm:$0xf]
        %s8899 = scalar_lea.vmem [#allocation7], 16
        %v8900 = vld [vmem:[%s8899] ss:$2 sm:$0xf]
        %s8901 = scalar_lea.vmem [#allocation7], 24
        %v8902 = vld [vmem:[%s8901] ss:$2 sm:$0xf]
        %s8903 = scalar_lea.vmem [#allocation7], 1
        %v8904 = vld [vmem:[%s8903] ss:$2 sm:$0xf]
        %s8905 = scalar_lea.vmem [#allocation7], 9
        %v8906 = vld [vmem:[%s8905] ss:$2 sm:$0xf]
        %s8907 = scalar_lea.vmem [#allocation7], 17
        %v8908 = vld [vmem:[%s8907] ss:$2 sm:$0xf]
        %s8909 = scalar_lea.vmem [#allocation7], 25
        %v8910 = vld [vmem:[%s8909] ss:$2 sm:$0xf]
        %v8911 = vmax.f32 %v8896, %v8904
        %v8912 = vmax.f32 %v8898, %v8906
        %v8913 = vmax.f32 %v8900, %v8908
        %v8914 = vmax.f32 %v8902, %v8910
        %vm8915 = vcmask 125952
        %v8916 = vsel %vm8915, %v8911, 0.0
        %v8917 = vsel %vm8915, %v8912, 0.0
        %v8918 = vadd.f32 %v8916, %v8917
        %v8919 = vsel %vm8915, %v8913, 0.0
        %v8920 = vadd.f32 %v8918, %v8919
        %v8921 = vsel %vm8915, %v8914, 0.0
        %v8922 = vadd.f32 %v8920, %v8921
        %v8923 = vsel %vm8915, %v8922, 0.0
        %v8924 = vrot.slane %v8923, 4
        %v8925 = vadd.f32 %v8923, %v8924
        %v8926 = vrot.slane %v8925, 2
        %v8927 = vadd.f32 %v8925, %v8926
        %v8928 = vrot.slane %v8927, 1
        %v8929 = vadd.f32 %v8927, %v8928
        %v8930 = vmul.f32 %v8929, 0.0625
        %vm8931 = vcmask 122880
        %8932 = vst.msk [vmem:[%s270] sm:$0x1] %vm8931, %v8930
        %s8933 = sand.u32 %s181, 1
        %s8934 = scalar_lea.sflag [#allocation9], %s8933
        %s8935 = sand.u32 %s181, 1
        %s8936 = scalar_lea.vmem [#allocation8], %s8935
        // Predicated region
        $region49: #{encoder_fused_forward.1} parent=47 // pred_check
          %p8937 = pneg %p191
        $region50: #{encoder_fused_forward.1} parent=47 // pred_check_branch
          %8939 = sbr.rel (%p8937) target = $region52
        $region51: #{encoder_fused_forward.1} parent=47 // pred_region
          %s8941 = ssub.s32 16, 16
          %8942 = vsyncadd %s8934, %s8941
          %s8943 = smul.addr %s21, 16
          %s8944 = scalar_lea.hbm %s7, %s8943
          %s8946 = sshll.u32 %s8936, 4
          %s8947 = int_to_ptr.vmem [resolvable:$true] %s8946
          %8949 = dma.vmem_to_hbm [thread:$0]  %s8947, 16, %s8944, %s8934
        $region52: #{encoder_fused_forward.1} parent=47 // pred_fallthru
          _
      $region48: #{encoder_fused_forward.1} parent=5 // pred_fallthru
        _
      %p8950 = scmp.le.s32.totalorder 2, %s16
      // Predicated region
      $region53: #{encoder_fused_forward.1} parent=5 // pred_check
        %p8951 = pneg %p8950
      $region54: #{encoder_fused_forward.1} parent=5 // pred_check_branch
        %8953 = sbr.rel (%p8951) target = $region56
      $region55: #{encoder_fused_forward.1} parent=5 // pred_region
        %s8954 = ssub.s32 %s16, 2
        // Predicated region
        $region57: #{encoder_fused_forward.1} parent=55 // pred_check
          %p8955 = pneg %p197
        $region58: #{encoder_fused_forward.1} parent=55 // pred_check_branch
          %8957 = sbr.rel (%p8955) target = $region60
        $region59: #{encoder_fused_forward.1} parent=55 // pred_region
          %s8958 = sand.u32 %s182, 1
          %s8959 = scalar_lea.sflag [#allocation9], %s8958
          %s8960 = sand.u32 %s182, 1
          %s8961 = scalar_lea.vmem [#allocation8], %s8960
          %8962 = dma.done %s8959, 16
        $region60: #{encoder_fused_forward.1} parent=55 // pred_fallthru
          _
      $region56: #{encoder_fused_forward.1} parent=5 // pred_fallthru
        _
    $region6: #{encoder_fused_forward.1} parent=1 // loop_footer
      %s20 = sadd.s32 1, %s16
    $region7: #{encoder_fused_forward.1} parent=1 // loop_footer_branch
      %15 = sbr.rel target = $region3
    $region8: #{encoder_fused_forward.1} parent=1 // loop_exit
      _
    %8963 = vsyncpa [#allocation9], 1
    %s8964 = scalar_lea.sflag [#allocation9], 1
    %8965 = vsyncpa %s8964, 1

</llo_original>
